<compile_context>
chip_gen: v7x
topology: tpu7x:2x2x1
jax: 0.10.0
libtpu: 0.0.40
codegen_flags: <defaults>
</compile_context>

<pallas_src>
import jax
import jax.numpy as jnp
from jax.experimental import pallas as pl
from jax.experimental.pallas import tpu as pltpu

_BN_EPS = 1e-3


# ----------------------------------------------------------------------------
# Hardware-aware VMEM limit
# ----------------------------------------------------------------------------
def _vmem_limit_bytes():
    """Generation-aware VMEM budget (v5e/v6e: 128 MiB physical, v7x: 64 MiB)."""
    cap = 128 * 1024 * 1024
    try:
        cap = int(getattr(pltpu.get_tpu_info(), "vmem_capacity_bytes", cap))
    except Exception:
        pass
    return int(min(cap * 3 // 4, 100 * 1024 * 1024))


# ----------------------------------------------------------------------------
# Parameter preparation (BN folding, tap stacking, bf16 cast)
# ----------------------------------------------------------------------------
def _bn_scale_bias(bn):
    gamma, beta, mean, var = bn
    scale = gamma / jnp.sqrt(var + _BN_EPS)
    return scale, beta - mean * scale


def _fold_conv3x3_bn(w_hwio, bn):
    """3x3 conv (HWIO) + BN -> tap-stacked bf16 weight (9, Cin, Cout) + f32 bias (1, Cout)."""
    scale, bias = _bn_scale_bias(bn)
    cin, cout = w_hwio.shape[2], w_hwio.shape[3]
    w = (w_hwio * scale).astype(jnp.bfloat16).reshape(9, cin, cout)
    return w, bias.reshape(1, -1).astype(jnp.float32)


def _fold_conv3x3s2_bn(w_hwio, bn):
    """3x3 stride-2 pad-1 conv + BN, re-expressed as a 2x2 stride-1 conv on the
    space-to-depth (factor-2) input: tap-stacked (4, 4*Cin, Cout) bf16 weight."""
    scale, bias = _bn_scale_bias(bn)
    cin, cout = w_hwio.shape[2], w_hwio.shape[3]
    w = w_hwio * scale                                      # (3,3,Cin,Cout) f32
    wt = jnp.zeros((2, 2, 2, 2, cin, cout), w.dtype)        # [th, tw, ph, pw, c, f]
    tap_map = [(0, 1, 0), (1, 0, 1), (1, 1, 2)]             # (tap, phase, 3x3 index)
    for th, ph, kh in tap_map:
        for tw, pw, kw in tap_map:
            wt = wt.at[th, tw, ph, pw].set(w[kh, kw])
    wt = wt.reshape(4, 4 * cin, cout).astype(jnp.bfloat16)
    return wt, bias.reshape(1, -1).astype(jnp.float32)


def _fold_deconv_bn(w_t, bn, u):
    """ConvTranspose2d(k=u, s=u) + BN -> per-output-subrow weights (u, Cin, u*Cout)
    + bias (1, u*Cout), so the kernel can store in depth-to-space order directly."""
    scale, bias = _bn_scale_bias(bn)
    cin, cout = w_t.shape[0], w_t.shape[1]
    w = w_t * scale.reshape(1, -1, 1, 1)                    # (Cin, Cout, u, u)
    w = jnp.transpose(w, (2, 0, 3, 1)).reshape(u, cin, u * cout).astype(jnp.bfloat16)
    b = jnp.tile(bias, (u,)).reshape(1, u * cout).astype(jnp.float32)
    return w, b


# ----------------------------------------------------------------------------
# Fused per-level kernel
# ----------------------------------------------------------------------------
def _make_level_kernel(*, Ho, Wo, K0, T0, Cf, u, UC, n_extra):
    """One backbone level: first conv (+BN+ReLU), n_extra convs, deblock, all in VMEM."""
    n_params = 2 + 2 * n_extra + 2
    if T0 == 9:                       # stride-1 first conv: 3x3 taps, halo on all sides
        tap_offs0 = [(kh, kw) for kh in range(3) for kw in range(3)]
        Hp0, Wp0 = Ho + 2, Wo + 2
    else:                             # stride-2 first conv on SD input: 2x2 taps, top/left halo
        tap_offs0 = [(th, tw) for th in range(2) for tw in range(2)]
        Hp0, Wp0 = Ho + 1, Wo + 1

    def kernel(x_ref, *args):
        params = args[:n_params]
        o_ref = args[n_params]
        pad0 = args[n_params + 1]
        pad1 = args[n_params + 2] if n_extra > 0 else None

        # ---- zero ONLY the halo strips of the padded scratch buffers (cheap) ----
        pad0[0:1, :, :] = jnp.zeros((1, Wp0, K0), pad0.dtype)
        pad0[:, 0:1, :] = jnp.zeros((Hp0, 1, K0), pad0.dtype)
        if T0 == 9:
            pad0[Hp0 - 1:Hp0, :, :] = jnp.zeros((1, Wp0, K0), pad0.dtype)
            pad0[:, Wp0 - 1:Wp0, :] = jnp.zeros((Hp0, 1, K0), pad0.dtype)
        if n_extra > 0:
            pad1[0:1, :, :] = jnp.zeros((1, Wo + 2, Cf), pad1.dtype)
            pad1[Ho + 1:Ho + 2, :, :] = jnp.zeros((1, Wo + 2, Cf), pad1.dtype)
            pad1[:, 0:1, :] = jnp.zeros((Ho + 2, 1, Cf), pad1.dtype)
            pad1[:, Wo + 1:Wo + 2, :] = jnp.zeros((Ho + 2, 1, Cf), pad1.dtype)

        # ---- first conv: per-tap accumulating MXU dots from the padded input ----
        pad0[1:1 + Ho, 1:1 + Wo, :] = x_ref[0]
        w0, b0 = params[0], params[1]
        acc = None
        for t, (dh, dw) in enumerate(tap_offs0):
            lhs = pad0[dh:dh + Ho, dw:dw + Wo, :].reshape(Ho * Wo, K0)
            p = jnp.dot(lhs, w0[t], preferred_element_type=jnp.float32)
            acc = p if acc is None else acc + p
        act = jnp.maximum(acc + b0[...], 0.0)               # (Ho*Wo, Cf) f32

        # ---- extra 3x3 stride-1 convs; activations never leave VMEM ----
        # TODO(synk): for LAYER_NUMS ~ 5, stack weights and use lax.fori_loop to
        #             bound vreg live ranges; static unroll is fine at 1-2 layers.
        for l in range(n_extra):
            wl, bl = params[2 + 2 * l], params[3 + 2 * l]
            pad1[1:1 + Ho, 1:1 + Wo, :] = act.reshape(Ho, Wo, Cf).astype(pad1.dtype)
            acc = None
            for t in range(9):
                kh, kw = t // 3, t % 3
                lhs = pad1[kh:kh + Ho, kw:kw + Wo, :].reshape(Ho * Wo, Cf)
                p = jnp.dot(lhs, wl[t], preferred_element_type=jnp.float32)
                acc = p if acc is None else acc + p
            act = jnp.maximum(acc + bl[...], 0.0)

        # ---- deblock: ConvTranspose2d(k=u,s=u)+BN+ReLU as u lane-dense matmuls,
        #      stored directly in depth-to-space order (Ho, u, Wo, u*Cup) ----
        wd, bd = params[-2], params[-1]
        act_b = act.astype(jnp.bfloat16)
        for a in range(u):
            y = jnp.dot(act_b, wd[a], preferred_element_type=jnp.float32)
            y = jnp.maximum(y + bd[...], 0.0)
            o_ref[0, :, a:a + 1, :, :] = y.reshape(Ho, 1, Wo, UC).astype(o_ref.dtype)

    return kernel


def _level_forward(x_bf, lp, *, stride, u):
    """x_bf: (N,H,W,Cin) bf16 NHWC. One backbone level fused in a single pallas_call."""
    N, H, W, Cin = x_bf.shape
    n_extra = len(lp["conv_w"]) - 1
    Cf = lp["conv_w"][0].shape[-1]
    Cup = lp["de_w"].shape[1]
    UC = u * Cup

    if stride == 1:
        Ho, Wo = H, W
        K0, T0 = Cin, 9
        x_in = x_bf
        w0, b0 = _fold_conv3x3_bn(lp["conv_w"][0], lp["conv_bn"][0])
    elif stride == 2:
        assert H % 2 == 0 and W % 2 == 0, "stride-2 level requires even H, W"
        Ho, Wo = H // 2, W // 2
        K0, T0 = 4 * Cin, 4
        # TODO(synk): this space-to-depth is one XLA reshape+transpose in HBM;
        #             fuse into the producer of spatial_features to remove it.
        x_in = x_bf.reshape(N, Ho, 2, Wo, 2, Cin).transpose(0, 1, 3, 2, 4, 5)
        x_in = x_in.reshape(N, Ho, Wo, 4 * Cin)
        w0, b0 = _fold_conv3x3s2_bn(lp["conv_w"][0], lp["conv_bn"][0])
    else:
        raise NotImplementedError("layer stride must be 1 or 2")

    flat_params = [w0, b0]
    for w, bn in zip(lp["conv_w"][1:], lp["conv_bn"][1:]):
        flat_params += list(_fold_conv3x3_bn(w, bn))
    flat_params += list(_fold_deconv_bn(lp["de_w"], lp["de_bn"], u))

    kernel = _make_level_kernel(Ho=Ho, Wo=Wo, K0=K0, T0=T0, Cf=Cf, u=u, UC=UC,
                                n_extra=n_extra)

    x_spec = pl.BlockSpec((1,) + x_in.shape[1:], lambda n: (n, 0, 0, 0))
    param_specs = [pl.BlockSpec(p.shape, lambda n, nd=p.ndim: (0,) * nd)
                   for p in flat_params]

    halo = 2 if T0 == 9 else 1
    scratch = [pltpu.VMEM((Ho + halo, Wo + halo, K0), jnp.bfloat16)]
    if n_extra > 0:
        scratch.append(pltpu.VMEM((Ho + 2, Wo + 2, Cf), jnp.bfloat16))

    flops = 2 * N * Ho * Wo * (T0 * K0 * Cf + n_extra * 9 * Cf * Cf + Cf * u * UC)
    bytes_accessed = int(x_in.size * x_in.dtype.itemsize
                         + sum(int(p.size) * p.dtype.itemsize for p in flat_params)
                         + N * Ho * u * Wo * UC * 2)

    out = pl.pallas_call(
        kernel,
        out_shape=jax.ShapeDtypeStruct((N, Ho, u, Wo, UC), jnp.bfloat16),
        grid_spec=pltpu.PrefetchScalarGridSpec(
            num_scalar_prefetch=0,
            grid=(N,),
            in_specs=[x_spec] + param_specs,
            out_specs=pl.BlockSpec((1, Ho, u, Wo, UC), lambda n: (n, 0, 0, 0, 0)),
            scratch_shapes=scratch,
        ),
        compiler_params=pltpu.CompilerParams(
            dimension_semantics=("parallel",),
            vmem_limit_bytes=_vmem_limit_bytes()),
        cost_estimate=pl.CostEstimate(flops=flops, transcendentals=0,
                                      bytes_accessed=bytes_accessed),
    )(x_in, *flat_params)

    # Depth-to-space: (N, Ho, u, Wo, u*Cup) -> (N, u*Ho, u*Wo, Cup) is a pure
    # adjacent-dim merge -> free view reshape in XLA (no HBM pass).
    return out.reshape(N, u * Ho, u * Wo, Cup)


# ----------------------------------------------------------------------------
# BaseBEVBackbone forward (mean path)
# ----------------------------------------------------------------------------
def base_bev_backbone_forward(data_dict, params, cfg, dropout_rate=None):
    """Mirrors the reference forward: every block consumes the raw `spatial_features`,
    each block output goes through its deblock, results are concatenated on channels."""
    spatial_features = data_dict["spatial_features"]            # NCHW float32
    x = jnp.transpose(spatial_features, (0, 2, 3, 1)).astype(jnp.bfloat16)
    ups = []
    for i, lp in enumerate(params["levels"]):
        y = _level_forward(x, lp, stride=cfg["LAYER_STRIDES"][i],
                           u=cfg["UPSAMPLE_STRIDES"][i])
        ups.append(y)
    mean = jnp.concatenate(ups, axis=-1) if len(ups) > 1 else ups[0]
    data_dict["spatial_features_2d"] = jnp.transpose(mean, (0, 3, 1, 2)).astype(jnp.float32)
    # TODO(synk): adf mean/variance propagation and the adf dropout-on-ReLU have no
    #             Pallas equivalent without the adf layer definitions; 'variance' is
    #             passed through unchanged and dropout_rate is ignored.
    # TODO(synk): per-level 'spatial_features_%dx' intermediates are not exported
    #             because the conv stack and deblock are fused into one kernel.
    return data_dict


# ----------------------------------------------------------------------------
# Pure-JAX reference (for self-check)
# ----------------------------------------------------------------------------
def _ref_level(x, lp, *, stride, u):
    def bn(y, p):
        g, b, m, v = p
        return (y - m) / jnp.sqrt(v + _BN_EPS) * g + b

    y = x
    for li, (w, bnp) in enumerate(zip(lp["conv_w"], lp["conv_bn"])):
        st = stride if li == 0 else 1
        y = jax.lax.conv_general_dilated(
            y, w, window_strides=(st, st), padding=[(1, 1), (1, 1)],
            dimension_numbers=("NHWC", "HWIO", "NHWC"))
        y = jnp.maximum(bn(y, bnp), 0.0)
    wt = lp["de_w"]                                             # (Cin, Cout, u, u)
    N, Hh, Ww, _ = y.shape
    cout = wt.shape[1]
    z = jnp.einsum("nhwi,ioab->nhawbo", y, wt).reshape(N, u * Hh, u * Ww, cout)
    return jnp.maximum(bn(z, lp["de_bn"]), 0.0)


def base_bev_backbone_reference(data_dict, params, cfg):
    x = jnp.transpose(data_dict["spatial_features"], (0, 2, 3, 1))
    ups = [_ref_level(x, lp, stride=cfg["LAYER_STRIDES"][i], u=cfg["UPSAMPLE_STRIDES"][i])
           for i, lp in enumerate(params["levels"])]
    mean = jnp.concatenate(ups, axis=-1) if len(ups) > 1 else ups[0]
    return jnp.transpose(mean, (0, 3, 1, 2))


# ----------------------------------------------------------------------------
# Main
# ----------------------------------------------------------------------------
if __name__ == "__main__":
    # Small but structurally faithful config: 2 levels, second level downsampled (stride 2)
    # and upsampled back with a 2x2 stride-2 transposed conv.  The module's forward feeds
    # the raw spatial_features into every block, which requires
    # input_channels == 2 * NUM_FILTERS[0].
    cfg = {
        "LAYER_NUMS": [1, 2],
        "LAYER_STRIDES": [1, 2],
        "NUM_FILTERS": [32, 64],
        "UPSAMPLE_STRIDES": [1, 2],
        "NUM_UPSAMPLE_FILTERS": [128, 128],
        "DROPOUT": False,
    }
    input_channels = 64
    N, H, W = 2, 16, 16

    key = jax.random.PRNGKey(0)
    keys = jax.random.split(key, 24)
    ki = 0

    def bn_params(k, c):
        k1, k2, k3, k4 = jax.random.split(k, 4)
        gamma = 1.0 + 0.2 * jax.random.normal(k1, (c,), jnp.float32)
        beta = 0.1 * jax.random.normal(k2, (c,), jnp.float32)
        mean = 0.1 * jax.random.normal(k3, (c,), jnp.float32)
        var = 0.8 + 0.4 * jax.random.uniform(k4, (c,), jnp.float32)
        return gamma, beta, mean, var

    num_levels = len(cfg["LAYER_NUMS"])
    c_in_list = [input_channels] + list(cfg["NUM_FILTERS"][:-1])

    levels = []
    for idx in range(num_levels):
        c_in = c_in_list[idx] * (2 if idx == num_levels - 1 else 1)
        cf = cfg["NUM_FILTERS"][idx]
        conv_w, conv_bn = [], []
        cprev = c_in
        for _ in range(1 + cfg["LAYER_NUMS"][idx]):
            conv_w.append(0.05 * jax.random.normal(keys[ki], (3, 3, cprev, cf), jnp.float32))
            ki += 1
            conv_bn.append(bn_params(keys[ki], cf))
            ki += 1
            cprev = cf
        u = cfg["UPSAMPLE_STRIDES"][idx]
        cup = cfg["NUM_UPSAMPLE_FILTERS"][idx]
        de_w = 0.1 * jax.random.normal(keys[ki], (cf, cup, u, u), jnp.float32)
        ki += 1
        de_bn = bn_params(keys[ki], cup)
        ki += 1
        levels.append({"conv_w": conv_w, "conv_bn": conv_bn, "de_w": de_w, "de_bn": de_bn})

    params = {"levels": levels}
    x = jax.random.normal(keys[-1], (N, input_channels, H, W), jnp.float32)
    data = {"spatial_features": x, "variance": jnp.zeros_like(x)}

    out = base_bev_backbone_forward(dict(data), params, cfg)
    y = jax.block_until_ready(out["spatial_features_2d"])
    y_ref = jax.block_until_ready(base_bev_backbone_reference(data, params, cfg))

    assert y.shape == (N, sum(cfg["NUM_UPSAMPLE_FILTERS"]), H, W), y.shape
    scale = float(jnp.max(jnp.abs(y_ref)))
    max_err = float(jnp.max(jnp.abs(y - y_ref)))
    assert max_err <= 0.04 * scale + 3e-3, (max_err, scale)

    print("KERNEL_OK")
</pallas_src>

<mosaic_0001>
module attributes {stable_mosaic.version = 11 : i64} {
  func.func @kernel(%arg0: i32, %arg1: memref<1x16x16x64xbf16, #tpu.memory_space<vmem>>, %arg2: memref<9x64x32xbf16, #tpu.memory_space<vmem>>, %arg3: memref<1x32xf32, #tpu.memory_space<vmem>>, %arg4: memref<9x32x32xbf16, #tpu.memory_space<vmem>>, %arg5: memref<1x32xf32, #tpu.memory_space<vmem>>, %arg6: memref<1x32x128xbf16, #tpu.memory_space<vmem>>, %arg7: memref<1x128xf32, #tpu.memory_space<vmem>>, %arg8: memref<1x16x1x16x128xbf16, #tpu.memory_space<vmem>>, %arg9: memref<18x18x64xbf16, #tpu.memory_space<vmem>>, %arg10: memref<18x18x32xbf16, #tpu.memory_space<vmem>>) attributes {dimension_semantics = [#tpu.dimension_semantics<parallel>], iteration_bounds = array<i64: 2>, scalar_prefetch = 0 : i64, scratch_operands = 2 : i64, tpu.core_type = #tpu.core_type<tc>, window_params = [{transform_indices = @transform_0, window_bounds = array<i64: 1, 16, 16, 64>}, {pipeline_mode = #tpu.pipeline_mode<synchronous>, transform_indices = @transform_1, window_bounds = array<i64: 9, 64, 32>}, {pipeline_mode = #tpu.pipeline_mode<synchronous>, transform_indices = @transform_2, window_bounds = array<i64: 1, 32>}, {pipeline_mode = #tpu.pipeline_mode<synchronous>, transform_indices = @transform_3, window_bounds = array<i64: 9, 32, 32>}, {pipeline_mode = #tpu.pipeline_mode<synchronous>, transform_indices = @transform_4, window_bounds = array<i64: 1, 32>}, {pipeline_mode = #tpu.pipeline_mode<synchronous>, transform_indices = @transform_5, window_bounds = array<i64: 1, 32, 128>}, {pipeline_mode = #tpu.pipeline_mode<synchronous>, transform_indices = @transform_6, window_bounds = array<i64: 1, 128>}, {transform_indices = @transform_7, window_bounds = array<i64: 1, 16, 1, 16, 128>}]} {
    %cst = arith.constant 0.000000e+00 : bf16
    %0 = vector.broadcast %cst : bf16 to vector<1x18x64xbf16>
    %c0 = arith.constant 0 : index
    %c0_0 = arith.constant 0 : index
    %c0_1 = arith.constant 0 : index
    %1 = vector.load %arg9[%c0, %c0_0, %c0_1] : memref<18x18x64xbf16, #tpu.memory_space<vmem>>, vector<1x18x64xbf16>
    tpu.vector_store %arg9[%c0, %c0_0, %c0_1], %0 {strides = array<i32>} : memref<18x18x64xbf16, #tpu.memory_space<vmem>>, vector<1x18x64xbf16>,
    %cst_2 = arith.constant 0.000000e+00 : bf16
    %2 = vector.broadcast %cst_2 : bf16 to vector<18x1x64xbf16>
    %c0_3 = arith.constant 0 : index
    %c0_4 = arith.constant 0 : index
    %c0_5 = arith.constant 0 : index
    %3 = vector.load %arg9[%c0_3, %c0_4, %c0_5] : memref<18x18x64xbf16, #tpu.memory_space<vmem>>, vector<18x1x64xbf16>
    tpu.vector_store %arg9[%c0_3, %c0_4, %c0_5], %2 {strides = array<i32>} : memref<18x18x64xbf16, #tpu.memory_space<vmem>>, vector<18x1x64xbf16>,
    %cst_6 = arith.constant 0.000000e+00 : bf16
    %4 = vector.broadcast %cst_6 : bf16 to vector<1x18x64xbf16>
    %c17 = arith.constant 17 : index
    %c0_7 = arith.constant 0 : index
    %c0_8 = arith.constant 0 : index
    %5 = vector.load %arg9[%c17, %c0_7, %c0_8] : memref<18x18x64xbf16, #tpu.memory_space<vmem>>, vector<1x18x64xbf16>
    tpu.vector_store %arg9[%c17, %c0_7, %c0_8], %4 {strides = array<i32>} : memref<18x18x64xbf16, #tpu.memory_space<vmem>>, vector<1x18x64xbf16>,
    %cst_9 = arith.constant 0.000000e+00 : bf16
    %6 = vector.broadcast %cst_9 : bf16 to vector<18x1x64xbf16>
    %c0_10 = arith.constant 0 : index
    %c17_11 = arith.constant 17 : index
    %c0_12 = arith.constant 0 : index
    %7 = vector.load %arg9[%c0_10, %c17_11, %c0_12] : memref<18x18x64xbf16, #tpu.memory_space<vmem>>, vector<18x1x64xbf16>
    tpu.vector_store %arg9[%c0_10, %c17_11, %c0_12], %6 {strides = array<i32>} : memref<18x18x64xbf16, #tpu.memory_space<vmem>>, vector<18x1x64xbf16>,
    %cst_13 = arith.constant 0.000000e+00 : bf16
    %8 = vector.broadcast %cst_13 : bf16 to vector<1x18x32xbf16>
    %c0_14 = arith.constant 0 : index
    %c0_15 = arith.constant 0 : index
    %c0_16 = arith.constant 0 : index
    %9 = vector.load %arg10[%c0_14, %c0_15, %c0_16] : memref<18x18x32xbf16, #tpu.memory_space<vmem>>, vector<1x18x32xbf16>
    tpu.vector_store %arg10[%c0_14, %c0_15, %c0_16], %8 {strides = array<i32>} : memref<18x18x32xbf16, #tpu.memory_space<vmem>>, vector<1x18x32xbf16>,
    %cst_17 = arith.constant 0.000000e+00 : bf16
    %10 = vector.broadcast %cst_17 : bf16 to vector<1x18x32xbf16>
    %c17_18 = arith.constant 17 : index
    %c0_19 = arith.constant 0 : index
    %c0_20 = arith.constant 0 : index
    %11 = vector.load %arg10[%c17_18, %c0_19, %c0_20] : memref<18x18x32xbf16, #tpu.memory_space<vmem>>, vector<1x18x32xbf16>
    tpu.vector_store %arg10[%c17_18, %c0_19, %c0_20], %10 {strides = array<i32>} : memref<18x18x32xbf16, #tpu.memory_space<vmem>>, vector<1x18x32xbf16>,
    %cst_21 = arith.constant 0.000000e+00 : bf16
    %12 = vector.broadcast %cst_21 : bf16 to vector<18x1x32xbf16>
    %c0_22 = arith.constant 0 : index
    %c0_23 = arith.constant 0 : index
    %c0_24 = arith.constant 0 : index
    %13 = vector.load %arg10[%c0_22, %c0_23, %c0_24] : memref<18x18x32xbf16, #tpu.memory_space<vmem>>, vector<18x1x32xbf16>
    tpu.vector_store %arg10[%c0_22, %c0_23, %c0_24], %12 {strides = array<i32>} : memref<18x18x32xbf16, #tpu.memory_space<vmem>>, vector<18x1x32xbf16>,
    %cst_25 = arith.constant 0.000000e+00 : bf16
    %14 = vector.broadcast %cst_25 : bf16 to vector<18x1x32xbf16>
    %c0_26 = arith.constant 0 : index
    %c17_27 = arith.constant 17 : index
    %c0_28 = arith.constant 0 : index
    %15 = vector.load %arg10[%c0_26, %c17_27, %c0_28] : memref<18x18x32xbf16, #tpu.memory_space<vmem>>, vector<18x1x32xbf16>
    tpu.vector_store %arg10[%c0_26, %c17_27, %c0_28], %14 {strides = array<i32>} : memref<18x18x32xbf16, #tpu.memory_space<vmem>>, vector<18x1x32xbf16>,
    %c0_29 = arith.constant 0 : index
    %c0_30 = arith.constant 0 : index
    %c0_31 = arith.constant 0 : index
    %c0_32 = arith.constant 0 : index
    %16 = vector.load %arg1[%c0_29, %c0_30, %c0_31, %c0_32] : memref<1x16x16x64xbf16, #tpu.memory_space<vmem>>, vector<1x16x16x64xbf16>
    %17 = vector.shape_cast %16 : vector<1x16x16x64xbf16> to vector<16x16x64xbf16>
    %c1 = arith.constant 1 : index
    %c1_33 = arith.constant 1 : index
    %c0_34 = arith.constant 0 : index
    %18 = vector.load %arg9[%c1, %c1_33, %c0_34] : memref<18x18x64xbf16, #tpu.memory_space<vmem>>, vector<16x16x64xbf16>
    tpu.vector_store %arg9[%c1, %c1_33, %c0_34], %17 {strides = array<i32>} : memref<18x18x64xbf16, #tpu.memory_space<vmem>>, vector<16x16x64xbf16>,
    %c0_35 = arith.constant 0 : index
    %c0_36 = arith.constant 0 : index
    %c0_37 = arith.constant 0 : index
    %19 = vector.load %arg9[%c0_35, %c0_36, %c0_37] : memref<18x18x64xbf16, #tpu.memory_space<vmem>>, vector<16x16x64xbf16>
    %20 = vector.shape_cast %19 : vector<16x16x64xbf16> to vector<256x64xbf16>
    %c0_38 = arith.constant 0 : index
    %c0_39 = arith.constant 0 : index
    %c0_40 = arith.constant 0 : index
    %21 = vector.load %arg2[%c0_38, %c0_39, %c0_40] : memref<9x64x32xbf16, #tpu.memory_space<vmem>>, vector<1x64x32xbf16>
    %22 = vector.shape_cast %21 : vector<1x64x32xbf16> to vector<64x32xbf16>
    %cst_41 = arith.constant dense<0.000000e+00> : vector<256x32xf32>
    %23 = tpu.matmul %20, %22, %cst_41 {dimension_numbers = #tpu.dot_dimension_numbers<[1], [0], [0], [1], [0, 0, 1, 1], [], []>} : vector<256x64xbf16>, vector<64x32xbf16>, vector<256x32xf32> -> vector<256x32xf32>
    %c0_42 = arith.constant 0 : index
    %c1_43 = arith.constant 1 : index
    %c0_44 = arith.constant 0 : index
    %24 = vector.load %arg9[%c0_42, %c1_43, %c0_44] : memref<18x18x64xbf16, #tpu.memory_space<vmem>>, vector<16x16x64xbf16>
    %25 = vector.shape_cast %24 : vector<16x16x64xbf16> to vector<256x64xbf16>
    %c1_45 = arith.constant 1 : index
    %c0_46 = arith.constant 0 : index
    %c0_47 = arith.constant 0 : index
    %26 = vector.load %arg2[%c1_45, %c0_46, %c0_47] : memref<9x64x32xbf16, #tpu.memory_space<vmem>>, vector<1x64x32xbf16>
    %27 = vector.shape_cast %26 : vector<1x64x32xbf16> to vector<64x32xbf16>
    %cst_48 = arith.constant dense<0.000000e+00> : vector<256x32xf32>
    %28 = tpu.matmul %25, %27, %cst_48 {dimension_numbers = #tpu.dot_dimension_numbers<[1], [0], [0], [1], [0, 0, 1, 1], [], []>} : vector<256x64xbf16>, vector<64x32xbf16>, vector<256x32xf32> -> vector<256x32xf32>
    %29 = arith.addf %23, %28 : vector<256x32xf32>
    %c0_49 = arith.constant 0 : index
    %c2 = arith.constant 2 : index
    %c0_50 = arith.constant 0 : index
    %30 = vector.load %arg9[%c0_49, %c2, %c0_50] : memref<18x18x64xbf16, #tpu.memory_space<vmem>>, vector<16x16x64xbf16>
    %31 = vector.shape_cast %30 : vector<16x16x64xbf16> to vector<256x64xbf16>
    %c2_51 = arith.constant 2 : index
    %c0_52 = arith.constant 0 : index
    %c0_53 = arith.constant 0 : index
    %32 = vector.load %arg2[%c2_51, %c0_52, %c0_53] : memref<9x64x32xbf16, #tpu.memory_space<vmem>>, vector<1x64x32xbf16>
    %33 = vector.shape_cast %32 : vector<1x64x32xbf16> to vector<64x32xbf16>
    %cst_54 = arith.constant dense<0.000000e+00> : vector<256x32xf32>
    %34 = tpu.matmul %31, %33, %cst_54 {dimension_numbers = #tpu.dot_dimension_numbers<[1], [0], [0], [1], [0, 0, 1, 1], [], []>} : vector<256x64xbf16>, vector<64x32xbf16>, vector<256x32xf32> -> vector<256x32xf32>
    %35 = arith.addf %29, %34 : vector<256x32xf32>
    %c1_55 = arith.constant 1 : index
    %c0_56 = arith.constant 0 : index
    %c0_57 = arith.constant 0 : index
    %36 = vector.load %arg9[%c1_55, %c0_56, %c0_57] : memref<18x18x64xbf16, #tpu.memory_space<vmem>>, vector<16x16x64xbf16>
    %37 = vector.shape_cast %36 : vector<16x16x64xbf16> to vector<256x64xbf16>
    %c3 = arith.constant 3 : index
    %c0_58 = arith.constant 0 : index
    %c0_59 = arith.constant 0 : index
    %38 = vector.load %arg2[%c3, %c0_58, %c0_59] : memref<9x64x32xbf16, #tpu.memory_space<vmem>>, vector<1x64x32xbf16>
    %39 = vector.shape_cast %38 : vector<1x64x32xbf16> to vector<64x32xbf16>
    %cst_60 = arith.constant dense<0.000000e+00> : vector<256x32xf32>
    %40 = tpu.matmul %37, %39, %cst_60 {dimension_numbers = #tpu.dot_dimension_numbers<[1], [0], [0], [1], [0, 0, 1, 1], [], []>} : vector<256x64xbf16>, vector<64x32xbf16>, vector<256x32xf32> -> vector<256x32xf32>
    %41 = arith.addf %35, %40 : vector<256x32xf32>
    %c1_61 = arith.constant 1 : index
    %c1_62 = arith.constant 1 : index
    %c0_63 = arith.constant 0 : index
    %42 = vector.load %arg9[%c1_61, %c1_62, %c0_63] : memref<18x18x64xbf16, #tpu.memory_space<vmem>>, vector<16x16x64xbf16>
    %43 = vector.shape_cast %42 : vector<16x16x64xbf16> to vector<256x64xbf16>
    %c4 = arith.constant 4 : index
    %c0_64 = arith.constant 0 : index
    %c0_65 = arith.constant 0 : index
    %44 = vector.load %arg2[%c4, %c0_64, %c0_65] : memref<9x64x32xbf16, #tpu.memory_space<vmem>>, vector<1x64x32xbf16>
    %45 = vector.shape_cast %44 : vector<1x64x32xbf16> to vector<64x32xbf16>
    %cst_66 = arith.constant dense<0.000000e+00> : vector<256x32xf32>
    %46 = tpu.matmul %43, %45, %cst_66 {dimension_numbers = #tpu.dot_dimension_numbers<[1], [0], [0], [1], [0, 0, 1, 1], [], []>} : vector<256x64xbf16>, vector<64x32xbf16>, vector<256x32xf32> -> vector<256x32xf32>
    %47 = arith.addf %41, %46 : vector<256x32xf32>
    %c1_67 = arith.constant 1 : index
    %c2_68 = arith.constant 2 : index
    %c0_69 = arith.constant 0 : index
    %48 = vector.load %arg9[%c1_67, %c2_68, %c0_69] : memref<18x18x64xbf16, #tpu.memory_space<vmem>>, vector<16x16x64xbf16>
    %49 = vector.shape_cast %48 : vector<16x16x64xbf16> to vector<256x64xbf16>
    %c5 = arith.constant 5 : index
    %c0_70 = arith.constant 0 : index
    %c0_71 = arith.constant 0 : index
    %50 = vector.load %arg2[%c5, %c0_70, %c0_71] : memref<9x64x32xbf16, #tpu.memory_space<vmem>>, vector<1x64x32xbf16>
    %51 = vector.shape_cast %50 : vector<1x64x32xbf16> to vector<64x32xbf16>
    %cst_72 = arith.constant dense<0.000000e+00> : vector<256x32xf32>
    %52 = tpu.matmul %49, %51, %cst_72 {dimension_numbers = #tpu.dot_dimension_numbers<[1], [0], [0], [1], [0, 0, 1, 1], [], []>} : vector<256x64xbf16>, vector<64x32xbf16>, vector<256x32xf32> -> vector<256x32xf32>
    %53 = arith.addf %47, %52 : vector<256x32xf32>
    %c2_73 = arith.constant 2 : index
    %c0_74 = arith.constant 0 : index
    %c0_75 = arith.constant 0 : index
    %54 = vector.load %arg9[%c2_73, %c0_74, %c0_75] : memref<18x18x64xbf16, #tpu.memory_space<vmem>>, vector<16x16x64xbf16>
    %55 = vector.shape_cast %54 : vector<16x16x64xbf16> to vector<256x64xbf16>
    %c6 = arith.constant 6 : index
    %c0_76 = arith.constant 0 : index
    %c0_77 = arith.constant 0 : index
    %56 = vector.load %arg2[%c6, %c0_76, %c0_77] : memref<9x64x32xbf16, #tpu.memory_space<vmem>>, vector<1x64x32xbf16>
    %57 = vector.shape_cast %56 : vector<1x64x32xbf16> to vector<64x32xbf16>
    %cst_78 = arith.constant dense<0.000000e+00> : vector<256x32xf32>
    %58 = tpu.matmul %55, %57, %cst_78 {dimension_numbers = #tpu.dot_dimension_numbers<[1], [0], [0], [1], [0, 0, 1, 1], [], []>} : vector<256x64xbf16>, vector<64x32xbf16>, vector<256x32xf32> -> vector<256x32xf32>
    %59 = arith.addf %53, %58 : vector<256x32xf32>
    %c2_79 = arith.constant 2 : index
    %c1_80 = arith.constant 1 : index
    %c0_81 = arith.constant 0 : index
    %60 = vector.load %arg9[%c2_79, %c1_80, %c0_81] : memref<18x18x64xbf16, #tpu.memory_space<vmem>>, vector<16x16x64xbf16>
    %61 = vector.shape_cast %60 : vector<16x16x64xbf16> to vector<256x64xbf16>
    %c7 = arith.constant 7 : index
    %c0_82 = arith.constant 0 : index
    %c0_83 = arith.constant 0 : index
    %62 = vector.load %arg2[%c7, %c0_82, %c0_83] : memref<9x64x32xbf16, #tpu.memory_space<vmem>>, vector<1x64x32xbf16>
    %63 = vector.shape_cast %62 : vector<1x64x32xbf16> to vector<64x32xbf16>
    %cst_84 = arith.constant dense<0.000000e+00> : vector<256x32xf32>
    %64 = tpu.matmul %61, %63, %cst_84 {dimension_numbers = #tpu.dot_dimension_numbers<[1], [0], [0], [1], [0, 0, 1, 1], [], []>} : vector<256x64xbf16>, vector<64x32xbf16>, vector<256x32xf32> -> vector<256x32xf32>
    %65 = arith.addf %59, %64 : vector<256x32xf32>
    %c2_85 = arith.constant 2 : index
    %c2_86 = arith.constant 2 : index
    %c0_87 = arith.constant 0 : index
    %66 = vector.load %arg9[%c2_85, %c2_86, %c0_87] : memref<18x18x64xbf16, #tpu.memory_space<vmem>>, vector<16x16x64xbf16>
    %67 = vector.shape_cast %66 : vector<16x16x64xbf16> to vector<256x64xbf16>
    %c8 = arith.constant 8 : index
    %c0_88 = arith.constant 0 : index
    %c0_89 = arith.constant 0 : index
    %68 = vector.load %arg2[%c8, %c0_88, %c0_89] : memref<9x64x32xbf16, #tpu.memory_space<vmem>>, vector<1x64x32xbf16>
    %69 = vector.shape_cast %68 : vector<1x64x32xbf16> to vector<64x32xbf16>
    %cst_90 = arith.constant dense<0.000000e+00> : vector<256x32xf32>
    %70 = tpu.matmul %67, %69, %cst_90 {dimension_numbers = #tpu.dot_dimension_numbers<[1], [0], [0], [1], [0, 0, 1, 1], [], []>} : vector<256x64xbf16>, vector<64x32xbf16>, vector<256x32xf32> -> vector<256x32xf32>
    %71 = arith.addf %65, %70 : vector<256x32xf32>
    %c0_91 = arith.constant 0 : index
    %c0_92 = arith.constant 0 : index
    %72 = vector.load %arg3[%c0_91, %c0_92] : memref<1x32xf32, #tpu.memory_space<vmem>>, vector<1x32xf32>
    %73 = vector.broadcast %72 : vector<1x32xf32> to vector<256x32xf32>
    %74 = arith.addf %71, %73 : vector<256x32xf32>
    %cst_93 = arith.constant 0.000000e+00 : f32
    %75 = vector.broadcast %cst_93 : f32 to vector<256x32xf32>
    %76 = arith.maximumf %74, %75 : vector<256x32xf32>
    %77 = vector.shape_cast %76 : vector<256x32xf32> to vector<16x16x32xf32>
    %78 = arith.truncf %77 : vector<16x16x32xf32> to vector<16x16x32xbf16>
    %c1_94 = arith.constant 1 : index
    %c1_95 = arith.constant 1 : index
    %c0_96 = arith.constant 0 : index
    %79 = vector.load %arg10[%c1_94, %c1_95, %c0_96] : memref<18x18x32xbf16, #tpu.memory_space<vmem>>, vector<16x16x32xbf16>
    tpu.vector_store %arg10[%c1_94, %c1_95, %c0_96], %78 {strides = array<i32>} : memref<18x18x32xbf16, #tpu.memory_space<vmem>>, vector<16x16x32xbf16>,
    %c0_97 = arith.constant 0 : index
    %c0_98 = arith.constant 0 : index
    %c0_99 = arith.constant 0 : index
    %80 = vector.load %arg10[%c0_97, %c0_98, %c0_99] : memref<18x18x32xbf16, #tpu.memory_space<vmem>>, vector<16x16x32xbf16>
    %81 = vector.shape_cast %80 : vector<16x16x32xbf16> to vector<256x32xbf16>
    %c0_100 = arith.constant 0 : index
    %c0_101 = arith.constant 0 : index
    %c0_102 = arith.constant 0 : index
    %82 = vector.load %arg4[%c0_100, %c0_101, %c0_102] : memref<9x32x32xbf16, #tpu.memory_space<vmem>>, vector<1x32x32xbf16>
    %83 = vector.shape_cast %82 : vector<1x32x32xbf16> to vector<32x32xbf16>
    %cst_103 = arith.constant dense<0.000000e+00> : vector<256x32xf32>
    %84 = tpu.matmul %81, %83, %cst_103 {dimension_numbers = #tpu.dot_dimension_numbers<[1], [0], [0], [1], [0, 0, 1, 1], [], []>} : vector<256x32xbf16>, vector<32x32xbf16>, vector<256x32xf32> -> vector<256x32xf32>
    %c0_104 = arith.constant 0 : index
    %c1_105 = arith.constant 1 : index
    %c0_106 = arith.constant 0 : index
    %85 = vector.load %arg10[%c0_104, %c1_105, %c0_106] : memref<18x18x32xbf16, #tpu.memory_space<vmem>>, vector<16x16x32xbf16>
    %86 = vector.shape_cast %85 : vector<16x16x32xbf16> to vector<256x32xbf16>
    %c1_107 = arith.constant 1 : index
    %c0_108 = arith.constant 0 : index
    %c0_109 = arith.constant 0 : index
    %87 = vector.load %arg4[%c1_107, %c0_108, %c0_109] : memref<9x32x32xbf16, #tpu.memory_space<vmem>>, vector<1x32x32xbf16>
    %88 = vector.shape_cast %87 : vector<1x32x32xbf16> to vector<32x32xbf16>
    %cst_110 = arith.constant dense<0.000000e+00> : vector<256x32xf32>
    %89 = tpu.matmul %86, %88, %cst_110 {dimension_numbers = #tpu.dot_dimension_numbers<[1], [0], [0], [1], [0, 0, 1, 1], [], []>} : vector<256x32xbf16>, vector<32x32xbf16>, vector<256x32xf32> -> vector<256x32xf32>
    %90 = arith.addf %84, %89 : vector<256x32xf32>
    %c0_111 = arith.constant 0 : index
    %c2_112 = arith.constant 2 : index
    %c0_113 = arith.constant 0 : index
    %91 = vector.load %arg10[%c0_111, %c2_112, %c0_113] : memref<18x18x32xbf16, #tpu.memory_space<vmem>>, vector<16x16x32xbf16>
    %92 = vector.shape_cast %91 : vector<16x16x32xbf16> to vector<256x32xbf16>
    %c2_114 = arith.constant 2 : index
    %c0_115 = arith.constant 0 : index
    %c0_116 = arith.constant 0 : index
    %93 = vector.load %arg4[%c2_114, %c0_115, %c0_116] : memref<9x32x32xbf16, #tpu.memory_space<vmem>>, vector<1x32x32xbf16>
    %94 = vector.shape_cast %93 : vector<1x32x32xbf16> to vector<32x32xbf16>
    %cst_117 = arith.constant dense<0.000000e+00> : vector<256x32xf32>
    %95 = tpu.matmul %92, %94, %cst_117 {dimension_numbers = #tpu.dot_dimension_numbers<[1], [0], [0], [1], [0, 0, 1, 1], [], []>} : vector<256x32xbf16>, vector<32x32xbf16>, vector<256x32xf32> -> vector<256x32xf32>
    %96 = arith.addf %90, %95 : vector<256x32xf32>
    %c1_118 = arith.constant 1 : index
    %c0_119 = arith.constant 0 : index
    %c0_120 = arith.constant 0 : index
    %97 = vector.load %arg10[%c1_118, %c0_119, %c0_120] : memref<18x18x32xbf16, #tpu.memory_space<vmem>>, vector<16x16x32xbf16>
    %98 = vector.shape_cast %97 : vector<16x16x32xbf16> to vector<256x32xbf16>
    %c3_121 = arith.constant 3 : index
    %c0_122 = arith.constant 0 : index
    %c0_123 = arith.constant 0 : index
    %99 = vector.load %arg4[%c3_121, %c0_122, %c0_123] : memref<9x32x32xbf16, #tpu.memory_space<vmem>>, vector<1x32x32xbf16>
    %100 = vector.shape_cast %99 : vector<1x32x32xbf16> to vector<32x32xbf16>
    %cst_124 = arith.constant dense<0.000000e+00> : vector<256x32xf32>
    %101 = tpu.matmul %98, %100, %cst_124 {dimension_numbers = #tpu.dot_dimension_numbers<[1], [0], [0], [1], [0, 0, 1, 1], [], []>} : vector<256x32xbf16>, vector<32x32xbf16>, vector<256x32xf32> -> vector<256x32xf32>
    %102 = arith.addf %96, %101 : vector<256x32xf32>
    %c1_125 = arith.constant 1 : index
    %c1_126 = arith.constant 1 : index
    %c0_127 = arith.constant 0 : index
    %103 = vector.load %arg10[%c1_125, %c1_126, %c0_127] : memref<18x18x32xbf16, #tpu.memory_space<vmem>>, vector<16x16x32xbf16>
    %104 = vector.shape_cast %103 : vector<16x16x32xbf16> to vector<256x32xbf16>
    %c4_128 = arith.constant 4 : index
    %c0_129 = arith.constant 0 : index
    %c0_130 = arith.constant 0 : index
    %105 = vector.load %arg4[%c4_128, %c0_129, %c0_130] : memref<9x32x32xbf16, #tpu.memory_space<vmem>>, vector<1x32x32xbf16>
    %106 = vector.shape_cast %105 : vector<1x32x32xbf16> to vector<32x32xbf16>
    %cst_131 = arith.constant dense<0.000000e+00> : vector<256x32xf32>
    %107 = tpu.matmul %104, %106, %cst_131 {dimension_numbers = #tpu.dot_dimension_numbers<[1], [0], [0], [1], [0, 0, 1, 1], [], []>} : vector<256x32xbf16>, vector<32x32xbf16>, vector<256x32xf32> -> vector<256x32xf32>
    %108 = arith.addf %102, %107 : vector<256x32xf32>
    %c1_132 = arith.constant 1 : index
    %c2_133 = arith.constant 2 : index
    %c0_134 = arith.constant 0 : index
    %109 = vector.load %arg10[%c1_132, %c2_133, %c0_134] : memref<18x18x32xbf16, #tpu.memory_space<vmem>>, vector<16x16x32xbf16>
    %110 = vector.shape_cast %109 : vector<16x16x32xbf16> to vector<256x32xbf16>
    %c5_135 = arith.constant 5 : index
    %c0_136 = arith.constant 0 : index
    %c0_137 = arith.constant 0 : index
    %111 = vector.load %arg4[%c5_135, %c0_136, %c0_137] : memref<9x32x32xbf16, #tpu.memory_space<vmem>>, vector<1x32x32xbf16>
    %112 = vector.shape_cast %111 : vector<1x32x32xbf16> to vector<32x32xbf16>
    %cst_138 = arith.constant dense<0.000000e+00> : vector<256x32xf32>
    %113 = tpu.matmul %110, %112, %cst_138 {dimension_numbers = #tpu.dot_dimension_numbers<[1], [0], [0], [1], [0, 0, 1, 1], [], []>} : vector<256x32xbf16>, vector<32x32xbf16>, vector<256x32xf32> -> vector<256x32xf32>
    %114 = arith.addf %108, %113 : vector<256x32xf32>
    %c2_139 = arith.constant 2 : index
    %c0_140 = arith.constant 0 : index
    %c0_141 = arith.constant 0 : index
    %115 = vector.load %arg10[%c2_139, %c0_140, %c0_141] : memref<18x18x32xbf16, #tpu.memory_space<vmem>>, vector<16x16x32xbf16>
    %116 = vector.shape_cast %115 : vector<16x16x32xbf16> to vector<256x32xbf16>
    %c6_142 = arith.constant 6 : index
    %c0_143 = arith.constant 0 : index
    %c0_144 = arith.constant 0 : index
    %117 = vector.load %arg4[%c6_142, %c0_143, %c0_144] : memref<9x32x32xbf16, #tpu.memory_space<vmem>>, vector<1x32x32xbf16>
    %118 = vector.shape_cast %117 : vector<1x32x32xbf16> to vector<32x32xbf16>
    %cst_145 = arith.constant dense<0.000000e+00> : vector<256x32xf32>
    %119 = tpu.matmul %116, %118, %cst_145 {dimension_numbers = #tpu.dot_dimension_numbers<[1], [0], [0], [1], [0, 0, 1, 1], [], []>} : vector<256x32xbf16>, vector<32x32xbf16>, vector<256x32xf32> -> vector<256x32xf32>
    %120 = arith.addf %114, %119 : vector<256x32xf32>
    %c2_146 = arith.constant 2 : index
    %c1_147 = arith.constant 1 : index
    %c0_148 = arith.constant 0 : index
    %121 = vector.load %arg10[%c2_146, %c1_147, %c0_148] : memref<18x18x32xbf16, #tpu.memory_space<vmem>>, vector<16x16x32xbf16>
    %122 = vector.shape_cast %121 : vector<16x16x32xbf16> to vector<256x32xbf16>
    %c7_149 = arith.constant 7 : index
    %c0_150 = arith.constant 0 : index
    %c0_151 = arith.constant 0 : index
    %123 = vector.load %arg4[%c7_149, %c0_150, %c0_151] : memref<9x32x32xbf16, #tpu.memory_space<vmem>>, vector<1x32x32xbf16>
    %124 = vector.shape_cast %123 : vector<1x32x32xbf16> to vector<32x32xbf16>
    %cst_152 = arith.constant dense<0.000000e+00> : vector<256x32xf32>
    %125 = tpu.matmul %122, %124, %cst_152 {dimension_numbers = #tpu.dot_dimension_numbers<[1], [0], [0], [1], [0, 0, 1, 1], [], []>} : vector<256x32xbf16>, vector<32x32xbf16>, vector<256x32xf32> -> vector<256x32xf32>
    %126 = arith.addf %120, %125 : vector<256x32xf32>
    %c2_153 = arith.constant 2 : index
    %c2_154 = arith.constant 2 : index
    %c0_155 = arith.constant 0 : index
    %127 = vector.load %arg10[%c2_153, %c2_154, %c0_155] : memref<18x18x32xbf16, #tpu.memory_space<vmem>>, vector<16x16x32xbf16>
    %128 = vector.shape_cast %127 : vector<16x16x32xbf16> to vector<256x32xbf16>
    %c8_156 = arith.constant 8 : index
    %c0_157 = arith.constant 0 : index
    %c0_158 = arith.constant 0 : index
    %129 = vector.load %arg4[%c8_156, %c0_157, %c0_158] : memref<9x32x32xbf16, #tpu.memory_space<vmem>>, vector<1x32x32xbf16>
    %130 = vector.shape_cast %129 : vector<1x32x32xbf16> to vector<32x32xbf16>
    %cst_159 = arith.constant dense<0.000000e+00> : vector<256x32xf32>
    %131 = tpu.matmul %128, %130, %cst_159 {dimension_numbers = #tpu.dot_dimension_numbers<[1], [0], [0], [1], [0, 0, 1, 1], [], []>} : vector<256x32xbf16>, vector<32x32xbf16>, vector<256x32xf32> -> vector<256x32xf32>
    %132 = arith.addf %126, %131 : vector<256x32xf32>
    %c0_160 = arith.constant 0 : index
    %c0_161 = arith.constant 0 : index
    %133 = vector.load %arg5[%c0_160, %c0_161] : memref<1x32xf32, #tpu.memory_space<vmem>>, vector<1x32xf32>
    %134 = vector.broadcast %133 : vector<1x32xf32> to vector<256x32xf32>
    %135 = arith.addf %132, %134 : vector<256x32xf32>
    %cst_162 = arith.constant 0.000000e+00 : f32
    %136 = vector.broadcast %cst_162 : f32 to vector<256x32xf32>
    %137 = arith.maximumf %135, %136 : vector<256x32xf32>
    %138 = arith.truncf %137 : vector<256x32xf32> to vector<256x32xbf16>
    %c0_163 = arith.constant 0 : index
    %c0_164 = arith.constant 0 : index
    %c0_165 = arith.constant 0 : index
    %139 = vector.load %arg6[%c0_163, %c0_164, %c0_165] : memref<1x32x128xbf16, #tpu.memory_space<vmem>>, vector<1x32x128xbf16>
    %140 = vector.shape_cast %139 : vector<1x32x128xbf16> to vector<32x128xbf16>
    %cst_166 = arith.constant dense<0.000000e+00> : vector<256x128xf32>
    %141 = tpu.matmul %138, %140, %cst_166 {dimension_numbers = #tpu.dot_dimension_numbers<[1], [0], [0], [1], [0, 0, 1, 1], [], []>} : vector<256x32xbf16>, vector<32x128xbf16>, vector<256x128xf32> -> vector<256x128xf32>
    %c0_167 = arith.constant 0 : index
    %c0_168 = arith.constant 0 : index
    %142 = vector.load %arg7[%c0_167, %c0_168] : memref<1x128xf32, #tpu.memory_space<vmem>>, vector<1x128xf32>
    %143 = vector.broadcast %142 : vector<1x128xf32> to vector<256x128xf32>
    %144 = arith.addf %141, %143 : vector<256x128xf32>
    %cst_169 = arith.constant 0.000000e+00 : f32
    %145 = vector.broadcast %cst_169 : f32 to vector<256x128xf32>
    %146 = arith.maximumf %144, %145 : vector<256x128xf32>
    %147 = vector.shape_cast %146 : vector<256x128xf32> to vector<16x1x16x128xf32>
    %148 = arith.truncf %147 : vector<16x1x16x128xf32> to vector<16x1x16x128xbf16>
    %c0_170 = arith.constant 0 : index
    %c0_171 = arith.constant 0 : index
    %c0_172 = arith.constant 0 : index
    %c0_173 = arith.constant 0 : index
    %c0_174 = arith.constant 0 : index
    %149 = vector.load %arg8[%c0_170, %c0_171, %c0_172, %c0_173, %c0_174] : memref<1x16x1x16x128xbf16, #tpu.memory_space<vmem>>, vector<1x16x1x16x128xbf16>
    %150 = vector.shape_cast %149 : vector<1x16x1x16x128xbf16> to vector<16x1x16x128xbf16>
    %151 = vector.shape_cast %148 : vector<16x1x16x128xbf16> to vector<1x16x1x16x128xbf16>
    tpu.vector_store %arg8[%c0_170, %c0_171, %c0_172, %c0_173, %c0_174], %151 {strides = array<i32>} : memref<1x16x1x16x128xbf16, #tpu.memory_space<vmem>>, vector<1x16x1x16x128xbf16>,
    return
  }
  func.func @transform_0(%arg0: i32) -> (i32, i32, i32, i32) {
    %c0_i32 = arith.constant 0 : i32
    %c0_i32_0 = arith.constant 0 : i32
    %c0_i32_1 = arith.constant 0 : i32
    %c0_i32_2 = arith.constant 0 : i32
    return %arg0, %c0_i32, %c0_i32_0, %c0_i32_1 : i32, i32, i32, i32
  }
  func.func @transform_1(%arg0: i32) -> (i32, i32, i32) {
    %c0_i32 = arith.constant 0 : i32
    %c0_i32_0 = arith.constant 0 : i32
    %c0_i32_1 = arith.constant 0 : i32
    %c0_i32_2 = arith.constant 0 : i32
    return %c0_i32, %c0_i32_0, %c0_i32_1 : i32, i32, i32
  }
  func.func @transform_2(%arg0: i32) -> (i32, i32) {
    %c0_i32 = arith.constant 0 : i32
    %c0_i32_0 = arith.constant 0 : i32
    %c0_i32_1 = arith.constant 0 : i32
    return %c0_i32, %c0_i32_0 : i32, i32
  }
  func.func @transform_3(%arg0: i32) -> (i32, i32, i32) {
    %c0_i32 = arith.constant 0 : i32
    %c0_i32_0 = arith.constant 0 : i32
    %c0_i32_1 = arith.constant 0 : i32
    %c0_i32_2 = arith.constant 0 : i32
    return %c0_i32, %c0_i32_0, %c0_i32_1 : i32, i32, i32
  }
  func.func @transform_4(%arg0: i32) -> (i32, i32) {
    %c0_i32 = arith.constant 0 : i32
    %c0_i32_0 = arith.constant 0 : i32
    %c0_i32_1 = arith.constant 0 : i32
    return %c0_i32, %c0_i32_0 : i32, i32
  }
  func.func @transform_5(%arg0: i32) -> (i32, i32, i32) {
    %c0_i32 = arith.constant 0 : i32
    %c0_i32_0 = arith.constant 0 : i32
    %c0_i32_1 = arith.constant 0 : i32
    %c0_i32_2 = arith.constant 0 : i32
    return %c0_i32, %c0_i32_0, %c0_i32_1 : i32, i32, i32
  }
  func.func @transform_6(%arg0: i32) -> (i32, i32) {
    %c0_i32 = arith.constant 0 : i32
    %c0_i32_0 = arith.constant 0 : i32
    %c0_i32_1 = arith.constant 0 : i32
    return %c0_i32, %c0_i32_0 : i32, i32
  }
  func.func @transform_7(%arg0: i32) -> (i32, i32, i32, i32, i32) {
    %c0_i32 = arith.constant 0 : i32
    %c0_i32_0 = arith.constant 0 : i32
    %c0_i32_1 = arith.constant 0 : i32
    %c0_i32_2 = arith.constant 0 : i32
    %c0_i32_3 = arith.constant 0 : i32
    return %arg0, %c0_i32, %c0_i32_0, %c0_i32_1, %c0_i32_2 : i32, i32, i32, i32, i32
  }
}

</mosaic_0001>

<llo_original>
// kernel: tpu_custom_call.1
$region0: #{tpu_custom_call.1}
  #allocation0 [shape = 'u32[]', space=smem, size = 0x4, offset = 0x4, fixed_abs, tag = 'smem constant byte address 0x4 - core index']
  #allocation1 [shape = 'u32[144,128]{1,0:T(1,128)}', space=vmem, size = 0x12000, scoped, tag = 'internal scratch']
  #allocation2 [shape = 'bf16[18,18,64]{2,1,0:T(8,128)(2,1)}', space=vmem, size = 0x1b000, scoped, tag = 'scratch operand']
  #allocation3 [shape = 'bf16[18,18,32]{2,1,0:T(8,128)(2,1)}', space=vmem, size = 0x1b000, scoped, tag = 'scratch operand']
  %s0 = inlined_call_operand.hbm [shape: bf16[2,16,16,64], index: 0, kind: input, shape index: {}]
  %s1 = inlined_call_operand.hbm [shape: bf16[9,64,32], index: 1, kind: input, shape index: {}]
  %s2 = inlined_call_operand.hbm [shape: f32[1,32], index: 2, kind: input, shape index: {}]
  %s3 = inlined_call_operand.hbm [shape: bf16[9,32,32], index: 3, kind: input, shape index: {}]
  %s4 = inlined_call_operand.hbm [shape: f32[1,32], index: 4, kind: input, shape index: {}]
  %s5 = inlined_call_operand.hbm [shape: bf16[1,32,128], index: 5, kind: input, shape index: {}]
  %s6 = inlined_call_operand.hbm [shape: f32[1,128], index: 6, kind: input, shape index: {}]
  %s7 = inlined_call_operand.hbm [shape: bf16[2,16,1,16,128], index: 7, kind: output, shape index: {}]
  %s8 = sld [smem:[#allocation0]]
  $region89: #{tpu_custom_call.1} parent=0
    _
  %s10 = ssub.s32 1, %s8
  %s11 = scalar_select 0, %s10, %s8
  $region1: #{tpu_custom_call.1} parent=0
    #allocation4 [shape = 'u8[131072]{0}', space=vmem, size = 0x20000, scoped, tag = 'input window, operand 0']
    #allocation5 [shape = 's32[2]{0}', space=sflag, size = 0x8, scoped, tag = 'scoped memory for tpu_custom_call.1']
    #allocation6 [shape = 's32[2]{0}', space=sflag, size = 0x8, scoped, tag = 'scoped memory for tpu_custom_call.1']
    #allocation7 [shape = 'u8[147456]{0}', space=vmem, size = 0x24000, scoped, tag = 'input window, operand 1, single buffered']
    #allocation8 [shape = 's32[1]{0}', space=sflag, size = 0x4, scoped, tag = 'scoped memory for tpu_custom_call.1']
    #allocation9 [shape = 'u8[512]{0}', space=vmem, size = 0x400, scoped, tag = 'input window, operand 2, single buffered']
    #allocation10 [shape = 'u8[73728]{0}', space=vmem, size = 0x12000, scoped, tag = 'input window, operand 3, single buffered']
    #allocation11 [shape = 's32[1]{0}', space=sflag, size = 0x4, scoped, tag = 'scoped memory for tpu_custom_call.1']
    #allocation12 [shape = 'u8[512]{0}', space=vmem, size = 0x400, scoped, tag = 'input window, operand 4, single buffered']
    #allocation13 [shape = 'u8[8192]{0}', space=vmem, size = 0x2000, scoped, tag = 'input window, operand 5, single buffered']
    #allocation14 [shape = 's32[1]{0}', space=sflag, size = 0x4, scoped, tag = 'scoped memory for tpu_custom_call.1']
    #allocation15 [shape = 'u8[512]{0}', space=vmem, size = 0x400, scoped, tag = 'input window, operand 6, single buffered']
    #allocation16 [shape = 'u8[131072]{0}', space=vmem, size = 0x20000, scoped, tag = 'output window, operand 0']
    %12 = vsyncpa [#allocation5], 0
    %s13 = scalar_lea.sflag [#allocation5], 1
    %14 = vsyncpa %s13, 0
    %15 = vsyncpa [#allocation8], 0
    %16 = vsyncpa [#allocation11], 0
    %17 = vsyncpa [#allocation14], 0
    %18 = vsyncpa [#allocation6], 0
    %s19 = scalar_lea.sflag [#allocation6], 1
    %20 = vsyncpa %s19, 0
    loop: start=0, step=1, limit=4
    $region2: #{tpu_custom_call.1} parent=1 // loop_pre_header
      _
    $region3: #{tpu_custom_call.1} parent=1 // loop_header
      %s22 = sphi 0, %s26
      %p23 = scmp.ge.s32.totalorder %s22, 4
      %s32 = sphi 0, %s34
      %s35 = sphi 0, %s32
      %s36 = sphi 0, %s35
      %s52 = sphi 0, %s36
      %s56 = sphi 0, %s56
      %s58 = sphi 0, %s56
      %s59 = sphi 0, %s58
      %s73 = sphi 0, %s59
      %s77 = sphi 0, %s77
      %s79 = sphi 0, %s77
      %s80 = sphi 0, %s79
      %s94 = sphi 0, %s80
      %s98 = sphi 0, %s98
      %s100 = sphi 0, %s98
      %s101 = sphi 0, %s100
      %s115 = sphi 0, %s101
      %s119 = sphi 0, %s119
      %s121 = sphi 0, %s119
      %s122 = sphi 0, %s121
      %s136 = sphi 0, %s122
      %s140 = sphi 0, %s140
      %s142 = sphi 0, %s140
      %s143 = sphi 0, %s142
      %s157 = sphi 0, %s143
      %s161 = sphi 0, %s161
      %s163 = sphi 0, %s161
      %s164 = sphi 0, %s163
      %s178 = sphi 0, %s164
      %s184 = sphi 0, %s186
      %s187 = sphi 0, %s184
      %s188 = sphi 0, %s187
      %s204 = sphi 0, %s188
    $region4: #{tpu_custom_call.1} parent=1 // loop_header_branch
      %25 = sbr.rel (%p23) target = $region8
    $region5: #{tpu_custom_call.1} parent=1 // loop_body
      %s27 = ssub.s32 %s22, 1
      %s28 = ssub.s32 %s22, 2
      %s29 = sadd.s32 %s22, 1
      %s30 = ssub.s32 %s22, %s29
      %p31 = scmp.eq.s32.totalorder %s30, 0
      %s33 = sadd.s32 %s32, 1
      %s34 = scalar_select %p31, %s32, %s33
      %p37 = pneg %p31
      %p38 = scmp.eq.s32.totalorder %s22, 1
      %p39 = por %p37, %p38
      %p40 = scmp.ne.s32.totalorder %s32, %s35
      %p41 = scmp.eq.s32.totalorder %s22, 0
      %p42 = por %p40, %p41
      %p43 = scmp.ne.s32.totalorder %s32, %s35
      %p44 = scmp.eq.s32.totalorder %s27, 1
      %p45 = por %p43, %p44
      %p46 = scmp.ne.s32.totalorder %s35, %s36
      %p47 = scmp.eq.s32.totalorder %s27, 0
      %p48 = por %p46, %p47
      %p49 = scmp.ne.s32.totalorder %s35, %s36
      %p50 = scmp.eq.s32.totalorder %s28, 1
      %p51 = por %p49, %p50
      %p53 = scmp.ne.s32.totalorder %s36, %s52
      %p54 = scmp.eq.s32.totalorder %s28, 0
      %p55 = por %p53, %p54
      %s57 = sadd.s32 %s56, 1
      %p60 = scmp.eq.s32.totalorder %s22, 1
      %p61 = scmp.ne.s32.totalorder %s56, %s58
      %p62 = scmp.eq.s32.totalorder %s22, 0
      %p63 = por %p61, %p62
      %p64 = scmp.ne.s32.totalorder %s56, %s58
      %p65 = scmp.eq.s32.totalorder %s27, 1
      %p66 = por %p64, %p65
      %p67 = scmp.ne.s32.totalorder %s58, %s59
      %p68 = scmp.eq.s32.totalorder %s27, 0
      %p69 = por %p67, %p68
      %p70 = scmp.ne.s32.totalorder %s58, %s59
      %p71 = scmp.eq.s32.totalorder %s28, 1
      %p72 = por %p70, %p71
      %p74 = scmp.ne.s32.totalorder %s59, %s73
      %p75 = scmp.eq.s32.totalorder %s28, 0
      %p76 = por %p74, %p75
      %s78 = sadd.s32 %s77, 1
      %p81 = scmp.eq.s32.totalorder %s22, 1
      %p82 = scmp.ne.s32.totalorder %s77, %s79
      %p83 = scmp.eq.s32.totalorder %s22, 0
      %p84 = por %p82, %p83
      %p85 = scmp.ne.s32.totalorder %s77, %s79
      %p86 = scmp.eq.s32.totalorder %s27, 1
      %p87 = por %p85, %p86
      %p88 = scmp.ne.s32.totalorder %s79, %s80
      %p89 = scmp.eq.s32.totalorder %s27, 0
      %p90 = por %p88, %p89
      %p91 = scmp.ne.s32.totalorder %s79, %s80
      %p92 = scmp.eq.s32.totalorder %s28, 1
      %p93 = por %p91, %p92
      %p95 = scmp.ne.s32.totalorder %s80, %s94
      %p96 = scmp.eq.s32.totalorder %s28, 0
      %p97 = por %p95, %p96
      %s99 = sadd.s32 %s98, 1
      %p102 = scmp.eq.s32.totalorder %s22, 1
      %p103 = scmp.ne.s32.totalorder %s98, %s100
      %p104 = scmp.eq.s32.totalorder %s22, 0
      %p105 = por %p103, %p104
      %p106 = scmp.ne.s32.totalorder %s98, %s100
      %p107 = scmp.eq.s32.totalorder %s27, 1
      %p108 = por %p106, %p107
      %p109 = scmp.ne.s32.totalorder %s100, %s101
      %p110 = scmp.eq.s32.totalorder %s27, 0
      %p111 = por %p109, %p110
      %p112 = scmp.ne.s32.totalorder %s100, %s101
      %p113 = scmp.eq.s32.totalorder %s28, 1
      %p114 = por %p112, %p113
      %p116 = scmp.ne.s32.totalorder %s101, %s115
      %p117 = scmp.eq.s32.totalorder %s28, 0
      %p118 = por %p116, %p117
      %s120 = sadd.s32 %s119, 1
      %p123 = scmp.eq.s32.totalorder %s22, 1
      %p124 = scmp.ne.s32.totalorder %s119, %s121
      %p125 = scmp.eq.s32.totalorder %s22, 0
      %p126 = por %p124, %p125
      %p127 = scmp.ne.s32.totalorder %s119, %s121
      %p128 = scmp.eq.s32.totalorder %s27, 1
      %p129 = por %p127, %p128
      %p130 = scmp.ne.s32.totalorder %s121, %s122
      %p131 = scmp.eq.s32.totalorder %s27, 0
      %p132 = por %p130, %p131
      %p133 = scmp.ne.s32.totalorder %s121, %s122
      %p134 = scmp.eq.s32.totalorder %s28, 1
      %p135 = por %p133, %p134
      %p137 = scmp.ne.s32.totalorder %s122, %s136
      %p138 = scmp.eq.s32.totalorder %s28, 0
      %p139 = por %p137, %p138
      %s141 = sadd.s32 %s140, 1
      %p144 = scmp.eq.s32.totalorder %s22, 1
      %p145 = scmp.ne.s32.totalorder %s140, %s142
      %p146 = scmp.eq.s32.totalorder %s22, 0
      %p147 = por %p145, %p146
      %p148 = scmp.ne.s32.totalorder %s140, %s142
      %p149 = scmp.eq.s32.totalorder %s27, 1
      %p150 = por %p148, %p149
      %p151 = scmp.ne.s32.totalorder %s142, %s143
      %p152 = scmp.eq.s32.totalorder %s27, 0
      %p153 = por %p151, %p152
      %p154 = scmp.ne.s32.totalorder %s142, %s143
      %p155 = scmp.eq.s32.totalorder %s28, 1
      %p156 = por %p154, %p155
      %p158 = scmp.ne.s32.totalorder %s143, %s157
      %p159 = scmp.eq.s32.totalorder %s28, 0
      %p160 = por %p158, %p159
      %s162 = sadd.s32 %s161, 1
      %p165 = scmp.eq.s32.totalorder %s22, 1
      %p166 = scmp.ne.s32.totalorder %s161, %s163
      %p167 = scmp.eq.s32.totalorder %s22, 0
      %p168 = por %p166, %p167
      %p169 = scmp.ne.s32.totalorder %s161, %s163
      %p170 = scmp.eq.s32.totalorder %s27, 1
      %p171 = por %p169, %p170
      %p172 = scmp.ne.s32.totalorder %s163, %s164
      %p173 = scmp.eq.s32.totalorder %s27, 0
      %p174 = por %p172, %p173
      %p175 = scmp.ne.s32.totalorder %s163, %s164
      %p176 = scmp.eq.s32.totalorder %s28, 1
      %p177 = por %p175, %p176
      %p179 = scmp.ne.s32.totalorder %s164, %s178
      %p180 = scmp.eq.s32.totalorder %s28, 0
      %p181 = por %p179, %p180
      %s182 = ssub.s32 %s22, %s29
      %p183 = scmp.eq.s32.totalorder %s182, 0
      %s185 = sadd.s32 %s184, 1
      %s186 = scalar_select %p183, %s184, %s185
      %p189 = pneg %p183
      %p190 = scmp.eq.s32.totalorder %s22, 1
      %p191 = por %p189, %p190
      %p192 = scmp.ne.s32.totalorder %s184, %s187
      %p193 = scmp.eq.s32.totalorder %s22, 0
      %p194 = por %p192, %p193
      %p195 = scmp.ne.s32.totalorder %s184, %s187
      %p196 = scmp.eq.s32.totalorder %s27, 1
      %p197 = por %p195, %p196
      %p198 = scmp.ne.s32.totalorder %s187, %s188
      %p199 = scmp.eq.s32.totalorder %s27, 0
      %p200 = por %p198, %p199
      %p201 = scmp.ne.s32.totalorder %s187, %s188
      %p202 = scmp.eq.s32.totalorder %s28, 1
      %p203 = por %p201, %p202
      %p205 = scmp.ne.s32.totalorder %s188, %s204
      %p206 = scmp.eq.s32.totalorder %s28, 0
      %p207 = por %p205, %p206
      %p208 = scmp.le.s32.totalorder 1, %s22
      %p209 = scmp.lt.s32.totalorder %s22, 3
      %p210 = pnand %p208, %p209
      %p211 = pneg %p210
      // Predicated region
      $region9: #{tpu_custom_call.1} parent=5 // pred_check
        _
      $region10: #{tpu_custom_call.1} parent=5 // pred_check_branch
        %213 = sbr.rel (%p210) target = $region12
      $region11: #{tpu_custom_call.1} parent=5 // pred_region
        %s214 = ssub.s32 %s22, 1
        // Predicated region
        $region13: #{tpu_custom_call.1} parent=11 // pred_check
          %p215 = pneg %p69
        $region14: #{tpu_custom_call.1} parent=11 // pred_check_branch
          %217 = sbr.rel (%p215) target = $region16
        $region15: #{tpu_custom_call.1} parent=11 // pred_region
          %s219 = ssub.s32 4608, 4608
          %220 = vsyncadd [#allocation8], %s219
          %s221 = sshll.u32 [#allocation7], 4
          %s222 = int_to_ptr.vmem [resolvable:$true] %s221
          %227 = dma.hbm_to_vmem [thread:$0]  %s1, 4608, %s222, [#allocation8], 64, 64, 4
        $region16: #{tpu_custom_call.1} parent=11 // pred_fallthru
          _
        // Predicated region
        $region17: #{tpu_custom_call.1} parent=11 // pred_check
          %p228 = pneg %p90
        $region18: #{tpu_custom_call.1} parent=11 // pred_check_branch
          %230 = sbr.rel (%p228) target = $region20
        $region19: #{tpu_custom_call.1} parent=11 // pred_region
          %s232 = ssub.s32 16, 16
          %233 = vsyncadd [#allocation8], %s232
          %s235 = sshll.u32 [#allocation9], 4
          %s236 = int_to_ptr.vmem [resolvable:$true] %s235
          %238 = dma.hbm_to_vmem [thread:$0]  %s2, 16, %s236, [#allocation8]
        $region20: #{tpu_custom_call.1} parent=11 // pred_fallthru
          _
        // Predicated region
        $region21: #{tpu_custom_call.1} parent=11 // pred_check
          %p239 = pneg %p111
        $region22: #{tpu_custom_call.1} parent=11 // pred_check_branch
          %241 = sbr.rel (%p239) target = $region24
        $region23: #{tpu_custom_call.1} parent=11 // pred_region
          %s243 = ssub.s32 2304, 2304
          %244 = vsyncadd [#allocation11], %s243
          %s245 = sshll.u32 [#allocation10], 4
          %s246 = int_to_ptr.vmem [resolvable:$true] %s245
          %251 = dma.hbm_to_vmem [thread:$0]  %s3, 2304, %s246, [#allocation11], 64, 64, 4
        $region24: #{tpu_custom_call.1} parent=11 // pred_fallthru
          _
        // Predicated region
        $region25: #{tpu_custom_call.1} parent=11 // pred_check
          %p252 = pneg %p132
        $region26: #{tpu_custom_call.1} parent=11 // pred_check_branch
          %254 = sbr.rel (%p252) target = $region28
        $region27: #{tpu_custom_call.1} parent=11 // pred_region
          %s256 = ssub.s32 16, 16
          %257 = vsyncadd [#allocation11], %s256
          %s259 = sshll.u32 [#allocation12], 4
          %s260 = int_to_ptr.vmem [resolvable:$true] %s259
          %262 = dma.hbm_to_vmem [thread:$0]  %s4, 16, %s260, [#allocation11]
        $region28: #{tpu_custom_call.1} parent=11 // pred_fallthru
          _
        // Predicated region
        $region29: #{tpu_custom_call.1} parent=11 // pred_check
          %p263 = pneg %p153
        $region30: #{tpu_custom_call.1} parent=11 // pred_check_branch
          %265 = sbr.rel (%p263) target = $region32
        $region31: #{tpu_custom_call.1} parent=11 // pred_region
          %s267 = ssub.s32 256, 256
          %268 = vsyncadd [#allocation14], %s267
          %s269 = sshll.u32 [#allocation13], 4
          %s270 = int_to_ptr.vmem [resolvable:$true] %s269
          %275 = dma.hbm_to_vmem [thread:$0]  %s5, 256, %s270, [#allocation14], 64, 64, 4
        $region32: #{tpu_custom_call.1} parent=11 // pred_fallthru
          _
        // Predicated region
        $region33: #{tpu_custom_call.1} parent=11 // pred_check
          %p276 = pneg %p174
        $region34: #{tpu_custom_call.1} parent=11 // pred_check_branch
          %278 = sbr.rel (%p276) target = $region36
        $region35: #{tpu_custom_call.1} parent=11 // pred_region
          %s280 = ssub.s32 16, 16
          %281 = vsyncadd [#allocation14], %s280
          %s283 = sshll.u32 [#allocation15], 4
          %s284 = int_to_ptr.vmem [resolvable:$true] %s283
          %286 = dma.hbm_to_vmem [thread:$0]  %s6, 16, %s284, [#allocation14]
        $region36: #{tpu_custom_call.1} parent=11 // pred_fallthru
          _
      $region12: #{tpu_custom_call.1} parent=5 // pred_fallthru
        _
      %p287 = scmp.lt.s32.totalorder %s22, 2
      // Predicated region
      $region37: #{tpu_custom_call.1} parent=5 // pred_check
        %p288 = pneg %p287
      $region38: #{tpu_custom_call.1} parent=5 // pred_check_branch
        %290 = sbr.rel (%p288) target = $region40
      $region39: #{tpu_custom_call.1} parent=5 // pred_region
        // Predicated region
        $region41: #{tpu_custom_call.1} parent=39 // pred_check
          %p291 = pneg %p42
        $region42: #{tpu_custom_call.1} parent=39 // pred_check_branch
          %293 = sbr.rel (%p291) target = $region44
        $region43: #{tpu_custom_call.1} parent=39 // pred_region
          %s294 = sand.u32 %s32, 1
          %s295 = scalar_lea.sflag [#allocation5], %s294
          %s296 = sand.u32 %s32, 1
          %s297 = smul.addr %s296, 128
          %s298 = scalar_lea.vmem [#allocation4], %s297
          %s300 = ssub.s32 2048, 2048
          %301 = vsyncadd %s295, %s300
          %s302 = smul.addr %s22, 32
          %s303 = smul.addr %s302, 64
          %s304 = scalar_lea.hbm %s0, %s303
          %s305 = sshll.u32 %s298, 4
          %s306 = int_to_ptr.vmem [resolvable:$true] %s305
          %311 = dma.hbm_to_vmem [thread:$0]  %s304, 2048, %s306, %s295, 64, 64, 4
        $region44: #{tpu_custom_call.1} parent=39 // pred_fallthru
          _
      $region40: #{tpu_custom_call.1} parent=5 // pred_fallthru
        _
      %p312 = scmp.le.s32.totalorder 1, %s22
      %p313 = scmp.lt.s32.totalorder %s22, 3
      %p314 = pnand %p312, %p313
      %p315 = pneg %p314
      // Predicated region
      $region45: #{tpu_custom_call.1} parent=5 // pred_check
        _
      $region46: #{tpu_custom_call.1} parent=5 // pred_check_branch
        %317 = sbr.rel (%p314) target = $region48
      $region47: #{tpu_custom_call.1} parent=5 // pred_region
        %s318 = ssub.s32 %s22, 1
        %s319 = sand.u32 %s35, 1
        %s320 = scalar_lea.sflag [#allocation5], %s319
        %s321 = sand.u32 %s35, 1
        %s322 = smul.addr %s321, 128
        %s323 = scalar_lea.vmem [#allocation4], %s322
        // Predicated region
        $region49: #{tpu_custom_call.1} parent=47 // pred_check
          %p324 = pneg %p48
        $region50: #{tpu_custom_call.1} parent=47 // pred_check_branch
          %326 = sbr.rel (%p324) target = $region52
        $region51: #{tpu_custom_call.1} parent=47 // pred_region
          %327 = dma.done %s320, 2048
        $region52: #{tpu_custom_call.1} parent=47 // pred_fallthru
          _
        // Predicated region
        $region53: #{tpu_custom_call.1} parent=47 // pred_check
          %p328 = pneg %p69
        $region54: #{tpu_custom_call.1} parent=47 // pred_check_branch
          %330 = sbr.rel (%p328) target = $region56
        $region55: #{tpu_custom_call.1} parent=47 // pred_region
          %331 = dma.done [#allocation8], 4608
        $region56: #{tpu_custom_call.1} parent=47 // pred_fallthru
          _
        // Predicated region
        $region57: #{tpu_custom_call.1} parent=47 // pred_check
          %p332 = pneg %p90
        $region58: #{tpu_custom_call.1} parent=47 // pred_check_branch
          %334 = sbr.rel (%p332) target = $region60
        $region59: #{tpu_custom_call.1} parent=47 // pred_region
          %335 = dma.done [#allocation8], 16
        $region60: #{tpu_custom_call.1} parent=47 // pred_fallthru
          _
        // Predicated region
        $region61: #{tpu_custom_call.1} parent=47 // pred_check
          %p336 = pneg %p111
        $region62: #{tpu_custom_call.1} parent=47 // pred_check_branch
          %338 = sbr.rel (%p336) target = $region64
        $region63: #{tpu_custom_call.1} parent=47 // pred_region
          %339 = dma.done [#allocation11], 2304
        $region64: #{tpu_custom_call.1} parent=47 // pred_fallthru
          _
        // Predicated region
        $region65: #{tpu_custom_call.1} parent=47 // pred_check
          %p340 = pneg %p132
        $region66: #{tpu_custom_call.1} parent=47 // pred_check_branch
          %342 = sbr.rel (%p340) target = $region68
        $region67: #{tpu_custom_call.1} parent=47 // pred_region
          %343 = dma.done [#allocation11], 16
        $region68: #{tpu_custom_call.1} parent=47 // pred_fallthru
          _
        // Predicated region
        $region69: #{tpu_custom_call.1} parent=47 // pred_check
          %p344 = pneg %p153
        $region70: #{tpu_custom_call.1} parent=47 // pred_check_branch
          %346 = sbr.rel (%p344) target = $region72
        $region71: #{tpu_custom_call.1} parent=47 // pred_region
          %347 = dma.done [#allocation14], 256
        $region72: #{tpu_custom_call.1} parent=47 // pred_fallthru
          _
        // Predicated region
        $region73: #{tpu_custom_call.1} parent=47 // pred_check
          %p348 = pneg %p174
        $region74: #{tpu_custom_call.1} parent=47 // pred_check_branch
          %350 = sbr.rel (%p348) target = $region76
        $region75: #{tpu_custom_call.1} parent=47 // pred_region
          %351 = dma.done [#allocation14], 16
        $region76: #{tpu_custom_call.1} parent=47 // pred_fallthru
          _
        %s352 = sand.u32 %s35, 1
        %s353 = scalar_lea.sflag [#allocation5], %s352
        %s354 = sand.u32 %s35, 1
        %s355 = smul.addr %s354, 128
        %s356 = scalar_lea.vmem [#allocation4], %s355
        %p357 = pneg %p48
        %p358 = pneg %p45
        %p359 = pneg %p69
        %p360 = pneg %p66
        %p361 = pneg %p90
        %p362 = pneg %p87
        %p363 = pneg %p111
        %p364 = pneg %p108
        %p365 = pneg %p132
        %p366 = pneg %p129
        %p367 = pneg %p153
        %p368 = pneg %p150
        %p369 = pneg %p174
        %p370 = pneg %p171
        %p371 = pneg %p200
        %p372 = pneg %p197
        %s373 = sand.u32 %s187, 1
        %s374 = scalar_lea.sflag [#allocation6], %s373
        %s375 = sand.u32 %s187, 1
        %s376 = smul.addr %s375, 128
        %s377 = scalar_lea.vmem [#allocation16], %s376
        %vm379 = vcmask 519168
        %380 = vst.msk [vmem:[#allocation2] sm:$0xf] %vm379, 0
        %381 = vst.msk [vmem:[#allocation2 + $0x4] sm:$0xf] %vm379, 0
        %vm382 = vcmask 516096
        %383 = vst.msk [vmem:[#allocation2 + $0x8] sm:$0x1] %vm382, 0
        %vm384 = vcmask 516096
        %vm385 = vsmask.f32 256
        %vm386 = vmand %vm384, %vm385
        %v387 = vld [vmem:[#allocation2] sm:$0x1]
        %v388 = vsel %vm386, 0, %v387
        %389 = vst [vmem:[#allocation2] sm:$0x1] %v388
        %v390 = vld [vmem:[#allocation2 + $0xc] sm:$0x1]
        %v391 = vsel %vm386, 0, %v390
        %392 = vst [vmem:[#allocation2 + $0xc] sm:$0x1] %v391
        %v393 = vld [vmem:[#allocation2 + $0x18] sm:$0x1]
        %v394 = vsel %vm386, 0, %v393
        %395 = vst [vmem:[#allocation2 + $0x18] sm:$0x1] %v394
        %v396 = vld [vmem:[#allocation2 + $0x24] sm:$0x1]
        %v397 = vsel %vm386, 0, %v396
        %398 = vst [vmem:[#allocation2 + $0x24] sm:$0x1] %v397
        %v399 = vld [vmem:[#allocation2 + $0x30] sm:$0x1]
        %v400 = vsel %vm386, 0, %v399
        %401 = vst [vmem:[#allocation2 + $0x30] sm:$0x1] %v400
        %v402 = vld [vmem:[#allocation2 + $0x3c] sm:$0x1]
        %v403 = vsel %vm386, 0, %v402
        %404 = vst [vmem:[#allocation2 + $0x3c] sm:$0x1] %v403
        %v405 = vld [vmem:[#allocation2 + $0x48] sm:$0x1]
        %v406 = vsel %vm386, 0, %v405
        %407 = vst [vmem:[#allocation2 + $0x48] sm:$0x1] %v406
        %v408 = vld [vmem:[#allocation2 + $0x54] sm:$0x1]
        %v409 = vsel %vm386, 0, %v408
        %410 = vst [vmem:[#allocation2 + $0x54] sm:$0x1] %v409
        %v411 = vld [vmem:[#allocation2 + $0x60] sm:$0x1]
        %v412 = vsel %vm386, 0, %v411
        %413 = vst [vmem:[#allocation2 + $0x60] sm:$0x1] %v412
        %v414 = vld [vmem:[#allocation2 + $0x6c] sm:$0x1]
        %v415 = vsel %vm386, 0, %v414
        %416 = vst [vmem:[#allocation2 + $0x6c] sm:$0x1] %v415
        %v417 = vld [vmem:[#allocation2 + $0x78] sm:$0x1]
        %v418 = vsel %vm386, 0, %v417
        %419 = vst [vmem:[#allocation2 + $0x78] sm:$0x1] %v418
        %v420 = vld [vmem:[#allocation2 + $0x84] sm:$0x1]
        %v421 = vsel %vm386, 0, %v420
        %422 = vst [vmem:[#allocation2 + $0x84] sm:$0x1] %v421
        %v423 = vld [vmem:[#allocation2 + $0x90] sm:$0x1]
        %v424 = vsel %vm386, 0, %v423
        %425 = vst [vmem:[#allocation2 + $0x90] sm:$0x1] %v424
        %v426 = vld [vmem:[#allocation2 + $0x9c] sm:$0x1]
        %v427 = vsel %vm386, 0, %v426
        %428 = vst [vmem:[#allocation2 + $0x9c] sm:$0x1] %v427
        %v429 = vld [vmem:[#allocation2 + $0xa8] sm:$0x1]
        %v430 = vsel %vm386, 0, %v429
        %431 = vst [vmem:[#allocation2 + $0xa8] sm:$0x1] %v430
        %v432 = vld [vmem:[#allocation2 + $0xb4] sm:$0x1]
        %v433 = vsel %vm386, 0, %v432
        %434 = vst [vmem:[#allocation2 + $0xb4] sm:$0x1] %v433
        %v435 = vld [vmem:[#allocation2 + $0xc0] sm:$0x1]
        %v436 = vsel %vm386, 0, %v435
        %437 = vst [vmem:[#allocation2 + $0xc0] sm:$0x1] %v436
        %v438 = vld [vmem:[#allocation2 + $0xcc] sm:$0x1]
        %v439 = vsel %vm386, 0, %v438
        %440 = vst [vmem:[#allocation2 + $0xcc] sm:$0x1] %v439
        %s441 = scalar_lea.vmem [#allocation2], 204
        %442 = vst.msk [vmem:[%s441] sm:$0xf] %vm379, 0
        %443 = vst.msk [vmem:[%s441 + $0x4] sm:$0xf] %vm379, 0
        %444 = vst.msk [vmem:[%s441 + $0x8] sm:$0x1] %vm382, 0
        %vm445 = vsmask.f32 7938
        %vm446 = vmand %vm384, %vm445
        %v447 = vld [vmem:[#allocation2 + $0x8] sm:$0x1]
        %v448 = vsel %vm446, 0, %v447
        %449 = vst [vmem:[#allocation2 + $0x8] sm:$0x1] %v448
        %v450 = vld [vmem:[#allocation2 + $0x14] sm:$0x1]
        %v451 = vsel %vm446, 0, %v450
        %452 = vst [vmem:[#allocation2 + $0x14] sm:$0x1] %v451
        %v453 = vld [vmem:[#allocation2 + $0x20] sm:$0x1]
        %v454 = vsel %vm446, 0, %v453
        %455 = vst [vmem:[#allocation2 + $0x20] sm:$0x1] %v454
        %v456 = vld [vmem:[#allocation2 + $0x2c] sm:$0x1]
        %v457 = vsel %vm446, 0, %v456
        %458 = vst [vmem:[#allocation2 + $0x2c] sm:$0x1] %v457
        %v459 = vld [vmem:[#allocation2 + $0x38] sm:$0x1]
        %v460 = vsel %vm446, 0, %v459
        %461 = vst [vmem:[#allocation2 + $0x38] sm:$0x1] %v460
        %v462 = vld [vmem:[#allocation2 + $0x44] sm:$0x1]
        %v463 = vsel %vm446, 0, %v462
        %464 = vst [vmem:[#allocation2 + $0x44] sm:$0x1] %v463
        %v465 = vld [vmem:[#allocation2 + $0x50] sm:$0x1]
        %v466 = vsel %vm446, 0, %v465
        %467 = vst [vmem:[#allocation2 + $0x50] sm:$0x1] %v466
        %v468 = vld [vmem:[#allocation2 + $0x5c] sm:$0x1]
        %v469 = vsel %vm446, 0, %v468
        %470 = vst [vmem:[#allocation2 + $0x5c] sm:$0x1] %v469
        %v471 = vld [vmem:[#allocation2 + $0x68] sm:$0x1]
        %v472 = vsel %vm446, 0, %v471
        %473 = vst [vmem:[#allocation2 + $0x68] sm:$0x1] %v472
        %v474 = vld [vmem:[#allocation2 + $0x74] sm:$0x1]
        %v475 = vsel %vm446, 0, %v474
        %476 = vst [vmem:[#allocation2 + $0x74] sm:$0x1] %v475
        %v477 = vld [vmem:[#allocation2 + $0x80] sm:$0x1]
        %v478 = vsel %vm446, 0, %v477
        %479 = vst [vmem:[#allocation2 + $0x80] sm:$0x1] %v478
        %v480 = vld [vmem:[#allocation2 + $0x8c] sm:$0x1]
        %v481 = vsel %vm446, 0, %v480
        %482 = vst [vmem:[#allocation2 + $0x8c] sm:$0x1] %v481
        %v483 = vld [vmem:[#allocation2 + $0x98] sm:$0x1]
        %v484 = vsel %vm446, 0, %v483
        %485 = vst [vmem:[#allocation2 + $0x98] sm:$0x1] %v484
        %v486 = vld [vmem:[#allocation2 + $0xa4] sm:$0x1]
        %v487 = vsel %vm446, 0, %v486
        %488 = vst [vmem:[#allocation2 + $0xa4] sm:$0x1] %v487
        %v489 = vld [vmem:[#allocation2 + $0xb0] sm:$0x1]
        %v490 = vsel %vm446, 0, %v489
        %491 = vst [vmem:[#allocation2 + $0xb0] sm:$0x1] %v490
        %v492 = vld [vmem:[#allocation2 + $0xbc] sm:$0x1]
        %v493 = vsel %vm446, 0, %v492
        %494 = vst [vmem:[#allocation2 + $0xbc] sm:$0x1] %v493
        %v495 = vld [vmem:[#allocation2 + $0xc8] sm:$0x1]
        %v496 = vsel %vm446, 0, %v495
        %497 = vst [vmem:[#allocation2 + $0xc8] sm:$0x1] %v496
        %v498 = vld [vmem:[#allocation2 + $0xd4] sm:$0x1]
        %v499 = vsel %vm446, 0, %v498
        %500 = vst [vmem:[#allocation2 + $0xd4] sm:$0x1] %v499
        %vm501 = vcmask 257024
        %502 = vst.msk [vmem:[#allocation3] sm:$0xf] %vm501, 0
        %503 = vst.msk [vmem:[#allocation3 + $0x4] sm:$0xf] %vm501, 0
        %vm504 = vcmask 253952
        %505 = vst.msk [vmem:[#allocation3 + $0x8] sm:$0x1] %vm504, 0
        %s506 = scalar_lea.vmem [#allocation3], 204
        %507 = vst.msk [vmem:[%s506] sm:$0xf] %vm501, 0
        %508 = vst.msk [vmem:[%s506 + $0x4] sm:$0xf] %vm501, 0
        %509 = vst.msk [vmem:[%s506 + $0x8] sm:$0x1] %vm504, 0
        %vm510 = vcmask 253952
        %vm511 = vmand %vm510, %vm385
        %v512 = vld [vmem:[#allocation3] sm:$0x1]
        %v513 = vsel %vm511, 0, %v512
        %514 = vst [vmem:[#allocation3] sm:$0x1] %v513
        %v515 = vld [vmem:[#allocation3 + $0xc] sm:$0x1]
        %v516 = vsel %vm511, 0, %v515
        %517 = vst [vmem:[#allocation3 + $0xc] sm:$0x1] %v516
        %v518 = vld [vmem:[#allocation3 + $0x18] sm:$0x1]
        %v519 = vsel %vm511, 0, %v518
        %520 = vst [vmem:[#allocation3 + $0x18] sm:$0x1] %v519
        %v521 = vld [vmem:[#allocation3 + $0x24] sm:$0x1]
        %v522 = vsel %vm511, 0, %v521
        %523 = vst [vmem:[#allocation3 + $0x24] sm:$0x1] %v522
        %v524 = vld [vmem:[#allocation3 + $0x30] sm:$0x1]
        %v525 = vsel %vm511, 0, %v524
        %526 = vst [vmem:[#allocation3 + $0x30] sm:$0x1] %v525
        %v527 = vld [vmem:[#allocation3 + $0x3c] sm:$0x1]
        %v528 = vsel %vm511, 0, %v527
        %529 = vst [vmem:[#allocation3 + $0x3c] sm:$0x1] %v528
        %v530 = vld [vmem:[#allocation3 + $0x48] sm:$0x1]
        %v531 = vsel %vm511, 0, %v530
        %532 = vst [vmem:[#allocation3 + $0x48] sm:$0x1] %v531
        %v533 = vld [vmem:[#allocation3 + $0x54] sm:$0x1]
        %v534 = vsel %vm511, 0, %v533
        %535 = vst [vmem:[#allocation3 + $0x54] sm:$0x1] %v534
        %v536 = vld [vmem:[#allocation3 + $0x60] sm:$0x1]
        %v537 = vsel %vm511, 0, %v536
        %538 = vst [vmem:[#allocation3 + $0x60] sm:$0x1] %v537
        %v539 = vld [vmem:[#allocation3 + $0x6c] sm:$0x1]
        %v540 = vsel %vm511, 0, %v539
        %541 = vst [vmem:[#allocation3 + $0x6c] sm:$0x1] %v540
        %v542 = vld [vmem:[#allocation3 + $0x78] sm:$0x1]
        %v543 = vsel %vm511, 0, %v542
        %544 = vst [vmem:[#allocation3 + $0x78] sm:$0x1] %v543
        %v545 = vld [vmem:[#allocation3 + $0x84] sm:$0x1]
        %v546 = vsel %vm511, 0, %v545
        %547 = vst [vmem:[#allocation3 + $0x84] sm:$0x1] %v546
        %v548 = vld [vmem:[#allocation3 + $0x90] sm:$0x1]
        %v549 = vsel %vm511, 0, %v548
        %550 = vst [vmem:[#allocation3 + $0x90] sm:$0x1] %v549
        %v551 = vld [vmem:[#allocation3 + $0x9c] sm:$0x1]
        %v552 = vsel %vm511, 0, %v551
        %553 = vst [vmem:[#allocation3 + $0x9c] sm:$0x1] %v552
        %v554 = vld [vmem:[#allocation3 + $0xa8] sm:$0x1]
        %v555 = vsel %vm511, 0, %v554
        %556 = vst [vmem:[#allocation3 + $0xa8] sm:$0x1] %v555
        %v557 = vld [vmem:[#allocation3 + $0xb4] sm:$0x1]
        %v558 = vsel %vm511, 0, %v557
        %559 = vst [vmem:[#allocation3 + $0xb4] sm:$0x1] %v558
        %v560 = vld [vmem:[#allocation3 + $0xc0] sm:$0x1]
        %v561 = vsel %vm511, 0, %v560
        %562 = vst [vmem:[#allocation3 + $0xc0] sm:$0x1] %v561
        %v563 = vld [vmem:[#allocation3 + $0xcc] sm:$0x1]
        %v564 = vsel %vm511, 0, %v563
        %565 = vst [vmem:[#allocation3 + $0xcc] sm:$0x1] %v564
        %vm566 = vmand %vm510, %vm445
        %v567 = vld [vmem:[#allocation3 + $0x8] sm:$0x1]
        %v568 = vsel %vm566, 0, %v567
        %569 = vst [vmem:[#allocation3 + $0x8] sm:$0x1] %v568
        %v570 = vld [vmem:[#allocation3 + $0x14] sm:$0x1]
        %v571 = vsel %vm566, 0, %v570
        %572 = vst [vmem:[#allocation3 + $0x14] sm:$0x1] %v571
        %v573 = vld [vmem:[#allocation3 + $0x20] sm:$0x1]
        %v574 = vsel %vm566, 0, %v573
        %575 = vst [vmem:[#allocation3 + $0x20] sm:$0x1] %v574
        %v576 = vld [vmem:[#allocation3 + $0x2c] sm:$0x1]
        %v577 = vsel %vm566, 0, %v576
        %578 = vst [vmem:[#allocation3 + $0x2c] sm:$0x1] %v577
        %v579 = vld [vmem:[#allocation3 + $0x38] sm:$0x1]
        %v580 = vsel %vm566, 0, %v579
        %581 = vst [vmem:[#allocation3 + $0x38] sm:$0x1] %v580
        %v582 = vld [vmem:[#allocation3 + $0x44] sm:$0x1]
        %v583 = vsel %vm566, 0, %v582
        %584 = vst [vmem:[#allocation3 + $0x44] sm:$0x1] %v583
        %v585 = vld [vmem:[#allocation3 + $0x50] sm:$0x1]
        %v586 = vsel %vm566, 0, %v585
        %587 = vst [vmem:[#allocation3 + $0x50] sm:$0x1] %v586
        %v588 = vld [vmem:[#allocation3 + $0x5c] sm:$0x1]
        %v589 = vsel %vm566, 0, %v588
        %590 = vst [vmem:[#allocation3 + $0x5c] sm:$0x1] %v589
        %v591 = vld [vmem:[#allocation3 + $0x68] sm:$0x1]
        %v592 = vsel %vm566, 0, %v591
        %593 = vst [vmem:[#allocation3 + $0x68] sm:$0x1] %v592
        %v594 = vld [vmem:[#allocation3 + $0x74] sm:$0x1]
        %v595 = vsel %vm566, 0, %v594
        %596 = vst [vmem:[#allocation3 + $0x74] sm:$0x1] %v595
        %v597 = vld [vmem:[#allocation3 + $0x80] sm:$0x1]
        %v598 = vsel %vm566, 0, %v597
        %599 = vst [vmem:[#allocation3 + $0x80] sm:$0x1] %v598
        %v600 = vld [vmem:[#allocation3 + $0x8c] sm:$0x1]
        %v601 = vsel %vm566, 0, %v600
        %602 = vst [vmem:[#allocation3 + $0x8c] sm:$0x1] %v601
        %v603 = vld [vmem:[#allocation3 + $0x98] sm:$0x1]
        %v604 = vsel %vm566, 0, %v603
        %605 = vst [vmem:[#allocation3 + $0x98] sm:$0x1] %v604
        %v606 = vld [vmem:[#allocation3 + $0xa4] sm:$0x1]
        %v607 = vsel %vm566, 0, %v606
        %608 = vst [vmem:[#allocation3 + $0xa4] sm:$0x1] %v607
        %v609 = vld [vmem:[#allocation3 + $0xb0] sm:$0x1]
        %v610 = vsel %vm566, 0, %v609
        %611 = vst [vmem:[#allocation3 + $0xb0] sm:$0x1] %v610
        %v612 = vld [vmem:[#allocation3 + $0xbc] sm:$0x1]
        %v613 = vsel %vm566, 0, %v612
        %614 = vst [vmem:[#allocation3 + $0xbc] sm:$0x1] %v613
        %v615 = vld [vmem:[#allocation3 + $0xc8] sm:$0x1]
        %v616 = vsel %vm566, 0, %v615
        %617 = vst [vmem:[#allocation3 + $0xc8] sm:$0x1] %v616
        %v618 = vld [vmem:[#allocation3 + $0xd4] sm:$0x1]
        %v619 = vsel %vm566, 0, %v618
        %620 = vst [vmem:[#allocation3 + $0xd4] sm:$0x1] %v619
        %v621 = vld [vmem:[%s323] sm:$0xf]
        %v622 = vld [vmem:[%s323 + $0x4] sm:$0xf]
        %v623 = vld [vmem:[%s323 + $0x8] sm:$0xf]
        %v624 = vld [vmem:[%s323 + $0xc] sm:$0xf]
        %v625 = vld [vmem:[%s323 + $0x10] sm:$0xf]
        %v626 = vld [vmem:[%s323 + $0x14] sm:$0xf]
        %v627 = vld [vmem:[%s323 + $0x18] sm:$0xf]
        %v628 = vld [vmem:[%s323 + $0x1c] sm:$0xf]
        %v629 = vld [vmem:[%s323 + $0x20] sm:$0xf]
        %v630 = vld [vmem:[%s323 + $0x24] sm:$0xf]
        %v631 = vld [vmem:[%s323 + $0x28] sm:$0xf]
        %v632 = vld [vmem:[%s323 + $0x2c] sm:$0xf]
        %v633 = vld [vmem:[%s323 + $0x30] sm:$0xf]
        %v634 = vld [vmem:[%s323 + $0x34] sm:$0xf]
        %v635 = vld [vmem:[%s323 + $0x38] sm:$0xf]
        %v636 = vld [vmem:[%s323 + $0x3c] sm:$0xf]
        %v637 = vld [vmem:[%s323 + $0x40] sm:$0xf]
        %v638 = vld [vmem:[%s323 + $0x44] sm:$0xf]
        %v639 = vld [vmem:[%s323 + $0x48] sm:$0xf]
        %v640 = vld [vmem:[%s323 + $0x4c] sm:$0xf]
        %v641 = vld [vmem:[%s323 + $0x50] sm:$0xf]
        %v642 = vld [vmem:[%s323 + $0x54] sm:$0xf]
        %v643 = vld [vmem:[%s323 + $0x58] sm:$0xf]
        %v644 = vld [vmem:[%s323 + $0x5c] sm:$0xf]
        %v645 = vld [vmem:[%s323 + $0x60] sm:$0xf]
        %v646 = vld [vmem:[%s323 + $0x64] sm:$0xf]
        %v647 = vld [vmem:[%s323 + $0x68] sm:$0xf]
        %v648 = vld [vmem:[%s323 + $0x6c] sm:$0xf]
        %v649 = vld [vmem:[%s323 + $0x70] sm:$0xf]
        %v650 = vld [vmem:[%s323 + $0x74] sm:$0xf]
        %v651 = vld [vmem:[%s323 + $0x78] sm:$0xf]
        %v652 = vld [vmem:[%s323 + $0x7c] sm:$0xf]
        %vm653 = vsmask.f32 4368
        %vm654 = vmor %vm385, %vm653
        %v656 = vshrl.u32 %v621, 16
        %v658 = vrot.slane %v656, 7
        %v659 = vshll.u32 %v621, 16
        %v661 = vor.u32 %v658, %v659
        %v662 = vrot.slane %v658, 4
        %v664 = vshrl.u32 %v622, 16
        %v666 = vrot.slane %v664, 7
        %v667 = vshll.u32 %v622, 16
        %v669 = vor.u32 %v666, %v667
        %v670 = vsel %vm654, %v662, %v669
        %v671 = vrot.slane %v666, 4
        %v673 = vshrl.u32 %v623, 16
        %v675 = vrot.slane %v673, 7
        %v676 = vshll.u32 %v623, 16
        %v678 = vor.u32 %v675, %v676
        %v679 = vrot.slane %v675, 4
        %v681 = vshrl.u32 %v624, 16
        %v683 = vrot.slane %v681, 7
        %v684 = vshll.u32 %v624, 16
        %v686 = vor.u32 %v683, %v684
        %v687 = vsel %vm654, %v679, %v686
        %v688 = vrot.slane %v683, 4
        %v690 = vshrl.u32 %v625, 16
        %v692 = vrot.slane %v690, 7
        %v693 = vshll.u32 %v625, 16
        %v695 = vor.u32 %v692, %v693
        %v696 = vrot.slane %v692, 4
        %v698 = vshrl.u32 %v626, 16
        %v700 = vrot.slane %v698, 7
        %v701 = vshll.u32 %v626, 16
        %v703 = vor.u32 %v700, %v701
        %v704 = vsel %vm654, %v696, %v703
        %v705 = vrot.slane %v700, 4
        %v707 = vshrl.u32 %v627, 16
        %v709 = vrot.slane %v707, 7
        %v710 = vshll.u32 %v627, 16
        %v712 = vor.u32 %v709, %v710
        %v713 = vrot.slane %v709, 4
        %v715 = vshrl.u32 %v628, 16
        %v717 = vrot.slane %v715, 7
        %v718 = vshll.u32 %v628, 16
        %v720 = vor.u32 %v717, %v718
        %v721 = vsel %vm654, %v713, %v720
        %v722 = vrot.slane %v717, 4
        %v724 = vshrl.u32 %v629, 16
        %v726 = vrot.slane %v724, 7
        %v727 = vshll.u32 %v629, 16
        %v729 = vor.u32 %v726, %v727
        %v730 = vrot.slane %v726, 4
        %v732 = vshrl.u32 %v630, 16
        %v734 = vrot.slane %v732, 7
        %v735 = vshll.u32 %v630, 16
        %v737 = vor.u32 %v734, %v735
        %v738 = vsel %vm654, %v730, %v737
        %v739 = vrot.slane %v734, 4
        %v741 = vshrl.u32 %v631, 16
        %v743 = vrot.slane %v741, 7
        %v744 = vshll.u32 %v631, 16
        %v746 = vor.u32 %v743, %v744
        %v747 = vrot.slane %v743, 4
        %v749 = vshrl.u32 %v632, 16
        %v751 = vrot.slane %v749, 7
        %v752 = vshll.u32 %v632, 16
        %v754 = vor.u32 %v751, %v752
        %v755 = vsel %vm654, %v747, %v754
        %v756 = vrot.slane %v751, 4
        %v758 = vshrl.u32 %v633, 16
        %v760 = vrot.slane %v758, 7
        %v761 = vshll.u32 %v633, 16
        %v763 = vor.u32 %v760, %v761
        %v764 = vrot.slane %v760, 4
        %v766 = vshrl.u32 %v634, 16
        %v768 = vrot.slane %v766, 7
        %v769 = vshll.u32 %v634, 16
        %v771 = vor.u32 %v768, %v769
        %v772 = vsel %vm654, %v764, %v771
        %v773 = vrot.slane %v768, 4
        %v775 = vshrl.u32 %v635, 16
        %v777 = vrot.slane %v775, 7
        %v778 = vshll.u32 %v635, 16
        %v780 = vor.u32 %v777, %v778
        %v781 = vrot.slane %v777, 4
        %v783 = vshrl.u32 %v636, 16
        %v785 = vrot.slane %v783, 7
        %v786 = vshll.u32 %v636, 16
        %v788 = vor.u32 %v785, %v786
        %v789 = vsel %vm654, %v781, %v788
        %v790 = vrot.slane %v785, 4
        %v792 = vshrl.u32 %v637, 16
        %v794 = vrot.slane %v792, 7
        %v795 = vshll.u32 %v637, 16
        %v797 = vor.u32 %v794, %v795
        %v798 = vrot.slane %v794, 4
        %v800 = vshrl.u32 %v638, 16
        %v802 = vrot.slane %v800, 7
        %v803 = vshll.u32 %v638, 16
        %v805 = vor.u32 %v802, %v803
        %v806 = vsel %vm654, %v798, %v805
        %v807 = vrot.slane %v802, 4
        %v809 = vshrl.u32 %v639, 16
        %v811 = vrot.slane %v809, 7
        %v812 = vshll.u32 %v639, 16
        %v814 = vor.u32 %v811, %v812
        %v815 = vrot.slane %v811, 4
        %v817 = vshrl.u32 %v640, 16
        %v819 = vrot.slane %v817, 7
        %v820 = vshll.u32 %v640, 16
        %v822 = vor.u32 %v819, %v820
        %v823 = vsel %vm654, %v815, %v822
        %v824 = vrot.slane %v819, 4
        %v826 = vshrl.u32 %v641, 16
        %v828 = vrot.slane %v826, 7
        %v829 = vshll.u32 %v641, 16
        %v831 = vor.u32 %v828, %v829
        %v832 = vrot.slane %v828, 4
        %v834 = vshrl.u32 %v642, 16
        %v836 = vrot.slane %v834, 7
        %v837 = vshll.u32 %v642, 16
        %v839 = vor.u32 %v836, %v837
        %v840 = vsel %vm654, %v832, %v839
        %v841 = vrot.slane %v836, 4
        %v843 = vshrl.u32 %v643, 16
        %v845 = vrot.slane %v843, 7
        %v846 = vshll.u32 %v643, 16
        %v848 = vor.u32 %v845, %v846
        %v849 = vrot.slane %v845, 4
        %v851 = vshrl.u32 %v644, 16
        %v853 = vrot.slane %v851, 7
        %v854 = vshll.u32 %v644, 16
        %v856 = vor.u32 %v853, %v854
        %v857 = vsel %vm654, %v849, %v856
        %v858 = vrot.slane %v853, 4
        %v860 = vshrl.u32 %v645, 16
        %v862 = vrot.slane %v860, 7
        %v863 = vshll.u32 %v645, 16
        %v865 = vor.u32 %v862, %v863
        %v866 = vrot.slane %v862, 4
        %v868 = vshrl.u32 %v646, 16
        %v870 = vrot.slane %v868, 7
        %v871 = vshll.u32 %v646, 16
        %v873 = vor.u32 %v870, %v871
        %v874 = vsel %vm654, %v866, %v873
        %v875 = vrot.slane %v870, 4
        %v877 = vshrl.u32 %v647, 16
        %v879 = vrot.slane %v877, 7
        %v880 = vshll.u32 %v647, 16
        %v882 = vor.u32 %v879, %v880
        %v883 = vrot.slane %v879, 4
        %v885 = vshrl.u32 %v648, 16
        %v887 = vrot.slane %v885, 7
        %v888 = vshll.u32 %v648, 16
        %v890 = vor.u32 %v887, %v888
        %v891 = vsel %vm654, %v883, %v890
        %v892 = vrot.slane %v887, 4
        %v894 = vshrl.u32 %v649, 16
        %v896 = vrot.slane %v894, 7
        %v897 = vshll.u32 %v649, 16
        %v899 = vor.u32 %v896, %v897
        %v900 = vrot.slane %v896, 4
        %v902 = vshrl.u32 %v650, 16
        %v904 = vrot.slane %v902, 7
        %v905 = vshll.u32 %v650, 16
        %v907 = vor.u32 %v904, %v905
        %v908 = vsel %vm654, %v900, %v907
        %v909 = vrot.slane %v904, 4
        %v911 = vshrl.u32 %v651, 16
        %v913 = vrot.slane %v911, 7
        %v914 = vshll.u32 %v651, 16
        %v916 = vor.u32 %v913, %v914
        %v917 = vrot.slane %v913, 4
        %v919 = vshrl.u32 %v652, 16
        %v921 = vrot.slane %v919, 7
        %v922 = vshll.u32 %v652, 16
        %v924 = vor.u32 %v921, %v922
        %v925 = vsel %vm654, %v917, %v924
        %v926 = vrot.slane %v921, 4
        %s975 = scalar_lea.vmem [#allocation2], 12
        %vm976 = vcmask 519168
        %vm977 = vmand %vm976, %vm445
        %v978 = vld [vmem:[%s975] sm:$0xf]
        %v979 = vsel %vm977, %v661, %v978
        %980 = vst [vmem:[%s975] sm:$0xf] %v979
        %981 = vst.msk [vmem:[%s975 + $0x4] sm:$0xf] %vm379, %v670
        %v982 = vld [vmem:[%s975 + $0x8] sm:$0x1]
        %v983 = vsel %vm386, %v671, %v982
        %984 = vst [vmem:[%s975 + $0x8] sm:$0x1] %v983
        %v985 = vld [vmem:[%s975 + $0xc] sm:$0xf]
        %v986 = vsel %vm977, %v678, %v985
        %987 = vst [vmem:[%s975 + $0xc] sm:$0xf] %v986
        %988 = vst.msk [vmem:[%s975 + $0x10] sm:$0xf] %vm379, %v687
        %v989 = vld [vmem:[%s975 + $0x14] sm:$0x1]
        %v990 = vsel %vm386, %v688, %v989
        %991 = vst [vmem:[%s975 + $0x14] sm:$0x1] %v990
        %v992 = vld [vmem:[%s975 + $0x18] sm:$0xf]
        %v993 = vsel %vm977, %v695, %v992
        %994 = vst [vmem:[%s975 + $0x18] sm:$0xf] %v993
        %995 = vst.msk [vmem:[%s975 + $0x1c] sm:$0xf] %vm379, %v704
        %v996 = vld [vmem:[%s975 + $0x20] sm:$0x1]
        %v997 = vsel %vm386, %v705, %v996
        %998 = vst [vmem:[%s975 + $0x20] sm:$0x1] %v997
        %v999 = vld [vmem:[%s975 + $0x24] sm:$0xf]
        %v1000 = vsel %vm977, %v712, %v999
        %1001 = vst [vmem:[%s975 + $0x24] sm:$0xf] %v1000
        %1002 = vst.msk [vmem:[%s975 + $0x28] sm:$0xf] %vm379, %v721
        %v1003 = vld [vmem:[%s975 + $0x2c] sm:$0x1]
        %v1004 = vsel %vm386, %v722, %v1003
        %1005 = vst [vmem:[%s975 + $0x2c] sm:$0x1] %v1004
        %v1006 = vld [vmem:[%s975 + $0x30] sm:$0xf]
        %v1007 = vsel %vm977, %v729, %v1006
        %1008 = vst [vmem:[%s975 + $0x30] sm:$0xf] %v1007
        %1009 = vst.msk [vmem:[%s975 + $0x34] sm:$0xf] %vm379, %v738
        %v1010 = vld [vmem:[%s975 + $0x38] sm:$0x1]
        %v1011 = vsel %vm386, %v739, %v1010
        %1012 = vst [vmem:[%s975 + $0x38] sm:$0x1] %v1011
        %v1013 = vld [vmem:[%s975 + $0x3c] sm:$0xf]
        %v1014 = vsel %vm977, %v746, %v1013
        %1015 = vst [vmem:[%s975 + $0x3c] sm:$0xf] %v1014
        %1016 = vst.msk [vmem:[%s975 + $0x40] sm:$0xf] %vm379, %v755
        %v1017 = vld [vmem:[%s975 + $0x44] sm:$0x1]
        %v1018 = vsel %vm386, %v756, %v1017
        %1019 = vst [vmem:[%s975 + $0x44] sm:$0x1] %v1018
        %v1020 = vld [vmem:[%s975 + $0x48] sm:$0xf]
        %v1021 = vsel %vm977, %v763, %v1020
        %1022 = vst [vmem:[%s975 + $0x48] sm:$0xf] %v1021
        %1023 = vst.msk [vmem:[%s975 + $0x4c] sm:$0xf] %vm379, %v772
        %v1024 = vld [vmem:[%s975 + $0x50] sm:$0x1]
        %v1025 = vsel %vm386, %v773, %v1024
        %1026 = vst [vmem:[%s975 + $0x50] sm:$0x1] %v1025
        %v1027 = vld [vmem:[%s975 + $0x54] sm:$0xf]
        %v1028 = vsel %vm977, %v780, %v1027
        %1029 = vst [vmem:[%s975 + $0x54] sm:$0xf] %v1028
        %1030 = vst.msk [vmem:[%s975 + $0x58] sm:$0xf] %vm379, %v789
        %v1031 = vld [vmem:[%s975 + $0x5c] sm:$0x1]
        %v1032 = vsel %vm386, %v790, %v1031
        %1033 = vst [vmem:[%s975 + $0x5c] sm:$0x1] %v1032
        %v1034 = vld [vmem:[%s975 + $0x60] sm:$0xf]
        %v1035 = vsel %vm977, %v797, %v1034
        %1036 = vst [vmem:[%s975 + $0x60] sm:$0xf] %v1035
        %1037 = vst.msk [vmem:[%s975 + $0x64] sm:$0xf] %vm379, %v806
        %v1038 = vld [vmem:[%s975 + $0x68] sm:$0x1]
        %v1039 = vsel %vm386, %v807, %v1038
        %1040 = vst [vmem:[%s975 + $0x68] sm:$0x1] %v1039
        %v1041 = vld [vmem:[%s975 + $0x6c] sm:$0xf]
        %v1042 = vsel %vm977, %v814, %v1041
        %1043 = vst [vmem:[%s975 + $0x6c] sm:$0xf] %v1042
        %1044 = vst.msk [vmem:[%s975 + $0x70] sm:$0xf] %vm379, %v823
        %v1045 = vld [vmem:[%s975 + $0x74] sm:$0x1]
        %v1046 = vsel %vm386, %v824, %v1045
        %1047 = vst [vmem:[%s975 + $0x74] sm:$0x1] %v1046
        %v1048 = vld [vmem:[%s975 + $0x78] sm:$0xf]
        %v1049 = vsel %vm977, %v831, %v1048
        %1050 = vst [vmem:[%s975 + $0x78] sm:$0xf] %v1049
        %1051 = vst.msk [vmem:[%s975 + $0x7c] sm:$0xf] %vm379, %v840
        %v1052 = vld [vmem:[%s975 + $0x80] sm:$0x1]
        %v1053 = vsel %vm386, %v841, %v1052
        %1054 = vst [vmem:[%s975 + $0x80] sm:$0x1] %v1053
        %v1055 = vld [vmem:[%s975 + $0x84] sm:$0xf]
        %v1056 = vsel %vm977, %v848, %v1055
        %1057 = vst [vmem:[%s975 + $0x84] sm:$0xf] %v1056
        %1058 = vst.msk [vmem:[%s975 + $0x88] sm:$0xf] %vm379, %v857
        %v1059 = vld [vmem:[%s975 + $0x8c] sm:$0x1]
        %v1060 = vsel %vm386, %v858, %v1059
        %1061 = vst [vmem:[%s975 + $0x8c] sm:$0x1] %v1060
        %v1062 = vld [vmem:[%s975 + $0x90] sm:$0xf]
        %v1063 = vsel %vm977, %v865, %v1062
        %1064 = vst [vmem:[%s975 + $0x90] sm:$0xf] %v1063
        %1065 = vst.msk [vmem:[%s975 + $0x94] sm:$0xf] %vm379, %v874
        %v1066 = vld [vmem:[%s975 + $0x98] sm:$0x1]
        %v1067 = vsel %vm386, %v875, %v1066
        %1068 = vst [vmem:[%s975 + $0x98] sm:$0x1] %v1067
        %v1069 = vld [vmem:[%s975 + $0x9c] sm:$0xf]
        %v1070 = vsel %vm977, %v882, %v1069
        %1071 = vst [vmem:[%s975 + $0x9c] sm:$0xf] %v1070
        %1072 = vst.msk [vmem:[%s975 + $0xa0] sm:$0xf] %vm379, %v891
        %v1073 = vld [vmem:[%s975 + $0xa4] sm:$0x1]
        %v1074 = vsel %vm386, %v892, %v1073
        %1075 = vst [vmem:[%s975 + $0xa4] sm:$0x1] %v1074
        %v1076 = vld [vmem:[%s975 + $0xa8] sm:$0xf]
        %v1077 = vsel %vm977, %v899, %v1076
        %1078 = vst [vmem:[%s975 + $0xa8] sm:$0xf] %v1077
        %1079 = vst.msk [vmem:[%s975 + $0xac] sm:$0xf] %vm379, %v908
        %v1080 = vld [vmem:[%s975 + $0xb0] sm:$0x1]
        %v1081 = vsel %vm386, %v909, %v1080
        %1082 = vst [vmem:[%s975 + $0xb0] sm:$0x1] %v1081
        %v1083 = vld [vmem:[%s975 + $0xb4] sm:$0xf]
        %v1084 = vsel %vm977, %v916, %v1083
        %1085 = vst [vmem:[%s975 + $0xb4] sm:$0xf] %v1084
        %1086 = vst.msk [vmem:[%s975 + $0xb8] sm:$0xf] %vm379, %v925
        %v1087 = vld [vmem:[%s975 + $0xbc] sm:$0x1]
        %v1088 = vsel %vm386, %v926, %v1087
        %1089 = vst [vmem:[%s975 + $0xbc] sm:$0x1] %v1088
        %v1090 = vld [vmem:[#allocation2] sm:$0xf]
        %v1091 = vld [vmem:[#allocation2 + $0x4] sm:$0xf]
        %v1092 = vld [vmem:[#allocation2 + $0xc] sm:$0xf]
        %v1093 = vld [vmem:[#allocation2 + $0x10] sm:$0xf]
        %v1094 = vld [vmem:[#allocation2 + $0x18] sm:$0xf]
        %v1095 = vld [vmem:[#allocation2 + $0x1c] sm:$0xf]
        %v1096 = vld [vmem:[#allocation2 + $0x24] sm:$0xf]
        %v1097 = vld [vmem:[#allocation2 + $0x28] sm:$0xf]
        %v1098 = vld [vmem:[#allocation2 + $0x30] sm:$0xf]
        %v1099 = vld [vmem:[#allocation2 + $0x34] sm:$0xf]
        %v1100 = vld [vmem:[#allocation2 + $0x3c] sm:$0xf]
        %v1101 = vld [vmem:[#allocation2 + $0x40] sm:$0xf]
        %v1102 = vld [vmem:[#allocation2 + $0x48] sm:$0xf]
        %v1103 = vld [vmem:[#allocation2 + $0x4c] sm:$0xf]
        %v1104 = vld [vmem:[#allocation2 + $0x54] sm:$0xf]
        %v1105 = vld [vmem:[#allocation2 + $0x58] sm:$0xf]
        %v1106 = vld [vmem:[#allocation2 + $0x60] sm:$0xf]
        %v1107 = vld [vmem:[#allocation2 + $0x64] sm:$0xf]
        %v1108 = vld [vmem:[#allocation2 + $0x6c] sm:$0xf]
        %v1109 = vld [vmem:[#allocation2 + $0x70] sm:$0xf]
        %v1110 = vld [vmem:[#allocation2 + $0x78] sm:$0xf]
        %v1111 = vld [vmem:[#allocation2 + $0x7c] sm:$0xf]
        %v1112 = vld [vmem:[#allocation2 + $0x84] sm:$0xf]
        %v1113 = vld [vmem:[#allocation2 + $0x88] sm:$0xf]
        %v1114 = vld [vmem:[#allocation2 + $0x90] sm:$0xf]
        %v1115 = vld [vmem:[#allocation2 + $0x94] sm:$0xf]
        %v1116 = vld [vmem:[#allocation2 + $0x9c] sm:$0xf]
        %v1117 = vld [vmem:[#allocation2 + $0xa0] sm:$0xf]
        %v1118 = vld [vmem:[#allocation2 + $0xa8] sm:$0xf]
        %v1119 = vld [vmem:[#allocation2 + $0xac] sm:$0xf]
        %v1120 = vld [vmem:[#allocation2 + $0xb4] sm:$0xf]
        %v1121 = vld [vmem:[#allocation2 + $0xb8] sm:$0xf]
        %v1122 = vld [vmem:[#allocation7] sm:$0xf]
        %v1123 = vld [vmem:[#allocation7 + $0x4] sm:$0xf]
        %v1124 = vld [vmem:[#allocation7 + $0x8] sm:$0xf]
        %v1125 = vld [vmem:[#allocation7 + $0xc] sm:$0xf]
        %v1126 = vld [vmem:[#allocation7 + $0x10] sm:$0xf]
        %v1127 = vld [vmem:[#allocation7 + $0x14] sm:$0xf]
        %v1128 = vld [vmem:[#allocation7 + $0x18] sm:$0xf]
        %v1129 = vld [vmem:[#allocation7 + $0x1c] sm:$0xf]
        %v1130 = vld [vmem:[#allocation2 + $0x8] sm:$0x1]
        %v1131 = vld [vmem:[#allocation2 + $0x14] sm:$0x1]
        %v1132 = vld [vmem:[#allocation2 + $0x20] sm:$0x1]
        %v1133 = vld [vmem:[#allocation2 + $0x2c] sm:$0x1]
        %v1134 = vld [vmem:[#allocation2 + $0x38] sm:$0x1]
        %v1135 = vld [vmem:[#allocation2 + $0x44] sm:$0x1]
        %v1136 = vld [vmem:[#allocation2 + $0x50] sm:$0x1]
        %v1137 = vld [vmem:[#allocation2 + $0x5c] sm:$0x1]
        %v1138 = vld [vmem:[#allocation2 + $0x68] sm:$0x1]
        %v1139 = vld [vmem:[#allocation2 + $0x74] sm:$0x1]
        %v1140 = vld [vmem:[#allocation2 + $0x80] sm:$0x1]
        %v1141 = vld [vmem:[#allocation2 + $0x8c] sm:$0x1]
        %v1142 = vld [vmem:[#allocation2 + $0x98] sm:$0x1]
        %v1143 = vld [vmem:[#allocation2 + $0xa4] sm:$0x1]
        %v1144 = vld [vmem:[#allocation2 + $0xb0] sm:$0x1]
        %v1145 = vld [vmem:[#allocation2 + $0xbc] sm:$0x1]
        %vm1146 = vsmask.f32 3328
        %vm1147 = vsmask.f32 7440
        %vm1148 = vmor %vm1146, %vm1147
        %v1150 = vshrl.u32 %v1090, 16
        %v1152 = vrot.slane %v1150, 4
        %v1153 = vshll.u32 %v1090, 16
        %v1155 = vrot.slane %v1153, 5
        %v1156 = vor.u32 %v1152, %v1155
        %v1157 = vrot.slane %v1156, 4
        %v1159 = vshll.u32 %v1091, 16
        %v1161 = vrot.slane %v1159, 5
        %v1162 = vsel %vm1148, %v1157, %v1161
        %v1163 = vshrl.u32 %v1091, 16
        %v1165 = vrot.slane %v1163, 4
        %v1166 = vor.u32 %v1165, %v1161
        %v1167 = vrot.slane %v1166, 4
        %v1169 = vshll.u32 %v1130, 16
        %v1171 = vrot.slane %v1169, 5
        %v1172 = vsel %vm1148, %v1167, %v1171
        %v1174 = vshrl.u32 %v1092, 16
        %v1176 = vrot.slane %v1174, 4
        %v1177 = vshll.u32 %v1092, 16
        %v1179 = vrot.slane %v1177, 5
        %v1180 = vor.u32 %v1176, %v1179
        %v1181 = vrot.slane %v1180, 4
        %v1183 = vshll.u32 %v1093, 16
        %v1185 = vrot.slane %v1183, 5
        %v1186 = vsel %vm1148, %v1181, %v1185
        %v1187 = vshrl.u32 %v1093, 16
        %v1189 = vrot.slane %v1187, 4
        %v1190 = vor.u32 %v1189, %v1185
        %v1191 = vrot.slane %v1190, 4
        %v1193 = vshll.u32 %v1131, 16
        %v1195 = vrot.slane %v1193, 5
        %v1196 = vsel %vm1148, %v1191, %v1195
        %v1198 = vshrl.u32 %v1094, 16
        %v1200 = vrot.slane %v1198, 4
        %v1201 = vshll.u32 %v1094, 16
        %v1203 = vrot.slane %v1201, 5
        %v1204 = vor.u32 %v1200, %v1203
        %v1205 = vrot.slane %v1204, 4
        %v1207 = vshll.u32 %v1095, 16
        %v1209 = vrot.slane %v1207, 5
        %v1210 = vsel %vm1148, %v1205, %v1209
        %v1211 = vshrl.u32 %v1095, 16
        %v1213 = vrot.slane %v1211, 4
        %v1214 = vor.u32 %v1213, %v1209
        %v1215 = vrot.slane %v1214, 4
        %v1217 = vshll.u32 %v1132, 16
        %v1219 = vrot.slane %v1217, 5
        %v1220 = vsel %vm1148, %v1215, %v1219
        %v1222 = vshrl.u32 %v1096, 16
        %v1224 = vrot.slane %v1222, 4
        %v1225 = vshll.u32 %v1096, 16
        %v1227 = vrot.slane %v1225, 5
        %v1228 = vor.u32 %v1224, %v1227
        %v1229 = vrot.slane %v1228, 4
        %v1231 = vshll.u32 %v1097, 16
        %v1233 = vrot.slane %v1231, 5
        %v1234 = vsel %vm1148, %v1229, %v1233
        %v1235 = vshrl.u32 %v1097, 16
        %v1237 = vrot.slane %v1235, 4
        %v1238 = vor.u32 %v1237, %v1233
        %v1239 = vrot.slane %v1238, 4
        %v1241 = vshll.u32 %v1133, 16
        %v1243 = vrot.slane %v1241, 5
        %v1244 = vsel %vm1148, %v1239, %v1243
        %v1246 = vshrl.u32 %v1098, 16
        %v1248 = vrot.slane %v1246, 4
        %v1249 = vshll.u32 %v1098, 16
        %v1251 = vrot.slane %v1249, 5
        %v1252 = vor.u32 %v1248, %v1251
        %v1253 = vrot.slane %v1252, 4
        %v1255 = vshll.u32 %v1099, 16
        %v1257 = vrot.slane %v1255, 5
        %v1258 = vsel %vm1148, %v1253, %v1257
        %v1259 = vshrl.u32 %v1099, 16
        %v1261 = vrot.slane %v1259, 4
        %v1262 = vor.u32 %v1261, %v1257
        %v1263 = vrot.slane %v1262, 4
        %v1265 = vshll.u32 %v1134, 16
        %v1267 = vrot.slane %v1265, 5
        %v1268 = vsel %vm1148, %v1263, %v1267
        %v1270 = vshrl.u32 %v1100, 16
        %v1272 = vrot.slane %v1270, 4
        %v1273 = vshll.u32 %v1100, 16
        %v1275 = vrot.slane %v1273, 5
        %v1276 = vor.u32 %v1272, %v1275
        %v1277 = vrot.slane %v1276, 4
        %v1279 = vshll.u32 %v1101, 16
        %v1281 = vrot.slane %v1279, 5
        %v1282 = vsel %vm1148, %v1277, %v1281
        %v1283 = vshrl.u32 %v1101, 16
        %v1285 = vrot.slane %v1283, 4
        %v1286 = vor.u32 %v1285, %v1281
        %v1287 = vrot.slane %v1286, 4
        %v1289 = vshll.u32 %v1135, 16
        %v1291 = vrot.slane %v1289, 5
        %v1292 = vsel %vm1148, %v1287, %v1291
        %v1294 = vshrl.u32 %v1102, 16
        %v1296 = vrot.slane %v1294, 4
        %v1297 = vshll.u32 %v1102, 16
        %v1299 = vrot.slane %v1297, 5
        %v1300 = vor.u32 %v1296, %v1299
        %v1301 = vrot.slane %v1300, 4
        %v1303 = vshll.u32 %v1103, 16
        %v1305 = vrot.slane %v1303, 5
        %v1306 = vsel %vm1148, %v1301, %v1305
        %v1307 = vshrl.u32 %v1103, 16
        %v1309 = vrot.slane %v1307, 4
        %v1310 = vor.u32 %v1309, %v1305
        %v1311 = vrot.slane %v1310, 4
        %v1313 = vshll.u32 %v1136, 16
        %v1315 = vrot.slane %v1313, 5
        %v1316 = vsel %vm1148, %v1311, %v1315
        %v1318 = vshrl.u32 %v1104, 16
        %v1320 = vrot.slane %v1318, 4
        %v1321 = vshll.u32 %v1104, 16
        %v1323 = vrot.slane %v1321, 5
        %v1324 = vor.u32 %v1320, %v1323
        %v1325 = vrot.slane %v1324, 4
        %v1327 = vshll.u32 %v1105, 16
        %v1329 = vrot.slane %v1327, 5
        %v1330 = vsel %vm1148, %v1325, %v1329
        %v1331 = vshrl.u32 %v1105, 16
        %v1333 = vrot.slane %v1331, 4
        %v1334 = vor.u32 %v1333, %v1329
        %v1335 = vrot.slane %v1334, 4
        %v1337 = vshll.u32 %v1137, 16
        %v1339 = vrot.slane %v1337, 5
        %v1340 = vsel %vm1148, %v1335, %v1339
        %v1342 = vshrl.u32 %v1106, 16
        %v1344 = vrot.slane %v1342, 4
        %v1345 = vshll.u32 %v1106, 16
        %v1347 = vrot.slane %v1345, 5
        %v1348 = vor.u32 %v1344, %v1347
        %v1349 = vrot.slane %v1348, 4
        %v1351 = vshll.u32 %v1107, 16
        %v1353 = vrot.slane %v1351, 5
        %v1354 = vsel %vm1148, %v1349, %v1353
        %v1355 = vshrl.u32 %v1107, 16
        %v1357 = vrot.slane %v1355, 4
        %v1358 = vor.u32 %v1357, %v1353
        %v1359 = vrot.slane %v1358, 4
        %v1361 = vshll.u32 %v1138, 16
        %v1363 = vrot.slane %v1361, 5
        %v1364 = vsel %vm1148, %v1359, %v1363
        %v1366 = vshrl.u32 %v1108, 16
        %v1368 = vrot.slane %v1366, 4
        %v1369 = vshll.u32 %v1108, 16
        %v1371 = vrot.slane %v1369, 5
        %v1372 = vor.u32 %v1368, %v1371
        %v1373 = vrot.slane %v1372, 4
        %v1375 = vshll.u32 %v1109, 16
        %v1377 = vrot.slane %v1375, 5
        %v1378 = vsel %vm1148, %v1373, %v1377
        %v1379 = vshrl.u32 %v1109, 16
        %v1381 = vrot.slane %v1379, 4
        %v1382 = vor.u32 %v1381, %v1377
        %v1383 = vrot.slane %v1382, 4
        %v1385 = vshll.u32 %v1139, 16
        %v1387 = vrot.slane %v1385, 5
        %v1388 = vsel %vm1148, %v1383, %v1387
        %v1390 = vshrl.u32 %v1110, 16
        %v1392 = vrot.slane %v1390, 4
        %v1393 = vshll.u32 %v1110, 16
        %v1395 = vrot.slane %v1393, 5
        %v1396 = vor.u32 %v1392, %v1395
        %v1397 = vrot.slane %v1396, 4
        %v1399 = vshll.u32 %v1111, 16
        %v1401 = vrot.slane %v1399, 5
        %v1402 = vsel %vm1148, %v1397, %v1401
        %v1403 = vshrl.u32 %v1111, 16
        %v1405 = vrot.slane %v1403, 4
        %v1406 = vor.u32 %v1405, %v1401
        %v1407 = vrot.slane %v1406, 4
        %v1409 = vshll.u32 %v1140, 16
        %v1411 = vrot.slane %v1409, 5
        %v1412 = vsel %vm1148, %v1407, %v1411
        %v1414 = vshrl.u32 %v1112, 16
        %v1416 = vrot.slane %v1414, 4
        %v1417 = vshll.u32 %v1112, 16
        %v1419 = vrot.slane %v1417, 5
        %v1420 = vor.u32 %v1416, %v1419
        %v1421 = vrot.slane %v1420, 4
        %v1423 = vshll.u32 %v1113, 16
        %v1425 = vrot.slane %v1423, 5
        %v1426 = vsel %vm1148, %v1421, %v1425
        %v1427 = vshrl.u32 %v1113, 16
        %v1429 = vrot.slane %v1427, 4
        %v1430 = vor.u32 %v1429, %v1425
        %v1431 = vrot.slane %v1430, 4
        %v1433 = vshll.u32 %v1141, 16
        %v1435 = vrot.slane %v1433, 5
        %v1436 = vsel %vm1148, %v1431, %v1435
        %v1438 = vshrl.u32 %v1114, 16
        %v1440 = vrot.slane %v1438, 4
        %v1441 = vshll.u32 %v1114, 16
        %v1443 = vrot.slane %v1441, 5
        %v1444 = vor.u32 %v1440, %v1443
        %v1445 = vrot.slane %v1444, 4
        %v1447 = vshll.u32 %v1115, 16
        %v1449 = vrot.slane %v1447, 5
        %v1450 = vsel %vm1148, %v1445, %v1449
        %v1451 = vshrl.u32 %v1115, 16
        %v1453 = vrot.slane %v1451, 4
        %v1454 = vor.u32 %v1453, %v1449
        %v1455 = vrot.slane %v1454, 4
        %v1457 = vshll.u32 %v1142, 16
        %v1459 = vrot.slane %v1457, 5
        %v1460 = vsel %vm1148, %v1455, %v1459
        %v1462 = vshrl.u32 %v1116, 16
        %v1464 = vrot.slane %v1462, 4
        %v1465 = vshll.u32 %v1116, 16
        %v1467 = vrot.slane %v1465, 5
        %v1468 = vor.u32 %v1464, %v1467
        %v1469 = vrot.slane %v1468, 4
        %v1471 = vshll.u32 %v1117, 16
        %v1473 = vrot.slane %v1471, 5
        %v1474 = vsel %vm1148, %v1469, %v1473
        %v1475 = vshrl.u32 %v1117, 16
        %v1477 = vrot.slane %v1475, 4
        %v1478 = vor.u32 %v1477, %v1473
        %v1479 = vrot.slane %v1478, 4
        %v1481 = vshll.u32 %v1143, 16
        %v1483 = vrot.slane %v1481, 5
        %v1484 = vsel %vm1148, %v1479, %v1483
        %v1486 = vshrl.u32 %v1118, 16
        %v1488 = vrot.slane %v1486, 4
        %v1489 = vshll.u32 %v1118, 16
        %v1491 = vrot.slane %v1489, 5
        %v1492 = vor.u32 %v1488, %v1491
        %v1493 = vrot.slane %v1492, 4
        %v1495 = vshll.u32 %v1119, 16
        %v1497 = vrot.slane %v1495, 5
        %v1498 = vsel %vm1148, %v1493, %v1497
        %v1499 = vshrl.u32 %v1119, 16
        %v1501 = vrot.slane %v1499, 4
        %v1502 = vor.u32 %v1501, %v1497
        %v1503 = vrot.slane %v1502, 4
        %v1505 = vshll.u32 %v1144, 16
        %v1507 = vrot.slane %v1505, 5
        %v1508 = vsel %vm1148, %v1503, %v1507
        %v1510 = vshrl.u32 %v1120, 16
        %v1512 = vrot.slane %v1510, 4
        %v1513 = vshll.u32 %v1120, 16
        %v1515 = vrot.slane %v1513, 5
        %v1516 = vor.u32 %v1512, %v1515
        %v1517 = vrot.slane %v1516, 4
        %v1519 = vshll.u32 %v1121, 16
        %v1521 = vrot.slane %v1519, 5
        %v1522 = vsel %vm1148, %v1517, %v1521
        %v1523 = vshrl.u32 %v1121, 16
        %v1525 = vrot.slane %v1523, 4
        %v1526 = vor.u32 %v1525, %v1521
        %v1527 = vrot.slane %v1526, 4
        %v1529 = vshll.u32 %v1145, 16
        %v1531 = vrot.slane %v1529, 5
        %v1532 = vsel %vm1148, %v1527, %v1531
        %s1533 = scalar_lea.vmem [#allocation7], 32
        %v1534 = vld [vmem:[%s1533] sm:$0xf]
        %v1535 = vld [vmem:[%s1533 + $0x4] sm:$0xf]
        %v1536 = vld [vmem:[%s1533 + $0x8] sm:$0xf]
        %v1537 = vld [vmem:[%s1533 + $0xc] sm:$0xf]
        %v1538 = vld [vmem:[%s1533 + $0x10] sm:$0xf]
        %v1539 = vld [vmem:[%s1533 + $0x14] sm:$0xf]
        %v1540 = vld [vmem:[%s1533 + $0x18] sm:$0xf]
        %v1541 = vld [vmem:[%s1533 + $0x1c] sm:$0xf]
        %v1542 = vunpack.c.l.b16 %v1162
        %v1543 = vunpack.c.l.b16 %v1172
        %v1544 = vunpack.c.l.b16 %v1186
        %v1545 = vunpack.c.l.b16 %v1196
        %v1546 = vunpack.c.l.b16 %v1210
        %v1547 = vunpack.c.l.b16 %v1220
        %v1548 = vunpack.c.l.b16 %v1234
        %v1549 = vunpack.c.l.b16 %v1244
        %v1550 = vunpack.c.l.b16 %v1258
        %v1551 = vunpack.c.l.b16 %v1268
        %v1552 = vunpack.c.l.b16 %v1282
        %v1553 = vunpack.c.l.b16 %v1292
        %v1554 = vunpack.c.l.b16 %v1306
        %v1555 = vunpack.c.l.b16 %v1316
        %v1556 = vunpack.c.l.b16 %v1330
        %v1557 = vunpack.c.l.b16 %v1340
        %v1558 = vunpack.c.l.b16 %v1354
        %v1559 = vunpack.c.l.b16 %v1364
        %v1560 = vunpack.c.l.b16 %v1378
        %v1561 = vunpack.c.l.b16 %v1388
        %v1562 = vunpack.c.l.b16 %v1402
        %v1563 = vunpack.c.l.b16 %v1412
        %v1564 = vunpack.c.l.b16 %v1426
        %v1565 = vunpack.c.l.b16 %v1436
        %v1566 = vunpack.c.l.b16 %v1450
        %v1567 = vunpack.c.l.b16 %v1460
        %v1568 = vunpack.c.l.b16 %v1474
        %v1569 = vunpack.c.l.b16 %v1484
        %v1570 = vunpack.c.l.b16 %v1498
        %v1571 = vunpack.c.l.b16 %v1508
        %v1572 = vunpack.c.l.b16 %v1522
        %v1573 = vunpack.c.l.b16 %v1532
        %v1574 = vpack.c.b16 %v1543, %v1542
        %v1575 = vpack.c.b16 %v1545, %v1544
        %v1576 = vpack.c.b16 %v1547, %v1546
        %v1577 = vpack.c.b16 %v1549, %v1548
        %v1578 = vpack.c.b16 %v1551, %v1550
        %v1579 = vpack.c.b16 %v1553, %v1552
        %v1580 = vpack.c.b16 %v1555, %v1554
        %v1581 = vpack.c.b16 %v1557, %v1556
        %v1582 = vpack.c.b16 %v1559, %v1558
        %v1583 = vpack.c.b16 %v1561, %v1560
        %v1584 = vpack.c.b16 %v1563, %v1562
        %v1585 = vpack.c.b16 %v1565, %v1564
        %v1586 = vpack.c.b16 %v1567, %v1566
        %v1587 = vpack.c.b16 %v1569, %v1568
        %v1588 = vpack.c.b16 %v1571, %v1570
        %v1589 = vpack.c.b16 %v1573, %v1572
        %v1598 = vunpack.c.l.b16 %v1534
        %v1599 = vunpack.c.l.b16 %v1535
        %v1600 = vunpack.c.l.b16 %v1536
        %v1601 = vunpack.c.l.b16 %v1537
        %v1602 = vunpack.c.l.b16 %v1538
        %v1603 = vunpack.c.l.b16 %v1539
        %v1604 = vunpack.c.l.b16 %v1540
        %v1605 = vunpack.c.l.b16 %v1541
        %v1606 = vpack.c.b16 %v1599, %v1598
        %v1607 = vpack.c.b16 %v1601, %v1600
        %v1608 = vpack.c.b16 %v1603, %v1602
        %v1609 = vpack.c.b16 %v1605, %v1604
        %vm1614 = vcmask 523264
        %v1616 = vsel %vm1614, %v1574, 0
        %v1619 = vsel %vm1614, %v1575, 0
        %v1622 = vsel %vm1614, %v1576, 0
        %v1625 = vsel %vm1614, %v1577, 0
        %v1628 = vsel %vm1614, %v1578, 0
        %v1631 = vsel %vm1614, %v1579, 0
        %v1634 = vsel %vm1614, %v1580, 0
        %v1637 = vsel %vm1614, %v1581, 0
        %v1640 = vsel %vm1614, %v1582, 0
        %v1643 = vsel %vm1614, %v1583, 0
        %v1646 = vsel %vm1614, %v1584, 0
        %v1649 = vsel %vm1614, %v1585, 0
        %v1652 = vsel %vm1614, %v1586, 0
        %v1655 = vsel %vm1614, %v1587, 0
        %v1658 = vsel %vm1614, %v1588, 0
        %v1661 = vsel %vm1614, %v1589, 0
        %1663 = vmatprep.subr.bf16.mxu0 0
        %1664 = vmatpush1.bf16.msra.mxu0 %v1606
        %1665 = vmatprep.subr.bf16.mxu0 0
        %1666 = vmatpush1.bf16.msra.mxu0 %v1607
        %1667 = vmatprep.subr.bf16.mxu0 0
        %1668 = vmatpush1.bf16.msra.mxu0 %v1608
        %1669 = vmatprep.subr.bf16.mxu0 0
        %1670 = vmatpush1.bf16.msra.mxu0 %v1609
        %1671 = vmatprep.subr.bf16.mxu0 0
        %1672 = vmatpush1.bf16.msra.mxu0 0
        %1673 = vmatprep.subr.bf16.mxu0 0
        %1674 = vmatpush1.bf16.msra.mxu0 0
        %1675 = vmatprep.subr.bf16.mxu0 0
        %1676 = vmatpush1.bf16.msra.mxu0 0
        %1677 = vmatprep.subr.bf16.mxu0 0
        %1678 = vmatpush1.bf16.msra.mxu0 0
        %1679 = vmatprep.subr.bf16.mxu0 0
        %1680 = vmatpush1.bf16.msra.mxu0 0
        %1681 = vmatprep.subr.bf16.mxu0 0
        %1682 = vmatpush1.bf16.msra.mxu0 0
        %1683 = vmatprep.subr.bf16.mxu0 0
        %1684 = vmatpush1.bf16.msra.mxu0 0
        %1685 = vmatprep.subr.bf16.mxu0 0
        %1686 = vmatpush1.bf16.msra.mxu0 0
        %1687 = vmatprep.subr.bf16.mxu0 0
        %1688 = vmatpush1.bf16.msra.mxu0 0
        %1689 = vmatprep.subr.bf16.mxu0 0
        %1690 = vmatpush1.bf16.msra.mxu0 0
        %1691 = vmatprep.subr.bf16.mxu0 0
        %1692 = vmatpush1.bf16.msra.mxu0 0
        %1693 = vmatprep.subr.bf16.mxu0 0
        %1694 = vmatpush1.bf16.msra.mxu0 0
        %1695 = vmatprep.mubr.bf16.mxu0 0
        %1696 = vmatmul.mubr.bf16.gmra.mrb[0].mxu0 %v1616
        %v1697 = vpop.f32.mrb[0].mxu0
        %v1698 = vadd.f32 0.0, %v1697
        %v1699 = vpop.f32.mrb[0].mxu0
        %v1700 = vpop.f32.mrb[0].mxu0
        %v1701 = vadd.f32 0.0, %v1700
        %v1702 = vpop.f32.mrb[0].mxu0
        %1703 = vmatprep.mubr.bf16.mxu0 0
        %1704 = vmatmul.mubr.bf16.gmra.mrb[0].mxu0 %v1619
        %v1705 = vpop.f32.mrb[0].mxu0
        %v1706 = vadd.f32 0.0, %v1705
        %v1707 = vpop.f32.mrb[0].mxu0
        %v1708 = vpop.f32.mrb[0].mxu0
        %v1709 = vadd.f32 0.0, %v1708
        %v1710 = vpop.f32.mrb[0].mxu0
        %1711 = vmatprep.mubr.bf16.mxu0 0
        %1712 = vmatmul.mubr.bf16.gmra.mrb[0].mxu0 %v1622
        %v1713 = vpop.f32.mrb[0].mxu0
        %v1714 = vadd.f32 0.0, %v1713
        %v1715 = vpop.f32.mrb[0].mxu0
        %v1716 = vpop.f32.mrb[0].mxu0
        %v1717 = vadd.f32 0.0, %v1716
        %v1718 = vpop.f32.mrb[0].mxu0
        %1719 = vmatprep.mubr.bf16.mxu0 0
        %1720 = vmatmul.mubr.bf16.gmra.mrb[0].mxu0 %v1625
        %v1721 = vpop.f32.mrb[0].mxu0
        %v1722 = vadd.f32 0.0, %v1721
        %v1723 = vpop.f32.mrb[0].mxu0
        %v1724 = vpop.f32.mrb[0].mxu0
        %v1725 = vadd.f32 0.0, %v1724
        %v1726 = vpop.f32.mrb[0].mxu0
        %1727 = vmatprep.mubr.bf16.mxu0 0
        %1728 = vmatmul.mubr.bf16.gmra.mrb[0].mxu0 %v1628
        %v1729 = vpop.f32.mrb[0].mxu0
        %v1730 = vadd.f32 0.0, %v1729
        %v1731 = vpop.f32.mrb[0].mxu0
        %v1732 = vpop.f32.mrb[0].mxu0
        %v1733 = vadd.f32 0.0, %v1732
        %v1734 = vpop.f32.mrb[0].mxu0
        %1735 = vmatprep.mubr.bf16.mxu0 0
        %1736 = vmatmul.mubr.bf16.gmra.mrb[0].mxu0 %v1631
        %v1737 = vpop.f32.mrb[0].mxu0
        %v1738 = vadd.f32 0.0, %v1737
        %v1739 = vpop.f32.mrb[0].mxu0
        %v1740 = vpop.f32.mrb[0].mxu0
        %v1741 = vadd.f32 0.0, %v1740
        %v1742 = vpop.f32.mrb[0].mxu0
        %1743 = vmatprep.mubr.bf16.mxu0 0
        %1744 = vmatmul.mubr.bf16.gmra.mrb[0].mxu0 %v1634
        %v1745 = vpop.f32.mrb[0].mxu0
        %v1746 = vadd.f32 0.0, %v1745
        %v1747 = vpop.f32.mrb[0].mxu0
        %v1748 = vpop.f32.mrb[0].mxu0
        %v1749 = vadd.f32 0.0, %v1748
        %v1750 = vpop.f32.mrb[0].mxu0
        %1751 = vmatprep.mubr.bf16.mxu0 0
        %1752 = vmatmul.mubr.bf16.gmra.mrb[0].mxu0 %v1637
        %v1753 = vpop.f32.mrb[0].mxu0
        %v1754 = vadd.f32 0.0, %v1753
        %v1755 = vpop.f32.mrb[0].mxu0
        %v1756 = vpop.f32.mrb[0].mxu0
        %v1757 = vadd.f32 0.0, %v1756
        %v1758 = vpop.f32.mrb[0].mxu0
        %1759 = vmatprep.mubr.bf16.mxu0 0
        %1760 = vmatmul.mubr.bf16.gmra.mrb[0].mxu0 %v1640
        %v1761 = vpop.f32.mrb[0].mxu0
        %v1762 = vadd.f32 0.0, %v1761
        %v1763 = vpop.f32.mrb[0].mxu0
        %v1764 = vpop.f32.mrb[0].mxu0
        %v1765 = vadd.f32 0.0, %v1764
        %v1766 = vpop.f32.mrb[0].mxu0
        %1767 = vmatprep.mubr.bf16.mxu0 0
        %1768 = vmatmul.mubr.bf16.gmra.mrb[0].mxu0 %v1643
        %v1769 = vpop.f32.mrb[0].mxu0
        %v1770 = vadd.f32 0.0, %v1769
        %v1771 = vpop.f32.mrb[0].mxu0
        %v1772 = vpop.f32.mrb[0].mxu0
        %v1773 = vadd.f32 0.0, %v1772
        %v1774 = vpop.f32.mrb[0].mxu0
        %1775 = vmatprep.mubr.bf16.mxu0 0
        %1776 = vmatmul.mubr.bf16.gmra.mrb[0].mxu0 %v1646
        %v1777 = vpop.f32.mrb[0].mxu0
        %v1778 = vadd.f32 0.0, %v1777
        %v1779 = vpop.f32.mrb[0].mxu0
        %v1780 = vpop.f32.mrb[0].mxu0
        %v1781 = vadd.f32 0.0, %v1780
        %v1782 = vpop.f32.mrb[0].mxu0
        %1783 = vmatprep.mubr.bf16.mxu0 0
        %1784 = vmatmul.mubr.bf16.gmra.mrb[0].mxu0 %v1649
        %v1785 = vpop.f32.mrb[0].mxu0
        %v1786 = vadd.f32 0.0, %v1785
        %v1787 = vpop.f32.mrb[0].mxu0
        %v1788 = vpop.f32.mrb[0].mxu0
        %v1789 = vadd.f32 0.0, %v1788
        %v1790 = vpop.f32.mrb[0].mxu0
        %1791 = vmatprep.mubr.bf16.mxu0 0
        %1792 = vmatmul.mubr.bf16.gmra.mrb[0].mxu0 %v1652
        %v1793 = vpop.f32.mrb[0].mxu0
        %v1794 = vadd.f32 0.0, %v1793
        %v1795 = vpop.f32.mrb[0].mxu0
        %v1796 = vpop.f32.mrb[0].mxu0
        %v1797 = vadd.f32 0.0, %v1796
        %v1798 = vpop.f32.mrb[0].mxu0
        %1799 = vmatprep.mubr.bf16.mxu0 0
        %1800 = vmatmul.mubr.bf16.gmra.mrb[0].mxu0 %v1655
        %v1801 = vpop.f32.mrb[0].mxu0
        %v1802 = vadd.f32 0.0, %v1801
        %v1803 = vpop.f32.mrb[0].mxu0
        %v1804 = vpop.f32.mrb[0].mxu0
        %v1805 = vadd.f32 0.0, %v1804
        %v1806 = vpop.f32.mrb[0].mxu0
        %1807 = vmatprep.mubr.bf16.mxu0 0
        %1808 = vmatmul.mubr.bf16.gmra.mrb[0].mxu0 %v1658
        %v1809 = vpop.f32.mrb[0].mxu0
        %v1810 = vadd.f32 0.0, %v1809
        %v1811 = vpop.f32.mrb[0].mxu0
        %v1812 = vpop.f32.mrb[0].mxu0
        %v1813 = vadd.f32 0.0, %v1812
        %v1814 = vpop.f32.mrb[0].mxu0
        %1815 = vmatprep.mubr.bf16.mxu0 0
        %1816 = vmatmul.mubr.bf16.gmra.mrb[0].mxu0 %v1661
        %v1817 = vpop.f32.mrb[0].mxu0
        %v1818 = vadd.f32 0.0, %v1817
        %v1819 = vpop.f32.mrb[0].mxu0
        %v1820 = vpop.f32.mrb[0].mxu0
        %v1821 = vadd.f32 0.0, %v1820
        %v1822 = vpop.f32.mrb[0].mxu0
        %1823 = vdwg.mxu0
        %v1856 = vunpack.c.l.b16 %v1090
        %v1857 = vunpack.c.l.b16 %v1091
        %v1858 = vunpack.c.l.b16 %v1092
        %v1859 = vunpack.c.l.b16 %v1093
        %v1860 = vunpack.c.l.b16 %v1094
        %v1861 = vunpack.c.l.b16 %v1095
        %v1862 = vunpack.c.l.b16 %v1096
        %v1863 = vunpack.c.l.b16 %v1097
        %v1864 = vunpack.c.l.b16 %v1098
        %v1865 = vunpack.c.l.b16 %v1099
        %v1866 = vunpack.c.l.b16 %v1100
        %v1867 = vunpack.c.l.b16 %v1101
        %v1868 = vunpack.c.l.b16 %v1102
        %v1869 = vunpack.c.l.b16 %v1103
        %v1870 = vunpack.c.l.b16 %v1104
        %v1871 = vunpack.c.l.b16 %v1105
        %v1872 = vunpack.c.l.b16 %v1106
        %v1873 = vunpack.c.l.b16 %v1107
        %v1874 = vunpack.c.l.b16 %v1108
        %v1875 = vunpack.c.l.b16 %v1109
        %v1876 = vunpack.c.l.b16 %v1110
        %v1877 = vunpack.c.l.b16 %v1111
        %v1878 = vunpack.c.l.b16 %v1112
        %v1879 = vunpack.c.l.b16 %v1113
        %v1880 = vunpack.c.l.b16 %v1114
        %v1881 = vunpack.c.l.b16 %v1115
        %v1882 = vunpack.c.l.b16 %v1116
        %v1883 = vunpack.c.l.b16 %v1117
        %v1884 = vunpack.c.l.b16 %v1118
        %v1885 = vunpack.c.l.b16 %v1119
        %v1886 = vunpack.c.l.b16 %v1120
        %v1887 = vunpack.c.l.b16 %v1121
        %v1888 = vpack.c.b16 %v1857, %v1856
        %v1889 = vpack.c.b16 %v1859, %v1858
        %v1890 = vpack.c.b16 %v1861, %v1860
        %v1891 = vpack.c.b16 %v1863, %v1862
        %v1892 = vpack.c.b16 %v1865, %v1864
        %v1893 = vpack.c.b16 %v1867, %v1866
        %v1894 = vpack.c.b16 %v1869, %v1868
        %v1895 = vpack.c.b16 %v1871, %v1870
        %v1896 = vpack.c.b16 %v1873, %v1872
        %v1897 = vpack.c.b16 %v1875, %v1874
        %v1898 = vpack.c.b16 %v1877, %v1876
        %v1899 = vpack.c.b16 %v1879, %v1878
        %v1900 = vpack.c.b16 %v1881, %v1880
        %v1901 = vpack.c.b16 %v1883, %v1882
        %v1902 = vpack.c.b16 %v1885, %v1884
        %v1903 = vpack.c.b16 %v1887, %v1886
        %v1912 = vunpack.c.l.b16 %v1122
        %v1913 = vunpack.c.l.b16 %v1123
        %v1914 = vunpack.c.l.b16 %v1124
        %v1915 = vunpack.c.l.b16 %v1125
        %v1916 = vunpack.c.l.b16 %v1126
        %v1917 = vunpack.c.l.b16 %v1127
        %v1918 = vunpack.c.l.b16 %v1128
        %v1919 = vunpack.c.l.b16 %v1129
        %v1920 = vpack.c.b16 %v1913, %v1912
        %v1921 = vpack.c.b16 %v1915, %v1914
        %v1922 = vpack.c.b16 %v1917, %v1916
        %v1923 = vpack.c.b16 %v1919, %v1918
        %v1929 = vsel %vm1614, %v1888, 0
        %v1932 = vsel %vm1614, %v1889, 0
        %v1935 = vsel %vm1614, %v1890, 0
        %v1938 = vsel %vm1614, %v1891, 0
        %v1941 = vsel %vm1614, %v1892, 0
        %v1944 = vsel %vm1614, %v1893, 0
        %v1947 = vsel %vm1614, %v1894, 0
        %v1950 = vsel %vm1614, %v1895, 0
        %v1953 = vsel %vm1614, %v1896, 0
        %v1956 = vsel %vm1614, %v1897, 0
        %v1959 = vsel %vm1614, %v1898, 0
        %v1962 = vsel %vm1614, %v1899, 0
        %v1965 = vsel %vm1614, %v1900, 0
        %v1968 = vsel %vm1614, %v1901, 0
        %v1971 = vsel %vm1614, %v1902, 0
        %v1974 = vsel %vm1614, %v1903, 0
        %1976 = vmatprep.subr.bf16.mxu0 0
        %1977 = vmatpush1.bf16.msra.mxu0 %v1920
        %1978 = vmatprep.subr.bf16.mxu0 0
        %1979 = vmatpush1.bf16.msra.mxu0 %v1921
        %1980 = vmatprep.subr.bf16.mxu0 0
        %1981 = vmatpush1.bf16.msra.mxu0 %v1922
        %1982 = vmatprep.subr.bf16.mxu0 0
        %1983 = vmatpush1.bf16.msra.mxu0 %v1923
        %1984 = vmatprep.subr.bf16.mxu0 0
        %1985 = vmatpush1.bf16.msra.mxu0 0
        %1986 = vmatprep.subr.bf16.mxu0 0
        %1987 = vmatpush1.bf16.msra.mxu0 0
        %1988 = vmatprep.subr.bf16.mxu0 0
        %1989 = vmatpush1.bf16.msra.mxu0 0
        %1990 = vmatprep.subr.bf16.mxu0 0
        %1991 = vmatpush1.bf16.msra.mxu0 0
        %1992 = vmatprep.subr.bf16.mxu0 0
        %1993 = vmatpush1.bf16.msra.mxu0 0
        %1994 = vmatprep.subr.bf16.mxu0 0
        %1995 = vmatpush1.bf16.msra.mxu0 0
        %1996 = vmatprep.subr.bf16.mxu0 0
        %1997 = vmatpush1.bf16.msra.mxu0 0
        %1998 = vmatprep.subr.bf16.mxu0 0
        %1999 = vmatpush1.bf16.msra.mxu0 0
        %2000 = vmatprep.subr.bf16.mxu0 0
        %2001 = vmatpush1.bf16.msra.mxu0 0
        %2002 = vmatprep.subr.bf16.mxu0 0
        %2003 = vmatpush1.bf16.msra.mxu0 0
        %2004 = vmatprep.subr.bf16.mxu0 0
        %2005 = vmatpush1.bf16.msra.mxu0 0
        %2006 = vmatprep.subr.bf16.mxu0 0
        %2007 = vmatpush1.bf16.msra.mxu0 0
        %2008 = vmatprep.mubr.bf16.mxu0 0
        %2009 = vmatmul.mubr.bf16.gmra.mrb[0].mxu0 %v1929
        %v2010 = vpop.f32.mrb[0].mxu0
        %v2011 = vadd.f32 %v1698, %v2010
        %v2012 = vpop.f32.mrb[0].mxu0
        %v2013 = vpop.f32.mrb[0].mxu0
        %v2014 = vadd.f32 %v1701, %v2013
        %v2015 = vpop.f32.mrb[0].mxu0
        %2016 = vmatprep.mubr.bf16.mxu0 0
        %2017 = vmatmul.mubr.bf16.gmra.mrb[0].mxu0 %v1932
        %v2018 = vpop.f32.mrb[0].mxu0
        %v2019 = vadd.f32 %v1706, %v2018
        %v2020 = vpop.f32.mrb[0].mxu0
        %v2021 = vpop.f32.mrb[0].mxu0
        %v2022 = vadd.f32 %v1709, %v2021
        %v2023 = vpop.f32.mrb[0].mxu0
        %2024 = vmatprep.mubr.bf16.mxu0 0
        %2025 = vmatmul.mubr.bf16.gmra.mrb[0].mxu0 %v1935
        %v2026 = vpop.f32.mrb[0].mxu0
        %v2027 = vadd.f32 %v1714, %v2026
        %v2028 = vpop.f32.mrb[0].mxu0
        %v2029 = vpop.f32.mrb[0].mxu0
        %v2030 = vadd.f32 %v1717, %v2029
        %v2031 = vpop.f32.mrb[0].mxu0
        %2032 = vmatprep.mubr.bf16.mxu0 0
        %2033 = vmatmul.mubr.bf16.gmra.mrb[0].mxu0 %v1938
        %v2034 = vpop.f32.mrb[0].mxu0
        %v2035 = vadd.f32 %v1722, %v2034
        %v2036 = vpop.f32.mrb[0].mxu0
        %v2037 = vpop.f32.mrb[0].mxu0
        %v2038 = vadd.f32 %v1725, %v2037
        %v2039 = vpop.f32.mrb[0].mxu0
        %2040 = vmatprep.mubr.bf16.mxu0 0
        %2041 = vmatmul.mubr.bf16.gmra.mrb[0].mxu0 %v1941
        %v2042 = vpop.f32.mrb[0].mxu0
        %v2043 = vadd.f32 %v1730, %v2042
        %v2044 = vpop.f32.mrb[0].mxu0
        %v2045 = vpop.f32.mrb[0].mxu0
        %v2046 = vadd.f32 %v1733, %v2045
        %v2047 = vpop.f32.mrb[0].mxu0
        %2048 = vmatprep.mubr.bf16.mxu0 0
        %2049 = vmatmul.mubr.bf16.gmra.mrb[0].mxu0 %v1944
        %v2050 = vpop.f32.mrb[0].mxu0
        %v2051 = vadd.f32 %v1738, %v2050
        %v2052 = vpop.f32.mrb[0].mxu0
        %v2053 = vpop.f32.mrb[0].mxu0
        %v2054 = vadd.f32 %v1741, %v2053
        %v2055 = vpop.f32.mrb[0].mxu0
        %2056 = vmatprep.mubr.bf16.mxu0 0
        %2057 = vmatmul.mubr.bf16.gmra.mrb[0].mxu0 %v1947
        %v2058 = vpop.f32.mrb[0].mxu0
        %v2059 = vadd.f32 %v1746, %v2058
        %v2060 = vpop.f32.mrb[0].mxu0
        %v2061 = vpop.f32.mrb[0].mxu0
        %v2062 = vadd.f32 %v1749, %v2061
        %v2063 = vpop.f32.mrb[0].mxu0
        %2064 = vmatprep.mubr.bf16.mxu0 0
        %2065 = vmatmul.mubr.bf16.gmra.mrb[0].mxu0 %v1950
        %v2066 = vpop.f32.mrb[0].mxu0
        %v2067 = vadd.f32 %v1754, %v2066
        %v2068 = vpop.f32.mrb[0].mxu0
        %v2069 = vpop.f32.mrb[0].mxu0
        %v2070 = vadd.f32 %v1757, %v2069
        %v2071 = vpop.f32.mrb[0].mxu0
        %2072 = vmatprep.mubr.bf16.mxu0 0
        %2073 = vmatmul.mubr.bf16.gmra.mrb[0].mxu0 %v1953
        %v2074 = vpop.f32.mrb[0].mxu0
        %v2075 = vadd.f32 %v1762, %v2074
        %v2076 = vpop.f32.mrb[0].mxu0
        %v2077 = vpop.f32.mrb[0].mxu0
        %v2078 = vadd.f32 %v1765, %v2077
        %v2079 = vpop.f32.mrb[0].mxu0
        %2080 = vmatprep.mubr.bf16.mxu0 0
        %2081 = vmatmul.mubr.bf16.gmra.mrb[0].mxu0 %v1956
        %v2082 = vpop.f32.mrb[0].mxu0
        %v2083 = vadd.f32 %v1770, %v2082
        %v2084 = vpop.f32.mrb[0].mxu0
        %v2085 = vpop.f32.mrb[0].mxu0
        %v2086 = vadd.f32 %v1773, %v2085
        %v2087 = vpop.f32.mrb[0].mxu0
        %2088 = vmatprep.mubr.bf16.mxu0 0
        %2089 = vmatmul.mubr.bf16.gmra.mrb[0].mxu0 %v1959
        %v2090 = vpop.f32.mrb[0].mxu0
        %v2091 = vadd.f32 %v1778, %v2090
        %v2092 = vpop.f32.mrb[0].mxu0
        %v2093 = vpop.f32.mrb[0].mxu0
        %v2094 = vadd.f32 %v1781, %v2093
        %v2095 = vpop.f32.mrb[0].mxu0
        %2096 = vmatprep.mubr.bf16.mxu0 0
        %2097 = vmatmul.mubr.bf16.gmra.mrb[0].mxu0 %v1962
        %v2098 = vpop.f32.mrb[0].mxu0
        %v2099 = vadd.f32 %v1786, %v2098
        %v2100 = vpop.f32.mrb[0].mxu0
        %v2101 = vpop.f32.mrb[0].mxu0
        %v2102 = vadd.f32 %v1789, %v2101
        %v2103 = vpop.f32.mrb[0].mxu0
        %2104 = vmatprep.mubr.bf16.mxu0 0
        %2105 = vmatmul.mubr.bf16.gmra.mrb[0].mxu0 %v1965
        %v2106 = vpop.f32.mrb[0].mxu0
        %v2107 = vadd.f32 %v1794, %v2106
        %v2108 = vpop.f32.mrb[0].mxu0
        %v2109 = vpop.f32.mrb[0].mxu0
        %v2110 = vadd.f32 %v1797, %v2109
        %v2111 = vpop.f32.mrb[0].mxu0
        %2112 = vmatprep.mubr.bf16.mxu0 0
        %2113 = vmatmul.mubr.bf16.gmra.mrb[0].mxu0 %v1968
        %v2114 = vpop.f32.mrb[0].mxu0
        %v2115 = vadd.f32 %v1802, %v2114
        %v2116 = vpop.f32.mrb[0].mxu0
        %v2117 = vpop.f32.mrb[0].mxu0
        %v2118 = vadd.f32 %v1805, %v2117
        %v2119 = vpop.f32.mrb[0].mxu0
        %2120 = vmatprep.mubr.bf16.mxu0 0
        %2121 = vmatmul.mubr.bf16.gmra.mrb[0].mxu0 %v1971
        %v2122 = vpop.f32.mrb[0].mxu0
        %v2123 = vadd.f32 %v1810, %v2122
        %v2124 = vpop.f32.mrb[0].mxu0
        %v2125 = vpop.f32.mrb[0].mxu0
        %v2126 = vadd.f32 %v1813, %v2125
        %v2127 = vpop.f32.mrb[0].mxu0
        %2128 = vmatprep.mubr.bf16.mxu0 0
        %2129 = vmatmul.mubr.bf16.gmra.mrb[0].mxu0 %v1974
        %v2130 = vpop.f32.mrb[0].mxu0
        %v2131 = vadd.f32 %v1818, %v2130
        %v2132 = vpop.f32.mrb[0].mxu0
        %v2133 = vpop.f32.mrb[0].mxu0
        %v2134 = vadd.f32 %v1821, %v2133
        %v2135 = vpop.f32.mrb[0].mxu0
        %2136 = vdwg.mxu0
        %v2137 = vld [vmem:[#allocation2] sm:$0xe]
        %v2138 = vld [vmem:[#allocation2 + $0xc] sm:$0xe]
        %v2139 = vld [vmem:[#allocation2 + $0x18] sm:$0xe]
        %v2140 = vld [vmem:[#allocation2 + $0x24] sm:$0xe]
        %v2141 = vld [vmem:[#allocation2 + $0x30] sm:$0xe]
        %v2142 = vld [vmem:[#allocation2 + $0x3c] sm:$0xe]
        %v2143 = vld [vmem:[#allocation2 + $0x48] sm:$0xe]
        %v2144 = vld [vmem:[#allocation2 + $0x54] sm:$0xe]
        %v2145 = vld [vmem:[#allocation2 + $0x60] sm:$0xe]
        %v2146 = vld [vmem:[#allocation2 + $0x6c] sm:$0xe]
        %v2147 = vld [vmem:[#allocation2 + $0x78] sm:$0xe]
        %v2148 = vld [vmem:[#allocation2 + $0x84] sm:$0xe]
        %v2149 = vld [vmem:[#allocation2 + $0x90] sm:$0xe]
        %v2150 = vld [vmem:[#allocation2 + $0x9c] sm:$0xe]
        %v2151 = vld [vmem:[#allocation2 + $0xa8] sm:$0xe]
        %v2152 = vld [vmem:[#allocation2 + $0xb4] sm:$0xe]
        %vm2185 = vcmask 1042432
        %vm2186 = vcmask 1046532
        %vm2187 = vmor %vm2185, %vm2186
        %v2188 = vrot.slane %v2137, 5
        %v2189 = vrot.slane %v2188, 4
        %v2190 = vrot.slane %v1091, 5
        %v2191 = vsel %vm2187, %v2189, %v2190
        %v2192 = vrot.slane %v2190, 4
        %v2193 = vrot.slane %v1130, 5
        %v2194 = vsel %vm2187, %v2192, %v2193
        %v2195 = vrot.slane %v2138, 5
        %v2196 = vrot.slane %v2195, 4
        %v2197 = vrot.slane %v1093, 5
        %v2198 = vsel %vm2187, %v2196, %v2197
        %v2199 = vrot.slane %v2197, 4
        %v2200 = vrot.slane %v1131, 5
        %v2201 = vsel %vm2187, %v2199, %v2200
        %v2202 = vrot.slane %v2139, 5
        %v2203 = vrot.slane %v2202, 4
        %v2204 = vrot.slane %v1095, 5
        %v2205 = vsel %vm2187, %v2203, %v2204
        %v2206 = vrot.slane %v2204, 4
        %v2207 = vrot.slane %v1132, 5
        %v2208 = vsel %vm2187, %v2206, %v2207
        %v2209 = vrot.slane %v2140, 5
        %v2210 = vrot.slane %v2209, 4
        %v2211 = vrot.slane %v1097, 5
        %v2212 = vsel %vm2187, %v2210, %v2211
        %v2213 = vrot.slane %v2211, 4
        %v2214 = vrot.slane %v1133, 5
        %v2215 = vsel %vm2187, %v2213, %v2214
        %v2216 = vrot.slane %v2141, 5
        %v2217 = vrot.slane %v2216, 4
        %v2218 = vrot.slane %v1099, 5
        %v2219 = vsel %vm2187, %v2217, %v2218
        %v2220 = vrot.slane %v2218, 4
        %v2221 = vrot.slane %v1134, 5
        %v2222 = vsel %vm2187, %v2220, %v2221
        %v2223 = vrot.slane %v2142, 5
        %v2224 = vrot.slane %v2223, 4
        %v2225 = vrot.slane %v1101, 5
        %v2226 = vsel %vm2187, %v2224, %v2225
        %v2227 = vrot.slane %v2225, 4
        %v2228 = vrot.slane %v1135, 5
        %v2229 = vsel %vm2187, %v2227, %v2228
        %v2230 = vrot.slane %v2143, 5
        %v2231 = vrot.slane %v2230, 4
        %v2232 = vrot.slane %v1103, 5
        %v2233 = vsel %vm2187, %v2231, %v2232
        %v2234 = vrot.slane %v2232, 4
        %v2235 = vrot.slane %v1136, 5
        %v2236 = vsel %vm2187, %v2234, %v2235
        %v2237 = vrot.slane %v2144, 5
        %v2238 = vrot.slane %v2237, 4
        %v2239 = vrot.slane %v1105, 5
        %v2240 = vsel %vm2187, %v2238, %v2239
        %v2241 = vrot.slane %v2239, 4
        %v2242 = vrot.slane %v1137, 5
        %v2243 = vsel %vm2187, %v2241, %v2242
        %v2244 = vrot.slane %v2145, 5
        %v2245 = vrot.slane %v2244, 4
        %v2246 = vrot.slane %v1107, 5
        %v2247 = vsel %vm2187, %v2245, %v2246
        %v2248 = vrot.slane %v2246, 4
        %v2249 = vrot.slane %v1138, 5
        %v2250 = vsel %vm2187, %v2248, %v2249
        %v2251 = vrot.slane %v2146, 5
        %v2252 = vrot.slane %v2251, 4
        %v2253 = vrot.slane %v1109, 5
        %v2254 = vsel %vm2187, %v2252, %v2253
        %v2255 = vrot.slane %v2253, 4
        %v2256 = vrot.slane %v1139, 5
        %v2257 = vsel %vm2187, %v2255, %v2256
        %v2258 = vrot.slane %v2147, 5
        %v2259 = vrot.slane %v2258, 4
        %v2260 = vrot.slane %v1111, 5
        %v2261 = vsel %vm2187, %v2259, %v2260
        %v2262 = vrot.slane %v2260, 4
        %v2263 = vrot.slane %v1140, 5
        %v2264 = vsel %vm2187, %v2262, %v2263
        %v2265 = vrot.slane %v2148, 5
        %v2266 = vrot.slane %v2265, 4
        %v2267 = vrot.slane %v1113, 5
        %v2268 = vsel %vm2187, %v2266, %v2267
        %v2269 = vrot.slane %v2267, 4
        %v2270 = vrot.slane %v1141, 5
        %v2271 = vsel %vm2187, %v2269, %v2270
        %v2272 = vrot.slane %v2149, 5
        %v2273 = vrot.slane %v2272, 4
        %v2274 = vrot.slane %v1115, 5
        %v2275 = vsel %vm2187, %v2273, %v2274
        %v2276 = vrot.slane %v2274, 4
        %v2277 = vrot.slane %v1142, 5
        %v2278 = vsel %vm2187, %v2276, %v2277
        %v2279 = vrot.slane %v2150, 5
        %v2280 = vrot.slane %v2279, 4
        %v2281 = vrot.slane %v1117, 5
        %v2282 = vsel %vm2187, %v2280, %v2281
        %v2283 = vrot.slane %v2281, 4
        %v2284 = vrot.slane %v1143, 5
        %v2285 = vsel %vm2187, %v2283, %v2284
        %v2286 = vrot.slane %v2151, 5
        %v2287 = vrot.slane %v2286, 4
        %v2288 = vrot.slane %v1119, 5
        %v2289 = vsel %vm2187, %v2287, %v2288
        %v2290 = vrot.slane %v2288, 4
        %v2291 = vrot.slane %v1144, 5
        %v2292 = vsel %vm2187, %v2290, %v2291
        %v2293 = vrot.slane %v2152, 5
        %v2294 = vrot.slane %v2293, 4
        %v2295 = vrot.slane %v1121, 5
        %v2296 = vsel %vm2187, %v2294, %v2295
        %v2297 = vrot.slane %v2295, 4
        %v2298 = vrot.slane %v1145, 5
        %v2299 = vsel %vm2187, %v2297, %v2298
        %s2300 = scalar_lea.vmem [#allocation7], 64
        %v2301 = vld [vmem:[%s2300] sm:$0xf]
        %v2302 = vld [vmem:[%s2300 + $0x4] sm:$0xf]
        %v2303 = vld [vmem:[%s2300 + $0x8] sm:$0xf]
        %v2304 = vld [vmem:[%s2300 + $0xc] sm:$0xf]
        %v2305 = vld [vmem:[%s2300 + $0x10] sm:$0xf]
        %v2306 = vld [vmem:[%s2300 + $0x14] sm:$0xf]
        %v2307 = vld [vmem:[%s2300 + $0x18] sm:$0xf]
        %v2308 = vld [vmem:[%s2300 + $0x1c] sm:$0xf]
        %v2309 = vunpack.c.l.b16 %v2191
        %v2310 = vunpack.c.l.b16 %v2194
        %v2311 = vunpack.c.l.b16 %v2198
        %v2312 = vunpack.c.l.b16 %v2201
        %v2313 = vunpack.c.l.b16 %v2205
        %v2314 = vunpack.c.l.b16 %v2208
        %v2315 = vunpack.c.l.b16 %v2212
        %v2316 = vunpack.c.l.b16 %v2215
        %v2317 = vunpack.c.l.b16 %v2219
        %v2318 = vunpack.c.l.b16 %v2222
        %v2319 = vunpack.c.l.b16 %v2226
        %v2320 = vunpack.c.l.b16 %v2229
        %v2321 = vunpack.c.l.b16 %v2233
        %v2322 = vunpack.c.l.b16 %v2236
        %v2323 = vunpack.c.l.b16 %v2240
        %v2324 = vunpack.c.l.b16 %v2243
        %v2325 = vunpack.c.l.b16 %v2247
        %v2326 = vunpack.c.l.b16 %v2250
        %v2327 = vunpack.c.l.b16 %v2254
        %v2328 = vunpack.c.l.b16 %v2257
        %v2329 = vunpack.c.l.b16 %v2261
        %v2330 = vunpack.c.l.b16 %v2264
        %v2331 = vunpack.c.l.b16 %v2268
        %v2332 = vunpack.c.l.b16 %v2271
        %v2333 = vunpack.c.l.b16 %v2275
        %v2334 = vunpack.c.l.b16 %v2278
        %v2335 = vunpack.c.l.b16 %v2282
        %v2336 = vunpack.c.l.b16 %v2285
        %v2337 = vunpack.c.l.b16 %v2289
        %v2338 = vunpack.c.l.b16 %v2292
        %v2339 = vunpack.c.l.b16 %v2296
        %v2340 = vunpack.c.l.b16 %v2299
        %v2341 = vpack.c.b16 %v2310, %v2309
        %v2342 = vpack.c.b16 %v2312, %v2311
        %v2343 = vpack.c.b16 %v2314, %v2313
        %v2344 = vpack.c.b16 %v2316, %v2315
        %v2345 = vpack.c.b16 %v2318, %v2317
        %v2346 = vpack.c.b16 %v2320, %v2319
        %v2347 = vpack.c.b16 %v2322, %v2321
        %v2348 = vpack.c.b16 %v2324, %v2323
        %v2349 = vpack.c.b16 %v2326, %v2325
        %v2350 = vpack.c.b16 %v2328, %v2327
        %v2351 = vpack.c.b16 %v2330, %v2329
        %v2352 = vpack.c.b16 %v2332, %v2331
        %v2353 = vpack.c.b16 %v2334, %v2333
        %v2354 = vpack.c.b16 %v2336, %v2335
        %v2355 = vpack.c.b16 %v2338, %v2337
        %v2356 = vpack.c.b16 %v2340, %v2339
        %v2365 = vunpack.c.l.b16 %v2301
        %v2366 = vunpack.c.l.b16 %v2302
        %v2367 = vunpack.c.l.b16 %v2303
        %v2368 = vunpack.c.l.b16 %v2304
        %v2369 = vunpack.c.l.b16 %v2305
        %v2370 = vunpack.c.l.b16 %v2306
        %v2371 = vunpack.c.l.b16 %v2307
        %v2372 = vunpack.c.l.b16 %v2308
        %v2373 = vpack.c.b16 %v2366, %v2365
        %v2374 = vpack.c.b16 %v2368, %v2367
        %v2375 = vpack.c.b16 %v2370, %v2369
        %v2376 = vpack.c.b16 %v2372, %v2371
        %v2382 = vsel %vm1614, %v2341, 0
        %v2385 = vsel %vm1614, %v2342, 0
        %v2388 = vsel %vm1614, %v2343, 0
        %v2391 = vsel %vm1614, %v2344, 0
        %v2394 = vsel %vm1614, %v2345, 0
        %v2397 = vsel %vm1614, %v2346, 0
        %v2400 = vsel %vm1614, %v2347, 0
        %v2403 = vsel %vm1614, %v2348, 0
        %v2406 = vsel %vm1614, %v2349, 0
        %v2409 = vsel %vm1614, %v2350, 0
        %v2412 = vsel %vm1614, %v2351, 0
        %v2415 = vsel %vm1614, %v2352, 0
        %v2418 = vsel %vm1614, %v2353, 0
        %v2421 = vsel %vm1614, %v2354, 0
        %v2424 = vsel %vm1614, %v2355, 0
        %v2427 = vsel %vm1614, %v2356, 0
        %2429 = vmatprep.subr.bf16.mxu0 0
        %2430 = vmatpush1.bf16.msra.mxu0 %v2373
        %2431 = vmatprep.subr.bf16.mxu0 0
        %2432 = vmatpush1.bf16.msra.mxu0 %v2374
        %2433 = vmatprep.subr.bf16.mxu0 0
        %2434 = vmatpush1.bf16.msra.mxu0 %v2375
        %2435 = vmatprep.subr.bf16.mxu0 0
        %2436 = vmatpush1.bf16.msra.mxu0 %v2376
        %2437 = vmatprep.subr.bf16.mxu0 0
        %2438 = vmatpush1.bf16.msra.mxu0 0
        %2439 = vmatprep.subr.bf16.mxu0 0
        %2440 = vmatpush1.bf16.msra.mxu0 0
        %2441 = vmatprep.subr.bf16.mxu0 0
        %2442 = vmatpush1.bf16.msra.mxu0 0
        %2443 = vmatprep.subr.bf16.mxu0 0
        %2444 = vmatpush1.bf16.msra.mxu0 0
        %2445 = vmatprep.subr.bf16.mxu0 0
        %2446 = vmatpush1.bf16.msra.mxu0 0
        %2447 = vmatprep.subr.bf16.mxu0 0
        %2448 = vmatpush1.bf16.msra.mxu0 0
        %2449 = vmatprep.subr.bf16.mxu0 0
        %2450 = vmatpush1.bf16.msra.mxu0 0
        %2451 = vmatprep.subr.bf16.mxu0 0
        %2452 = vmatpush1.bf16.msra.mxu0 0
        %2453 = vmatprep.subr.bf16.mxu0 0
        %2454 = vmatpush1.bf16.msra.mxu0 0
        %2455 = vmatprep.subr.bf16.mxu0 0
        %2456 = vmatpush1.bf16.msra.mxu0 0
        %2457 = vmatprep.subr.bf16.mxu0 0
        %2458 = vmatpush1.bf16.msra.mxu0 0
        %2459 = vmatprep.subr.bf16.mxu0 0
        %2460 = vmatpush1.bf16.msra.mxu0 0
        %2461 = vmatprep.mubr.bf16.mxu0 0
        %2462 = vmatmul.mubr.bf16.gmra.mrb[0].mxu0 %v2382
        %v2463 = vpop.f32.mrb[0].mxu0
        %v2464 = vadd.f32 0.0, %v2463
        %v2465 = vpop.f32.mrb[0].mxu0
        %v2466 = vpop.f32.mrb[0].mxu0
        %v2467 = vadd.f32 0.0, %v2466
        %v2468 = vpop.f32.mrb[0].mxu0
        %2469 = vmatprep.mubr.bf16.mxu0 0
        %2470 = vmatmul.mubr.bf16.gmra.mrb[0].mxu0 %v2385
        %v2471 = vpop.f32.mrb[0].mxu0
        %v2472 = vadd.f32 0.0, %v2471
        %v2473 = vpop.f32.mrb[0].mxu0
        %v2474 = vpop.f32.mrb[0].mxu0
        %v2475 = vadd.f32 0.0, %v2474
        %v2476 = vpop.f32.mrb[0].mxu0
        %2477 = vmatprep.mubr.bf16.mxu0 0
        %2478 = vmatmul.mubr.bf16.gmra.mrb[0].mxu0 %v2388
        %v2479 = vpop.f32.mrb[0].mxu0
        %v2480 = vadd.f32 0.0, %v2479
        %v2481 = vpop.f32.mrb[0].mxu0
        %v2482 = vpop.f32.mrb[0].mxu0
        %v2483 = vadd.f32 0.0, %v2482
        %v2484 = vpop.f32.mrb[0].mxu0
        %2485 = vmatprep.mubr.bf16.mxu0 0
        %2486 = vmatmul.mubr.bf16.gmra.mrb[0].mxu0 %v2391
        %v2487 = vpop.f32.mrb[0].mxu0
        %v2488 = vadd.f32 0.0, %v2487
        %v2489 = vpop.f32.mrb[0].mxu0
        %v2490 = vpop.f32.mrb[0].mxu0
        %v2491 = vadd.f32 0.0, %v2490
        %v2492 = vpop.f32.mrb[0].mxu0
        %2493 = vmatprep.mubr.bf16.mxu0 0
        %2494 = vmatmul.mubr.bf16.gmra.mrb[0].mxu0 %v2394
        %v2495 = vpop.f32.mrb[0].mxu0
        %v2496 = vadd.f32 0.0, %v2495
        %v2497 = vpop.f32.mrb[0].mxu0
        %v2498 = vpop.f32.mrb[0].mxu0
        %v2499 = vadd.f32 0.0, %v2498
        %v2500 = vpop.f32.mrb[0].mxu0
        %2501 = vmatprep.mubr.bf16.mxu0 0
        %2502 = vmatmul.mubr.bf16.gmra.mrb[0].mxu0 %v2397
        %v2503 = vpop.f32.mrb[0].mxu0
        %v2504 = vadd.f32 0.0, %v2503
        %v2505 = vpop.f32.mrb[0].mxu0
        %v2506 = vpop.f32.mrb[0].mxu0
        %v2507 = vadd.f32 0.0, %v2506
        %v2508 = vpop.f32.mrb[0].mxu0
        %2509 = vmatprep.mubr.bf16.mxu0 0
        %2510 = vmatmul.mubr.bf16.gmra.mrb[0].mxu0 %v2400
        %v2511 = vpop.f32.mrb[0].mxu0
        %v2512 = vadd.f32 0.0, %v2511
        %v2513 = vpop.f32.mrb[0].mxu0
        %v2514 = vpop.f32.mrb[0].mxu0
        %v2515 = vadd.f32 0.0, %v2514
        %v2516 = vpop.f32.mrb[0].mxu0
        %2517 = vmatprep.mubr.bf16.mxu0 0
        %2518 = vmatmul.mubr.bf16.gmra.mrb[0].mxu0 %v2403
        %v2519 = vpop.f32.mrb[0].mxu0
        %v2520 = vadd.f32 0.0, %v2519
        %v2521 = vpop.f32.mrb[0].mxu0
        %v2522 = vpop.f32.mrb[0].mxu0
        %v2523 = vadd.f32 0.0, %v2522
        %v2524 = vpop.f32.mrb[0].mxu0
        %2525 = vmatprep.mubr.bf16.mxu0 0
        %2526 = vmatmul.mubr.bf16.gmra.mrb[0].mxu0 %v2406
        %v2527 = vpop.f32.mrb[0].mxu0
        %v2528 = vadd.f32 0.0, %v2527
        %v2529 = vpop.f32.mrb[0].mxu0
        %v2530 = vpop.f32.mrb[0].mxu0
        %v2531 = vadd.f32 0.0, %v2530
        %v2532 = vpop.f32.mrb[0].mxu0
        %2533 = vmatprep.mubr.bf16.mxu0 0
        %2534 = vmatmul.mubr.bf16.gmra.mrb[0].mxu0 %v2409
        %v2535 = vpop.f32.mrb[0].mxu0
        %v2536 = vadd.f32 0.0, %v2535
        %v2537 = vpop.f32.mrb[0].mxu0
        %v2538 = vpop.f32.mrb[0].mxu0
        %v2539 = vadd.f32 0.0, %v2538
        %v2540 = vpop.f32.mrb[0].mxu0
        %2541 = vmatprep.mubr.bf16.mxu0 0
        %2542 = vmatmul.mubr.bf16.gmra.mrb[0].mxu0 %v2412
        %v2543 = vpop.f32.mrb[0].mxu0
        %v2544 = vadd.f32 0.0, %v2543
        %v2545 = vpop.f32.mrb[0].mxu0
        %v2546 = vpop.f32.mrb[0].mxu0
        %v2547 = vadd.f32 0.0, %v2546
        %v2548 = vpop.f32.mrb[0].mxu0
        %2549 = vmatprep.mubr.bf16.mxu0 0
        %2550 = vmatmul.mubr.bf16.gmra.mrb[0].mxu0 %v2415
        %v2551 = vpop.f32.mrb[0].mxu0
        %v2552 = vadd.f32 0.0, %v2551
        %v2553 = vpop.f32.mrb[0].mxu0
        %v2554 = vpop.f32.mrb[0].mxu0
        %v2555 = vadd.f32 0.0, %v2554
        %v2556 = vpop.f32.mrb[0].mxu0
        %2557 = vmatprep.mubr.bf16.mxu0 0
        %2558 = vmatmul.mubr.bf16.gmra.mrb[0].mxu0 %v2418
        %v2559 = vpop.f32.mrb[0].mxu0
        %v2560 = vadd.f32 0.0, %v2559
        %v2561 = vpop.f32.mrb[0].mxu0
        %v2562 = vpop.f32.mrb[0].mxu0
        %v2563 = vadd.f32 0.0, %v2562
        %v2564 = vpop.f32.mrb[0].mxu0
        %2565 = vmatprep.mubr.bf16.mxu0 0
        %2566 = vmatmul.mubr.bf16.gmra.mrb[0].mxu0 %v2421
        %v2567 = vpop.f32.mrb[0].mxu0
        %v2568 = vadd.f32 0.0, %v2567
        %v2569 = vpop.f32.mrb[0].mxu0
        %v2570 = vpop.f32.mrb[0].mxu0
        %v2571 = vadd.f32 0.0, %v2570
        %v2572 = vpop.f32.mrb[0].mxu0
        %2573 = vmatprep.mubr.bf16.mxu0 0
        %2574 = vmatmul.mubr.bf16.gmra.mrb[0].mxu0 %v2424
        %v2575 = vpop.f32.mrb[0].mxu0
        %v2576 = vadd.f32 0.0, %v2575
        %v2577 = vpop.f32.mrb[0].mxu0
        %v2578 = vpop.f32.mrb[0].mxu0
        %v2579 = vadd.f32 0.0, %v2578
        %v2580 = vpop.f32.mrb[0].mxu0
        %2581 = vmatprep.mubr.bf16.mxu0 0
        %2582 = vmatmul.mubr.bf16.gmra.mrb[0].mxu0 %v2427
        %v2583 = vpop.f32.mrb[0].mxu0
        %v2584 = vadd.f32 0.0, %v2583
        %v2585 = vpop.f32.mrb[0].mxu0
        %v2586 = vpop.f32.mrb[0].mxu0
        %v2587 = vadd.f32 0.0, %v2586
        %v2588 = vpop.f32.mrb[0].mxu0
        %2589 = vdwg.mxu0
        %v2590 = vadd.f32 %v2011, %v2464
        %v2591 = vadd.f32 %v2014, %v2467
        %v2592 = vadd.f32 %v2019, %v2472
        %v2593 = vadd.f32 %v2022, %v2475
        %v2594 = vadd.f32 %v2027, %v2480
        %v2595 = vadd.f32 %v2030, %v2483
        %v2596 = vadd.f32 %v2035, %v2488
        %v2597 = vadd.f32 %v2038, %v2491
        %v2598 = vadd.f32 %v2043, %v2496
        %v2599 = vadd.f32 %v2046, %v2499
        %v2600 = vadd.f32 %v2051, %v2504
        %v2601 = vadd.f32 %v2054, %v2507
        %v2602 = vadd.f32 %v2059, %v2512
        %v2603 = vadd.f32 %v2062, %v2515
        %v2604 = vadd.f32 %v2067, %v2520
        %v2605 = vadd.f32 %v2070, %v2523
        %v2606 = vadd.f32 %v2075, %v2528
        %v2607 = vadd.f32 %v2078, %v2531
        %v2608 = vadd.f32 %v2083, %v2536
        %v2609 = vadd.f32 %v2086, %v2539
        %v2610 = vadd.f32 %v2091, %v2544
        %v2611 = vadd.f32 %v2094, %v2547
        %v2612 = vadd.f32 %v2099, %v2552
        %v2613 = vadd.f32 %v2102, %v2555
        %v2614 = vadd.f32 %v2107, %v2560
        %v2615 = vadd.f32 %v2110, %v2563
        %v2616 = vadd.f32 %v2115, %v2568
        %v2617 = vadd.f32 %v2118, %v2571
        %v2618 = vadd.f32 %v2123, %v2576
        %v2619 = vadd.f32 %v2126, %v2579
        %v2620 = vadd.f32 %v2131, %v2584
        %v2621 = vadd.f32 %v2134, %v2587
        %v2622 = vld [vmem:[%s975] sm:$0xf]
        %v2623 = vld [vmem:[%s975 + $0x4] sm:$0xf]
        %v2624 = vld [vmem:[%s975 + $0xc] sm:$0xf]
        %v2625 = vld [vmem:[%s975 + $0x10] sm:$0xf]
        %v2626 = vld [vmem:[%s975 + $0x18] sm:$0xf]
        %v2627 = vld [vmem:[%s975 + $0x1c] sm:$0xf]
        %v2628 = vld [vmem:[%s975 + $0x24] sm:$0xf]
        %v2629 = vld [vmem:[%s975 + $0x28] sm:$0xf]
        %v2630 = vld [vmem:[%s975 + $0x30] sm:$0xf]
        %v2631 = vld [vmem:[%s975 + $0x34] sm:$0xf]
        %v2632 = vld [vmem:[%s975 + $0x3c] sm:$0xf]
        %v2633 = vld [vmem:[%s975 + $0x40] sm:$0xf]
        %v2634 = vld [vmem:[%s975 + $0x48] sm:$0xf]
        %v2635 = vld [vmem:[%s975 + $0x4c] sm:$0xf]
        %v2636 = vld [vmem:[%s975 + $0x54] sm:$0xf]
        %v2637 = vld [vmem:[%s975 + $0x58] sm:$0xf]
        %v2638 = vld [vmem:[%s975 + $0x60] sm:$0xf]
        %v2639 = vld [vmem:[%s975 + $0x64] sm:$0xf]
        %v2640 = vld [vmem:[%s975 + $0x6c] sm:$0xf]
        %v2641 = vld [vmem:[%s975 + $0x70] sm:$0xf]
        %v2642 = vld [vmem:[%s975 + $0x78] sm:$0xf]
        %v2643 = vld [vmem:[%s975 + $0x7c] sm:$0xf]
        %v2644 = vld [vmem:[%s975 + $0x84] sm:$0xf]
        %v2645 = vld [vmem:[%s975 + $0x88] sm:$0xf]
        %v2646 = vld [vmem:[%s975 + $0x90] sm:$0xf]
        %v2647 = vld [vmem:[%s975 + $0x94] sm:$0xf]
        %v2648 = vld [vmem:[%s975 + $0x9c] sm:$0xf]
        %v2649 = vld [vmem:[%s975 + $0xa0] sm:$0xf]
        %v2650 = vld [vmem:[%s975 + $0xa8] sm:$0xf]
        %v2651 = vld [vmem:[%s975 + $0xac] sm:$0xf]
        %v2652 = vld [vmem:[%s975 + $0xb4] sm:$0xf]
        %v2653 = vld [vmem:[%s975 + $0xb8] sm:$0xf]
        %s2654 = scalar_lea.vmem [#allocation7], 96
        %v2655 = vld [vmem:[%s2654] sm:$0xf]
        %v2656 = vld [vmem:[%s2654 + $0x4] sm:$0xf]
        %v2657 = vld [vmem:[%s2654 + $0x8] sm:$0xf]
        %v2658 = vld [vmem:[%s2654 + $0xc] sm:$0xf]
        %v2659 = vld [vmem:[%s2654 + $0x10] sm:$0xf]
        %v2660 = vld [vmem:[%s2654 + $0x14] sm:$0xf]
        %v2661 = vld [vmem:[%s2654 + $0x18] sm:$0xf]
        %v2662 = vld [vmem:[%s2654 + $0x1c] sm:$0xf]
        %v2695 = vunpack.c.l.b16 %v2622
        %v2696 = vunpack.c.l.b16 %v2623
        %v2697 = vunpack.c.l.b16 %v2624
        %v2698 = vunpack.c.l.b16 %v2625
        %v2699 = vunpack.c.l.b16 %v2626
        %v2700 = vunpack.c.l.b16 %v2627
        %v2701 = vunpack.c.l.b16 %v2628
        %v2702 = vunpack.c.l.b16 %v2629
        %v2703 = vunpack.c.l.b16 %v2630
        %v2704 = vunpack.c.l.b16 %v2631
        %v2705 = vunpack.c.l.b16 %v2632
        %v2706 = vunpack.c.l.b16 %v2633
        %v2707 = vunpack.c.l.b16 %v2634
        %v2708 = vunpack.c.l.b16 %v2635
        %v2709 = vunpack.c.l.b16 %v2636
        %v2710 = vunpack.c.l.b16 %v2637
        %v2711 = vunpack.c.l.b16 %v2638
        %v2712 = vunpack.c.l.b16 %v2639
        %v2713 = vunpack.c.l.b16 %v2640
        %v2714 = vunpack.c.l.b16 %v2641
        %v2715 = vunpack.c.l.b16 %v2642
        %v2716 = vunpack.c.l.b16 %v2643
        %v2717 = vunpack.c.l.b16 %v2644
        %v2718 = vunpack.c.l.b16 %v2645
        %v2719 = vunpack.c.l.b16 %v2646
        %v2720 = vunpack.c.l.b16 %v2647
        %v2721 = vunpack.c.l.b16 %v2648
        %v2722 = vunpack.c.l.b16 %v2649
        %v2723 = vunpack.c.l.b16 %v2650
        %v2724 = vunpack.c.l.b16 %v2651
        %v2725 = vunpack.c.l.b16 %v2652
        %v2726 = vunpack.c.l.b16 %v2653
        %v2727 = vpack.c.b16 %v2696, %v2695
        %v2728 = vpack.c.b16 %v2698, %v2697
        %v2729 = vpack.c.b16 %v2700, %v2699
        %v2730 = vpack.c.b16 %v2702, %v2701
        %v2731 = vpack.c.b16 %v2704, %v2703
        %v2732 = vpack.c.b16 %v2706, %v2705
        %v2733 = vpack.c.b16 %v2708, %v2707
        %v2734 = vpack.c.b16 %v2710, %v2709
        %v2735 = vpack.c.b16 %v2712, %v2711
        %v2736 = vpack.c.b16 %v2714, %v2713
        %v2737 = vpack.c.b16 %v2716, %v2715
        %v2738 = vpack.c.b16 %v2718, %v2717
        %v2739 = vpack.c.b16 %v2720, %v2719
        %v2740 = vpack.c.b16 %v2722, %v2721
        %v2741 = vpack.c.b16 %v2724, %v2723
        %v2742 = vpack.c.b16 %v2726, %v2725
        %v2751 = vunpack.c.l.b16 %v2655
        %v2752 = vunpack.c.l.b16 %v2656
        %v2753 = vunpack.c.l.b16 %v2657
        %v2754 = vunpack.c.l.b16 %v2658
        %v2755 = vunpack.c.l.b16 %v2659
        %v2756 = vunpack.c.l.b16 %v2660
        %v2757 = vunpack.c.l.b16 %v2661
        %v2758 = vunpack.c.l.b16 %v2662
        %v2759 = vpack.c.b16 %v2752, %v2751
        %v2760 = vpack.c.b16 %v2754, %v2753
        %v2761 = vpack.c.b16 %v2756, %v2755
        %v2762 = vpack.c.b16 %v2758, %v2757
        %v2768 = vsel %vm1614, %v2727, 0
        %v2771 = vsel %vm1614, %v2728, 0
        %v2774 = vsel %vm1614, %v2729, 0
        %v2777 = vsel %vm1614, %v2730, 0
        %v2780 = vsel %vm1614, %v2731, 0
        %v2783 = vsel %vm1614, %v2732, 0
        %v2786 = vsel %vm1614, %v2733, 0
        %v2789 = vsel %vm1614, %v2734, 0
        %v2792 = vsel %vm1614, %v2735, 0
        %v2795 = vsel %vm1614, %v2736, 0
        %v2798 = vsel %vm1614, %v2737, 0
        %v2801 = vsel %vm1614, %v2738, 0
        %v2804 = vsel %vm1614, %v2739, 0
        %v2807 = vsel %vm1614, %v2740, 0
        %v2810 = vsel %vm1614, %v2741, 0
        %v2813 = vsel %vm1614, %v2742, 0
        %2815 = vmatprep.subr.bf16.mxu0 0
        %2816 = vmatpush1.bf16.msra.mxu0 %v2759
        %2817 = vmatprep.subr.bf16.mxu0 0
        %2818 = vmatpush1.bf16.msra.mxu0 %v2760
        %2819 = vmatprep.subr.bf16.mxu0 0
        %2820 = vmatpush1.bf16.msra.mxu0 %v2761
        %2821 = vmatprep.subr.bf16.mxu0 0
        %2822 = vmatpush1.bf16.msra.mxu0 %v2762
        %2823 = vmatprep.subr.bf16.mxu0 0
        %2824 = vmatpush1.bf16.msra.mxu0 0
        %2825 = vmatprep.subr.bf16.mxu0 0
        %2826 = vmatpush1.bf16.msra.mxu0 0
        %2827 = vmatprep.subr.bf16.mxu0 0
        %2828 = vmatpush1.bf16.msra.mxu0 0
        %2829 = vmatprep.subr.bf16.mxu0 0
        %2830 = vmatpush1.bf16.msra.mxu0 0
        %2831 = vmatprep.subr.bf16.mxu0 0
        %2832 = vmatpush1.bf16.msra.mxu0 0
        %2833 = vmatprep.subr.bf16.mxu0 0
        %2834 = vmatpush1.bf16.msra.mxu0 0
        %2835 = vmatprep.subr.bf16.mxu0 0
        %2836 = vmatpush1.bf16.msra.mxu0 0
        %2837 = vmatprep.subr.bf16.mxu0 0
        %2838 = vmatpush1.bf16.msra.mxu0 0
        %2839 = vmatprep.subr.bf16.mxu0 0
        %2840 = vmatpush1.bf16.msra.mxu0 0
        %2841 = vmatprep.subr.bf16.mxu0 0
        %2842 = vmatpush1.bf16.msra.mxu0 0
        %2843 = vmatprep.subr.bf16.mxu0 0
        %2844 = vmatpush1.bf16.msra.mxu0 0
        %2845 = vmatprep.subr.bf16.mxu0 0
        %2846 = vmatpush1.bf16.msra.mxu0 0
        %2847 = vmatprep.mubr.bf16.mxu0 0
        %2848 = vmatmul.mubr.bf16.gmra.mrb[0].mxu0 %v2768
        %v2849 = vpop.f32.mrb[0].mxu0
        %v2850 = vadd.f32 0.0, %v2849
        %v2851 = vpop.f32.mrb[0].mxu0
        %v2852 = vpop.f32.mrb[0].mxu0
        %v2853 = vadd.f32 0.0, %v2852
        %v2854 = vpop.f32.mrb[0].mxu0
        %2855 = vmatprep.mubr.bf16.mxu0 0
        %2856 = vmatmul.mubr.bf16.gmra.mrb[0].mxu0 %v2771
        %v2857 = vpop.f32.mrb[0].mxu0
        %v2858 = vadd.f32 0.0, %v2857
        %v2859 = vpop.f32.mrb[0].mxu0
        %v2860 = vpop.f32.mrb[0].mxu0
        %v2861 = vadd.f32 0.0, %v2860
        %v2862 = vpop.f32.mrb[0].mxu0
        %2863 = vmatprep.mubr.bf16.mxu0 0
        %2864 = vmatmul.mubr.bf16.gmra.mrb[0].mxu0 %v2774
        %v2865 = vpop.f32.mrb[0].mxu0
        %v2866 = vadd.f32 0.0, %v2865
        %v2867 = vpop.f32.mrb[0].mxu0
        %v2868 = vpop.f32.mrb[0].mxu0
        %v2869 = vadd.f32 0.0, %v2868
        %v2870 = vpop.f32.mrb[0].mxu0
        %2871 = vmatprep.mubr.bf16.mxu0 0
        %2872 = vmatmul.mubr.bf16.gmra.mrb[0].mxu0 %v2777
        %v2873 = vpop.f32.mrb[0].mxu0
        %v2874 = vadd.f32 0.0, %v2873
        %v2875 = vpop.f32.mrb[0].mxu0
        %v2876 = vpop.f32.mrb[0].mxu0
        %v2877 = vadd.f32 0.0, %v2876
        %v2878 = vpop.f32.mrb[0].mxu0
        %2879 = vmatprep.mubr.bf16.mxu0 0
        %2880 = vmatmul.mubr.bf16.gmra.mrb[0].mxu0 %v2780
        %v2881 = vpop.f32.mrb[0].mxu0
        %v2882 = vadd.f32 0.0, %v2881
        %v2883 = vpop.f32.mrb[0].mxu0
        %v2884 = vpop.f32.mrb[0].mxu0
        %v2885 = vadd.f32 0.0, %v2884
        %v2886 = vpop.f32.mrb[0].mxu0
        %2887 = vmatprep.mubr.bf16.mxu0 0
        %2888 = vmatmul.mubr.bf16.gmra.mrb[0].mxu0 %v2783
        %v2889 = vpop.f32.mrb[0].mxu0
        %v2890 = vadd.f32 0.0, %v2889
        %v2891 = vpop.f32.mrb[0].mxu0
        %v2892 = vpop.f32.mrb[0].mxu0
        %v2893 = vadd.f32 0.0, %v2892
        %v2894 = vpop.f32.mrb[0].mxu0
        %2895 = vmatprep.mubr.bf16.mxu0 0
        %2896 = vmatmul.mubr.bf16.gmra.mrb[0].mxu0 %v2786
        %v2897 = vpop.f32.mrb[0].mxu0
        %v2898 = vadd.f32 0.0, %v2897
        %v2899 = vpop.f32.mrb[0].mxu0
        %v2900 = vpop.f32.mrb[0].mxu0
        %v2901 = vadd.f32 0.0, %v2900
        %v2902 = vpop.f32.mrb[0].mxu0
        %2903 = vmatprep.mubr.bf16.mxu0 0
        %2904 = vmatmul.mubr.bf16.gmra.mrb[0].mxu0 %v2789
        %v2905 = vpop.f32.mrb[0].mxu0
        %v2906 = vadd.f32 0.0, %v2905
        %v2907 = vpop.f32.mrb[0].mxu0
        %v2908 = vpop.f32.mrb[0].mxu0
        %v2909 = vadd.f32 0.0, %v2908
        %v2910 = vpop.f32.mrb[0].mxu0
        %2911 = vmatprep.mubr.bf16.mxu0 0
        %2912 = vmatmul.mubr.bf16.gmra.mrb[0].mxu0 %v2792
        %v2913 = vpop.f32.mrb[0].mxu0
        %v2914 = vadd.f32 0.0, %v2913
        %v2915 = vpop.f32.mrb[0].mxu0
        %v2916 = vpop.f32.mrb[0].mxu0
        %v2917 = vadd.f32 0.0, %v2916
        %v2918 = vpop.f32.mrb[0].mxu0
        %2919 = vmatprep.mubr.bf16.mxu0 0
        %2920 = vmatmul.mubr.bf16.gmra.mrb[0].mxu0 %v2795
        %v2921 = vpop.f32.mrb[0].mxu0
        %v2922 = vadd.f32 0.0, %v2921
        %v2923 = vpop.f32.mrb[0].mxu0
        %v2924 = vpop.f32.mrb[0].mxu0
        %v2925 = vadd.f32 0.0, %v2924
        %v2926 = vpop.f32.mrb[0].mxu0
        %2927 = vmatprep.mubr.bf16.mxu0 0
        %2928 = vmatmul.mubr.bf16.gmra.mrb[0].mxu0 %v2798
        %v2929 = vpop.f32.mrb[0].mxu0
        %v2930 = vadd.f32 0.0, %v2929
        %v2931 = vpop.f32.mrb[0].mxu0
        %v2932 = vpop.f32.mrb[0].mxu0
        %v2933 = vadd.f32 0.0, %v2932
        %v2934 = vpop.f32.mrb[0].mxu0
        %2935 = vmatprep.mubr.bf16.mxu0 0
        %2936 = vmatmul.mubr.bf16.gmra.mrb[0].mxu0 %v2801
        %v2937 = vpop.f32.mrb[0].mxu0
        %v2938 = vadd.f32 0.0, %v2937
        %v2939 = vpop.f32.mrb[0].mxu0
        %v2940 = vpop.f32.mrb[0].mxu0
        %v2941 = vadd.f32 0.0, %v2940
        %v2942 = vpop.f32.mrb[0].mxu0
        %2943 = vmatprep.mubr.bf16.mxu0 0
        %2944 = vmatmul.mubr.bf16.gmra.mrb[0].mxu0 %v2804
        %v2945 = vpop.f32.mrb[0].mxu0
        %v2946 = vadd.f32 0.0, %v2945
        %v2947 = vpop.f32.mrb[0].mxu0
        %v2948 = vpop.f32.mrb[0].mxu0
        %v2949 = vadd.f32 0.0, %v2948
        %v2950 = vpop.f32.mrb[0].mxu0
        %2951 = vmatprep.mubr.bf16.mxu0 0
        %2952 = vmatmul.mubr.bf16.gmra.mrb[0].mxu0 %v2807
        %v2953 = vpop.f32.mrb[0].mxu0
        %v2954 = vadd.f32 0.0, %v2953
        %v2955 = vpop.f32.mrb[0].mxu0
        %v2956 = vpop.f32.mrb[0].mxu0
        %v2957 = vadd.f32 0.0, %v2956
        %v2958 = vpop.f32.mrb[0].mxu0
        %2959 = vmatprep.mubr.bf16.mxu0 0
        %2960 = vmatmul.mubr.bf16.gmra.mrb[0].mxu0 %v2810
        %v2961 = vpop.f32.mrb[0].mxu0
        %v2962 = vadd.f32 0.0, %v2961
        %v2963 = vpop.f32.mrb[0].mxu0
        %v2964 = vpop.f32.mrb[0].mxu0
        %v2965 = vadd.f32 0.0, %v2964
        %v2966 = vpop.f32.mrb[0].mxu0
        %2967 = vmatprep.mubr.bf16.mxu0 0
        %2968 = vmatmul.mubr.bf16.gmra.mrb[0].mxu0 %v2813
        %v2969 = vpop.f32.mrb[0].mxu0
        %v2970 = vadd.f32 0.0, %v2969
        %v2971 = vpop.f32.mrb[0].mxu0
        %v2972 = vpop.f32.mrb[0].mxu0
        %v2973 = vadd.f32 0.0, %v2972
        %v2974 = vpop.f32.mrb[0].mxu0
        %2975 = vdwg.mxu0
        %v2976 = vadd.f32 %v2590, %v2850
        %v2977 = vadd.f32 %v2591, %v2853
        %v2978 = vadd.f32 %v2592, %v2858
        %v2979 = vadd.f32 %v2593, %v2861
        %v2980 = vadd.f32 %v2594, %v2866
        %v2981 = vadd.f32 %v2595, %v2869
        %v2982 = vadd.f32 %v2596, %v2874
        %v2983 = vadd.f32 %v2597, %v2877
        %v2984 = vadd.f32 %v2598, %v2882
        %v2985 = vadd.f32 %v2599, %v2885
        %v2986 = vadd.f32 %v2600, %v2890
        %v2987 = vadd.f32 %v2601, %v2893
        %v2988 = vadd.f32 %v2602, %v2898
        %v2989 = vadd.f32 %v2603, %v2901
        %v2990 = vadd.f32 %v2604, %v2906
        %v2991 = vadd.f32 %v2605, %v2909
        %v2992 = vadd.f32 %v2606, %v2914
        %v2993 = vadd.f32 %v2607, %v2917
        %v2994 = vadd.f32 %v2608, %v2922
        %v2995 = vadd.f32 %v2609, %v2925
        %v2996 = vadd.f32 %v2610, %v2930
        %v2997 = vadd.f32 %v2611, %v2933
        %v2998 = vadd.f32 %v2612, %v2938
        %v2999 = vadd.f32 %v2613, %v2941
        %v3000 = vadd.f32 %v2614, %v2946
        %v3001 = vadd.f32 %v2615, %v2949
        %v3002 = vadd.f32 %v2616, %v2954
        %v3003 = vadd.f32 %v2617, %v2957
        %v3004 = vadd.f32 %v2618, %v2962
        %v3005 = vadd.f32 %v2619, %v2965
        %v3006 = vadd.f32 %v2620, %v2970
        %v3007 = vadd.f32 %v2621, %v2973
        %v3008 = vld [vmem:[%s975] sm:$0xf]
        %v3009 = vld [vmem:[%s975 + $0x4] sm:$0xf]
        %v3010 = vld [vmem:[%s975 + $0x8] sm:$0x1]
        %v3011 = vld [vmem:[%s975 + $0xc] sm:$0xf]
        %v3012 = vld [vmem:[%s975 + $0x10] sm:$0xf]
        %v3013 = vld [vmem:[%s975 + $0x14] sm:$0x1]
        %v3014 = vld [vmem:[%s975 + $0x18] sm:$0xf]
        %v3015 = vld [vmem:[%s975 + $0x1c] sm:$0xf]
        %v3016 = vld [vmem:[%s975 + $0x20] sm:$0x1]
        %v3017 = vld [vmem:[%s975 + $0x24] sm:$0xf]
        %v3018 = vld [vmem:[%s975 + $0x28] sm:$0xf]
        %v3019 = vld [vmem:[%s975 + $0x2c] sm:$0x1]
        %v3020 = vld [vmem:[%s975 + $0x30] sm:$0xf]
        %v3021 = vld [vmem:[%s975 + $0x34] sm:$0xf]
        %v3022 = vld [vmem:[%s975 + $0x38] sm:$0x1]
        %v3023 = vld [vmem:[%s975 + $0x3c] sm:$0xf]
        %v3024 = vld [vmem:[%s975 + $0x40] sm:$0xf]
        %v3025 = vld [vmem:[%s975 + $0x44] sm:$0x1]
        %v3026 = vld [vmem:[%s975 + $0x48] sm:$0xf]
        %v3027 = vld [vmem:[%s975 + $0x4c] sm:$0xf]
        %v3028 = vld [vmem:[%s975 + $0x50] sm:$0x1]
        %v3029 = vld [vmem:[%s975 + $0x54] sm:$0xf]
        %v3030 = vld [vmem:[%s975 + $0x58] sm:$0xf]
        %v3031 = vld [vmem:[%s975 + $0x5c] sm:$0x1]
        %v3032 = vld [vmem:[%s975 + $0x60] sm:$0xf]
        %v3033 = vld [vmem:[%s975 + $0x64] sm:$0xf]
        %v3034 = vld [vmem:[%s975 + $0x68] sm:$0x1]
        %v3035 = vld [vmem:[%s975 + $0x6c] sm:$0xf]
        %v3036 = vld [vmem:[%s975 + $0x70] sm:$0xf]
        %v3037 = vld [vmem:[%s975 + $0x74] sm:$0x1]
        %v3038 = vld [vmem:[%s975 + $0x78] sm:$0xf]
        %v3039 = vld [vmem:[%s975 + $0x7c] sm:$0xf]
        %v3040 = vld [vmem:[%s975 + $0x80] sm:$0x1]
        %v3041 = vld [vmem:[%s975 + $0x84] sm:$0xf]
        %v3042 = vld [vmem:[%s975 + $0x88] sm:$0xf]
        %v3043 = vld [vmem:[%s975 + $0x8c] sm:$0x1]
        %v3044 = vld [vmem:[%s975 + $0x90] sm:$0xf]
        %v3045 = vld [vmem:[%s975 + $0x94] sm:$0xf]
        %v3046 = vld [vmem:[%s975 + $0x98] sm:$0x1]
        %v3047 = vld [vmem:[%s975 + $0x9c] sm:$0xf]
        %v3048 = vld [vmem:[%s975 + $0xa0] sm:$0xf]
        %v3049 = vld [vmem:[%s975 + $0xa4] sm:$0x1]
        %v3050 = vld [vmem:[%s975 + $0xa8] sm:$0xf]
        %v3051 = vld [vmem:[%s975 + $0xac] sm:$0xf]
        %v3052 = vld [vmem:[%s975 + $0xb0] sm:$0x1]
        %v3053 = vld [vmem:[%s975 + $0xb4] sm:$0xf]
        %v3054 = vld [vmem:[%s975 + $0xb8] sm:$0xf]
        %v3055 = vld [vmem:[%s975 + $0xbc] sm:$0x1]
        %v3057 = vshrl.u32 %v3008, 16
        %v3059 = vrot.slane %v3057, 4
        %v3060 = vshll.u32 %v3008, 16
        %v3062 = vrot.slane %v3060, 5
        %v3063 = vor.u32 %v3059, %v3062
        %v3064 = vrot.slane %v3063, 4
        %v3066 = vshll.u32 %v3009, 16
        %v3068 = vrot.slane %v3066, 5
        %v3069 = vsel %vm1148, %v3064, %v3068
        %v3070 = vshrl.u32 %v3009, 16
        %v3072 = vrot.slane %v3070, 4
        %v3073 = vor.u32 %v3072, %v3068
        %v3074 = vrot.slane %v3073, 4
        %v3076 = vshll.u32 %v3010, 16
        %v3078 = vrot.slane %v3076, 5
        %v3079 = vsel %vm1148, %v3074, %v3078
        %v3081 = vshrl.u32 %v3011, 16
        %v3083 = vrot.slane %v3081, 4
        %v3084 = vshll.u32 %v3011, 16
        %v3086 = vrot.slane %v3084, 5
        %v3087 = vor.u32 %v3083, %v3086
        %v3088 = vrot.slane %v3087, 4
        %v3090 = vshll.u32 %v3012, 16
        %v3092 = vrot.slane %v3090, 5
        %v3093 = vsel %vm1148, %v3088, %v3092
        %v3094 = vshrl.u32 %v3012, 16
        %v3096 = vrot.slane %v3094, 4
        %v3097 = vor.u32 %v3096, %v3092
        %v3098 = vrot.slane %v3097, 4
        %v3100 = vshll.u32 %v3013, 16
        %v3102 = vrot.slane %v3100, 5
        %v3103 = vsel %vm1148, %v3098, %v3102
        %v3105 = vshrl.u32 %v3014, 16
        %v3107 = vrot.slane %v3105, 4
        %v3108 = vshll.u32 %v3014, 16
        %v3110 = vrot.slane %v3108, 5
        %v3111 = vor.u32 %v3107, %v3110
        %v3112 = vrot.slane %v3111, 4
        %v3114 = vshll.u32 %v3015, 16
        %v3116 = vrot.slane %v3114, 5
        %v3117 = vsel %vm1148, %v3112, %v3116
        %v3118 = vshrl.u32 %v3015, 16
        %v3120 = vrot.slane %v3118, 4
        %v3121 = vor.u32 %v3120, %v3116
        %v3122 = vrot.slane %v3121, 4
        %v3124 = vshll.u32 %v3016, 16
        %v3126 = vrot.slane %v3124, 5
        %v3127 = vsel %vm1148, %v3122, %v3126
        %v3129 = vshrl.u32 %v3017, 16
        %v3131 = vrot.slane %v3129, 4
        %v3132 = vshll.u32 %v3017, 16
        %v3134 = vrot.slane %v3132, 5
        %v3135 = vor.u32 %v3131, %v3134
        %v3136 = vrot.slane %v3135, 4
        %v3138 = vshll.u32 %v3018, 16
        %v3140 = vrot.slane %v3138, 5
        %v3141 = vsel %vm1148, %v3136, %v3140
        %v3142 = vshrl.u32 %v3018, 16
        %v3144 = vrot.slane %v3142, 4
        %v3145 = vor.u32 %v3144, %v3140
        %v3146 = vrot.slane %v3145, 4
        %v3148 = vshll.u32 %v3019, 16
        %v3150 = vrot.slane %v3148, 5
        %v3151 = vsel %vm1148, %v3146, %v3150
        %v3153 = vshrl.u32 %v3020, 16
        %v3155 = vrot.slane %v3153, 4
        %v3156 = vshll.u32 %v3020, 16
        %v3158 = vrot.slane %v3156, 5
        %v3159 = vor.u32 %v3155, %v3158
        %v3160 = vrot.slane %v3159, 4
        %v3162 = vshll.u32 %v3021, 16
        %v3164 = vrot.slane %v3162, 5
        %v3165 = vsel %vm1148, %v3160, %v3164
        %v3166 = vshrl.u32 %v3021, 16
        %v3168 = vrot.slane %v3166, 4
        %v3169 = vor.u32 %v3168, %v3164
        %v3170 = vrot.slane %v3169, 4
        %v3172 = vshll.u32 %v3022, 16
        %v3174 = vrot.slane %v3172, 5
        %v3175 = vsel %vm1148, %v3170, %v3174
        %v3177 = vshrl.u32 %v3023, 16
        %v3179 = vrot.slane %v3177, 4
        %v3180 = vshll.u32 %v3023, 16
        %v3182 = vrot.slane %v3180, 5
        %v3183 = vor.u32 %v3179, %v3182
        %v3184 = vrot.slane %v3183, 4
        %v3186 = vshll.u32 %v3024, 16
        %v3188 = vrot.slane %v3186, 5
        %v3189 = vsel %vm1148, %v3184, %v3188
        %v3190 = vshrl.u32 %v3024, 16
        %v3192 = vrot.slane %v3190, 4
        %v3193 = vor.u32 %v3192, %v3188
        %v3194 = vrot.slane %v3193, 4
        %v3196 = vshll.u32 %v3025, 16
        %v3198 = vrot.slane %v3196, 5
        %v3199 = vsel %vm1148, %v3194, %v3198
        %v3201 = vshrl.u32 %v3026, 16
        %v3203 = vrot.slane %v3201, 4
        %v3204 = vshll.u32 %v3026, 16
        %v3206 = vrot.slane %v3204, 5
        %v3207 = vor.u32 %v3203, %v3206
        %v3208 = vrot.slane %v3207, 4
        %v3210 = vshll.u32 %v3027, 16
        %v3212 = vrot.slane %v3210, 5
        %v3213 = vsel %vm1148, %v3208, %v3212
        %v3214 = vshrl.u32 %v3027, 16
        %v3216 = vrot.slane %v3214, 4
        %v3217 = vor.u32 %v3216, %v3212
        %v3218 = vrot.slane %v3217, 4
        %v3220 = vshll.u32 %v3028, 16
        %v3222 = vrot.slane %v3220, 5
        %v3223 = vsel %vm1148, %v3218, %v3222
        %v3225 = vshrl.u32 %v3029, 16
        %v3227 = vrot.slane %v3225, 4
        %v3228 = vshll.u32 %v3029, 16
        %v3230 = vrot.slane %v3228, 5
        %v3231 = vor.u32 %v3227, %v3230
        %v3232 = vrot.slane %v3231, 4
        %v3234 = vshll.u32 %v3030, 16
        %v3236 = vrot.slane %v3234, 5
        %v3237 = vsel %vm1148, %v3232, %v3236
        %v3238 = vshrl.u32 %v3030, 16
        %v3240 = vrot.slane %v3238, 4
        %v3241 = vor.u32 %v3240, %v3236
        %v3242 = vrot.slane %v3241, 4
        %v3244 = vshll.u32 %v3031, 16
        %v3246 = vrot.slane %v3244, 5
        %v3247 = vsel %vm1148, %v3242, %v3246
        %v3249 = vshrl.u32 %v3032, 16
        %v3251 = vrot.slane %v3249, 4
        %v3252 = vshll.u32 %v3032, 16
        %v3254 = vrot.slane %v3252, 5
        %v3255 = vor.u32 %v3251, %v3254
        %v3256 = vrot.slane %v3255, 4
        %v3258 = vshll.u32 %v3033, 16
        %v3260 = vrot.slane %v3258, 5
        %v3261 = vsel %vm1148, %v3256, %v3260
        %v3262 = vshrl.u32 %v3033, 16
        %v3264 = vrot.slane %v3262, 4
        %v3265 = vor.u32 %v3264, %v3260
        %v3266 = vrot.slane %v3265, 4
        %v3268 = vshll.u32 %v3034, 16
        %v3270 = vrot.slane %v3268, 5
        %v3271 = vsel %vm1148, %v3266, %v3270
        %v3273 = vshrl.u32 %v3035, 16
        %v3275 = vrot.slane %v3273, 4
        %v3276 = vshll.u32 %v3035, 16
        %v3278 = vrot.slane %v3276, 5
        %v3279 = vor.u32 %v3275, %v3278
        %v3280 = vrot.slane %v3279, 4
        %v3282 = vshll.u32 %v3036, 16
        %v3284 = vrot.slane %v3282, 5
        %v3285 = vsel %vm1148, %v3280, %v3284
        %v3286 = vshrl.u32 %v3036, 16
        %v3288 = vrot.slane %v3286, 4
        %v3289 = vor.u32 %v3288, %v3284
        %v3290 = vrot.slane %v3289, 4
        %v3292 = vshll.u32 %v3037, 16
        %v3294 = vrot.slane %v3292, 5
        %v3295 = vsel %vm1148, %v3290, %v3294
        %v3297 = vshrl.u32 %v3038, 16
        %v3299 = vrot.slane %v3297, 4
        %v3300 = vshll.u32 %v3038, 16
        %v3302 = vrot.slane %v3300, 5
        %v3303 = vor.u32 %v3299, %v3302
        %v3304 = vrot.slane %v3303, 4
        %v3306 = vshll.u32 %v3039, 16
        %v3308 = vrot.slane %v3306, 5
        %v3309 = vsel %vm1148, %v3304, %v3308
        %v3310 = vshrl.u32 %v3039, 16
        %v3312 = vrot.slane %v3310, 4
        %v3313 = vor.u32 %v3312, %v3308
        %v3314 = vrot.slane %v3313, 4
        %v3316 = vshll.u32 %v3040, 16
        %v3318 = vrot.slane %v3316, 5
        %v3319 = vsel %vm1148, %v3314, %v3318
        %v3321 = vshrl.u32 %v3041, 16
        %v3323 = vrot.slane %v3321, 4
        %v3324 = vshll.u32 %v3041, 16
        %v3326 = vrot.slane %v3324, 5
        %v3327 = vor.u32 %v3323, %v3326
        %v3328 = vrot.slane %v3327, 4
        %v3330 = vshll.u32 %v3042, 16
        %v3332 = vrot.slane %v3330, 5
        %v3333 = vsel %vm1148, %v3328, %v3332
        %v3334 = vshrl.u32 %v3042, 16
        %v3336 = vrot.slane %v3334, 4
        %v3337 = vor.u32 %v3336, %v3332
        %v3338 = vrot.slane %v3337, 4
        %v3340 = vshll.u32 %v3043, 16
        %v3342 = vrot.slane %v3340, 5
        %v3343 = vsel %vm1148, %v3338, %v3342
        %v3345 = vshrl.u32 %v3044, 16
        %v3347 = vrot.slane %v3345, 4
        %v3348 = vshll.u32 %v3044, 16
        %v3350 = vrot.slane %v3348, 5
        %v3351 = vor.u32 %v3347, %v3350
        %v3352 = vrot.slane %v3351, 4
        %v3354 = vshll.u32 %v3045, 16
        %v3356 = vrot.slane %v3354, 5
        %v3357 = vsel %vm1148, %v3352, %v3356
        %v3358 = vshrl.u32 %v3045, 16
        %v3360 = vrot.slane %v3358, 4
        %v3361 = vor.u32 %v3360, %v3356
        %v3362 = vrot.slane %v3361, 4
        %v3364 = vshll.u32 %v3046, 16
        %v3366 = vrot.slane %v3364, 5
        %v3367 = vsel %vm1148, %v3362, %v3366
        %v3369 = vshrl.u32 %v3047, 16
        %v3371 = vrot.slane %v3369, 4
        %v3372 = vshll.u32 %v3047, 16
        %v3374 = vrot.slane %v3372, 5
        %v3375 = vor.u32 %v3371, %v3374
        %v3376 = vrot.slane %v3375, 4
        %v3378 = vshll.u32 %v3048, 16
        %v3380 = vrot.slane %v3378, 5
        %v3381 = vsel %vm1148, %v3376, %v3380
        %v3382 = vshrl.u32 %v3048, 16
        %v3384 = vrot.slane %v3382, 4
        %v3385 = vor.u32 %v3384, %v3380
        %v3386 = vrot.slane %v3385, 4
        %v3388 = vshll.u32 %v3049, 16
        %v3390 = vrot.slane %v3388, 5
        %v3391 = vsel %vm1148, %v3386, %v3390
        %v3393 = vshrl.u32 %v3050, 16
        %v3395 = vrot.slane %v3393, 4
        %v3396 = vshll.u32 %v3050, 16
        %v3398 = vrot.slane %v3396, 5
        %v3399 = vor.u32 %v3395, %v3398
        %v3400 = vrot.slane %v3399, 4
        %v3402 = vshll.u32 %v3051, 16
        %v3404 = vrot.slane %v3402, 5
        %v3405 = vsel %vm1148, %v3400, %v3404
        %v3406 = vshrl.u32 %v3051, 16
        %v3408 = vrot.slane %v3406, 4
        %v3409 = vor.u32 %v3408, %v3404
        %v3410 = vrot.slane %v3409, 4
        %v3412 = vshll.u32 %v3052, 16
        %v3414 = vrot.slane %v3412, 5
        %v3415 = vsel %vm1148, %v3410, %v3414
        %v3417 = vshrl.u32 %v3053, 16
        %v3419 = vrot.slane %v3417, 4
        %v3420 = vshll.u32 %v3053, 16
        %v3422 = vrot.slane %v3420, 5
        %v3423 = vor.u32 %v3419, %v3422
        %v3424 = vrot.slane %v3423, 4
        %v3426 = vshll.u32 %v3054, 16
        %v3428 = vrot.slane %v3426, 5
        %v3429 = vsel %vm1148, %v3424, %v3428
        %v3430 = vshrl.u32 %v3054, 16
        %v3432 = vrot.slane %v3430, 4
        %v3433 = vor.u32 %v3432, %v3428
        %v3434 = vrot.slane %v3433, 4
        %v3436 = vshll.u32 %v3055, 16
        %v3438 = vrot.slane %v3436, 5
        %v3439 = vsel %vm1148, %v3434, %v3438
        %s3440 = scalar_lea.vmem [#allocation7], 128
        %v3441 = vld [vmem:[%s3440] sm:$0xf]
        %v3442 = vld [vmem:[%s3440 + $0x4] sm:$0xf]
        %v3443 = vld [vmem:[%s3440 + $0x8] sm:$0xf]
        %v3444 = vld [vmem:[%s3440 + $0xc] sm:$0xf]
        %v3445 = vld [vmem:[%s3440 + $0x10] sm:$0xf]
        %v3446 = vld [vmem:[%s3440 + $0x14] sm:$0xf]
        %v3447 = vld [vmem:[%s3440 + $0x18] sm:$0xf]
        %v3448 = vld [vmem:[%s3440 + $0x1c] sm:$0xf]
        %v3449 = vunpack.c.l.b16 %v3069
        %v3450 = vunpack.c.l.b16 %v3079
        %v3451 = vunpack.c.l.b16 %v3093
        %v3452 = vunpack.c.l.b16 %v3103
        %v3453 = vunpack.c.l.b16 %v3117
        %v3454 = vunpack.c.l.b16 %v3127
        %v3455 = vunpack.c.l.b16 %v3141
        %v3456 = vunpack.c.l.b16 %v3151
        %v3457 = vunpack.c.l.b16 %v3165
        %v3458 = vunpack.c.l.b16 %v3175
        %v3459 = vunpack.c.l.b16 %v3189
        %v3460 = vunpack.c.l.b16 %v3199
        %v3461 = vunpack.c.l.b16 %v3213
        %v3462 = vunpack.c.l.b16 %v3223
        %v3463 = vunpack.c.l.b16 %v3237
        %v3464 = vunpack.c.l.b16 %v3247
        %v3465 = vunpack.c.l.b16 %v3261
        %v3466 = vunpack.c.l.b16 %v3271
        %v3467 = vunpack.c.l.b16 %v3285
        %v3468 = vunpack.c.l.b16 %v3295
        %v3469 = vunpack.c.l.b16 %v3309
        %v3470 = vunpack.c.l.b16 %v3319
        %v3471 = vunpack.c.l.b16 %v3333
        %v3472 = vunpack.c.l.b16 %v3343
        %v3473 = vunpack.c.l.b16 %v3357
        %v3474 = vunpack.c.l.b16 %v3367
        %v3475 = vunpack.c.l.b16 %v3381
        %v3476 = vunpack.c.l.b16 %v3391
        %v3477 = vunpack.c.l.b16 %v3405
        %v3478 = vunpack.c.l.b16 %v3415
        %v3479 = vunpack.c.l.b16 %v3429
        %v3480 = vunpack.c.l.b16 %v3439
        %v3481 = vpack.c.b16 %v3450, %v3449
        %v3482 = vpack.c.b16 %v3452, %v3451
        %v3483 = vpack.c.b16 %v3454, %v3453
        %v3484 = vpack.c.b16 %v3456, %v3455
        %v3485 = vpack.c.b16 %v3458, %v3457
        %v3486 = vpack.c.b16 %v3460, %v3459
        %v3487 = vpack.c.b16 %v3462, %v3461
        %v3488 = vpack.c.b16 %v3464, %v3463
        %v3489 = vpack.c.b16 %v3466, %v3465
        %v3490 = vpack.c.b16 %v3468, %v3467
        %v3491 = vpack.c.b16 %v3470, %v3469
        %v3492 = vpack.c.b16 %v3472, %v3471
        %v3493 = vpack.c.b16 %v3474, %v3473
        %v3494 = vpack.c.b16 %v3476, %v3475
        %v3495 = vpack.c.b16 %v3478, %v3477
        %v3496 = vpack.c.b16 %v3480, %v3479
        %v3505 = vunpack.c.l.b16 %v3441
        %v3506 = vunpack.c.l.b16 %v3442
        %v3507 = vunpack.c.l.b16 %v3443
        %v3508 = vunpack.c.l.b16 %v3444
        %v3509 = vunpack.c.l.b16 %v3445
        %v3510 = vunpack.c.l.b16 %v3446
        %v3511 = vunpack.c.l.b16 %v3447
        %v3512 = vunpack.c.l.b16 %v3448
        %v3513 = vpack.c.b16 %v3506, %v3505
        %v3514 = vpack.c.b16 %v3508, %v3507
        %v3515 = vpack.c.b16 %v3510, %v3509
        %v3516 = vpack.c.b16 %v3512, %v3511
        %v3522 = vsel %vm1614, %v3481, 0
        %v3525 = vsel %vm1614, %v3482, 0
        %v3528 = vsel %vm1614, %v3483, 0
        %v3531 = vsel %vm1614, %v3484, 0
        %v3534 = vsel %vm1614, %v3485, 0
        %v3537 = vsel %vm1614, %v3486, 0
        %v3540 = vsel %vm1614, %v3487, 0
        %v3543 = vsel %vm1614, %v3488, 0
        %v3546 = vsel %vm1614, %v3489, 0
        %v3549 = vsel %vm1614, %v3490, 0
        %v3552 = vsel %vm1614, %v3491, 0
        %v3555 = vsel %vm1614, %v3492, 0
        %v3558 = vsel %vm1614, %v3493, 0
        %v3561 = vsel %vm1614, %v3494, 0
        %v3564 = vsel %vm1614, %v3495, 0
        %v3567 = vsel %vm1614, %v3496, 0
        %3569 = vmatprep.subr.bf16.mxu0 0
        %3570 = vmatpush1.bf16.msra.mxu0 %v3513
        %3571 = vmatprep.subr.bf16.mxu0 0
        %3572 = vmatpush1.bf16.msra.mxu0 %v3514
        %3573 = vmatprep.subr.bf16.mxu0 0
        %3574 = vmatpush1.bf16.msra.mxu0 %v3515
        %3575 = vmatprep.subr.bf16.mxu0 0
        %3576 = vmatpush1.bf16.msra.mxu0 %v3516
        %3577 = vmatprep.subr.bf16.mxu0 0
        %3578 = vmatpush1.bf16.msra.mxu0 0
        %3579 = vmatprep.subr.bf16.mxu0 0
        %3580 = vmatpush1.bf16.msra.mxu0 0
        %3581 = vmatprep.subr.bf16.mxu0 0
        %3582 = vmatpush1.bf16.msra.mxu0 0
        %3583 = vmatprep.subr.bf16.mxu0 0
        %3584 = vmatpush1.bf16.msra.mxu0 0
        %3585 = vmatprep.subr.bf16.mxu0 0
        %3586 = vmatpush1.bf16.msra.mxu0 0
        %3587 = vmatprep.subr.bf16.mxu0 0
        %3588 = vmatpush1.bf16.msra.mxu0 0
        %3589 = vmatprep.subr.bf16.mxu0 0
        %3590 = vmatpush1.bf16.msra.mxu0 0
        %3591 = vmatprep.subr.bf16.mxu0 0
        %3592 = vmatpush1.bf16.msra.mxu0 0
        %3593 = vmatprep.subr.bf16.mxu0 0
        %3594 = vmatpush1.bf16.msra.mxu0 0
        %3595 = vmatprep.subr.bf16.mxu0 0
        %3596 = vmatpush1.bf16.msra.mxu0 0
        %3597 = vmatprep.subr.bf16.mxu0 0
        %3598 = vmatpush1.bf16.msra.mxu0 0
        %3599 = vmatprep.subr.bf16.mxu0 0
        %3600 = vmatpush1.bf16.msra.mxu0 0
        %3601 = vmatprep.mubr.bf16.mxu0 0
        %3602 = vmatmul.mubr.bf16.gmra.mrb[0].mxu0 %v3522
        %v3603 = vpop.f32.mrb[0].mxu0
        %v3604 = vadd.f32 0.0, %v3603
        %v3605 = vpop.f32.mrb[0].mxu0
        %v3606 = vpop.f32.mrb[0].mxu0
        %v3607 = vadd.f32 0.0, %v3606
        %v3608 = vpop.f32.mrb[0].mxu0
        %3609 = vmatprep.mubr.bf16.mxu0 0
        %3610 = vmatmul.mubr.bf16.gmra.mrb[0].mxu0 %v3525
        %v3611 = vpop.f32.mrb[0].mxu0
        %v3612 = vadd.f32 0.0, %v3611
        %v3613 = vpop.f32.mrb[0].mxu0
        %v3614 = vpop.f32.mrb[0].mxu0
        %v3615 = vadd.f32 0.0, %v3614
        %v3616 = vpop.f32.mrb[0].mxu0
        %3617 = vmatprep.mubr.bf16.mxu0 0
        %3618 = vmatmul.mubr.bf16.gmra.mrb[0].mxu0 %v3528
        %v3619 = vpop.f32.mrb[0].mxu0
        %v3620 = vadd.f32 0.0, %v3619
        %v3621 = vpop.f32.mrb[0].mxu0
        %v3622 = vpop.f32.mrb[0].mxu0
        %v3623 = vadd.f32 0.0, %v3622
        %v3624 = vpop.f32.mrb[0].mxu0
        %3625 = vmatprep.mubr.bf16.mxu0 0
        %3626 = vmatmul.mubr.bf16.gmra.mrb[0].mxu0 %v3531
        %v3627 = vpop.f32.mrb[0].mxu0
        %v3628 = vadd.f32 0.0, %v3627
        %v3629 = vpop.f32.mrb[0].mxu0
        %v3630 = vpop.f32.mrb[0].mxu0
        %v3631 = vadd.f32 0.0, %v3630
        %v3632 = vpop.f32.mrb[0].mxu0
        %3633 = vmatprep.mubr.bf16.mxu0 0
        %3634 = vmatmul.mubr.bf16.gmra.mrb[0].mxu0 %v3534
        %v3635 = vpop.f32.mrb[0].mxu0
        %v3636 = vadd.f32 0.0, %v3635
        %v3637 = vpop.f32.mrb[0].mxu0
        %v3638 = vpop.f32.mrb[0].mxu0
        %v3639 = vadd.f32 0.0, %v3638
        %v3640 = vpop.f32.mrb[0].mxu0
        %3641 = vmatprep.mubr.bf16.mxu0 0
        %3642 = vmatmul.mubr.bf16.gmra.mrb[0].mxu0 %v3537
        %v3643 = vpop.f32.mrb[0].mxu0
        %v3644 = vadd.f32 0.0, %v3643
        %v3645 = vpop.f32.mrb[0].mxu0
        %v3646 = vpop.f32.mrb[0].mxu0
        %v3647 = vadd.f32 0.0, %v3646
        %v3648 = vpop.f32.mrb[0].mxu0
        %3649 = vmatprep.mubr.bf16.mxu0 0
        %3650 = vmatmul.mubr.bf16.gmra.mrb[0].mxu0 %v3540
        %v3651 = vpop.f32.mrb[0].mxu0
        %v3652 = vadd.f32 0.0, %v3651
        %v3653 = vpop.f32.mrb[0].mxu0
        %v3654 = vpop.f32.mrb[0].mxu0
        %v3655 = vadd.f32 0.0, %v3654
        %v3656 = vpop.f32.mrb[0].mxu0
        %3657 = vmatprep.mubr.bf16.mxu0 0
        %3658 = vmatmul.mubr.bf16.gmra.mrb[0].mxu0 %v3543
        %v3659 = vpop.f32.mrb[0].mxu0
        %v3660 = vadd.f32 0.0, %v3659
        %v3661 = vpop.f32.mrb[0].mxu0
        %v3662 = vpop.f32.mrb[0].mxu0
        %v3663 = vadd.f32 0.0, %v3662
        %v3664 = vpop.f32.mrb[0].mxu0
        %3665 = vmatprep.mubr.bf16.mxu0 0
        %3666 = vmatmul.mubr.bf16.gmra.mrb[0].mxu0 %v3546
        %v3667 = vpop.f32.mrb[0].mxu0
        %v3668 = vadd.f32 0.0, %v3667
        %v3669 = vpop.f32.mrb[0].mxu0
        %v3670 = vpop.f32.mrb[0].mxu0
        %v3671 = vadd.f32 0.0, %v3670
        %v3672 = vpop.f32.mrb[0].mxu0
        %3673 = vmatprep.mubr.bf16.mxu0 0
        %3674 = vmatmul.mubr.bf16.gmra.mrb[0].mxu0 %v3549
        %v3675 = vpop.f32.mrb[0].mxu0
        %v3676 = vadd.f32 0.0, %v3675
        %v3677 = vpop.f32.mrb[0].mxu0
        %v3678 = vpop.f32.mrb[0].mxu0
        %v3679 = vadd.f32 0.0, %v3678
        %v3680 = vpop.f32.mrb[0].mxu0
        %3681 = vmatprep.mubr.bf16.mxu0 0
        %3682 = vmatmul.mubr.bf16.gmra.mrb[0].mxu0 %v3552
        %v3683 = vpop.f32.mrb[0].mxu0
        %v3684 = vadd.f32 0.0, %v3683
        %v3685 = vpop.f32.mrb[0].mxu0
        %v3686 = vpop.f32.mrb[0].mxu0
        %v3687 = vadd.f32 0.0, %v3686
        %v3688 = vpop.f32.mrb[0].mxu0
        %3689 = vmatprep.mubr.bf16.mxu0 0
        %3690 = vmatmul.mubr.bf16.gmra.mrb[0].mxu0 %v3555
        %v3691 = vpop.f32.mrb[0].mxu0
        %v3692 = vadd.f32 0.0, %v3691
        %v3693 = vpop.f32.mrb[0].mxu0
        %v3694 = vpop.f32.mrb[0].mxu0
        %v3695 = vadd.f32 0.0, %v3694
        %v3696 = vpop.f32.mrb[0].mxu0
        %3697 = vmatprep.mubr.bf16.mxu0 0
        %3698 = vmatmul.mubr.bf16.gmra.mrb[0].mxu0 %v3558
        %v3699 = vpop.f32.mrb[0].mxu0
        %v3700 = vadd.f32 0.0, %v3699
        %v3701 = vpop.f32.mrb[0].mxu0
        %v3702 = vpop.f32.mrb[0].mxu0
        %v3703 = vadd.f32 0.0, %v3702
        %v3704 = vpop.f32.mrb[0].mxu0
        %3705 = vmatprep.mubr.bf16.mxu0 0
        %3706 = vmatmul.mubr.bf16.gmra.mrb[0].mxu0 %v3561
        %v3707 = vpop.f32.mrb[0].mxu0
        %v3708 = vadd.f32 0.0, %v3707
        %v3709 = vpop.f32.mrb[0].mxu0
        %v3710 = vpop.f32.mrb[0].mxu0
        %v3711 = vadd.f32 0.0, %v3710
        %v3712 = vpop.f32.mrb[0].mxu0
        %3713 = vmatprep.mubr.bf16.mxu0 0
        %3714 = vmatmul.mubr.bf16.gmra.mrb[0].mxu0 %v3564
        %v3715 = vpop.f32.mrb[0].mxu0
        %v3716 = vadd.f32 0.0, %v3715
        %v3717 = vpop.f32.mrb[0].mxu0
        %v3718 = vpop.f32.mrb[0].mxu0
        %v3719 = vadd.f32 0.0, %v3718
        %v3720 = vpop.f32.mrb[0].mxu0
        %3721 = vmatprep.mubr.bf16.mxu0 0
        %3722 = vmatmul.mubr.bf16.gmra.mrb[0].mxu0 %v3567
        %v3723 = vpop.f32.mrb[0].mxu0
        %v3724 = vadd.f32 0.0, %v3723
        %v3725 = vpop.f32.mrb[0].mxu0
        %v3726 = vpop.f32.mrb[0].mxu0
        %v3727 = vadd.f32 0.0, %v3726
        %v3728 = vpop.f32.mrb[0].mxu0
        %3729 = vdwg.mxu0
        %v3730 = vadd.f32 %v2976, %v3604
        %v3731 = vadd.f32 %v2977, %v3607
        %v3732 = vadd.f32 %v2978, %v3612
        %v3733 = vadd.f32 %v2979, %v3615
        %v3734 = vadd.f32 %v2980, %v3620
        %v3735 = vadd.f32 %v2981, %v3623
        %v3736 = vadd.f32 %v2982, %v3628
        %v3737 = vadd.f32 %v2983, %v3631
        %v3738 = vadd.f32 %v2984, %v3636
        %v3739 = vadd.f32 %v2985, %v3639
        %v3740 = vadd.f32 %v2986, %v3644
        %v3741 = vadd.f32 %v2987, %v3647
        %v3742 = vadd.f32 %v2988, %v3652
        %v3743 = vadd.f32 %v2989, %v3655
        %v3744 = vadd.f32 %v2990, %v3660
        %v3745 = vadd.f32 %v2991, %v3663
        %v3746 = vadd.f32 %v2992, %v3668
        %v3747 = vadd.f32 %v2993, %v3671
        %v3748 = vadd.f32 %v2994, %v3676
        %v3749 = vadd.f32 %v2995, %v3679
        %v3750 = vadd.f32 %v2996, %v3684
        %v3751 = vadd.f32 %v2997, %v3687
        %v3752 = vadd.f32 %v2998, %v3692
        %v3753 = vadd.f32 %v2999, %v3695
        %v3754 = vadd.f32 %v3000, %v3700
        %v3755 = vadd.f32 %v3001, %v3703
        %v3756 = vadd.f32 %v3002, %v3708
        %v3757 = vadd.f32 %v3003, %v3711
        %v3758 = vadd.f32 %v3004, %v3716
        %v3759 = vadd.f32 %v3005, %v3719
        %v3760 = vadd.f32 %v3006, %v3724
        %v3761 = vadd.f32 %v3007, %v3727
        %v3762 = vld [vmem:[%s975] sm:$0xe]
        %v3763 = vld [vmem:[%s975 + $0xc] sm:$0xe]
        %v3764 = vld [vmem:[%s975 + $0x18] sm:$0xe]
        %v3765 = vld [vmem:[%s975 + $0x24] sm:$0xe]
        %v3766 = vld [vmem:[%s975 + $0x30] sm:$0xe]
        %v3767 = vld [vmem:[%s975 + $0x3c] sm:$0xe]
        %v3768 = vld [vmem:[%s975 + $0x48] sm:$0xe]
        %v3769 = vld [vmem:[%s975 + $0x54] sm:$0xe]
        %v3770 = vld [vmem:[%s975 + $0x60] sm:$0xe]
        %v3771 = vld [vmem:[%s975 + $0x6c] sm:$0xe]
        %v3772 = vld [vmem:[%s975 + $0x78] sm:$0xe]
        %v3773 = vld [vmem:[%s975 + $0x84] sm:$0xe]
        %v3774 = vld [vmem:[%s975 + $0x90] sm:$0xe]
        %v3775 = vld [vmem:[%s975 + $0x9c] sm:$0xe]
        %v3776 = vld [vmem:[%s975 + $0xa8] sm:$0xe]
        %v3777 = vld [vmem:[%s975 + $0xb4] sm:$0xe]
        %v3826 = vrot.slane %v3762, 5
        %v3827 = vrot.slane %v3826, 4
        %v3828 = vrot.slane %v3009, 5
        %v3829 = vsel %vm2187, %v3827, %v3828
        %v3830 = vrot.slane %v3828, 4
        %v3831 = vrot.slane %v3010, 5
        %v3832 = vsel %vm2187, %v3830, %v3831
        %v3833 = vrot.slane %v3763, 5
        %v3834 = vrot.slane %v3833, 4
        %v3835 = vrot.slane %v3012, 5
        %v3836 = vsel %vm2187, %v3834, %v3835
        %v3837 = vrot.slane %v3835, 4
        %v3838 = vrot.slane %v3013, 5
        %v3839 = vsel %vm2187, %v3837, %v3838
        %v3840 = vrot.slane %v3764, 5
        %v3841 = vrot.slane %v3840, 4
        %v3842 = vrot.slane %v3015, 5
        %v3843 = vsel %vm2187, %v3841, %v3842
        %v3844 = vrot.slane %v3842, 4
        %v3845 = vrot.slane %v3016, 5
        %v3846 = vsel %vm2187, %v3844, %v3845
        %v3847 = vrot.slane %v3765, 5
        %v3848 = vrot.slane %v3847, 4
        %v3849 = vrot.slane %v3018, 5
        %v3850 = vsel %vm2187, %v3848, %v3849
        %v3851 = vrot.slane %v3849, 4
        %v3852 = vrot.slane %v3019, 5
        %v3853 = vsel %vm2187, %v3851, %v3852
        %v3854 = vrot.slane %v3766, 5
        %v3855 = vrot.slane %v3854, 4
        %v3856 = vrot.slane %v3021, 5
        %v3857 = vsel %vm2187, %v3855, %v3856
        %v3858 = vrot.slane %v3856, 4
        %v3859 = vrot.slane %v3022, 5
        %v3860 = vsel %vm2187, %v3858, %v3859
        %v3861 = vrot.slane %v3767, 5
        %v3862 = vrot.slane %v3861, 4
        %v3863 = vrot.slane %v3024, 5
        %v3864 = vsel %vm2187, %v3862, %v3863
        %v3865 = vrot.slane %v3863, 4
        %v3866 = vrot.slane %v3025, 5
        %v3867 = vsel %vm2187, %v3865, %v3866
        %v3868 = vrot.slane %v3768, 5
        %v3869 = vrot.slane %v3868, 4
        %v3870 = vrot.slane %v3027, 5
        %v3871 = vsel %vm2187, %v3869, %v3870
        %v3872 = vrot.slane %v3870, 4
        %v3873 = vrot.slane %v3028, 5
        %v3874 = vsel %vm2187, %v3872, %v3873
        %v3875 = vrot.slane %v3769, 5
        %v3876 = vrot.slane %v3875, 4
        %v3877 = vrot.slane %v3030, 5
        %v3878 = vsel %vm2187, %v3876, %v3877
        %v3879 = vrot.slane %v3877, 4
        %v3880 = vrot.slane %v3031, 5
        %v3881 = vsel %vm2187, %v3879, %v3880
        %v3882 = vrot.slane %v3770, 5
        %v3883 = vrot.slane %v3882, 4
        %v3884 = vrot.slane %v3033, 5
        %v3885 = vsel %vm2187, %v3883, %v3884
        %v3886 = vrot.slane %v3884, 4
        %v3887 = vrot.slane %v3034, 5
        %v3888 = vsel %vm2187, %v3886, %v3887
        %v3889 = vrot.slane %v3771, 5
        %v3890 = vrot.slane %v3889, 4
        %v3891 = vrot.slane %v3036, 5
        %v3892 = vsel %vm2187, %v3890, %v3891
        %v3893 = vrot.slane %v3891, 4
        %v3894 = vrot.slane %v3037, 5
        %v3895 = vsel %vm2187, %v3893, %v3894
        %v3896 = vrot.slane %v3772, 5
        %v3897 = vrot.slane %v3896, 4
        %v3898 = vrot.slane %v3039, 5
        %v3899 = vsel %vm2187, %v3897, %v3898
        %v3900 = vrot.slane %v3898, 4
        %v3901 = vrot.slane %v3040, 5
        %v3902 = vsel %vm2187, %v3900, %v3901
        %v3903 = vrot.slane %v3773, 5
        %v3904 = vrot.slane %v3903, 4
        %v3905 = vrot.slane %v3042, 5
        %v3906 = vsel %vm2187, %v3904, %v3905
        %v3907 = vrot.slane %v3905, 4
        %v3908 = vrot.slane %v3043, 5
        %v3909 = vsel %vm2187, %v3907, %v3908
        %v3910 = vrot.slane %v3774, 5
        %v3911 = vrot.slane %v3910, 4
        %v3912 = vrot.slane %v3045, 5
        %v3913 = vsel %vm2187, %v3911, %v3912
        %v3914 = vrot.slane %v3912, 4
        %v3915 = vrot.slane %v3046, 5
        %v3916 = vsel %vm2187, %v3914, %v3915
        %v3917 = vrot.slane %v3775, 5
        %v3918 = vrot.slane %v3917, 4
        %v3919 = vrot.slane %v3048, 5
        %v3920 = vsel %vm2187, %v3918, %v3919
        %v3921 = vrot.slane %v3919, 4
        %v3922 = vrot.slane %v3049, 5
        %v3923 = vsel %vm2187, %v3921, %v3922
        %v3924 = vrot.slane %v3776, 5
        %v3925 = vrot.slane %v3924, 4
        %v3926 = vrot.slane %v3051, 5
        %v3927 = vsel %vm2187, %v3925, %v3926
        %v3928 = vrot.slane %v3926, 4
        %v3929 = vrot.slane %v3052, 5
        %v3930 = vsel %vm2187, %v3928, %v3929
        %v3931 = vrot.slane %v3777, 5
        %v3932 = vrot.slane %v3931, 4
        %v3933 = vrot.slane %v3054, 5
        %v3934 = vsel %vm2187, %v3932, %v3933
        %v3935 = vrot.slane %v3933, 4
        %v3936 = vrot.slane %v3055, 5
        %v3937 = vsel %vm2187, %v3935, %v3936
        %s3938 = scalar_lea.vmem [#allocation7], 160
        %v3939 = vld [vmem:[%s3938] sm:$0xf]
        %v3940 = vld [vmem:[%s3938 + $0x4] sm:$0xf]
        %v3941 = vld [vmem:[%s3938 + $0x8] sm:$0xf]
        %v3942 = vld [vmem:[%s3938 + $0xc] sm:$0xf]
        %v3943 = vld [vmem:[%s3938 + $0x10] sm:$0xf]
        %v3944 = vld [vmem:[%s3938 + $0x14] sm:$0xf]
        %v3945 = vld [vmem:[%s3938 + $0x18] sm:$0xf]
        %v3946 = vld [vmem:[%s3938 + $0x1c] sm:$0xf]
        %v3947 = vunpack.c.l.b16 %v3829
        %v3948 = vunpack.c.l.b16 %v3832
        %v3949 = vunpack.c.l.b16 %v3836
        %v3950 = vunpack.c.l.b16 %v3839
        %v3951 = vunpack.c.l.b16 %v3843
        %v3952 = vunpack.c.l.b16 %v3846
        %v3953 = vunpack.c.l.b16 %v3850
        %v3954 = vunpack.c.l.b16 %v3853
        %v3955 = vunpack.c.l.b16 %v3857
        %v3956 = vunpack.c.l.b16 %v3860
        %v3957 = vunpack.c.l.b16 %v3864
        %v3958 = vunpack.c.l.b16 %v3867
        %v3959 = vunpack.c.l.b16 %v3871
        %v3960 = vunpack.c.l.b16 %v3874
        %v3961 = vunpack.c.l.b16 %v3878
        %v3962 = vunpack.c.l.b16 %v3881
        %v3963 = vunpack.c.l.b16 %v3885
        %v3964 = vunpack.c.l.b16 %v3888
        %v3965 = vunpack.c.l.b16 %v3892
        %v3966 = vunpack.c.l.b16 %v3895
        %v3967 = vunpack.c.l.b16 %v3899
        %v3968 = vunpack.c.l.b16 %v3902
        %v3969 = vunpack.c.l.b16 %v3906
        %v3970 = vunpack.c.l.b16 %v3909
        %v3971 = vunpack.c.l.b16 %v3913
        %v3972 = vunpack.c.l.b16 %v3916
        %v3973 = vunpack.c.l.b16 %v3920
        %v3974 = vunpack.c.l.b16 %v3923
        %v3975 = vunpack.c.l.b16 %v3927
        %v3976 = vunpack.c.l.b16 %v3930
        %v3977 = vunpack.c.l.b16 %v3934
        %v3978 = vunpack.c.l.b16 %v3937
        %v3979 = vpack.c.b16 %v3948, %v3947
        %v3980 = vpack.c.b16 %v3950, %v3949
        %v3981 = vpack.c.b16 %v3952, %v3951
        %v3982 = vpack.c.b16 %v3954, %v3953
        %v3983 = vpack.c.b16 %v3956, %v3955
        %v3984 = vpack.c.b16 %v3958, %v3957
        %v3985 = vpack.c.b16 %v3960, %v3959
        %v3986 = vpack.c.b16 %v3962, %v3961
        %v3987 = vpack.c.b16 %v3964, %v3963
        %v3988 = vpack.c.b16 %v3966, %v3965
        %v3989 = vpack.c.b16 %v3968, %v3967
        %v3990 = vpack.c.b16 %v3970, %v3969
        %v3991 = vpack.c.b16 %v3972, %v3971
        %v3992 = vpack.c.b16 %v3974, %v3973
        %v3993 = vpack.c.b16 %v3976, %v3975
        %v3994 = vpack.c.b16 %v3978, %v3977
        %v4003 = vunpack.c.l.b16 %v3939
        %v4004 = vunpack.c.l.b16 %v3940
        %v4005 = vunpack.c.l.b16 %v3941
        %v4006 = vunpack.c.l.b16 %v3942
        %v4007 = vunpack.c.l.b16 %v3943
        %v4008 = vunpack.c.l.b16 %v3944
        %v4009 = vunpack.c.l.b16 %v3945
        %v4010 = vunpack.c.l.b16 %v3946
        %v4011 = vpack.c.b16 %v4004, %v4003
        %v4012 = vpack.c.b16 %v4006, %v4005
        %v4013 = vpack.c.b16 %v4008, %v4007
        %v4014 = vpack.c.b16 %v4010, %v4009
        %v4020 = vsel %vm1614, %v3979, 0
        %v4023 = vsel %vm1614, %v3980, 0
        %v4026 = vsel %vm1614, %v3981, 0
        %v4029 = vsel %vm1614, %v3982, 0
        %v4032 = vsel %vm1614, %v3983, 0
        %v4035 = vsel %vm1614, %v3984, 0
        %v4038 = vsel %vm1614, %v3985, 0
        %v4041 = vsel %vm1614, %v3986, 0
        %v4044 = vsel %vm1614, %v3987, 0
        %v4047 = vsel %vm1614, %v3988, 0
        %v4050 = vsel %vm1614, %v3989, 0
        %v4053 = vsel %vm1614, %v3990, 0
        %v4056 = vsel %vm1614, %v3991, 0
        %v4059 = vsel %vm1614, %v3992, 0
        %v4062 = vsel %vm1614, %v3993, 0
        %v4065 = vsel %vm1614, %v3994, 0
        %4067 = vmatprep.subr.bf16.mxu0 0
        %4068 = vmatpush1.bf16.msra.mxu0 %v4011
        %4069 = vmatprep.subr.bf16.mxu0 0
        %4070 = vmatpush1.bf16.msra.mxu0 %v4012
        %4071 = vmatprep.subr.bf16.mxu0 0
        %4072 = vmatpush1.bf16.msra.mxu0 %v4013
        %4073 = vmatprep.subr.bf16.mxu0 0
        %4074 = vmatpush1.bf16.msra.mxu0 %v4014
        %4075 = vmatprep.subr.bf16.mxu0 0
        %4076 = vmatpush1.bf16.msra.mxu0 0
        %4077 = vmatprep.subr.bf16.mxu0 0
        %4078 = vmatpush1.bf16.msra.mxu0 0
        %4079 = vmatprep.subr.bf16.mxu0 0
        %4080 = vmatpush1.bf16.msra.mxu0 0
        %4081 = vmatprep.subr.bf16.mxu0 0
        %4082 = vmatpush1.bf16.msra.mxu0 0
        %4083 = vmatprep.subr.bf16.mxu0 0
        %4084 = vmatpush1.bf16.msra.mxu0 0
        %4085 = vmatprep.subr.bf16.mxu0 0
        %4086 = vmatpush1.bf16.msra.mxu0 0
        %4087 = vmatprep.subr.bf16.mxu0 0
        %4088 = vmatpush1.bf16.msra.mxu0 0
        %4089 = vmatprep.subr.bf16.mxu0 0
        %4090 = vmatpush1.bf16.msra.mxu0 0
        %4091 = vmatprep.subr.bf16.mxu0 0
        %4092 = vmatpush1.bf16.msra.mxu0 0
        %4093 = vmatprep.subr.bf16.mxu0 0
        %4094 = vmatpush1.bf16.msra.mxu0 0
        %4095 = vmatprep.subr.bf16.mxu0 0
        %4096 = vmatpush1.bf16.msra.mxu0 0
        %4097 = vmatprep.subr.bf16.mxu0 0
        %4098 = vmatpush1.bf16.msra.mxu0 0
        %4099 = vmatprep.mubr.bf16.mxu0 0
        %4100 = vmatmul.mubr.bf16.gmra.mrb[0].mxu0 %v4020
        %v4101 = vpop.f32.mrb[0].mxu0
        %v4102 = vadd.f32 0.0, %v4101
        %v4103 = vpop.f32.mrb[0].mxu0
        %v4104 = vpop.f32.mrb[0].mxu0
        %v4105 = vadd.f32 0.0, %v4104
        %v4106 = vpop.f32.mrb[0].mxu0
        %4107 = vmatprep.mubr.bf16.mxu0 0
        %4108 = vmatmul.mubr.bf16.gmra.mrb[0].mxu0 %v4023
        %v4109 = vpop.f32.mrb[0].mxu0
        %v4110 = vadd.f32 0.0, %v4109
        %v4111 = vpop.f32.mrb[0].mxu0
        %v4112 = vpop.f32.mrb[0].mxu0
        %v4113 = vadd.f32 0.0, %v4112
        %v4114 = vpop.f32.mrb[0].mxu0
        %4115 = vmatprep.mubr.bf16.mxu0 0
        %4116 = vmatmul.mubr.bf16.gmra.mrb[0].mxu0 %v4026
        %v4117 = vpop.f32.mrb[0].mxu0
        %v4118 = vadd.f32 0.0, %v4117
        %v4119 = vpop.f32.mrb[0].mxu0
        %v4120 = vpop.f32.mrb[0].mxu0
        %v4121 = vadd.f32 0.0, %v4120
        %v4122 = vpop.f32.mrb[0].mxu0
        %4123 = vmatprep.mubr.bf16.mxu0 0
        %4124 = vmatmul.mubr.bf16.gmra.mrb[0].mxu0 %v4029
        %v4125 = vpop.f32.mrb[0].mxu0
        %v4126 = vadd.f32 0.0, %v4125
        %v4127 = vpop.f32.mrb[0].mxu0
        %v4128 = vpop.f32.mrb[0].mxu0
        %v4129 = vadd.f32 0.0, %v4128
        %v4130 = vpop.f32.mrb[0].mxu0
        %4131 = vmatprep.mubr.bf16.mxu0 0
        %4132 = vmatmul.mubr.bf16.gmra.mrb[0].mxu0 %v4032
        %v4133 = vpop.f32.mrb[0].mxu0
        %v4134 = vadd.f32 0.0, %v4133
        %v4135 = vpop.f32.mrb[0].mxu0
        %v4136 = vpop.f32.mrb[0].mxu0
        %v4137 = vadd.f32 0.0, %v4136
        %v4138 = vpop.f32.mrb[0].mxu0
        %4139 = vmatprep.mubr.bf16.mxu0 0
        %4140 = vmatmul.mubr.bf16.gmra.mrb[0].mxu0 %v4035
        %v4141 = vpop.f32.mrb[0].mxu0
        %v4142 = vadd.f32 0.0, %v4141
        %v4143 = vpop.f32.mrb[0].mxu0
        %v4144 = vpop.f32.mrb[0].mxu0
        %v4145 = vadd.f32 0.0, %v4144
        %v4146 = vpop.f32.mrb[0].mxu0
        %4147 = vmatprep.mubr.bf16.mxu0 0
        %4148 = vmatmul.mubr.bf16.gmra.mrb[0].mxu0 %v4038
        %v4149 = vpop.f32.mrb[0].mxu0
        %v4150 = vadd.f32 0.0, %v4149
        %v4151 = vpop.f32.mrb[0].mxu0
        %v4152 = vpop.f32.mrb[0].mxu0
        %v4153 = vadd.f32 0.0, %v4152
        %v4154 = vpop.f32.mrb[0].mxu0
        %4155 = vmatprep.mubr.bf16.mxu0 0
        %4156 = vmatmul.mubr.bf16.gmra.mrb[0].mxu0 %v4041
        %v4157 = vpop.f32.mrb[0].mxu0
        %v4158 = vadd.f32 0.0, %v4157
        %v4159 = vpop.f32.mrb[0].mxu0
        %v4160 = vpop.f32.mrb[0].mxu0
        %v4161 = vadd.f32 0.0, %v4160
        %v4162 = vpop.f32.mrb[0].mxu0
        %4163 = vmatprep.mubr.bf16.mxu0 0
        %4164 = vmatmul.mubr.bf16.gmra.mrb[0].mxu0 %v4044
        %v4165 = vpop.f32.mrb[0].mxu0
        %v4166 = vadd.f32 0.0, %v4165
        %v4167 = vpop.f32.mrb[0].mxu0
        %v4168 = vpop.f32.mrb[0].mxu0
        %v4169 = vadd.f32 0.0, %v4168
        %v4170 = vpop.f32.mrb[0].mxu0
        %4171 = vmatprep.mubr.bf16.mxu0 0
        %4172 = vmatmul.mubr.bf16.gmra.mrb[0].mxu0 %v4047
        %v4173 = vpop.f32.mrb[0].mxu0
        %v4174 = vadd.f32 0.0, %v4173
        %v4175 = vpop.f32.mrb[0].mxu0
        %v4176 = vpop.f32.mrb[0].mxu0
        %v4177 = vadd.f32 0.0, %v4176
        %v4178 = vpop.f32.mrb[0].mxu0
        %4179 = vmatprep.mubr.bf16.mxu0 0
        %4180 = vmatmul.mubr.bf16.gmra.mrb[0].mxu0 %v4050
        %v4181 = vpop.f32.mrb[0].mxu0
        %v4182 = vadd.f32 0.0, %v4181
        %v4183 = vpop.f32.mrb[0].mxu0
        %v4184 = vpop.f32.mrb[0].mxu0
        %v4185 = vadd.f32 0.0, %v4184
        %v4186 = vpop.f32.mrb[0].mxu0
        %4187 = vmatprep.mubr.bf16.mxu0 0
        %4188 = vmatmul.mubr.bf16.gmra.mrb[0].mxu0 %v4053
        %v4189 = vpop.f32.mrb[0].mxu0
        %v4190 = vadd.f32 0.0, %v4189
        %v4191 = vpop.f32.mrb[0].mxu0
        %v4192 = vpop.f32.mrb[0].mxu0
        %v4193 = vadd.f32 0.0, %v4192
        %v4194 = vpop.f32.mrb[0].mxu0
        %4195 = vmatprep.mubr.bf16.mxu0 0
        %4196 = vmatmul.mubr.bf16.gmra.mrb[0].mxu0 %v4056
        %v4197 = vpop.f32.mrb[0].mxu0
        %v4198 = vadd.f32 0.0, %v4197
        %v4199 = vpop.f32.mrb[0].mxu0
        %v4200 = vpop.f32.mrb[0].mxu0
        %v4201 = vadd.f32 0.0, %v4200
        %v4202 = vpop.f32.mrb[0].mxu0
        %4203 = vmatprep.mubr.bf16.mxu0 0
        %4204 = vmatmul.mubr.bf16.gmra.mrb[0].mxu0 %v4059
        %v4205 = vpop.f32.mrb[0].mxu0
        %v4206 = vadd.f32 0.0, %v4205
        %v4207 = vpop.f32.mrb[0].mxu0
        %v4208 = vpop.f32.mrb[0].mxu0
        %v4209 = vadd.f32 0.0, %v4208
        %v4210 = vpop.f32.mrb[0].mxu0
        %4211 = vmatprep.mubr.bf16.mxu0 0
        %4212 = vmatmul.mubr.bf16.gmra.mrb[0].mxu0 %v4062
        %v4213 = vpop.f32.mrb[0].mxu0
        %v4214 = vadd.f32 0.0, %v4213
        %v4215 = vpop.f32.mrb[0].mxu0
        %v4216 = vpop.f32.mrb[0].mxu0
        %v4217 = vadd.f32 0.0, %v4216
        %v4218 = vpop.f32.mrb[0].mxu0
        %4219 = vmatprep.mubr.bf16.mxu0 0
        %4220 = vmatmul.mubr.bf16.gmra.mrb[0].mxu0 %v4065
        %v4221 = vpop.f32.mrb[0].mxu0
        %v4222 = vadd.f32 0.0, %v4221
        %v4223 = vpop.f32.mrb[0].mxu0
        %v4224 = vpop.f32.mrb[0].mxu0
        %v4225 = vadd.f32 0.0, %v4224
        %v4226 = vpop.f32.mrb[0].mxu0
        %4227 = vdwg.mxu0
        %v4228 = vadd.f32 %v3730, %v4102
        %v4229 = vadd.f32 %v3731, %v4105
        %v4230 = vadd.f32 %v3732, %v4110
        %v4231 = vadd.f32 %v3733, %v4113
        %v4232 = vadd.f32 %v3734, %v4118
        %v4233 = vadd.f32 %v3735, %v4121
        %v4234 = vadd.f32 %v3736, %v4126
        %v4235 = vadd.f32 %v3737, %v4129
        %v4236 = vadd.f32 %v3738, %v4134
        %v4237 = vadd.f32 %v3739, %v4137
        %v4238 = vadd.f32 %v3740, %v4142
        %v4239 = vadd.f32 %v3741, %v4145
        %v4240 = vadd.f32 %v3742, %v4150
        %v4241 = vadd.f32 %v3743, %v4153
        %v4242 = vadd.f32 %v3744, %v4158
        %v4243 = vadd.f32 %v3745, %v4161
        %v4244 = vadd.f32 %v3746, %v4166
        %v4245 = vadd.f32 %v3747, %v4169
        %v4246 = vadd.f32 %v3748, %v4174
        %v4247 = vadd.f32 %v3749, %v4177
        %v4248 = vadd.f32 %v3750, %v4182
        %v4249 = vadd.f32 %v3751, %v4185
        %v4250 = vadd.f32 %v3752, %v4190
        %v4251 = vadd.f32 %v3753, %v4193
        %v4252 = vadd.f32 %v3754, %v4198
        %v4253 = vadd.f32 %v3755, %v4201
        %v4254 = vadd.f32 %v3756, %v4206
        %v4255 = vadd.f32 %v3757, %v4209
        %v4256 = vadd.f32 %v3758, %v4214
        %v4257 = vadd.f32 %v3759, %v4217
        %v4258 = vadd.f32 %v3760, %v4222
        %v4259 = vadd.f32 %v3761, %v4225
        %s4260 = scalar_lea.vmem [#allocation2], 24
        %v4261 = vld [vmem:[%s4260] sm:$0xf]
        %v4262 = vld [vmem:[%s4260 + $0x4] sm:$0xf]
        %v4263 = vld [vmem:[%s4260 + $0xc] sm:$0xf]
        %v4264 = vld [vmem:[%s4260 + $0x10] sm:$0xf]
        %v4265 = vld [vmem:[%s4260 + $0x18] sm:$0xf]
        %v4266 = vld [vmem:[%s4260 + $0x1c] sm:$0xf]
        %v4267 = vld [vmem:[%s4260 + $0x24] sm:$0xf]
        %v4268 = vld [vmem:[%s4260 + $0x28] sm:$0xf]
        %v4269 = vld [vmem:[%s4260 + $0x30] sm:$0xf]
        %v4270 = vld [vmem:[%s4260 + $0x34] sm:$0xf]
        %v4271 = vld [vmem:[%s4260 + $0x3c] sm:$0xf]
        %v4272 = vld [vmem:[%s4260 + $0x40] sm:$0xf]
        %v4273 = vld [vmem:[%s4260 + $0x48] sm:$0xf]
        %v4274 = vld [vmem:[%s4260 + $0x4c] sm:$0xf]
        %v4275 = vld [vmem:[%s4260 + $0x54] sm:$0xf]
        %v4276 = vld [vmem:[%s4260 + $0x58] sm:$0xf]
        %v4277 = vld [vmem:[%s4260 + $0x60] sm:$0xf]
        %v4278 = vld [vmem:[%s4260 + $0x64] sm:$0xf]
        %v4279 = vld [vmem:[%s4260 + $0x6c] sm:$0xf]
        %v4280 = vld [vmem:[%s4260 + $0x70] sm:$0xf]
        %v4281 = vld [vmem:[%s4260 + $0x78] sm:$0xf]
        %v4282 = vld [vmem:[%s4260 + $0x7c] sm:$0xf]
        %v4283 = vld [vmem:[%s4260 + $0x84] sm:$0xf]
        %v4284 = vld [vmem:[%s4260 + $0x88] sm:$0xf]
        %v4285 = vld [vmem:[%s4260 + $0x90] sm:$0xf]
        %v4286 = vld [vmem:[%s4260 + $0x94] sm:$0xf]
        %v4287 = vld [vmem:[%s4260 + $0x9c] sm:$0xf]
        %v4288 = vld [vmem:[%s4260 + $0xa0] sm:$0xf]
        %v4289 = vld [vmem:[%s4260 + $0xa8] sm:$0xf]
        %v4290 = vld [vmem:[%s4260 + $0xac] sm:$0xf]
        %v4291 = vld [vmem:[%s4260 + $0xb4] sm:$0xf]
        %v4292 = vld [vmem:[%s4260 + $0xb8] sm:$0xf]
        %s4293 = scalar_lea.vmem [#allocation7], 192
        %v4294 = vld [vmem:[%s4293] sm:$0xf]
        %v4295 = vld [vmem:[%s4293 + $0x4] sm:$0xf]
        %v4296 = vld [vmem:[%s4293 + $0x8] sm:$0xf]
        %v4297 = vld [vmem:[%s4293 + $0xc] sm:$0xf]
        %v4298 = vld [vmem:[%s4293 + $0x10] sm:$0xf]
        %v4299 = vld [vmem:[%s4293 + $0x14] sm:$0xf]
        %v4300 = vld [vmem:[%s4293 + $0x18] sm:$0xf]
        %v4301 = vld [vmem:[%s4293 + $0x1c] sm:$0xf]
        %v4334 = vunpack.c.l.b16 %v4261
        %v4335 = vunpack.c.l.b16 %v4262
        %v4336 = vunpack.c.l.b16 %v4263
        %v4337 = vunpack.c.l.b16 %v4264
        %v4338 = vunpack.c.l.b16 %v4265
        %v4339 = vunpack.c.l.b16 %v4266
        %v4340 = vunpack.c.l.b16 %v4267
        %v4341 = vunpack.c.l.b16 %v4268
        %v4342 = vunpack.c.l.b16 %v4269
        %v4343 = vunpack.c.l.b16 %v4270
        %v4344 = vunpack.c.l.b16 %v4271
        %v4345 = vunpack.c.l.b16 %v4272
        %v4346 = vunpack.c.l.b16 %v4273
        %v4347 = vunpack.c.l.b16 %v4274
        %v4348 = vunpack.c.l.b16 %v4275
        %v4349 = vunpack.c.l.b16 %v4276
        %v4350 = vunpack.c.l.b16 %v4277
        %v4351 = vunpack.c.l.b16 %v4278
        %v4352 = vunpack.c.l.b16 %v4279
        %v4353 = vunpack.c.l.b16 %v4280
        %v4354 = vunpack.c.l.b16 %v4281
        %v4355 = vunpack.c.l.b16 %v4282
        %v4356 = vunpack.c.l.b16 %v4283
        %v4357 = vunpack.c.l.b16 %v4284
        %v4358 = vunpack.c.l.b16 %v4285
        %v4359 = vunpack.c.l.b16 %v4286
        %v4360 = vunpack.c.l.b16 %v4287
        %v4361 = vunpack.c.l.b16 %v4288
        %v4362 = vunpack.c.l.b16 %v4289
        %v4363 = vunpack.c.l.b16 %v4290
        %v4364 = vunpack.c.l.b16 %v4291
        %v4365 = vunpack.c.l.b16 %v4292
        %v4366 = vpack.c.b16 %v4335, %v4334
        %v4367 = vpack.c.b16 %v4337, %v4336
        %v4368 = vpack.c.b16 %v4339, %v4338
        %v4369 = vpack.c.b16 %v4341, %v4340
        %v4370 = vpack.c.b16 %v4343, %v4342
        %v4371 = vpack.c.b16 %v4345, %v4344
        %v4372 = vpack.c.b16 %v4347, %v4346
        %v4373 = vpack.c.b16 %v4349, %v4348
        %v4374 = vpack.c.b16 %v4351, %v4350
        %v4375 = vpack.c.b16 %v4353, %v4352
        %v4376 = vpack.c.b16 %v4355, %v4354
        %v4377 = vpack.c.b16 %v4357, %v4356
        %v4378 = vpack.c.b16 %v4359, %v4358
        %v4379 = vpack.c.b16 %v4361, %v4360
        %v4380 = vpack.c.b16 %v4363, %v4362
        %v4381 = vpack.c.b16 %v4365, %v4364
        %v4390 = vunpack.c.l.b16 %v4294
        %v4391 = vunpack.c.l.b16 %v4295
        %v4392 = vunpack.c.l.b16 %v4296
        %v4393 = vunpack.c.l.b16 %v4297
        %v4394 = vunpack.c.l.b16 %v4298
        %v4395 = vunpack.c.l.b16 %v4299
        %v4396 = vunpack.c.l.b16 %v4300
        %v4397 = vunpack.c.l.b16 %v4301
        %v4398 = vpack.c.b16 %v4391, %v4390
        %v4399 = vpack.c.b16 %v4393, %v4392
        %v4400 = vpack.c.b16 %v4395, %v4394
        %v4401 = vpack.c.b16 %v4397, %v4396
        %v4407 = vsel %vm1614, %v4366, 0
        %v4410 = vsel %vm1614, %v4367, 0
        %v4413 = vsel %vm1614, %v4368, 0
        %v4416 = vsel %vm1614, %v4369, 0
        %v4419 = vsel %vm1614, %v4370, 0
        %v4422 = vsel %vm1614, %v4371, 0
        %v4425 = vsel %vm1614, %v4372, 0
        %v4428 = vsel %vm1614, %v4373, 0
        %v4431 = vsel %vm1614, %v4374, 0
        %v4434 = vsel %vm1614, %v4375, 0
        %v4437 = vsel %vm1614, %v4376, 0
        %v4440 = vsel %vm1614, %v4377, 0
        %v4443 = vsel %vm1614, %v4378, 0
        %v4446 = vsel %vm1614, %v4379, 0
        %v4449 = vsel %vm1614, %v4380, 0
        %v4452 = vsel %vm1614, %v4381, 0
        %4454 = vmatprep.subr.bf16.mxu0 0
        %4455 = vmatpush1.bf16.msra.mxu0 %v4398
        %4456 = vmatprep.subr.bf16.mxu0 0
        %4457 = vmatpush1.bf16.msra.mxu0 %v4399
        %4458 = vmatprep.subr.bf16.mxu0 0
        %4459 = vmatpush1.bf16.msra.mxu0 %v4400
        %4460 = vmatprep.subr.bf16.mxu0 0
        %4461 = vmatpush1.bf16.msra.mxu0 %v4401
        %4462 = vmatprep.subr.bf16.mxu0 0
        %4463 = vmatpush1.bf16.msra.mxu0 0
        %4464 = vmatprep.subr.bf16.mxu0 0
        %4465 = vmatpush1.bf16.msra.mxu0 0
        %4466 = vmatprep.subr.bf16.mxu0 0
        %4467 = vmatpush1.bf16.msra.mxu0 0
        %4468 = vmatprep.subr.bf16.mxu0 0
        %4469 = vmatpush1.bf16.msra.mxu0 0
        %4470 = vmatprep.subr.bf16.mxu0 0
        %4471 = vmatpush1.bf16.msra.mxu0 0
        %4472 = vmatprep.subr.bf16.mxu0 0
        %4473 = vmatpush1.bf16.msra.mxu0 0
        %4474 = vmatprep.subr.bf16.mxu0 0
        %4475 = vmatpush1.bf16.msra.mxu0 0
        %4476 = vmatprep.subr.bf16.mxu0 0
        %4477 = vmatpush1.bf16.msra.mxu0 0
        %4478 = vmatprep.subr.bf16.mxu0 0
        %4479 = vmatpush1.bf16.msra.mxu0 0
        %4480 = vmatprep.subr.bf16.mxu0 0
        %4481 = vmatpush1.bf16.msra.mxu0 0
        %4482 = vmatprep.subr.bf16.mxu0 0
        %4483 = vmatpush1.bf16.msra.mxu0 0
        %4484 = vmatprep.subr.bf16.mxu0 0
        %4485 = vmatpush1.bf16.msra.mxu0 0
        %4486 = vmatprep.mubr.bf16.mxu0 0
        %4487 = vmatmul.mubr.bf16.gmra.mrb[0].mxu0 %v4407
        %v4488 = vpop.f32.mrb[0].mxu0
        %v4489 = vadd.f32 0.0, %v4488
        %v4490 = vpop.f32.mrb[0].mxu0
        %v4491 = vpop.f32.mrb[0].mxu0
        %v4492 = vadd.f32 0.0, %v4491
        %v4493 = vpop.f32.mrb[0].mxu0
        %4494 = vmatprep.mubr.bf16.mxu0 0
        %4495 = vmatmul.mubr.bf16.gmra.mrb[0].mxu0 %v4410
        %v4496 = vpop.f32.mrb[0].mxu0
        %v4497 = vadd.f32 0.0, %v4496
        %v4498 = vpop.f32.mrb[0].mxu0
        %v4499 = vpop.f32.mrb[0].mxu0
        %v4500 = vadd.f32 0.0, %v4499
        %v4501 = vpop.f32.mrb[0].mxu0
        %4502 = vmatprep.mubr.bf16.mxu0 0
        %4503 = vmatmul.mubr.bf16.gmra.mrb[0].mxu0 %v4413
        %v4504 = vpop.f32.mrb[0].mxu0
        %v4505 = vadd.f32 0.0, %v4504
        %v4506 = vpop.f32.mrb[0].mxu0
        %v4507 = vpop.f32.mrb[0].mxu0
        %v4508 = vadd.f32 0.0, %v4507
        %v4509 = vpop.f32.mrb[0].mxu0
        %4510 = vmatprep.mubr.bf16.mxu0 0
        %4511 = vmatmul.mubr.bf16.gmra.mrb[0].mxu0 %v4416
        %v4512 = vpop.f32.mrb[0].mxu0
        %v4513 = vadd.f32 0.0, %v4512
        %v4514 = vpop.f32.mrb[0].mxu0
        %v4515 = vpop.f32.mrb[0].mxu0
        %v4516 = vadd.f32 0.0, %v4515
        %v4517 = vpop.f32.mrb[0].mxu0
        %4518 = vmatprep.mubr.bf16.mxu0 0
        %4519 = vmatmul.mubr.bf16.gmra.mrb[0].mxu0 %v4419
        %v4520 = vpop.f32.mrb[0].mxu0
        %v4521 = vadd.f32 0.0, %v4520
        %v4522 = vpop.f32.mrb[0].mxu0
        %v4523 = vpop.f32.mrb[0].mxu0
        %v4524 = vadd.f32 0.0, %v4523
        %v4525 = vpop.f32.mrb[0].mxu0
        %4526 = vmatprep.mubr.bf16.mxu0 0
        %4527 = vmatmul.mubr.bf16.gmra.mrb[0].mxu0 %v4422
        %v4528 = vpop.f32.mrb[0].mxu0
        %v4529 = vadd.f32 0.0, %v4528
        %v4530 = vpop.f32.mrb[0].mxu0
        %v4531 = vpop.f32.mrb[0].mxu0
        %v4532 = vadd.f32 0.0, %v4531
        %v4533 = vpop.f32.mrb[0].mxu0
        %4534 = vmatprep.mubr.bf16.mxu0 0
        %4535 = vmatmul.mubr.bf16.gmra.mrb[0].mxu0 %v4425
        %v4536 = vpop.f32.mrb[0].mxu0
        %v4537 = vadd.f32 0.0, %v4536
        %v4538 = vpop.f32.mrb[0].mxu0
        %v4539 = vpop.f32.mrb[0].mxu0
        %v4540 = vadd.f32 0.0, %v4539
        %v4541 = vpop.f32.mrb[0].mxu0
        %4542 = vmatprep.mubr.bf16.mxu0 0
        %4543 = vmatmul.mubr.bf16.gmra.mrb[0].mxu0 %v4428
        %v4544 = vpop.f32.mrb[0].mxu0
        %v4545 = vadd.f32 0.0, %v4544
        %v4546 = vpop.f32.mrb[0].mxu0
        %v4547 = vpop.f32.mrb[0].mxu0
        %v4548 = vadd.f32 0.0, %v4547
        %v4549 = vpop.f32.mrb[0].mxu0
        %4550 = vmatprep.mubr.bf16.mxu0 0
        %4551 = vmatmul.mubr.bf16.gmra.mrb[0].mxu0 %v4431
        %v4552 = vpop.f32.mrb[0].mxu0
        %v4553 = vadd.f32 0.0, %v4552
        %v4554 = vpop.f32.mrb[0].mxu0
        %v4555 = vpop.f32.mrb[0].mxu0
        %v4556 = vadd.f32 0.0, %v4555
        %v4557 = vpop.f32.mrb[0].mxu0
        %4558 = vmatprep.mubr.bf16.mxu0 0
        %4559 = vmatmul.mubr.bf16.gmra.mrb[0].mxu0 %v4434
        %v4560 = vpop.f32.mrb[0].mxu0
        %v4561 = vadd.f32 0.0, %v4560
        %v4562 = vpop.f32.mrb[0].mxu0
        %v4563 = vpop.f32.mrb[0].mxu0
        %v4564 = vadd.f32 0.0, %v4563
        %v4565 = vpop.f32.mrb[0].mxu0
        %4566 = vmatprep.mubr.bf16.mxu0 0
        %4567 = vmatmul.mubr.bf16.gmra.mrb[0].mxu0 %v4437
        %v4568 = vpop.f32.mrb[0].mxu0
        %v4569 = vadd.f32 0.0, %v4568
        %v4570 = vpop.f32.mrb[0].mxu0
        %v4571 = vpop.f32.mrb[0].mxu0
        %v4572 = vadd.f32 0.0, %v4571
        %v4573 = vpop.f32.mrb[0].mxu0
        %4574 = vmatprep.mubr.bf16.mxu0 0
        %4575 = vmatmul.mubr.bf16.gmra.mrb[0].mxu0 %v4440
        %v4576 = vpop.f32.mrb[0].mxu0
        %v4577 = vadd.f32 0.0, %v4576
        %v4578 = vpop.f32.mrb[0].mxu0
        %v4579 = vpop.f32.mrb[0].mxu0
        %v4580 = vadd.f32 0.0, %v4579
        %v4581 = vpop.f32.mrb[0].mxu0
        %4582 = vmatprep.mubr.bf16.mxu0 0
        %4583 = vmatmul.mubr.bf16.gmra.mrb[0].mxu0 %v4443
        %v4584 = vpop.f32.mrb[0].mxu0
        %v4585 = vadd.f32 0.0, %v4584
        %v4586 = vpop.f32.mrb[0].mxu0
        %v4587 = vpop.f32.mrb[0].mxu0
        %v4588 = vadd.f32 0.0, %v4587
        %v4589 = vpop.f32.mrb[0].mxu0
        %4590 = vmatprep.mubr.bf16.mxu0 0
        %4591 = vmatmul.mubr.bf16.gmra.mrb[0].mxu0 %v4446
        %v4592 = vpop.f32.mrb[0].mxu0
        %v4593 = vadd.f32 0.0, %v4592
        %v4594 = vpop.f32.mrb[0].mxu0
        %v4595 = vpop.f32.mrb[0].mxu0
        %v4596 = vadd.f32 0.0, %v4595
        %v4597 = vpop.f32.mrb[0].mxu0
        %4598 = vmatprep.mubr.bf16.mxu0 0
        %4599 = vmatmul.mubr.bf16.gmra.mrb[0].mxu0 %v4449
        %v4600 = vpop.f32.mrb[0].mxu0
        %v4601 = vadd.f32 0.0, %v4600
        %v4602 = vpop.f32.mrb[0].mxu0
        %v4603 = vpop.f32.mrb[0].mxu0
        %v4604 = vadd.f32 0.0, %v4603
        %v4605 = vpop.f32.mrb[0].mxu0
        %4606 = vmatprep.mubr.bf16.mxu0 0
        %4607 = vmatmul.mubr.bf16.gmra.mrb[0].mxu0 %v4452
        %v4608 = vpop.f32.mrb[0].mxu0
        %v4609 = vadd.f32 0.0, %v4608
        %v4610 = vpop.f32.mrb[0].mxu0
        %v4611 = vpop.f32.mrb[0].mxu0
        %v4612 = vadd.f32 0.0, %v4611
        %v4613 = vpop.f32.mrb[0].mxu0
        %4614 = vdwg.mxu0
        %v4615 = vadd.f32 %v4228, %v4489
        %v4616 = vadd.f32 %v4229, %v4492
        %v4617 = vadd.f32 %v4230, %v4497
        %v4618 = vadd.f32 %v4231, %v4500
        %v4619 = vadd.f32 %v4232, %v4505
        %v4620 = vadd.f32 %v4233, %v4508
        %v4621 = vadd.f32 %v4234, %v4513
        %v4622 = vadd.f32 %v4235, %v4516
        %v4623 = vadd.f32 %v4236, %v4521
        %v4624 = vadd.f32 %v4237, %v4524
        %v4625 = vadd.f32 %v4238, %v4529
        %v4626 = vadd.f32 %v4239, %v4532
        %v4627 = vadd.f32 %v4240, %v4537
        %v4628 = vadd.f32 %v4241, %v4540
        %v4629 = vadd.f32 %v4242, %v4545
        %v4630 = vadd.f32 %v4243, %v4548
        %v4631 = vadd.f32 %v4244, %v4553
        %v4632 = vadd.f32 %v4245, %v4556
        %v4633 = vadd.f32 %v4246, %v4561
        %v4634 = vadd.f32 %v4247, %v4564
        %v4635 = vadd.f32 %v4248, %v4569
        %v4636 = vadd.f32 %v4249, %v4572
        %v4637 = vadd.f32 %v4250, %v4577
        %v4638 = vadd.f32 %v4251, %v4580
        %v4639 = vadd.f32 %v4252, %v4585
        %v4640 = vadd.f32 %v4253, %v4588
        %v4641 = vadd.f32 %v4254, %v4593
        %v4642 = vadd.f32 %v4255, %v4596
        %v4643 = vadd.f32 %v4256, %v4601
        %v4644 = vadd.f32 %v4257, %v4604
        %v4645 = vadd.f32 %v4258, %v4609
        %v4646 = vadd.f32 %v4259, %v4612
        %v4647 = vld [vmem:[%s4260] sm:$0xf]
        %v4648 = vld [vmem:[%s4260 + $0x4] sm:$0xf]
        %v4649 = vld [vmem:[%s4260 + $0x8] sm:$0x1]
        %v4650 = vld [vmem:[%s4260 + $0xc] sm:$0xf]
        %v4651 = vld [vmem:[%s4260 + $0x10] sm:$0xf]
        %v4652 = vld [vmem:[%s4260 + $0x14] sm:$0x1]
        %v4653 = vld [vmem:[%s4260 + $0x18] sm:$0xf]
        %v4654 = vld [vmem:[%s4260 + $0x1c] sm:$0xf]
        %v4655 = vld [vmem:[%s4260 + $0x20] sm:$0x1]
        %v4656 = vld [vmem:[%s4260 + $0x24] sm:$0xf]
        %v4657 = vld [vmem:[%s4260 + $0x28] sm:$0xf]
        %v4658 = vld [vmem:[%s4260 + $0x2c] sm:$0x1]
        %v4659 = vld [vmem:[%s4260 + $0x30] sm:$0xf]
        %v4660 = vld [vmem:[%s4260 + $0x34] sm:$0xf]
        %v4661 = vld [vmem:[%s4260 + $0x38] sm:$0x1]
        %v4662 = vld [vmem:[%s4260 + $0x3c] sm:$0xf]
        %v4663 = vld [vmem:[%s4260 + $0x40] sm:$0xf]
        %v4664 = vld [vmem:[%s4260 + $0x44] sm:$0x1]
        %v4665 = vld [vmem:[%s4260 + $0x48] sm:$0xf]
        %v4666 = vld [vmem:[%s4260 + $0x4c] sm:$0xf]
        %v4667 = vld [vmem:[%s4260 + $0x50] sm:$0x1]
        %v4668 = vld [vmem:[%s4260 + $0x54] sm:$0xf]
        %v4669 = vld [vmem:[%s4260 + $0x58] sm:$0xf]
        %v4670 = vld [vmem:[%s4260 + $0x5c] sm:$0x1]
        %v4671 = vld [vmem:[%s4260 + $0x60] sm:$0xf]
        %v4672 = vld [vmem:[%s4260 + $0x64] sm:$0xf]
        %v4673 = vld [vmem:[%s4260 + $0x68] sm:$0x1]
        %v4674 = vld [vmem:[%s4260 + $0x6c] sm:$0xf]
        %v4675 = vld [vmem:[%s4260 + $0x70] sm:$0xf]
        %v4676 = vld [vmem:[%s4260 + $0x74] sm:$0x1]
        %v4677 = vld [vmem:[%s4260 + $0x78] sm:$0xf]
        %v4678 = vld [vmem:[%s4260 + $0x7c] sm:$0xf]
        %v4679 = vld [vmem:[%s4260 + $0x80] sm:$0x1]
        %v4680 = vld [vmem:[%s4260 + $0x84] sm:$0xf]
        %v4681 = vld [vmem:[%s4260 + $0x88] sm:$0xf]
        %v4682 = vld [vmem:[%s4260 + $0x8c] sm:$0x1]
        %v4683 = vld [vmem:[%s4260 + $0x90] sm:$0xf]
        %v4684 = vld [vmem:[%s4260 + $0x94] sm:$0xf]
        %v4685 = vld [vmem:[%s4260 + $0x98] sm:$0x1]
        %v4686 = vld [vmem:[%s4260 + $0x9c] sm:$0xf]
        %v4687 = vld [vmem:[%s4260 + $0xa0] sm:$0xf]
        %v4688 = vld [vmem:[%s4260 + $0xa4] sm:$0x1]
        %v4689 = vld [vmem:[%s4260 + $0xa8] sm:$0xf]
        %v4690 = vld [vmem:[%s4260 + $0xac] sm:$0xf]
        %v4691 = vld [vmem:[%s4260 + $0xb0] sm:$0x1]
        %v4692 = vld [vmem:[%s4260 + $0xb4] sm:$0xf]
        %v4693 = vld [vmem:[%s4260 + $0xb8] sm:$0xf]
        %v4694 = vld [vmem:[%s4260 + $0xbc] sm:$0x1]
        %v4696 = vshrl.u32 %v4647, 16
        %v4698 = vrot.slane %v4696, 4
        %v4699 = vshll.u32 %v4647, 16
        %v4701 = vrot.slane %v4699, 5
        %v4702 = vor.u32 %v4698, %v4701
        %v4703 = vrot.slane %v4702, 4
        %v4705 = vshll.u32 %v4648, 16
        %v4707 = vrot.slane %v4705, 5
        %v4708 = vsel %vm1148, %v4703, %v4707
        %v4709 = vshrl.u32 %v4648, 16
        %v4711 = vrot.slane %v4709, 4
        %v4712 = vor.u32 %v4711, %v4707
        %v4713 = vrot.slane %v4712, 4
        %v4715 = vshll.u32 %v4649, 16
        %v4717 = vrot.slane %v4715, 5
        %v4718 = vsel %vm1148, %v4713, %v4717
        %v4720 = vshrl.u32 %v4650, 16
        %v4722 = vrot.slane %v4720, 4
        %v4723 = vshll.u32 %v4650, 16
        %v4725 = vrot.slane %v4723, 5
        %v4726 = vor.u32 %v4722, %v4725
        %v4727 = vrot.slane %v4726, 4
        %v4729 = vshll.u32 %v4651, 16
        %v4731 = vrot.slane %v4729, 5
        %v4732 = vsel %vm1148, %v4727, %v4731
        %v4733 = vshrl.u32 %v4651, 16
        %v4735 = vrot.slane %v4733, 4
        %v4736 = vor.u32 %v4735, %v4731
        %v4737 = vrot.slane %v4736, 4
        %v4739 = vshll.u32 %v4652, 16
        %v4741 = vrot.slane %v4739, 5
        %v4742 = vsel %vm1148, %v4737, %v4741
        %v4744 = vshrl.u32 %v4653, 16
        %v4746 = vrot.slane %v4744, 4
        %v4747 = vshll.u32 %v4653, 16
        %v4749 = vrot.slane %v4747, 5
        %v4750 = vor.u32 %v4746, %v4749
        %v4751 = vrot.slane %v4750, 4
        %v4753 = vshll.u32 %v4654, 16
        %v4755 = vrot.slane %v4753, 5
        %v4756 = vsel %vm1148, %v4751, %v4755
        %v4757 = vshrl.u32 %v4654, 16
        %v4759 = vrot.slane %v4757, 4
        %v4760 = vor.u32 %v4759, %v4755
        %v4761 = vrot.slane %v4760, 4
        %v4763 = vshll.u32 %v4655, 16
        %v4765 = vrot.slane %v4763, 5
        %v4766 = vsel %vm1148, %v4761, %v4765
        %v4768 = vshrl.u32 %v4656, 16
        %v4770 = vrot.slane %v4768, 4
        %v4771 = vshll.u32 %v4656, 16
        %v4773 = vrot.slane %v4771, 5
        %v4774 = vor.u32 %v4770, %v4773
        %v4775 = vrot.slane %v4774, 4
        %v4777 = vshll.u32 %v4657, 16
        %v4779 = vrot.slane %v4777, 5
        %v4780 = vsel %vm1148, %v4775, %v4779
        %v4781 = vshrl.u32 %v4657, 16
        %v4783 = vrot.slane %v4781, 4
        %v4784 = vor.u32 %v4783, %v4779
        %v4785 = vrot.slane %v4784, 4
        %v4787 = vshll.u32 %v4658, 16
        %v4789 = vrot.slane %v4787, 5
        %v4790 = vsel %vm1148, %v4785, %v4789
        %v4792 = vshrl.u32 %v4659, 16
        %v4794 = vrot.slane %v4792, 4
        %v4795 = vshll.u32 %v4659, 16
        %v4797 = vrot.slane %v4795, 5
        %v4798 = vor.u32 %v4794, %v4797
        %v4799 = vrot.slane %v4798, 4
        %v4801 = vshll.u32 %v4660, 16
        %v4803 = vrot.slane %v4801, 5
        %v4804 = vsel %vm1148, %v4799, %v4803
        %v4805 = vshrl.u32 %v4660, 16
        %v4807 = vrot.slane %v4805, 4
        %v4808 = vor.u32 %v4807, %v4803
        %v4809 = vrot.slane %v4808, 4
        %v4811 = vshll.u32 %v4661, 16
        %v4813 = vrot.slane %v4811, 5
        %v4814 = vsel %vm1148, %v4809, %v4813
        %v4816 = vshrl.u32 %v4662, 16
        %v4818 = vrot.slane %v4816, 4
        %v4819 = vshll.u32 %v4662, 16
        %v4821 = vrot.slane %v4819, 5
        %v4822 = vor.u32 %v4818, %v4821
        %v4823 = vrot.slane %v4822, 4
        %v4825 = vshll.u32 %v4663, 16
        %v4827 = vrot.slane %v4825, 5
        %v4828 = vsel %vm1148, %v4823, %v4827
        %v4829 = vshrl.u32 %v4663, 16
        %v4831 = vrot.slane %v4829, 4
        %v4832 = vor.u32 %v4831, %v4827
        %v4833 = vrot.slane %v4832, 4
        %v4835 = vshll.u32 %v4664, 16
        %v4837 = vrot.slane %v4835, 5
        %v4838 = vsel %vm1148, %v4833, %v4837
        %v4840 = vshrl.u32 %v4665, 16
        %v4842 = vrot.slane %v4840, 4
        %v4843 = vshll.u32 %v4665, 16
        %v4845 = vrot.slane %v4843, 5
        %v4846 = vor.u32 %v4842, %v4845
        %v4847 = vrot.slane %v4846, 4
        %v4849 = vshll.u32 %v4666, 16
        %v4851 = vrot.slane %v4849, 5
        %v4852 = vsel %vm1148, %v4847, %v4851
        %v4853 = vshrl.u32 %v4666, 16
        %v4855 = vrot.slane %v4853, 4
        %v4856 = vor.u32 %v4855, %v4851
        %v4857 = vrot.slane %v4856, 4
        %v4859 = vshll.u32 %v4667, 16
        %v4861 = vrot.slane %v4859, 5
        %v4862 = vsel %vm1148, %v4857, %v4861
        %v4864 = vshrl.u32 %v4668, 16
        %v4866 = vrot.slane %v4864, 4
        %v4867 = vshll.u32 %v4668, 16
        %v4869 = vrot.slane %v4867, 5
        %v4870 = vor.u32 %v4866, %v4869
        %v4871 = vrot.slane %v4870, 4
        %v4873 = vshll.u32 %v4669, 16
        %v4875 = vrot.slane %v4873, 5
        %v4876 = vsel %vm1148, %v4871, %v4875
        %v4877 = vshrl.u32 %v4669, 16
        %v4879 = vrot.slane %v4877, 4
        %v4880 = vor.u32 %v4879, %v4875
        %v4881 = vrot.slane %v4880, 4
        %v4883 = vshll.u32 %v4670, 16
        %v4885 = vrot.slane %v4883, 5
        %v4886 = vsel %vm1148, %v4881, %v4885
        %v4888 = vshrl.u32 %v4671, 16
        %v4890 = vrot.slane %v4888, 4
        %v4891 = vshll.u32 %v4671, 16
        %v4893 = vrot.slane %v4891, 5
        %v4894 = vor.u32 %v4890, %v4893
        %v4895 = vrot.slane %v4894, 4
        %v4897 = vshll.u32 %v4672, 16
        %v4899 = vrot.slane %v4897, 5
        %v4900 = vsel %vm1148, %v4895, %v4899
        %v4901 = vshrl.u32 %v4672, 16
        %v4903 = vrot.slane %v4901, 4
        %v4904 = vor.u32 %v4903, %v4899
        %v4905 = vrot.slane %v4904, 4
        %v4907 = vshll.u32 %v4673, 16
        %v4909 = vrot.slane %v4907, 5
        %v4910 = vsel %vm1148, %v4905, %v4909
        %v4912 = vshrl.u32 %v4674, 16
        %v4914 = vrot.slane %v4912, 4
        %v4915 = vshll.u32 %v4674, 16
        %v4917 = vrot.slane %v4915, 5
        %v4918 = vor.u32 %v4914, %v4917
        %v4919 = vrot.slane %v4918, 4
        %v4921 = vshll.u32 %v4675, 16
        %v4923 = vrot.slane %v4921, 5
        %v4924 = vsel %vm1148, %v4919, %v4923
        %v4925 = vshrl.u32 %v4675, 16
        %v4927 = vrot.slane %v4925, 4
        %v4928 = vor.u32 %v4927, %v4923
        %v4929 = vrot.slane %v4928, 4
        %v4931 = vshll.u32 %v4676, 16
        %v4933 = vrot.slane %v4931, 5
        %v4934 = vsel %vm1148, %v4929, %v4933
        %v4936 = vshrl.u32 %v4677, 16
        %v4938 = vrot.slane %v4936, 4
        %v4939 = vshll.u32 %v4677, 16
        %v4941 = vrot.slane %v4939, 5
        %v4942 = vor.u32 %v4938, %v4941
        %v4943 = vrot.slane %v4942, 4
        %v4945 = vshll.u32 %v4678, 16
        %v4947 = vrot.slane %v4945, 5
        %v4948 = vsel %vm1148, %v4943, %v4947
        %v4949 = vshrl.u32 %v4678, 16
        %v4951 = vrot.slane %v4949, 4
        %v4952 = vor.u32 %v4951, %v4947
        %v4953 = vrot.slane %v4952, 4
        %v4955 = vshll.u32 %v4679, 16
        %v4957 = vrot.slane %v4955, 5
        %v4958 = vsel %vm1148, %v4953, %v4957
        %v4960 = vshrl.u32 %v4680, 16
        %v4962 = vrot.slane %v4960, 4
        %v4963 = vshll.u32 %v4680, 16
        %v4965 = vrot.slane %v4963, 5
        %v4966 = vor.u32 %v4962, %v4965
        %v4967 = vrot.slane %v4966, 4
        %v4969 = vshll.u32 %v4681, 16
        %v4971 = vrot.slane %v4969, 5
        %v4972 = vsel %vm1148, %v4967, %v4971
        %v4973 = vshrl.u32 %v4681, 16
        %v4975 = vrot.slane %v4973, 4
        %v4976 = vor.u32 %v4975, %v4971
        %v4977 = vrot.slane %v4976, 4
        %v4979 = vshll.u32 %v4682, 16
        %v4981 = vrot.slane %v4979, 5
        %v4982 = vsel %vm1148, %v4977, %v4981
        %v4984 = vshrl.u32 %v4683, 16
        %v4986 = vrot.slane %v4984, 4
        %v4987 = vshll.u32 %v4683, 16
        %v4989 = vrot.slane %v4987, 5
        %v4990 = vor.u32 %v4986, %v4989
        %v4991 = vrot.slane %v4990, 4
        %v4993 = vshll.u32 %v4684, 16
        %v4995 = vrot.slane %v4993, 5
        %v4996 = vsel %vm1148, %v4991, %v4995
        %v4997 = vshrl.u32 %v4684, 16
        %v4999 = vrot.slane %v4997, 4
        %v5000 = vor.u32 %v4999, %v4995
        %v5001 = vrot.slane %v5000, 4
        %v5003 = vshll.u32 %v4685, 16
        %v5005 = vrot.slane %v5003, 5
        %v5006 = vsel %vm1148, %v5001, %v5005
        %v5008 = vshrl.u32 %v4686, 16
        %v5010 = vrot.slane %v5008, 4
        %v5011 = vshll.u32 %v4686, 16
        %v5013 = vrot.slane %v5011, 5
        %v5014 = vor.u32 %v5010, %v5013
        %v5015 = vrot.slane %v5014, 4
        %v5017 = vshll.u32 %v4687, 16
        %v5019 = vrot.slane %v5017, 5
        %v5020 = vsel %vm1148, %v5015, %v5019
        %v5021 = vshrl.u32 %v4687, 16
        %v5023 = vrot.slane %v5021, 4
        %v5024 = vor.u32 %v5023, %v5019
        %v5025 = vrot.slane %v5024, 4
        %v5027 = vshll.u32 %v4688, 16
        %v5029 = vrot.slane %v5027, 5
        %v5030 = vsel %vm1148, %v5025, %v5029
        %v5032 = vshrl.u32 %v4689, 16
        %v5034 = vrot.slane %v5032, 4
        %v5035 = vshll.u32 %v4689, 16
        %v5037 = vrot.slane %v5035, 5
        %v5038 = vor.u32 %v5034, %v5037
        %v5039 = vrot.slane %v5038, 4
        %v5041 = vshll.u32 %v4690, 16
        %v5043 = vrot.slane %v5041, 5
        %v5044 = vsel %vm1148, %v5039, %v5043
        %v5045 = vshrl.u32 %v4690, 16
        %v5047 = vrot.slane %v5045, 4
        %v5048 = vor.u32 %v5047, %v5043
        %v5049 = vrot.slane %v5048, 4
        %v5051 = vshll.u32 %v4691, 16
        %v5053 = vrot.slane %v5051, 5
        %v5054 = vsel %vm1148, %v5049, %v5053
        %v5056 = vshrl.u32 %v4692, 16
        %v5058 = vrot.slane %v5056, 4
        %v5059 = vshll.u32 %v4692, 16
        %v5061 = vrot.slane %v5059, 5
        %v5062 = vor.u32 %v5058, %v5061
        %v5063 = vrot.slane %v5062, 4
        %v5065 = vshll.u32 %v4693, 16
        %v5067 = vrot.slane %v5065, 5
        %v5068 = vsel %vm1148, %v5063, %v5067
        %v5069 = vshrl.u32 %v4693, 16
        %v5071 = vrot.slane %v5069, 4
        %v5072 = vor.u32 %v5071, %v5067
        %v5073 = vrot.slane %v5072, 4
        %v5075 = vshll.u32 %v4694, 16
        %v5077 = vrot.slane %v5075, 5
        %v5078 = vsel %vm1148, %v5073, %v5077
        %s5079 = scalar_lea.vmem [#allocation7], 224
        %v5080 = vld [vmem:[%s5079] sm:$0xf]
        %v5081 = vld [vmem:[%s5079 + $0x4] sm:$0xf]
        %v5082 = vld [vmem:[%s5079 + $0x8] sm:$0xf]
        %v5083 = vld [vmem:[%s5079 + $0xc] sm:$0xf]
        %v5084 = vld [vmem:[%s5079 + $0x10] sm:$0xf]
        %v5085 = vld [vmem:[%s5079 + $0x14] sm:$0xf]
        %v5086 = vld [vmem:[%s5079 + $0x18] sm:$0xf]
        %v5087 = vld [vmem:[%s5079 + $0x1c] sm:$0xf]
        %v5088 = vunpack.c.l.b16 %v4708
        %v5089 = vunpack.c.l.b16 %v4718
        %v5090 = vunpack.c.l.b16 %v4732
        %v5091 = vunpack.c.l.b16 %v4742
        %v5092 = vunpack.c.l.b16 %v4756
        %v5093 = vunpack.c.l.b16 %v4766
        %v5094 = vunpack.c.l.b16 %v4780
        %v5095 = vunpack.c.l.b16 %v4790
        %v5096 = vunpack.c.l.b16 %v4804
        %v5097 = vunpack.c.l.b16 %v4814
        %v5098 = vunpack.c.l.b16 %v4828
        %v5099 = vunpack.c.l.b16 %v4838
        %v5100 = vunpack.c.l.b16 %v4852
        %v5101 = vunpack.c.l.b16 %v4862
        %v5102 = vunpack.c.l.b16 %v4876
        %v5103 = vunpack.c.l.b16 %v4886
        %v5104 = vunpack.c.l.b16 %v4900
        %v5105 = vunpack.c.l.b16 %v4910
        %v5106 = vunpack.c.l.b16 %v4924
        %v5107 = vunpack.c.l.b16 %v4934
        %v5108 = vunpack.c.l.b16 %v4948
        %v5109 = vunpack.c.l.b16 %v4958
        %v5110 = vunpack.c.l.b16 %v4972
        %v5111 = vunpack.c.l.b16 %v4982
        %v5112 = vunpack.c.l.b16 %v4996
        %v5113 = vunpack.c.l.b16 %v5006
        %v5114 = vunpack.c.l.b16 %v5020
        %v5115 = vunpack.c.l.b16 %v5030
        %v5116 = vunpack.c.l.b16 %v5044
        %v5117 = vunpack.c.l.b16 %v5054
        %v5118 = vunpack.c.l.b16 %v5068
        %v5119 = vunpack.c.l.b16 %v5078
        %v5120 = vpack.c.b16 %v5089, %v5088
        %v5121 = vpack.c.b16 %v5091, %v5090
        %v5122 = vpack.c.b16 %v5093, %v5092
        %v5123 = vpack.c.b16 %v5095, %v5094
        %v5124 = vpack.c.b16 %v5097, %v5096
        %v5125 = vpack.c.b16 %v5099, %v5098
        %v5126 = vpack.c.b16 %v5101, %v5100
        %v5127 = vpack.c.b16 %v5103, %v5102
        %v5128 = vpack.c.b16 %v5105, %v5104
        %v5129 = vpack.c.b16 %v5107, %v5106
        %v5130 = vpack.c.b16 %v5109, %v5108
        %v5131 = vpack.c.b16 %v5111, %v5110
        %v5132 = vpack.c.b16 %v5113, %v5112
        %v5133 = vpack.c.b16 %v5115, %v5114
        %v5134 = vpack.c.b16 %v5117, %v5116
        %v5135 = vpack.c.b16 %v5119, %v5118
        %v5144 = vunpack.c.l.b16 %v5080
        %v5145 = vunpack.c.l.b16 %v5081
        %v5146 = vunpack.c.l.b16 %v5082
        %v5147 = vunpack.c.l.b16 %v5083
        %v5148 = vunpack.c.l.b16 %v5084
        %v5149 = vunpack.c.l.b16 %v5085
        %v5150 = vunpack.c.l.b16 %v5086
        %v5151 = vunpack.c.l.b16 %v5087
        %v5152 = vpack.c.b16 %v5145, %v5144
        %v5153 = vpack.c.b16 %v5147, %v5146
        %v5154 = vpack.c.b16 %v5149, %v5148
        %v5155 = vpack.c.b16 %v5151, %v5150
        %v5161 = vsel %vm1614, %v5120, 0
        %v5164 = vsel %vm1614, %v5121, 0
        %v5167 = vsel %vm1614, %v5122, 0
        %v5170 = vsel %vm1614, %v5123, 0
        %v5173 = vsel %vm1614, %v5124, 0
        %v5176 = vsel %vm1614, %v5125, 0
        %v5179 = vsel %vm1614, %v5126, 0
        %v5182 = vsel %vm1614, %v5127, 0
        %v5185 = vsel %vm1614, %v5128, 0
        %v5188 = vsel %vm1614, %v5129, 0
        %v5191 = vsel %vm1614, %v5130, 0
        %v5194 = vsel %vm1614, %v5131, 0
        %v5197 = vsel %vm1614, %v5132, 0
        %v5200 = vsel %vm1614, %v5133, 0
        %v5203 = vsel %vm1614, %v5134, 0
        %v5206 = vsel %vm1614, %v5135, 0
        %5208 = vmatprep.subr.bf16.mxu0 0
        %5209 = vmatpush1.bf16.msra.mxu0 %v5152
        %5210 = vmatprep.subr.bf16.mxu0 0
        %5211 = vmatpush1.bf16.msra.mxu0 %v5153
        %5212 = vmatprep.subr.bf16.mxu0 0
        %5213 = vmatpush1.bf16.msra.mxu0 %v5154
        %5214 = vmatprep.subr.bf16.mxu0 0
        %5215 = vmatpush1.bf16.msra.mxu0 %v5155
        %5216 = vmatprep.subr.bf16.mxu0 0
        %5217 = vmatpush1.bf16.msra.mxu0 0
        %5218 = vmatprep.subr.bf16.mxu0 0
        %5219 = vmatpush1.bf16.msra.mxu0 0
        %5220 = vmatprep.subr.bf16.mxu0 0
        %5221 = vmatpush1.bf16.msra.mxu0 0
        %5222 = vmatprep.subr.bf16.mxu0 0
        %5223 = vmatpush1.bf16.msra.mxu0 0
        %5224 = vmatprep.subr.bf16.mxu0 0
        %5225 = vmatpush1.bf16.msra.mxu0 0
        %5226 = vmatprep.subr.bf16.mxu0 0
        %5227 = vmatpush1.bf16.msra.mxu0 0
        %5228 = vmatprep.subr.bf16.mxu0 0
        %5229 = vmatpush1.bf16.msra.mxu0 0
        %5230 = vmatprep.subr.bf16.mxu0 0
        %5231 = vmatpush1.bf16.msra.mxu0 0
        %5232 = vmatprep.subr.bf16.mxu0 0
        %5233 = vmatpush1.bf16.msra.mxu0 0
        %5234 = vmatprep.subr.bf16.mxu0 0
        %5235 = vmatpush1.bf16.msra.mxu0 0
        %5236 = vmatprep.subr.bf16.mxu0 0
        %5237 = vmatpush1.bf16.msra.mxu0 0
        %5238 = vmatprep.subr.bf16.mxu0 0
        %5239 = vmatpush1.bf16.msra.mxu0 0
        %5240 = vmatprep.mubr.bf16.mxu0 0
        %5241 = vmatmul.mubr.bf16.gmra.mrb[0].mxu0 %v5161
        %v5242 = vpop.f32.mrb[0].mxu0
        %v5243 = vadd.f32 0.0, %v5242
        %v5244 = vpop.f32.mrb[0].mxu0
        %v5245 = vpop.f32.mrb[0].mxu0
        %v5246 = vadd.f32 0.0, %v5245
        %v5247 = vpop.f32.mrb[0].mxu0
        %5248 = vmatprep.mubr.bf16.mxu0 0
        %5249 = vmatmul.mubr.bf16.gmra.mrb[0].mxu0 %v5164
        %v5250 = vpop.f32.mrb[0].mxu0
        %v5251 = vadd.f32 0.0, %v5250
        %v5252 = vpop.f32.mrb[0].mxu0
        %v5253 = vpop.f32.mrb[0].mxu0
        %v5254 = vadd.f32 0.0, %v5253
        %v5255 = vpop.f32.mrb[0].mxu0
        %5256 = vmatprep.mubr.bf16.mxu0 0
        %5257 = vmatmul.mubr.bf16.gmra.mrb[0].mxu0 %v5167
        %v5258 = vpop.f32.mrb[0].mxu0
        %v5259 = vadd.f32 0.0, %v5258
        %v5260 = vpop.f32.mrb[0].mxu0
        %v5261 = vpop.f32.mrb[0].mxu0
        %v5262 = vadd.f32 0.0, %v5261
        %v5263 = vpop.f32.mrb[0].mxu0
        %5264 = vmatprep.mubr.bf16.mxu0 0
        %5265 = vmatmul.mubr.bf16.gmra.mrb[0].mxu0 %v5170
        %v5266 = vpop.f32.mrb[0].mxu0
        %v5267 = vadd.f32 0.0, %v5266
        %v5268 = vpop.f32.mrb[0].mxu0
        %v5269 = vpop.f32.mrb[0].mxu0
        %v5270 = vadd.f32 0.0, %v5269
        %v5271 = vpop.f32.mrb[0].mxu0
        %5272 = vmatprep.mubr.bf16.mxu0 0
        %5273 = vmatmul.mubr.bf16.gmra.mrb[0].mxu0 %v5173
        %v5274 = vpop.f32.mrb[0].mxu0
        %v5275 = vadd.f32 0.0, %v5274
        %v5276 = vpop.f32.mrb[0].mxu0
        %v5277 = vpop.f32.mrb[0].mxu0
        %v5278 = vadd.f32 0.0, %v5277
        %v5279 = vpop.f32.mrb[0].mxu0
        %5280 = vmatprep.mubr.bf16.mxu0 0
        %5281 = vmatmul.mubr.bf16.gmra.mrb[0].mxu0 %v5176
        %v5282 = vpop.f32.mrb[0].mxu0
        %v5283 = vadd.f32 0.0, %v5282
        %v5284 = vpop.f32.mrb[0].mxu0
        %v5285 = vpop.f32.mrb[0].mxu0
        %v5286 = vadd.f32 0.0, %v5285
        %v5287 = vpop.f32.mrb[0].mxu0
        %5288 = vmatprep.mubr.bf16.mxu0 0
        %5289 = vmatmul.mubr.bf16.gmra.mrb[0].mxu0 %v5179
        %v5290 = vpop.f32.mrb[0].mxu0
        %v5291 = vadd.f32 0.0, %v5290
        %v5292 = vpop.f32.mrb[0].mxu0
        %v5293 = vpop.f32.mrb[0].mxu0
        %v5294 = vadd.f32 0.0, %v5293
        %v5295 = vpop.f32.mrb[0].mxu0
        %5296 = vmatprep.mubr.bf16.mxu0 0
        %5297 = vmatmul.mubr.bf16.gmra.mrb[0].mxu0 %v5182
        %v5298 = vpop.f32.mrb[0].mxu0
        %v5299 = vadd.f32 0.0, %v5298
        %v5300 = vpop.f32.mrb[0].mxu0
        %v5301 = vpop.f32.mrb[0].mxu0
        %v5302 = vadd.f32 0.0, %v5301
        %v5303 = vpop.f32.mrb[0].mxu0
        %5304 = vmatprep.mubr.bf16.mxu0 0
        %5305 = vmatmul.mubr.bf16.gmra.mrb[0].mxu0 %v5185
        %v5306 = vpop.f32.mrb[0].mxu0
        %v5307 = vadd.f32 0.0, %v5306
        %v5308 = vpop.f32.mrb[0].mxu0
        %v5309 = vpop.f32.mrb[0].mxu0
        %v5310 = vadd.f32 0.0, %v5309
        %v5311 = vpop.f32.mrb[0].mxu0
        %5312 = vmatprep.mubr.bf16.mxu0 0
        %5313 = vmatmul.mubr.bf16.gmra.mrb[0].mxu0 %v5188
        %v5314 = vpop.f32.mrb[0].mxu0
        %v5315 = vadd.f32 0.0, %v5314
        %v5316 = vpop.f32.mrb[0].mxu0
        %v5317 = vpop.f32.mrb[0].mxu0
        %v5318 = vadd.f32 0.0, %v5317
        %v5319 = vpop.f32.mrb[0].mxu0
        %5320 = vmatprep.mubr.bf16.mxu0 0
        %5321 = vmatmul.mubr.bf16.gmra.mrb[0].mxu0 %v5191
        %v5322 = vpop.f32.mrb[0].mxu0
        %v5323 = vadd.f32 0.0, %v5322
        %v5324 = vpop.f32.mrb[0].mxu0
        %v5325 = vpop.f32.mrb[0].mxu0
        %v5326 = vadd.f32 0.0, %v5325
        %v5327 = vpop.f32.mrb[0].mxu0
        %5328 = vmatprep.mubr.bf16.mxu0 0
        %5329 = vmatmul.mubr.bf16.gmra.mrb[0].mxu0 %v5194
        %v5330 = vpop.f32.mrb[0].mxu0
        %v5331 = vadd.f32 0.0, %v5330
        %v5332 = vpop.f32.mrb[0].mxu0
        %v5333 = vpop.f32.mrb[0].mxu0
        %v5334 = vadd.f32 0.0, %v5333
        %v5335 = vpop.f32.mrb[0].mxu0
        %5336 = vmatprep.mubr.bf16.mxu0 0
        %5337 = vmatmul.mubr.bf16.gmra.mrb[0].mxu0 %v5197
        %v5338 = vpop.f32.mrb[0].mxu0
        %v5339 = vadd.f32 0.0, %v5338
        %v5340 = vpop.f32.mrb[0].mxu0
        %v5341 = vpop.f32.mrb[0].mxu0
        %v5342 = vadd.f32 0.0, %v5341
        %v5343 = vpop.f32.mrb[0].mxu0
        %5344 = vmatprep.mubr.bf16.mxu0 0
        %5345 = vmatmul.mubr.bf16.gmra.mrb[0].mxu0 %v5200
        %v5346 = vpop.f32.mrb[0].mxu0
        %v5347 = vadd.f32 0.0, %v5346
        %v5348 = vpop.f32.mrb[0].mxu0
        %v5349 = vpop.f32.mrb[0].mxu0
        %v5350 = vadd.f32 0.0, %v5349
        %v5351 = vpop.f32.mrb[0].mxu0
        %5352 = vmatprep.mubr.bf16.mxu0 0
        %5353 = vmatmul.mubr.bf16.gmra.mrb[0].mxu0 %v5203
        %v5354 = vpop.f32.mrb[0].mxu0
        %v5355 = vadd.f32 0.0, %v5354
        %v5356 = vpop.f32.mrb[0].mxu0
        %v5357 = vpop.f32.mrb[0].mxu0
        %v5358 = vadd.f32 0.0, %v5357
        %v5359 = vpop.f32.mrb[0].mxu0
        %5360 = vmatprep.mubr.bf16.mxu0 0
        %5361 = vmatmul.mubr.bf16.gmra.mrb[0].mxu0 %v5206
        %v5362 = vpop.f32.mrb[0].mxu0
        %v5363 = vadd.f32 0.0, %v5362
        %v5364 = vpop.f32.mrb[0].mxu0
        %v5365 = vpop.f32.mrb[0].mxu0
        %v5366 = vadd.f32 0.0, %v5365
        %v5367 = vpop.f32.mrb[0].mxu0
        %5368 = vdwg.mxu0
        %v5369 = vadd.f32 %v4615, %v5243
        %v5370 = vadd.f32 %v4616, %v5246
        %v5371 = vadd.f32 %v4617, %v5251
        %v5372 = vadd.f32 %v4618, %v5254
        %v5373 = vadd.f32 %v4619, %v5259
        %v5374 = vadd.f32 %v4620, %v5262
        %v5375 = vadd.f32 %v4621, %v5267
        %v5376 = vadd.f32 %v4622, %v5270
        %v5377 = vadd.f32 %v4623, %v5275
        %v5378 = vadd.f32 %v4624, %v5278
        %v5379 = vadd.f32 %v4625, %v5283
        %v5380 = vadd.f32 %v4626, %v5286
        %v5381 = vadd.f32 %v4627, %v5291
        %v5382 = vadd.f32 %v4628, %v5294
        %v5383 = vadd.f32 %v4629, %v5299
        %v5384 = vadd.f32 %v4630, %v5302
        %v5385 = vadd.f32 %v4631, %v5307
        %v5386 = vadd.f32 %v4632, %v5310
        %v5387 = vadd.f32 %v4633, %v5315
        %v5388 = vadd.f32 %v4634, %v5318
        %v5389 = vadd.f32 %v4635, %v5323
        %v5390 = vadd.f32 %v4636, %v5326
        %v5391 = vadd.f32 %v4637, %v5331
        %v5392 = vadd.f32 %v4638, %v5334
        %v5393 = vadd.f32 %v4639, %v5339
        %v5394 = vadd.f32 %v4640, %v5342
        %v5395 = vadd.f32 %v4641, %v5347
        %v5396 = vadd.f32 %v4642, %v5350
        %v5397 = vadd.f32 %v4643, %v5355
        %v5398 = vadd.f32 %v4644, %v5358
        %v5399 = vadd.f32 %v4645, %v5363
        %v5400 = vadd.f32 %v4646, %v5366
        %v5401 = vld [vmem:[%s4260] sm:$0xe]
        %v5402 = vld [vmem:[%s4260 + $0xc] sm:$0xe]
        %v5403 = vld [vmem:[%s4260 + $0x18] sm:$0xe]
        %v5404 = vld [vmem:[%s4260 + $0x24] sm:$0xe]
        %v5405 = vld [vmem:[%s4260 + $0x30] sm:$0xe]
        %v5406 = vld [vmem:[%s4260 + $0x3c] sm:$0xe]
        %v5407 = vld [vmem:[%s4260 + $0x48] sm:$0xe]
        %v5408 = vld [vmem:[%s4260 + $0x54] sm:$0xe]
        %v5409 = vld [vmem:[%s4260 + $0x60] sm:$0xe]
        %v5410 = vld [vmem:[%s4260 + $0x6c] sm:$0xe]
        %v5411 = vld [vmem:[%s4260 + $0x78] sm:$0xe]
        %v5412 = vld [vmem:[%s4260 + $0x84] sm:$0xe]
        %v5413 = vld [vmem:[%s4260 + $0x90] sm:$0xe]
        %v5414 = vld [vmem:[%s4260 + $0x9c] sm:$0xe]
        %v5415 = vld [vmem:[%s4260 + $0xa8] sm:$0xe]
        %v5416 = vld [vmem:[%s4260 + $0xb4] sm:$0xe]
        %v5465 = vrot.slane %v5401, 5
        %v5466 = vrot.slane %v5465, 4
        %v5467 = vrot.slane %v4648, 5
        %v5468 = vsel %vm2187, %v5466, %v5467
        %v5469 = vrot.slane %v5467, 4
        %v5470 = vrot.slane %v4649, 5
        %v5471 = vsel %vm2187, %v5469, %v5470
        %v5472 = vrot.slane %v5402, 5
        %v5473 = vrot.slane %v5472, 4
        %v5474 = vrot.slane %v4651, 5
        %v5475 = vsel %vm2187, %v5473, %v5474
        %v5476 = vrot.slane %v5474, 4
        %v5477 = vrot.slane %v4652, 5
        %v5478 = vsel %vm2187, %v5476, %v5477
        %v5479 = vrot.slane %v5403, 5
        %v5480 = vrot.slane %v5479, 4
        %v5481 = vrot.slane %v4654, 5
        %v5482 = vsel %vm2187, %v5480, %v5481
        %v5483 = vrot.slane %v5481, 4
        %v5484 = vrot.slane %v4655, 5
        %v5485 = vsel %vm2187, %v5483, %v5484
        %v5486 = vrot.slane %v5404, 5
        %v5487 = vrot.slane %v5486, 4
        %v5488 = vrot.slane %v4657, 5
        %v5489 = vsel %vm2187, %v5487, %v5488
        %v5490 = vrot.slane %v5488, 4
        %v5491 = vrot.slane %v4658, 5
        %v5492 = vsel %vm2187, %v5490, %v5491
        %v5493 = vrot.slane %v5405, 5
        %v5494 = vrot.slane %v5493, 4
        %v5495 = vrot.slane %v4660, 5
        %v5496 = vsel %vm2187, %v5494, %v5495
        %v5497 = vrot.slane %v5495, 4
        %v5498 = vrot.slane %v4661, 5
        %v5499 = vsel %vm2187, %v5497, %v5498
        %v5500 = vrot.slane %v5406, 5
        %v5501 = vrot.slane %v5500, 4
        %v5502 = vrot.slane %v4663, 5
        %v5503 = vsel %vm2187, %v5501, %v5502
        %v5504 = vrot.slane %v5502, 4
        %v5505 = vrot.slane %v4664, 5
        %v5506 = vsel %vm2187, %v5504, %v5505
        %v5507 = vrot.slane %v5407, 5
        %v5508 = vrot.slane %v5507, 4
        %v5509 = vrot.slane %v4666, 5
        %v5510 = vsel %vm2187, %v5508, %v5509
        %v5511 = vrot.slane %v5509, 4
        %v5512 = vrot.slane %v4667, 5
        %v5513 = vsel %vm2187, %v5511, %v5512
        %v5514 = vrot.slane %v5408, 5
        %v5515 = vrot.slane %v5514, 4
        %v5516 = vrot.slane %v4669, 5
        %v5517 = vsel %vm2187, %v5515, %v5516
        %v5518 = vrot.slane %v5516, 4
        %v5519 = vrot.slane %v4670, 5
        %v5520 = vsel %vm2187, %v5518, %v5519
        %v5521 = vrot.slane %v5409, 5
        %v5522 = vrot.slane %v5521, 4
        %v5523 = vrot.slane %v4672, 5
        %v5524 = vsel %vm2187, %v5522, %v5523
        %v5525 = vrot.slane %v5523, 4
        %v5526 = vrot.slane %v4673, 5
        %v5527 = vsel %vm2187, %v5525, %v5526
        %v5528 = vrot.slane %v5410, 5
        %v5529 = vrot.slane %v5528, 4
        %v5530 = vrot.slane %v4675, 5
        %v5531 = vsel %vm2187, %v5529, %v5530
        %v5532 = vrot.slane %v5530, 4
        %v5533 = vrot.slane %v4676, 5
        %v5534 = vsel %vm2187, %v5532, %v5533
        %v5535 = vrot.slane %v5411, 5
        %v5536 = vrot.slane %v5535, 4
        %v5537 = vrot.slane %v4678, 5
        %v5538 = vsel %vm2187, %v5536, %v5537
        %v5539 = vrot.slane %v5537, 4
        %v5540 = vrot.slane %v4679, 5
        %v5541 = vsel %vm2187, %v5539, %v5540
        %v5542 = vrot.slane %v5412, 5
        %v5543 = vrot.slane %v5542, 4
        %v5544 = vrot.slane %v4681, 5
        %v5545 = vsel %vm2187, %v5543, %v5544
        %v5546 = vrot.slane %v5544, 4
        %v5547 = vrot.slane %v4682, 5
        %v5548 = vsel %vm2187, %v5546, %v5547
        %v5549 = vrot.slane %v5413, 5
        %v5550 = vrot.slane %v5549, 4
        %v5551 = vrot.slane %v4684, 5
        %v5552 = vsel %vm2187, %v5550, %v5551
        %v5553 = vrot.slane %v5551, 4
        %v5554 = vrot.slane %v4685, 5
        %v5555 = vsel %vm2187, %v5553, %v5554
        %v5556 = vrot.slane %v5414, 5
        %v5557 = vrot.slane %v5556, 4
        %v5558 = vrot.slane %v4687, 5
        %v5559 = vsel %vm2187, %v5557, %v5558
        %v5560 = vrot.slane %v5558, 4
        %v5561 = vrot.slane %v4688, 5
        %v5562 = vsel %vm2187, %v5560, %v5561
        %v5563 = vrot.slane %v5415, 5
        %v5564 = vrot.slane %v5563, 4
        %v5565 = vrot.slane %v4690, 5
        %v5566 = vsel %vm2187, %v5564, %v5565
        %v5567 = vrot.slane %v5565, 4
        %v5568 = vrot.slane %v4691, 5
        %v5569 = vsel %vm2187, %v5567, %v5568
        %v5570 = vrot.slane %v5416, 5
        %v5571 = vrot.slane %v5570, 4
        %v5572 = vrot.slane %v4693, 5
        %v5573 = vsel %vm2187, %v5571, %v5572
        %v5574 = vrot.slane %v5572, 4
        %v5575 = vrot.slane %v4694, 5
        %v5576 = vsel %vm2187, %v5574, %v5575
        %s5577 = scalar_lea.vmem [#allocation7], 256
        %v5578 = vld [vmem:[%s5577] sm:$0xf]
        %v5579 = vld [vmem:[%s5577 + $0x4] sm:$0xf]
        %v5580 = vld [vmem:[%s5577 + $0x8] sm:$0xf]
        %v5581 = vld [vmem:[%s5577 + $0xc] sm:$0xf]
        %v5582 = vld [vmem:[%s5577 + $0x10] sm:$0xf]
        %v5583 = vld [vmem:[%s5577 + $0x14] sm:$0xf]
        %v5584 = vld [vmem:[%s5577 + $0x18] sm:$0xf]
        %v5585 = vld [vmem:[%s5577 + $0x1c] sm:$0xf]
        %v5586 = vunpack.c.l.b16 %v5468
        %v5587 = vunpack.c.l.b16 %v5471
        %v5588 = vunpack.c.l.b16 %v5475
        %v5589 = vunpack.c.l.b16 %v5478
        %v5590 = vunpack.c.l.b16 %v5482
        %v5591 = vunpack.c.l.b16 %v5485
        %v5592 = vunpack.c.l.b16 %v5489
        %v5593 = vunpack.c.l.b16 %v5492
        %v5594 = vunpack.c.l.b16 %v5496
        %v5595 = vunpack.c.l.b16 %v5499
        %v5596 = vunpack.c.l.b16 %v5503
        %v5597 = vunpack.c.l.b16 %v5506
        %v5598 = vunpack.c.l.b16 %v5510
        %v5599 = vunpack.c.l.b16 %v5513
        %v5600 = vunpack.c.l.b16 %v5517
        %v5601 = vunpack.c.l.b16 %v5520
        %v5602 = vunpack.c.l.b16 %v5524
        %v5603 = vunpack.c.l.b16 %v5527
        %v5604 = vunpack.c.l.b16 %v5531
        %v5605 = vunpack.c.l.b16 %v5534
        %v5606 = vunpack.c.l.b16 %v5538
        %v5607 = vunpack.c.l.b16 %v5541
        %v5608 = vunpack.c.l.b16 %v5545
        %v5609 = vunpack.c.l.b16 %v5548
        %v5610 = vunpack.c.l.b16 %v5552
        %v5611 = vunpack.c.l.b16 %v5555
        %v5612 = vunpack.c.l.b16 %v5559
        %v5613 = vunpack.c.l.b16 %v5562
        %v5614 = vunpack.c.l.b16 %v5566
        %v5615 = vunpack.c.l.b16 %v5569
        %v5616 = vunpack.c.l.b16 %v5573
        %v5617 = vunpack.c.l.b16 %v5576
        %v5618 = vpack.c.b16 %v5587, %v5586
        %v5619 = vpack.c.b16 %v5589, %v5588
        %v5620 = vpack.c.b16 %v5591, %v5590
        %v5621 = vpack.c.b16 %v5593, %v5592
        %v5622 = vpack.c.b16 %v5595, %v5594
        %v5623 = vpack.c.b16 %v5597, %v5596
        %v5624 = vpack.c.b16 %v5599, %v5598
        %v5625 = vpack.c.b16 %v5601, %v5600
        %v5626 = vpack.c.b16 %v5603, %v5602
        %v5627 = vpack.c.b16 %v5605, %v5604
        %v5628 = vpack.c.b16 %v5607, %v5606
        %v5629 = vpack.c.b16 %v5609, %v5608
        %v5630 = vpack.c.b16 %v5611, %v5610
        %v5631 = vpack.c.b16 %v5613, %v5612
        %v5632 = vpack.c.b16 %v5615, %v5614
        %v5633 = vpack.c.b16 %v5617, %v5616
        %v5642 = vunpack.c.l.b16 %v5578
        %v5643 = vunpack.c.l.b16 %v5579
        %v5644 = vunpack.c.l.b16 %v5580
        %v5645 = vunpack.c.l.b16 %v5581
        %v5646 = vunpack.c.l.b16 %v5582
        %v5647 = vunpack.c.l.b16 %v5583
        %v5648 = vunpack.c.l.b16 %v5584
        %v5649 = vunpack.c.l.b16 %v5585
        %v5650 = vpack.c.b16 %v5643, %v5642
        %v5651 = vpack.c.b16 %v5645, %v5644
        %v5652 = vpack.c.b16 %v5647, %v5646
        %v5653 = vpack.c.b16 %v5649, %v5648
        %v5659 = vsel %vm1614, %v5618, 0
        %v5662 = vsel %vm1614, %v5619, 0
        %v5665 = vsel %vm1614, %v5620, 0
        %v5668 = vsel %vm1614, %v5621, 0
        %v5671 = vsel %vm1614, %v5622, 0
        %v5674 = vsel %vm1614, %v5623, 0
        %v5677 = vsel %vm1614, %v5624, 0
        %v5680 = vsel %vm1614, %v5625, 0
        %v5683 = vsel %vm1614, %v5626, 0
        %v5686 = vsel %vm1614, %v5627, 0
        %v5689 = vsel %vm1614, %v5628, 0
        %v5692 = vsel %vm1614, %v5629, 0
        %v5695 = vsel %vm1614, %v5630, 0
        %v5698 = vsel %vm1614, %v5631, 0
        %v5701 = vsel %vm1614, %v5632, 0
        %v5704 = vsel %vm1614, %v5633, 0
        %5706 = vmatprep.subr.bf16.mxu0 0
        %5707 = vmatpush1.bf16.msra.mxu0 %v5650
        %5708 = vmatprep.subr.bf16.mxu0 0
        %5709 = vmatpush1.bf16.msra.mxu0 %v5651
        %5710 = vmatprep.subr.bf16.mxu0 0
        %5711 = vmatpush1.bf16.msra.mxu0 %v5652
        %5712 = vmatprep.subr.bf16.mxu0 0
        %5713 = vmatpush1.bf16.msra.mxu0 %v5653
        %5714 = vmatprep.subr.bf16.mxu0 0
        %5715 = vmatpush1.bf16.msra.mxu0 0
        %5716 = vmatprep.subr.bf16.mxu0 0
        %5717 = vmatpush1.bf16.msra.mxu0 0
        %5718 = vmatprep.subr.bf16.mxu0 0
        %5719 = vmatpush1.bf16.msra.mxu0 0
        %5720 = vmatprep.subr.bf16.mxu0 0
        %5721 = vmatpush1.bf16.msra.mxu0 0
        %5722 = vmatprep.subr.bf16.mxu0 0
        %5723 = vmatpush1.bf16.msra.mxu0 0
        %5724 = vmatprep.subr.bf16.mxu0 0
        %5725 = vmatpush1.bf16.msra.mxu0 0
        %5726 = vmatprep.subr.bf16.mxu0 0
        %5727 = vmatpush1.bf16.msra.mxu0 0
        %5728 = vmatprep.subr.bf16.mxu0 0
        %5729 = vmatpush1.bf16.msra.mxu0 0
        %5730 = vmatprep.subr.bf16.mxu0 0
        %5731 = vmatpush1.bf16.msra.mxu0 0
        %5732 = vmatprep.subr.bf16.mxu0 0
        %5733 = vmatpush1.bf16.msra.mxu0 0
        %5734 = vmatprep.subr.bf16.mxu0 0
        %5735 = vmatpush1.bf16.msra.mxu0 0
        %5736 = vmatprep.subr.bf16.mxu0 0
        %5737 = vmatpush1.bf16.msra.mxu0 0
        %5738 = vmatprep.mubr.bf16.mxu0 0
        %5739 = vmatmul.mubr.bf16.gmra.mrb[0].mxu0 %v5659
        %v5740 = vpop.f32.mrb[0].mxu0
        %v5741 = vadd.f32 0.0, %v5740
        %v5742 = vpop.f32.mrb[0].mxu0
        %v5743 = vpop.f32.mrb[0].mxu0
        %v5744 = vadd.f32 0.0, %v5743
        %v5745 = vpop.f32.mrb[0].mxu0
        %5746 = vmatprep.mubr.bf16.mxu0 0
        %5747 = vmatmul.mubr.bf16.gmra.mrb[0].mxu0 %v5662
        %v5748 = vpop.f32.mrb[0].mxu0
        %v5749 = vadd.f32 0.0, %v5748
        %v5750 = vpop.f32.mrb[0].mxu0
        %v5751 = vpop.f32.mrb[0].mxu0
        %v5752 = vadd.f32 0.0, %v5751
        %v5753 = vpop.f32.mrb[0].mxu0
        %5754 = vmatprep.mubr.bf16.mxu0 0
        %5755 = vmatmul.mubr.bf16.gmra.mrb[0].mxu0 %v5665
        %v5756 = vpop.f32.mrb[0].mxu0
        %v5757 = vadd.f32 0.0, %v5756
        %v5758 = vpop.f32.mrb[0].mxu0
        %v5759 = vpop.f32.mrb[0].mxu0
        %v5760 = vadd.f32 0.0, %v5759
        %v5761 = vpop.f32.mrb[0].mxu0
        %5762 = vmatprep.mubr.bf16.mxu0 0
        %5763 = vmatmul.mubr.bf16.gmra.mrb[0].mxu0 %v5668
        %v5764 = vpop.f32.mrb[0].mxu0
        %v5765 = vadd.f32 0.0, %v5764
        %v5766 = vpop.f32.mrb[0].mxu0
        %v5767 = vpop.f32.mrb[0].mxu0
        %v5768 = vadd.f32 0.0, %v5767
        %v5769 = vpop.f32.mrb[0].mxu0
        %5770 = vmatprep.mubr.bf16.mxu0 0
        %5771 = vmatmul.mubr.bf16.gmra.mrb[0].mxu0 %v5671
        %v5772 = vpop.f32.mrb[0].mxu0
        %v5773 = vadd.f32 0.0, %v5772
        %v5774 = vpop.f32.mrb[0].mxu0
        %v5775 = vpop.f32.mrb[0].mxu0
        %v5776 = vadd.f32 0.0, %v5775
        %v5777 = vpop.f32.mrb[0].mxu0
        %5778 = vmatprep.mubr.bf16.mxu0 0
        %5779 = vmatmul.mubr.bf16.gmra.mrb[0].mxu0 %v5674
        %v5780 = vpop.f32.mrb[0].mxu0
        %v5781 = vadd.f32 0.0, %v5780
        %v5782 = vpop.f32.mrb[0].mxu0
        %v5783 = vpop.f32.mrb[0].mxu0
        %v5784 = vadd.f32 0.0, %v5783
        %v5785 = vpop.f32.mrb[0].mxu0
        %5786 = vmatprep.mubr.bf16.mxu0 0
        %5787 = vmatmul.mubr.bf16.gmra.mrb[0].mxu0 %v5677
        %v5788 = vpop.f32.mrb[0].mxu0
        %v5789 = vadd.f32 0.0, %v5788
        %v5790 = vpop.f32.mrb[0].mxu0
        %v5791 = vpop.f32.mrb[0].mxu0
        %v5792 = vadd.f32 0.0, %v5791
        %v5793 = vpop.f32.mrb[0].mxu0
        %5794 = vmatprep.mubr.bf16.mxu0 0
        %5795 = vmatmul.mubr.bf16.gmra.mrb[0].mxu0 %v5680
        %v5796 = vpop.f32.mrb[0].mxu0
        %v5797 = vadd.f32 0.0, %v5796
        %v5798 = vpop.f32.mrb[0].mxu0
        %v5799 = vpop.f32.mrb[0].mxu0
        %v5800 = vadd.f32 0.0, %v5799
        %v5801 = vpop.f32.mrb[0].mxu0
        %5802 = vmatprep.mubr.bf16.mxu0 0
        %5803 = vmatmul.mubr.bf16.gmra.mrb[0].mxu0 %v5683
        %v5804 = vpop.f32.mrb[0].mxu0
        %v5805 = vadd.f32 0.0, %v5804
        %v5806 = vpop.f32.mrb[0].mxu0
        %v5807 = vpop.f32.mrb[0].mxu0
        %v5808 = vadd.f32 0.0, %v5807
        %v5809 = vpop.f32.mrb[0].mxu0
        %5810 = vmatprep.mubr.bf16.mxu0 0
        %5811 = vmatmul.mubr.bf16.gmra.mrb[0].mxu0 %v5686
        %v5812 = vpop.f32.mrb[0].mxu0
        %v5813 = vadd.f32 0.0, %v5812
        %v5814 = vpop.f32.mrb[0].mxu0
        %v5815 = vpop.f32.mrb[0].mxu0
        %v5816 = vadd.f32 0.0, %v5815
        %v5817 = vpop.f32.mrb[0].mxu0
        %5818 = vmatprep.mubr.bf16.mxu0 0
        %5819 = vmatmul.mubr.bf16.gmra.mrb[0].mxu0 %v5689
        %v5820 = vpop.f32.mrb[0].mxu0
        %v5821 = vadd.f32 0.0, %v5820
        %v5822 = vpop.f32.mrb[0].mxu0
        %v5823 = vpop.f32.mrb[0].mxu0
        %v5824 = vadd.f32 0.0, %v5823
        %v5825 = vpop.f32.mrb[0].mxu0
        %5826 = vmatprep.mubr.bf16.mxu0 0
        %5827 = vmatmul.mubr.bf16.gmra.mrb[0].mxu0 %v5692
        %v5828 = vpop.f32.mrb[0].mxu0
        %v5829 = vadd.f32 0.0, %v5828
        %v5830 = vpop.f32.mrb[0].mxu0
        %v5831 = vpop.f32.mrb[0].mxu0
        %v5832 = vadd.f32 0.0, %v5831
        %v5833 = vpop.f32.mrb[0].mxu0
        %5834 = vmatprep.mubr.bf16.mxu0 0
        %5835 = vmatmul.mubr.bf16.gmra.mrb[0].mxu0 %v5695
        %v5836 = vpop.f32.mrb[0].mxu0
        %v5837 = vadd.f32 0.0, %v5836
        %v5838 = vpop.f32.mrb[0].mxu0
        %v5839 = vpop.f32.mrb[0].mxu0
        %v5840 = vadd.f32 0.0, %v5839
        %v5841 = vpop.f32.mrb[0].mxu0
        %5842 = vmatprep.mubr.bf16.mxu0 0
        %5843 = vmatmul.mubr.bf16.gmra.mrb[0].mxu0 %v5698
        %v5844 = vpop.f32.mrb[0].mxu0
        %v5845 = vadd.f32 0.0, %v5844
        %v5846 = vpop.f32.mrb[0].mxu0
        %v5847 = vpop.f32.mrb[0].mxu0
        %v5848 = vadd.f32 0.0, %v5847
        %v5849 = vpop.f32.mrb[0].mxu0
        %5850 = vmatprep.mubr.bf16.mxu0 0
        %5851 = vmatmul.mubr.bf16.gmra.mrb[0].mxu0 %v5701
        %v5852 = vpop.f32.mrb[0].mxu0
        %v5853 = vadd.f32 0.0, %v5852
        %v5854 = vpop.f32.mrb[0].mxu0
        %v5855 = vpop.f32.mrb[0].mxu0
        %v5856 = vadd.f32 0.0, %v5855
        %v5857 = vpop.f32.mrb[0].mxu0
        %5858 = vmatprep.mubr.bf16.mxu0 0
        %5859 = vmatmul.mubr.bf16.gmra.mrb[0].mxu0 %v5704
        %v5860 = vpop.f32.mrb[0].mxu0
        %v5861 = vadd.f32 0.0, %v5860
        %v5862 = vpop.f32.mrb[0].mxu0
        %v5863 = vpop.f32.mrb[0].mxu0
        %v5864 = vadd.f32 0.0, %v5863
        %v5865 = vpop.f32.mrb[0].mxu0
        %5866 = vdwg.mxu0
        %v5867 = vadd.f32 %v5369, %v5741
        %v5868 = vadd.f32 %v5370, %v5744
        %v5869 = vadd.f32 %v5371, %v5749
        %v5870 = vadd.f32 %v5372, %v5752
        %v5871 = vadd.f32 %v5373, %v5757
        %v5872 = vadd.f32 %v5374, %v5760
        %v5873 = vadd.f32 %v5375, %v5765
        %v5874 = vadd.f32 %v5376, %v5768
        %v5875 = vadd.f32 %v5377, %v5773
        %v5876 = vadd.f32 %v5378, %v5776
        %v5877 = vadd.f32 %v5379, %v5781
        %v5878 = vadd.f32 %v5380, %v5784
        %v5879 = vadd.f32 %v5381, %v5789
        %v5880 = vadd.f32 %v5382, %v5792
        %v5881 = vadd.f32 %v5383, %v5797
        %v5882 = vadd.f32 %v5384, %v5800
        %v5883 = vadd.f32 %v5385, %v5805
        %v5884 = vadd.f32 %v5386, %v5808
        %v5885 = vadd.f32 %v5387, %v5813
        %v5886 = vadd.f32 %v5388, %v5816
        %v5887 = vadd.f32 %v5389, %v5821
        %v5888 = vadd.f32 %v5390, %v5824
        %v5889 = vadd.f32 %v5391, %v5829
        %v5890 = vadd.f32 %v5392, %v5832
        %v5891 = vadd.f32 %v5393, %v5837
        %v5892 = vadd.f32 %v5394, %v5840
        %v5893 = vadd.f32 %v5395, %v5845
        %v5894 = vadd.f32 %v5396, %v5848
        %v5895 = vadd.f32 %v5397, %v5853
        %v5896 = vadd.f32 %v5398, %v5856
        %v5897 = vadd.f32 %v5399, %v5861
        %v5898 = vadd.f32 %v5400, %v5864
        %v5899 = vld [vmem:[#allocation9] sm:$0x1]
        %v5901 = vlaneseq
        %v5902 = vshrl.u32 %v5901, 7
        %v5903 = vsub.s32 0, %v5902
        %v5904 = vrot.slane %v5899, %v5903
        %v5906 = vadd.f32 %v5867, %v5904
        %v5907 = vadd.f32 %v5868, %v5904
        %v5908 = vadd.f32 %v5869, %v5904
        %v5909 = vadd.f32 %v5870, %v5904
        %v5910 = vadd.f32 %v5871, %v5904
        %v5911 = vadd.f32 %v5872, %v5904
        %v5912 = vadd.f32 %v5873, %v5904
        %v5913 = vadd.f32 %v5874, %v5904
        %v5914 = vadd.f32 %v5875, %v5904
        %v5915 = vadd.f32 %v5876, %v5904
        %v5916 = vadd.f32 %v5877, %v5904
        %v5917 = vadd.f32 %v5878, %v5904
        %v5918 = vadd.f32 %v5879, %v5904
        %v5919 = vadd.f32 %v5880, %v5904
        %v5920 = vadd.f32 %v5881, %v5904
        %v5921 = vadd.f32 %v5882, %v5904
        %v5922 = vadd.f32 %v5883, %v5904
        %v5923 = vadd.f32 %v5884, %v5904
        %v5924 = vadd.f32 %v5885, %v5904
        %v5925 = vadd.f32 %v5886, %v5904
        %v5926 = vadd.f32 %v5887, %v5904
        %v5927 = vadd.f32 %v5888, %v5904
        %v5928 = vadd.f32 %v5889, %v5904
        %v5929 = vadd.f32 %v5890, %v5904
        %v5930 = vadd.f32 %v5891, %v5904
        %v5931 = vadd.f32 %v5892, %v5904
        %v5932 = vadd.f32 %v5893, %v5904
        %v5933 = vadd.f32 %v5894, %v5904
        %v5934 = vadd.f32 %v5895, %v5904
        %v5935 = vadd.f32 %v5896, %v5904
        %v5936 = vadd.f32 %v5897, %v5904
        %v5937 = vadd.f32 %v5898, %v5904
        %v5938 = vmax.f32 %v5906, 0.0
        %v5939 = vmax.f32 %v5907, 0.0
        %v5940 = vmax.f32 %v5908, 0.0
        %v5941 = vmax.f32 %v5909, 0.0
        %v5942 = vmax.f32 %v5910, 0.0
        %v5943 = vmax.f32 %v5911, 0.0
        %v5944 = vmax.f32 %v5912, 0.0
        %v5945 = vmax.f32 %v5913, 0.0
        %v5946 = vmax.f32 %v5914, 0.0
        %v5947 = vmax.f32 %v5915, 0.0
        %v5948 = vmax.f32 %v5916, 0.0
        %v5949 = vmax.f32 %v5917, 0.0
        %v5950 = vmax.f32 %v5918, 0.0
        %v5951 = vmax.f32 %v5919, 0.0
        %v5952 = vmax.f32 %v5920, 0.0
        %v5953 = vmax.f32 %v5921, 0.0
        %v5954 = vmax.f32 %v5922, 0.0
        %v5955 = vmax.f32 %v5923, 0.0
        %v5956 = vmax.f32 %v5924, 0.0
        %v5957 = vmax.f32 %v5925, 0.0
        %v5958 = vmax.f32 %v5926, 0.0
        %v5959 = vmax.f32 %v5927, 0.0
        %v5960 = vmax.f32 %v5928, 0.0
        %v5961 = vmax.f32 %v5929, 0.0
        %v5962 = vmax.f32 %v5930, 0.0
        %v5963 = vmax.f32 %v5931, 0.0
        %v5964 = vmax.f32 %v5932, 0.0
        %v5965 = vmax.f32 %v5933, 0.0
        %v5966 = vmax.f32 %v5934, 0.0
        %v5967 = vmax.f32 %v5935, 0.0
        %v5968 = vmax.f32 %v5936, 0.0
        %v5969 = vmax.f32 %v5937, 0.0
        %v5970 = vpack.c.bf16 %v5939, %v5938
        %v5971 = vpack.c.bf16 %v5941, %v5940
        %v5972 = vpack.c.bf16 %v5943, %v5942
        %v5973 = vpack.c.bf16 %v5945, %v5944
        %v5974 = vpack.c.bf16 %v5947, %v5946
        %v5975 = vpack.c.bf16 %v5949, %v5948
        %v5976 = vpack.c.bf16 %v5951, %v5950
        %v5977 = vpack.c.bf16 %v5953, %v5952
        %v5978 = vpack.c.bf16 %v5955, %v5954
        %v5979 = vpack.c.bf16 %v5957, %v5956
        %v5980 = vpack.c.bf16 %v5959, %v5958
        %v5981 = vpack.c.bf16 %v5961, %v5960
        %v5982 = vpack.c.bf16 %v5963, %v5962
        %v5983 = vpack.c.bf16 %v5965, %v5964
        %v5984 = vpack.c.bf16 %v5967, %v5966
        %v5985 = vpack.c.bf16 %v5969, %v5968
        %v6002 = vunpack.c.l.b16 %v5970
        %v6003 = vunpack.c.h.b16 %v5970
        %v6004 = vunpack.c.l.b16 %v5971
        %v6005 = vunpack.c.h.b16 %v5971
        %v6006 = vunpack.c.l.b16 %v5972
        %v6007 = vunpack.c.h.b16 %v5972
        %v6008 = vunpack.c.l.b16 %v5973
        %v6009 = vunpack.c.h.b16 %v5973
        %v6010 = vunpack.c.l.b16 %v5974
        %v6011 = vunpack.c.h.b16 %v5974
        %v6012 = vunpack.c.l.b16 %v5975
        %v6013 = vunpack.c.h.b16 %v5975
        %v6014 = vunpack.c.l.b16 %v5976
        %v6015 = vunpack.c.h.b16 %v5976
        %v6016 = vunpack.c.l.b16 %v5977
        %v6017 = vunpack.c.h.b16 %v5977
        %v6018 = vunpack.c.l.b16 %v5978
        %v6019 = vunpack.c.h.b16 %v5978
        %v6020 = vunpack.c.l.b16 %v5979
        %v6021 = vunpack.c.h.b16 %v5979
        %v6022 = vunpack.c.l.b16 %v5980
        %v6023 = vunpack.c.h.b16 %v5980
        %v6024 = vunpack.c.l.b16 %v5981
        %v6025 = vunpack.c.h.b16 %v5981
        %v6026 = vunpack.c.l.b16 %v5982
        %v6027 = vunpack.c.h.b16 %v5982
        %v6028 = vunpack.c.l.b16 %v5983
        %v6029 = vunpack.c.h.b16 %v5983
        %v6030 = vunpack.c.l.b16 %v5984
        %v6031 = vunpack.c.h.b16 %v5984
        %v6032 = vunpack.c.l.b16 %v5985
        %v6033 = vunpack.c.h.b16 %v5985
        %v6034 = vpack.c.b16 %v6002, %v6002
        %v6035 = vpack.c.b16 %v6003, %v6003
        %v6036 = vpack.c.b16 %v6004, %v6004
        %v6037 = vpack.c.b16 %v6005, %v6005
        %v6038 = vpack.c.b16 %v6006, %v6006
        %v6039 = vpack.c.b16 %v6007, %v6007
        %v6040 = vpack.c.b16 %v6008, %v6008
        %v6041 = vpack.c.b16 %v6009, %v6009
        %v6042 = vpack.c.b16 %v6010, %v6010
        %v6043 = vpack.c.b16 %v6011, %v6011
        %v6044 = vpack.c.b16 %v6012, %v6012
        %v6045 = vpack.c.b16 %v6013, %v6013
        %v6046 = vpack.c.b16 %v6014, %v6014
        %v6047 = vpack.c.b16 %v6015, %v6015
        %v6048 = vpack.c.b16 %v6016, %v6016
        %v6049 = vpack.c.b16 %v6017, %v6017
        %v6050 = vpack.c.b16 %v6018, %v6018
        %v6051 = vpack.c.b16 %v6019, %v6019
        %v6052 = vpack.c.b16 %v6020, %v6020
        %v6053 = vpack.c.b16 %v6021, %v6021
        %v6054 = vpack.c.b16 %v6022, %v6022
        %v6055 = vpack.c.b16 %v6023, %v6023
        %v6056 = vpack.c.b16 %v6024, %v6024
        %v6057 = vpack.c.b16 %v6025, %v6025
        %v6058 = vpack.c.b16 %v6026, %v6026
        %v6059 = vpack.c.b16 %v6027, %v6027
        %v6060 = vpack.c.b16 %v6028, %v6028
        %v6061 = vpack.c.b16 %v6029, %v6029
        %v6062 = vpack.c.b16 %v6030, %v6030
        %v6063 = vpack.c.b16 %v6031, %v6031
        %v6064 = vpack.c.b16 %v6032, %v6032
        %v6065 = vpack.c.b16 %v6033, %v6033
        %v6067 = vshrl.u32 %v6034, 16
        %v6069 = vrot.slane %v6067, 7
        %v6070 = vshll.u32 %v6034, 16
        %v6072 = vor.u32 %v6069, %v6070
        %v6073 = vrot.slane %v6069, 4
        %v6075 = vshrl.u32 %v6035, 16
        %v6077 = vrot.slane %v6075, 7
        %v6078 = vshll.u32 %v6035, 16
        %v6080 = vor.u32 %v6077, %v6078
        %v6081 = vsel %vm654, %v6073, %v6080
        %v6082 = vrot.slane %v6077, 4
        %v6084 = vshrl.u32 %v6036, 16
        %v6086 = vrot.slane %v6084, 7
        %v6087 = vshll.u32 %v6036, 16
        %v6089 = vor.u32 %v6086, %v6087
        %v6090 = vrot.slane %v6086, 4
        %v6092 = vshrl.u32 %v6037, 16
        %v6094 = vrot.slane %v6092, 7
        %v6095 = vshll.u32 %v6037, 16
        %v6097 = vor.u32 %v6094, %v6095
        %v6098 = vsel %vm654, %v6090, %v6097
        %v6099 = vrot.slane %v6094, 4
        %v6101 = vshrl.u32 %v6038, 16
        %v6103 = vrot.slane %v6101, 7
        %v6104 = vshll.u32 %v6038, 16
        %v6106 = vor.u32 %v6103, %v6104
        %v6107 = vrot.slane %v6103, 4
        %v6109 = vshrl.u32 %v6039, 16
        %v6111 = vrot.slane %v6109, 7
        %v6112 = vshll.u32 %v6039, 16
        %v6114 = vor.u32 %v6111, %v6112
        %v6115 = vsel %vm654, %v6107, %v6114
        %v6116 = vrot.slane %v6111, 4
        %v6118 = vshrl.u32 %v6040, 16
        %v6120 = vrot.slane %v6118, 7
        %v6121 = vshll.u32 %v6040, 16
        %v6123 = vor.u32 %v6120, %v6121
        %v6124 = vrot.slane %v6120, 4
        %v6126 = vshrl.u32 %v6041, 16
        %v6128 = vrot.slane %v6126, 7
        %v6129 = vshll.u32 %v6041, 16
        %v6131 = vor.u32 %v6128, %v6129
        %v6132 = vsel %vm654, %v6124, %v6131
        %v6133 = vrot.slane %v6128, 4
        %v6135 = vshrl.u32 %v6042, 16
        %v6137 = vrot.slane %v6135, 7
        %v6138 = vshll.u32 %v6042, 16
        %v6140 = vor.u32 %v6137, %v6138
        %v6141 = vrot.slane %v6137, 4
        %v6143 = vshrl.u32 %v6043, 16
        %v6145 = vrot.slane %v6143, 7
        %v6146 = vshll.u32 %v6043, 16
        %v6148 = vor.u32 %v6145, %v6146
        %v6149 = vsel %vm654, %v6141, %v6148
        %v6150 = vrot.slane %v6145, 4
        %v6152 = vshrl.u32 %v6044, 16
        %v6154 = vrot.slane %v6152, 7
        %v6155 = vshll.u32 %v6044, 16
        %v6157 = vor.u32 %v6154, %v6155
        %v6158 = vrot.slane %v6154, 4
        %v6160 = vshrl.u32 %v6045, 16
        %v6162 = vrot.slane %v6160, 7
        %v6163 = vshll.u32 %v6045, 16
        %v6165 = vor.u32 %v6162, %v6163
        %v6166 = vsel %vm654, %v6158, %v6165
        %v6167 = vrot.slane %v6162, 4
        %v6169 = vshrl.u32 %v6046, 16
        %v6171 = vrot.slane %v6169, 7
        %v6172 = vshll.u32 %v6046, 16
        %v6174 = vor.u32 %v6171, %v6172
        %v6175 = vrot.slane %v6171, 4
        %v6177 = vshrl.u32 %v6047, 16
        %v6179 = vrot.slane %v6177, 7
        %v6180 = vshll.u32 %v6047, 16
        %v6182 = vor.u32 %v6179, %v6180
        %v6183 = vsel %vm654, %v6175, %v6182
        %v6184 = vrot.slane %v6179, 4
        %v6186 = vshrl.u32 %v6048, 16
        %v6188 = vrot.slane %v6186, 7
        %v6189 = vshll.u32 %v6048, 16
        %v6191 = vor.u32 %v6188, %v6189
        %v6192 = vrot.slane %v6188, 4
        %v6194 = vshrl.u32 %v6049, 16
        %v6196 = vrot.slane %v6194, 7
        %v6197 = vshll.u32 %v6049, 16
        %v6199 = vor.u32 %v6196, %v6197
        %v6200 = vsel %vm654, %v6192, %v6199
        %v6201 = vrot.slane %v6196, 4
        %v6203 = vshrl.u32 %v6050, 16
        %v6205 = vrot.slane %v6203, 7
        %v6206 = vshll.u32 %v6050, 16
        %v6208 = vor.u32 %v6205, %v6206
        %v6209 = vrot.slane %v6205, 4
        %v6211 = vshrl.u32 %v6051, 16
        %v6213 = vrot.slane %v6211, 7
        %v6214 = vshll.u32 %v6051, 16
        %v6216 = vor.u32 %v6213, %v6214
        %v6217 = vsel %vm654, %v6209, %v6216
        %v6218 = vrot.slane %v6213, 4
        %v6220 = vshrl.u32 %v6052, 16
        %v6222 = vrot.slane %v6220, 7
        %v6223 = vshll.u32 %v6052, 16
        %v6225 = vor.u32 %v6222, %v6223
        %v6226 = vrot.slane %v6222, 4
        %v6228 = vshrl.u32 %v6053, 16
        %v6230 = vrot.slane %v6228, 7
        %v6231 = vshll.u32 %v6053, 16
        %v6233 = vor.u32 %v6230, %v6231
        %v6234 = vsel %vm654, %v6226, %v6233
        %v6235 = vrot.slane %v6230, 4
        %v6237 = vshrl.u32 %v6054, 16
        %v6239 = vrot.slane %v6237, 7
        %v6240 = vshll.u32 %v6054, 16
        %v6242 = vor.u32 %v6239, %v6240
        %v6243 = vrot.slane %v6239, 4
        %v6245 = vshrl.u32 %v6055, 16
        %v6247 = vrot.slane %v6245, 7
        %v6248 = vshll.u32 %v6055, 16
        %v6250 = vor.u32 %v6247, %v6248
        %v6251 = vsel %vm654, %v6243, %v6250
        %v6252 = vrot.slane %v6247, 4
        %v6254 = vshrl.u32 %v6056, 16
        %v6256 = vrot.slane %v6254, 7
        %v6257 = vshll.u32 %v6056, 16
        %v6259 = vor.u32 %v6256, %v6257
        %v6260 = vrot.slane %v6256, 4
        %v6262 = vshrl.u32 %v6057, 16
        %v6264 = vrot.slane %v6262, 7
        %v6265 = vshll.u32 %v6057, 16
        %v6267 = vor.u32 %v6264, %v6265
        %v6268 = vsel %vm654, %v6260, %v6267
        %v6269 = vrot.slane %v6264, 4
        %v6271 = vshrl.u32 %v6058, 16
        %v6273 = vrot.slane %v6271, 7
        %v6274 = vshll.u32 %v6058, 16
        %v6276 = vor.u32 %v6273, %v6274
        %v6277 = vrot.slane %v6273, 4
        %v6279 = vshrl.u32 %v6059, 16
        %v6281 = vrot.slane %v6279, 7
        %v6282 = vshll.u32 %v6059, 16
        %v6284 = vor.u32 %v6281, %v6282
        %v6285 = vsel %vm654, %v6277, %v6284
        %v6286 = vrot.slane %v6281, 4
        %v6288 = vshrl.u32 %v6060, 16
        %v6290 = vrot.slane %v6288, 7
        %v6291 = vshll.u32 %v6060, 16
        %v6293 = vor.u32 %v6290, %v6291
        %v6294 = vrot.slane %v6290, 4
        %v6296 = vshrl.u32 %v6061, 16
        %v6298 = vrot.slane %v6296, 7
        %v6299 = vshll.u32 %v6061, 16
        %v6301 = vor.u32 %v6298, %v6299
        %v6302 = vsel %vm654, %v6294, %v6301
        %v6303 = vrot.slane %v6298, 4
        %v6305 = vshrl.u32 %v6062, 16
        %v6307 = vrot.slane %v6305, 7
        %v6308 = vshll.u32 %v6062, 16
        %v6310 = vor.u32 %v6307, %v6308
        %v6311 = vrot.slane %v6307, 4
        %v6313 = vshrl.u32 %v6063, 16
        %v6315 = vrot.slane %v6313, 7
        %v6316 = vshll.u32 %v6063, 16
        %v6318 = vor.u32 %v6315, %v6316
        %v6319 = vsel %vm654, %v6311, %v6318
        %v6320 = vrot.slane %v6315, 4
        %v6322 = vshrl.u32 %v6064, 16
        %v6324 = vrot.slane %v6322, 7
        %v6325 = vshll.u32 %v6064, 16
        %v6327 = vor.u32 %v6324, %v6325
        %v6328 = vrot.slane %v6324, 4
        %v6330 = vshrl.u32 %v6065, 16
        %v6332 = vrot.slane %v6330, 7
        %v6333 = vshll.u32 %v6065, 16
        %v6335 = vor.u32 %v6332, %v6333
        %v6336 = vsel %vm654, %v6328, %v6335
        %v6337 = vrot.slane %v6332, 4
        %s6386 = scalar_lea.vmem [#allocation3], 12
        %vm6387 = vcmask 257024
        %vm6388 = vmand %vm6387, %vm445
        %v6389 = vld [vmem:[%s6386] sm:$0xf]
        %v6390 = vsel %vm6388, %v6072, %v6389
        %6391 = vst [vmem:[%s6386] sm:$0xf] %v6390
        %6392 = vst.msk [vmem:[%s6386 + $0x4] sm:$0xf] %vm501, %v6081
        %v6393 = vld [vmem:[%s6386 + $0x8] sm:$0x1]
        %v6394 = vsel %vm511, %v6082, %v6393
        %6395 = vst [vmem:[%s6386 + $0x8] sm:$0x1] %v6394
        %v6396 = vld [vmem:[%s6386 + $0xc] sm:$0xf]
        %v6397 = vsel %vm6388, %v6089, %v6396
        %6398 = vst [vmem:[%s6386 + $0xc] sm:$0xf] %v6397
        %6399 = vst.msk [vmem:[%s6386 + $0x10] sm:$0xf] %vm501, %v6098
        %v6400 = vld [vmem:[%s6386 + $0x14] sm:$0x1]
        %v6401 = vsel %vm511, %v6099, %v6400
        %6402 = vst [vmem:[%s6386 + $0x14] sm:$0x1] %v6401
        %v6403 = vld [vmem:[%s6386 + $0x18] sm:$0xf]
        %v6404 = vsel %vm6388, %v6106, %v6403
        %6405 = vst [vmem:[%s6386 + $0x18] sm:$0xf] %v6404
        %6406 = vst.msk [vmem:[%s6386 + $0x1c] sm:$0xf] %vm501, %v6115
        %v6407 = vld [vmem:[%s6386 + $0x20] sm:$0x1]
        %v6408 = vsel %vm511, %v6116, %v6407
        %6409 = vst [vmem:[%s6386 + $0x20] sm:$0x1] %v6408
        %v6410 = vld [vmem:[%s6386 + $0x24] sm:$0xf]
        %v6411 = vsel %vm6388, %v6123, %v6410
        %6412 = vst [vmem:[%s6386 + $0x24] sm:$0xf] %v6411
        %6413 = vst.msk [vmem:[%s6386 + $0x28] sm:$0xf] %vm501, %v6132
        %v6414 = vld [vmem:[%s6386 + $0x2c] sm:$0x1]
        %v6415 = vsel %vm511, %v6133, %v6414
        %6416 = vst [vmem:[%s6386 + $0x2c] sm:$0x1] %v6415
        %v6417 = vld [vmem:[%s6386 + $0x30] sm:$0xf]
        %v6418 = vsel %vm6388, %v6140, %v6417
        %6419 = vst [vmem:[%s6386 + $0x30] sm:$0xf] %v6418
        %6420 = vst.msk [vmem:[%s6386 + $0x34] sm:$0xf] %vm501, %v6149
        %v6421 = vld [vmem:[%s6386 + $0x38] sm:$0x1]
        %v6422 = vsel %vm511, %v6150, %v6421
        %6423 = vst [vmem:[%s6386 + $0x38] sm:$0x1] %v6422
        %v6424 = vld [vmem:[%s6386 + $0x3c] sm:$0xf]
        %v6425 = vsel %vm6388, %v6157, %v6424
        %6426 = vst [vmem:[%s6386 + $0x3c] sm:$0xf] %v6425
        %6427 = vst.msk [vmem:[%s6386 + $0x40] sm:$0xf] %vm501, %v6166
        %v6428 = vld [vmem:[%s6386 + $0x44] sm:$0x1]
        %v6429 = vsel %vm511, %v6167, %v6428
        %6430 = vst [vmem:[%s6386 + $0x44] sm:$0x1] %v6429
        %v6431 = vld [vmem:[%s6386 + $0x48] sm:$0xf]
        %v6432 = vsel %vm6388, %v6174, %v6431
        %6433 = vst [vmem:[%s6386 + $0x48] sm:$0xf] %v6432
        %6434 = vst.msk [vmem:[%s6386 + $0x4c] sm:$0xf] %vm501, %v6183
        %v6435 = vld [vmem:[%s6386 + $0x50] sm:$0x1]
        %v6436 = vsel %vm511, %v6184, %v6435
        %6437 = vst [vmem:[%s6386 + $0x50] sm:$0x1] %v6436
        %v6438 = vld [vmem:[%s6386 + $0x54] sm:$0xf]
        %v6439 = vsel %vm6388, %v6191, %v6438
        %6440 = vst [vmem:[%s6386 + $0x54] sm:$0xf] %v6439
        %6441 = vst.msk [vmem:[%s6386 + $0x58] sm:$0xf] %vm501, %v6200
        %v6442 = vld [vmem:[%s6386 + $0x5c] sm:$0x1]
        %v6443 = vsel %vm511, %v6201, %v6442
        %6444 = vst [vmem:[%s6386 + $0x5c] sm:$0x1] %v6443
        %v6445 = vld [vmem:[%s6386 + $0x60] sm:$0xf]
        %v6446 = vsel %vm6388, %v6208, %v6445
        %6447 = vst [vmem:[%s6386 + $0x60] sm:$0xf] %v6446
        %6448 = vst.msk [vmem:[%s6386 + $0x64] sm:$0xf] %vm501, %v6217
        %v6449 = vld [vmem:[%s6386 + $0x68] sm:$0x1]
        %v6450 = vsel %vm511, %v6218, %v6449
        %6451 = vst [vmem:[%s6386 + $0x68] sm:$0x1] %v6450
        %v6452 = vld [vmem:[%s6386 + $0x6c] sm:$0xf]
        %v6453 = vsel %vm6388, %v6225, %v6452
        %6454 = vst [vmem:[%s6386 + $0x6c] sm:$0xf] %v6453
        %6455 = vst.msk [vmem:[%s6386 + $0x70] sm:$0xf] %vm501, %v6234
        %v6456 = vld [vmem:[%s6386 + $0x74] sm:$0x1]
        %v6457 = vsel %vm511, %v6235, %v6456
        %6458 = vst [vmem:[%s6386 + $0x74] sm:$0x1] %v6457
        %v6459 = vld [vmem:[%s6386 + $0x78] sm:$0xf]
        %v6460 = vsel %vm6388, %v6242, %v6459
        %6461 = vst [vmem:[%s6386 + $0x78] sm:$0xf] %v6460
        %6462 = vst.msk [vmem:[%s6386 + $0x7c] sm:$0xf] %vm501, %v6251
        %v6463 = vld [vmem:[%s6386 + $0x80] sm:$0x1]
        %v6464 = vsel %vm511, %v6252, %v6463
        %6465 = vst [vmem:[%s6386 + $0x80] sm:$0x1] %v6464
        %v6466 = vld [vmem:[%s6386 + $0x84] sm:$0xf]
        %v6467 = vsel %vm6388, %v6259, %v6466
        %6468 = vst [vmem:[%s6386 + $0x84] sm:$0xf] %v6467
        %6469 = vst.msk [vmem:[%s6386 + $0x88] sm:$0xf] %vm501, %v6268
        %v6470 = vld [vmem:[%s6386 + $0x8c] sm:$0x1]
        %v6471 = vsel %vm511, %v6269, %v6470
        %6472 = vst [vmem:[%s6386 + $0x8c] sm:$0x1] %v6471
        %v6473 = vld [vmem:[%s6386 + $0x90] sm:$0xf]
        %v6474 = vsel %vm6388, %v6276, %v6473
        %6475 = vst [vmem:[%s6386 + $0x90] sm:$0xf] %v6474
        %6476 = vst.msk [vmem:[%s6386 + $0x94] sm:$0xf] %vm501, %v6285
        %v6477 = vld [vmem:[%s6386 + $0x98] sm:$0x1]
        %v6478 = vsel %vm511, %v6286, %v6477
        %6479 = vst [vmem:[%s6386 + $0x98] sm:$0x1] %v6478
        %v6480 = vld [vmem:[%s6386 + $0x9c] sm:$0xf]
        %v6481 = vsel %vm6388, %v6293, %v6480
        %6482 = vst [vmem:[%s6386 + $0x9c] sm:$0xf] %v6481
        %6483 = vst.msk [vmem:[%s6386 + $0xa0] sm:$0xf] %vm501, %v6302
        %v6484 = vld [vmem:[%s6386 + $0xa4] sm:$0x1]
        %v6485 = vsel %vm511, %v6303, %v6484
        %6486 = vst [vmem:[%s6386 + $0xa4] sm:$0x1] %v6485
        %v6487 = vld [vmem:[%s6386 + $0xa8] sm:$0xf]
        %v6488 = vsel %vm6388, %v6310, %v6487
        %6489 = vst [vmem:[%s6386 + $0xa8] sm:$0xf] %v6488
        %6490 = vst.msk [vmem:[%s6386 + $0xac] sm:$0xf] %vm501, %v6319
        %v6491 = vld [vmem:[%s6386 + $0xb0] sm:$0x1]
        %v6492 = vsel %vm511, %v6320, %v6491
        %6493 = vst [vmem:[%s6386 + $0xb0] sm:$0x1] %v6492
        %v6494 = vld [vmem:[%s6386 + $0xb4] sm:$0xf]
        %v6495 = vsel %vm6388, %v6327, %v6494
        %6496 = vst [vmem:[%s6386 + $0xb4] sm:$0xf] %v6495
        %6497 = vst.msk [vmem:[%s6386 + $0xb8] sm:$0xf] %vm501, %v6336
        %v6498 = vld [vmem:[%s6386 + $0xbc] sm:$0x1]
        %v6499 = vsel %vm511, %v6337, %v6498
        %6500 = vst [vmem:[%s6386 + $0xbc] sm:$0x1] %v6499
        %v6501 = vld [vmem:[#allocation3] sm:$0xf]
        %v6502 = vld [vmem:[#allocation3 + $0x4] sm:$0xf]
        %v6503 = vld [vmem:[#allocation3 + $0xc] sm:$0xf]
        %v6504 = vld [vmem:[#allocation3 + $0x10] sm:$0xf]
        %v6505 = vld [vmem:[#allocation3 + $0x18] sm:$0xf]
        %v6506 = vld [vmem:[#allocation3 + $0x1c] sm:$0xf]
        %v6507 = vld [vmem:[#allocation3 + $0x24] sm:$0xf]
        %v6508 = vld [vmem:[#allocation3 + $0x28] sm:$0xf]
        %v6509 = vld [vmem:[#allocation3 + $0x30] sm:$0xf]
        %v6510 = vld [vmem:[#allocation3 + $0x34] sm:$0xf]
        %v6511 = vld [vmem:[#allocation3 + $0x3c] sm:$0xf]
        %v6512 = vld [vmem:[#allocation3 + $0x40] sm:$0xf]
        %v6513 = vld [vmem:[#allocation3 + $0x48] sm:$0xf]
        %v6514 = vld [vmem:[#allocation3 + $0x4c] sm:$0xf]
        %v6515 = vld [vmem:[#allocation3 + $0x54] sm:$0xf]
        %v6516 = vld [vmem:[#allocation3 + $0x58] sm:$0xf]
        %v6517 = vld [vmem:[#allocation3 + $0x60] sm:$0xf]
        %v6518 = vld [vmem:[#allocation3 + $0x64] sm:$0xf]
        %v6519 = vld [vmem:[#allocation3 + $0x6c] sm:$0xf]
        %v6520 = vld [vmem:[#allocation3 + $0x70] sm:$0xf]
        %v6521 = vld [vmem:[#allocation3 + $0x78] sm:$0xf]
        %v6522 = vld [vmem:[#allocation3 + $0x7c] sm:$0xf]
        %v6523 = vld [vmem:[#allocation3 + $0x84] sm:$0xf]
        %v6524 = vld [vmem:[#allocation3 + $0x88] sm:$0xf]
        %v6525 = vld [vmem:[#allocation3 + $0x90] sm:$0xf]
        %v6526 = vld [vmem:[#allocation3 + $0x94] sm:$0xf]
        %v6527 = vld [vmem:[#allocation3 + $0x9c] sm:$0xf]
        %v6528 = vld [vmem:[#allocation3 + $0xa0] sm:$0xf]
        %v6529 = vld [vmem:[#allocation3 + $0xa8] sm:$0xf]
        %v6530 = vld [vmem:[#allocation3 + $0xac] sm:$0xf]
        %v6531 = vld [vmem:[#allocation3 + $0xb4] sm:$0xf]
        %v6532 = vld [vmem:[#allocation3 + $0xb8] sm:$0xf]
        %v6533 = vld [vmem:[#allocation10] sm:$0xf]
        %v6534 = vld [vmem:[#allocation10 + $0x4] sm:$0xf]
        %v6535 = vld [vmem:[#allocation10 + $0x8] sm:$0xf]
        %v6536 = vld [vmem:[#allocation10 + $0xc] sm:$0xf]
        %v6537 = vld [vmem:[#allocation3 + $0x8] sm:$0x1]
        %v6538 = vld [vmem:[#allocation3 + $0x14] sm:$0x1]
        %v6539 = vld [vmem:[#allocation3 + $0x20] sm:$0x1]
        %v6540 = vld [vmem:[#allocation3 + $0x2c] sm:$0x1]
        %v6541 = vld [vmem:[#allocation3 + $0x38] sm:$0x1]
        %v6542 = vld [vmem:[#allocation3 + $0x44] sm:$0x1]
        %v6543 = vld [vmem:[#allocation3 + $0x50] sm:$0x1]
        %v6544 = vld [vmem:[#allocation3 + $0x5c] sm:$0x1]
        %v6545 = vld [vmem:[#allocation3 + $0x68] sm:$0x1]
        %v6546 = vld [vmem:[#allocation3 + $0x74] sm:$0x1]
        %v6547 = vld [vmem:[#allocation3 + $0x80] sm:$0x1]
        %v6548 = vld [vmem:[#allocation3 + $0x8c] sm:$0x1]
        %v6549 = vld [vmem:[#allocation3 + $0x98] sm:$0x1]
        %v6550 = vld [vmem:[#allocation3 + $0xa4] sm:$0x1]
        %v6551 = vld [vmem:[#allocation3 + $0xb0] sm:$0x1]
        %v6552 = vld [vmem:[#allocation3 + $0xbc] sm:$0x1]
        %v6554 = vshrl.u32 %v6501, 16
        %v6556 = vrot.slane %v6554, 4
        %v6557 = vshll.u32 %v6501, 16
        %v6559 = vrot.slane %v6557, 5
        %v6560 = vor.u32 %v6556, %v6559
        %v6561 = vrot.slane %v6560, 4
        %v6563 = vshll.u32 %v6502, 16
        %v6565 = vrot.slane %v6563, 5
        %v6566 = vsel %vm1148, %v6561, %v6565
        %v6567 = vshrl.u32 %v6502, 16
        %v6569 = vrot.slane %v6567, 4
        %v6570 = vor.u32 %v6569, %v6565
        %v6571 = vrot.slane %v6570, 4
        %v6573 = vshll.u32 %v6537, 16
        %v6575 = vrot.slane %v6573, 5
        %v6576 = vsel %vm1148, %v6571, %v6575
        %v6578 = vshrl.u32 %v6503, 16
        %v6580 = vrot.slane %v6578, 4
        %v6581 = vshll.u32 %v6503, 16
        %v6583 = vrot.slane %v6581, 5
        %v6584 = vor.u32 %v6580, %v6583
        %v6585 = vrot.slane %v6584, 4
        %v6587 = vshll.u32 %v6504, 16
        %v6589 = vrot.slane %v6587, 5
        %v6590 = vsel %vm1148, %v6585, %v6589
        %v6591 = vshrl.u32 %v6504, 16
        %v6593 = vrot.slane %v6591, 4
        %v6594 = vor.u32 %v6593, %v6589
        %v6595 = vrot.slane %v6594, 4
        %v6597 = vshll.u32 %v6538, 16
        %v6599 = vrot.slane %v6597, 5
        %v6600 = vsel %vm1148, %v6595, %v6599
        %v6602 = vshrl.u32 %v6505, 16
        %v6604 = vrot.slane %v6602, 4
        %v6605 = vshll.u32 %v6505, 16
        %v6607 = vrot.slane %v6605, 5
        %v6608 = vor.u32 %v6604, %v6607
        %v6609 = vrot.slane %v6608, 4
        %v6611 = vshll.u32 %v6506, 16
        %v6613 = vrot.slane %v6611, 5
        %v6614 = vsel %vm1148, %v6609, %v6613
        %v6615 = vshrl.u32 %v6506, 16
        %v6617 = vrot.slane %v6615, 4
        %v6618 = vor.u32 %v6617, %v6613
        %v6619 = vrot.slane %v6618, 4
        %v6621 = vshll.u32 %v6539, 16
        %v6623 = vrot.slane %v6621, 5
        %v6624 = vsel %vm1148, %v6619, %v6623
        %v6626 = vshrl.u32 %v6507, 16
        %v6628 = vrot.slane %v6626, 4
        %v6629 = vshll.u32 %v6507, 16
        %v6631 = vrot.slane %v6629, 5
        %v6632 = vor.u32 %v6628, %v6631
        %v6633 = vrot.slane %v6632, 4
        %v6635 = vshll.u32 %v6508, 16
        %v6637 = vrot.slane %v6635, 5
        %v6638 = vsel %vm1148, %v6633, %v6637
        %v6639 = vshrl.u32 %v6508, 16
        %v6641 = vrot.slane %v6639, 4
        %v6642 = vor.u32 %v6641, %v6637
        %v6643 = vrot.slane %v6642, 4
        %v6645 = vshll.u32 %v6540, 16
        %v6647 = vrot.slane %v6645, 5
        %v6648 = vsel %vm1148, %v6643, %v6647
        %v6650 = vshrl.u32 %v6509, 16
        %v6652 = vrot.slane %v6650, 4
        %v6653 = vshll.u32 %v6509, 16
        %v6655 = vrot.slane %v6653, 5
        %v6656 = vor.u32 %v6652, %v6655
        %v6657 = vrot.slane %v6656, 4
        %v6659 = vshll.u32 %v6510, 16
        %v6661 = vrot.slane %v6659, 5
        %v6662 = vsel %vm1148, %v6657, %v6661
        %v6663 = vshrl.u32 %v6510, 16
        %v6665 = vrot.slane %v6663, 4
        %v6666 = vor.u32 %v6665, %v6661
        %v6667 = vrot.slane %v6666, 4
        %v6669 = vshll.u32 %v6541, 16
        %v6671 = vrot.slane %v6669, 5
        %v6672 = vsel %vm1148, %v6667, %v6671
        %v6674 = vshrl.u32 %v6511, 16
        %v6676 = vrot.slane %v6674, 4
        %v6677 = vshll.u32 %v6511, 16
        %v6679 = vrot.slane %v6677, 5
        %v6680 = vor.u32 %v6676, %v6679
        %v6681 = vrot.slane %v6680, 4
        %v6683 = vshll.u32 %v6512, 16
        %v6685 = vrot.slane %v6683, 5
        %v6686 = vsel %vm1148, %v6681, %v6685
        %v6687 = vshrl.u32 %v6512, 16
        %v6689 = vrot.slane %v6687, 4
        %v6690 = vor.u32 %v6689, %v6685
        %v6691 = vrot.slane %v6690, 4
        %v6693 = vshll.u32 %v6542, 16
        %v6695 = vrot.slane %v6693, 5
        %v6696 = vsel %vm1148, %v6691, %v6695
        %v6698 = vshrl.u32 %v6513, 16
        %v6700 = vrot.slane %v6698, 4
        %v6701 = vshll.u32 %v6513, 16
        %v6703 = vrot.slane %v6701, 5
        %v6704 = vor.u32 %v6700, %v6703
        %v6705 = vrot.slane %v6704, 4
        %v6707 = vshll.u32 %v6514, 16
        %v6709 = vrot.slane %v6707, 5
        %v6710 = vsel %vm1148, %v6705, %v6709
        %v6711 = vshrl.u32 %v6514, 16
        %v6713 = vrot.slane %v6711, 4
        %v6714 = vor.u32 %v6713, %v6709
        %v6715 = vrot.slane %v6714, 4
        %v6717 = vshll.u32 %v6543, 16
        %v6719 = vrot.slane %v6717, 5
        %v6720 = vsel %vm1148, %v6715, %v6719
        %v6722 = vshrl.u32 %v6515, 16
        %v6724 = vrot.slane %v6722, 4
        %v6725 = vshll.u32 %v6515, 16
        %v6727 = vrot.slane %v6725, 5
        %v6728 = vor.u32 %v6724, %v6727
        %v6729 = vrot.slane %v6728, 4
        %v6731 = vshll.u32 %v6516, 16
        %v6733 = vrot.slane %v6731, 5
        %v6734 = vsel %vm1148, %v6729, %v6733
        %v6735 = vshrl.u32 %v6516, 16
        %v6737 = vrot.slane %v6735, 4
        %v6738 = vor.u32 %v6737, %v6733
        %v6739 = vrot.slane %v6738, 4
        %v6741 = vshll.u32 %v6544, 16
        %v6743 = vrot.slane %v6741, 5
        %v6744 = vsel %vm1148, %v6739, %v6743
        %v6746 = vshrl.u32 %v6517, 16
        %v6748 = vrot.slane %v6746, 4
        %v6749 = vshll.u32 %v6517, 16
        %v6751 = vrot.slane %v6749, 5
        %v6752 = vor.u32 %v6748, %v6751
        %v6753 = vrot.slane %v6752, 4
        %v6755 = vshll.u32 %v6518, 16
        %v6757 = vrot.slane %v6755, 5
        %v6758 = vsel %vm1148, %v6753, %v6757
        %v6759 = vshrl.u32 %v6518, 16
        %v6761 = vrot.slane %v6759, 4
        %v6762 = vor.u32 %v6761, %v6757
        %v6763 = vrot.slane %v6762, 4
        %v6765 = vshll.u32 %v6545, 16
        %v6767 = vrot.slane %v6765, 5
        %v6768 = vsel %vm1148, %v6763, %v6767
        %v6770 = vshrl.u32 %v6519, 16
        %v6772 = vrot.slane %v6770, 4
        %v6773 = vshll.u32 %v6519, 16
        %v6775 = vrot.slane %v6773, 5
        %v6776 = vor.u32 %v6772, %v6775
        %v6777 = vrot.slane %v6776, 4
        %v6779 = vshll.u32 %v6520, 16
        %v6781 = vrot.slane %v6779, 5
        %v6782 = vsel %vm1148, %v6777, %v6781
        %v6783 = vshrl.u32 %v6520, 16
        %v6785 = vrot.slane %v6783, 4
        %v6786 = vor.u32 %v6785, %v6781
        %v6787 = vrot.slane %v6786, 4
        %v6789 = vshll.u32 %v6546, 16
        %v6791 = vrot.slane %v6789, 5
        %v6792 = vsel %vm1148, %v6787, %v6791
        %v6794 = vshrl.u32 %v6521, 16
        %v6796 = vrot.slane %v6794, 4
        %v6797 = vshll.u32 %v6521, 16
        %v6799 = vrot.slane %v6797, 5
        %v6800 = vor.u32 %v6796, %v6799
        %v6801 = vrot.slane %v6800, 4
        %v6803 = vshll.u32 %v6522, 16
        %v6805 = vrot.slane %v6803, 5
        %v6806 = vsel %vm1148, %v6801, %v6805
        %v6807 = vshrl.u32 %v6522, 16
        %v6809 = vrot.slane %v6807, 4
        %v6810 = vor.u32 %v6809, %v6805
        %v6811 = vrot.slane %v6810, 4
        %v6813 = vshll.u32 %v6547, 16
        %v6815 = vrot.slane %v6813, 5
        %v6816 = vsel %vm1148, %v6811, %v6815
        %v6818 = vshrl.u32 %v6523, 16
        %v6820 = vrot.slane %v6818, 4
        %v6821 = vshll.u32 %v6523, 16
        %v6823 = vrot.slane %v6821, 5
        %v6824 = vor.u32 %v6820, %v6823
        %v6825 = vrot.slane %v6824, 4
        %v6827 = vshll.u32 %v6524, 16
        %v6829 = vrot.slane %v6827, 5
        %v6830 = vsel %vm1148, %v6825, %v6829
        %v6831 = vshrl.u32 %v6524, 16
        %v6833 = vrot.slane %v6831, 4
        %v6834 = vor.u32 %v6833, %v6829
        %v6835 = vrot.slane %v6834, 4
        %v6837 = vshll.u32 %v6548, 16
        %v6839 = vrot.slane %v6837, 5
        %v6840 = vsel %vm1148, %v6835, %v6839
        %v6842 = vshrl.u32 %v6525, 16
        %v6844 = vrot.slane %v6842, 4
        %v6845 = vshll.u32 %v6525, 16
        %v6847 = vrot.slane %v6845, 5
        %v6848 = vor.u32 %v6844, %v6847
        %v6849 = vrot.slane %v6848, 4
        %v6851 = vshll.u32 %v6526, 16
        %v6853 = vrot.slane %v6851, 5
        %v6854 = vsel %vm1148, %v6849, %v6853
        %v6855 = vshrl.u32 %v6526, 16
        %v6857 = vrot.slane %v6855, 4
        %v6858 = vor.u32 %v6857, %v6853
        %v6859 = vrot.slane %v6858, 4
        %v6861 = vshll.u32 %v6549, 16
        %v6863 = vrot.slane %v6861, 5
        %v6864 = vsel %vm1148, %v6859, %v6863
        %v6866 = vshrl.u32 %v6527, 16
        %v6868 = vrot.slane %v6866, 4
        %v6869 = vshll.u32 %v6527, 16
        %v6871 = vrot.slane %v6869, 5
        %v6872 = vor.u32 %v6868, %v6871
        %v6873 = vrot.slane %v6872, 4
        %v6875 = vshll.u32 %v6528, 16
        %v6877 = vrot.slane %v6875, 5
        %v6878 = vsel %vm1148, %v6873, %v6877
        %v6879 = vshrl.u32 %v6528, 16
        %v6881 = vrot.slane %v6879, 4
        %v6882 = vor.u32 %v6881, %v6877
        %v6883 = vrot.slane %v6882, 4
        %v6885 = vshll.u32 %v6550, 16
        %v6887 = vrot.slane %v6885, 5
        %v6888 = vsel %vm1148, %v6883, %v6887
        %v6890 = vshrl.u32 %v6529, 16
        %v6892 = vrot.slane %v6890, 4
        %v6893 = vshll.u32 %v6529, 16
        %v6895 = vrot.slane %v6893, 5
        %v6896 = vor.u32 %v6892, %v6895
        %v6897 = vrot.slane %v6896, 4
        %v6899 = vshll.u32 %v6530, 16
        %v6901 = vrot.slane %v6899, 5
        %v6902 = vsel %vm1148, %v6897, %v6901
        %v6903 = vshrl.u32 %v6530, 16
        %v6905 = vrot.slane %v6903, 4
        %v6906 = vor.u32 %v6905, %v6901
        %v6907 = vrot.slane %v6906, 4
        %v6909 = vshll.u32 %v6551, 16
        %v6911 = vrot.slane %v6909, 5
        %v6912 = vsel %vm1148, %v6907, %v6911
        %v6914 = vshrl.u32 %v6531, 16
        %v6916 = vrot.slane %v6914, 4
        %v6917 = vshll.u32 %v6531, 16
        %v6919 = vrot.slane %v6917, 5
        %v6920 = vor.u32 %v6916, %v6919
        %v6921 = vrot.slane %v6920, 4
        %v6923 = vshll.u32 %v6532, 16
        %v6925 = vrot.slane %v6923, 5
        %v6926 = vsel %vm1148, %v6921, %v6925
        %v6927 = vshrl.u32 %v6532, 16
        %v6929 = vrot.slane %v6927, 4
        %v6930 = vor.u32 %v6929, %v6925
        %v6931 = vrot.slane %v6930, 4
        %v6933 = vshll.u32 %v6552, 16
        %v6935 = vrot.slane %v6933, 5
        %v6936 = vsel %vm1148, %v6931, %v6935
        %s6937 = scalar_lea.vmem [#allocation10], 16
        %v6938 = vld [vmem:[%s6937] sm:$0xf]
        %v6939 = vld [vmem:[%s6937 + $0x4] sm:$0xf]
        %v6940 = vld [vmem:[%s6937 + $0x8] sm:$0xf]
        %v6941 = vld [vmem:[%s6937 + $0xc] sm:$0xf]
        %v6942 = vunpack.c.l.b16 %v6566
        %v6943 = vunpack.c.l.b16 %v6576
        %v6944 = vunpack.c.l.b16 %v6590
        %v6945 = vunpack.c.l.b16 %v6600
        %v6946 = vunpack.c.l.b16 %v6614
        %v6947 = vunpack.c.l.b16 %v6624
        %v6948 = vunpack.c.l.b16 %v6638
        %v6949 = vunpack.c.l.b16 %v6648
        %v6950 = vunpack.c.l.b16 %v6662
        %v6951 = vunpack.c.l.b16 %v6672
        %v6952 = vunpack.c.l.b16 %v6686
        %v6953 = vunpack.c.l.b16 %v6696
        %v6954 = vunpack.c.l.b16 %v6710
        %v6955 = vunpack.c.l.b16 %v6720
        %v6956 = vunpack.c.l.b16 %v6734
        %v6957 = vunpack.c.l.b16 %v6744
        %v6958 = vunpack.c.l.b16 %v6758
        %v6959 = vunpack.c.l.b16 %v6768
        %v6960 = vunpack.c.l.b16 %v6782
        %v6961 = vunpack.c.l.b16 %v6792
        %v6962 = vunpack.c.l.b16 %v6806
        %v6963 = vunpack.c.l.b16 %v6816
        %v6964 = vunpack.c.l.b16 %v6830
        %v6965 = vunpack.c.l.b16 %v6840
        %v6966 = vunpack.c.l.b16 %v6854
        %v6967 = vunpack.c.l.b16 %v6864
        %v6968 = vunpack.c.l.b16 %v6878
        %v6969 = vunpack.c.l.b16 %v6888
        %v6970 = vunpack.c.l.b16 %v6902
        %v6971 = vunpack.c.l.b16 %v6912
        %v6972 = vunpack.c.l.b16 %v6926
        %v6973 = vunpack.c.l.b16 %v6936
        %v6974 = vpack.c.b16 %v6943, %v6942
        %v6975 = vpack.c.b16 %v6945, %v6944
        %v6976 = vpack.c.b16 %v6947, %v6946
        %v6977 = vpack.c.b16 %v6949, %v6948
        %v6978 = vpack.c.b16 %v6951, %v6950
        %v6979 = vpack.c.b16 %v6953, %v6952
        %v6980 = vpack.c.b16 %v6955, %v6954
        %v6981 = vpack.c.b16 %v6957, %v6956
        %v6982 = vpack.c.b16 %v6959, %v6958
        %v6983 = vpack.c.b16 %v6961, %v6960
        %v6984 = vpack.c.b16 %v6963, %v6962
        %v6985 = vpack.c.b16 %v6965, %v6964
        %v6986 = vpack.c.b16 %v6967, %v6966
        %v6987 = vpack.c.b16 %v6969, %v6968
        %v6988 = vpack.c.b16 %v6971, %v6970
        %v6989 = vpack.c.b16 %v6973, %v6972
        %v6994 = vunpack.c.l.b16 %v6938
        %v6995 = vunpack.c.l.b16 %v6939
        %v6996 = vunpack.c.l.b16 %v6940
        %v6997 = vunpack.c.l.b16 %v6941
        %v6998 = vpack.c.b16 %v6995, %v6994
        %v6999 = vpack.c.b16 %v6997, %v6996
        %vm7002 = vcmask 261120
        %v7004 = vsel %vm7002, %v6974, 0
        %v7007 = vsel %vm7002, %v6975, 0
        %v7010 = vsel %vm7002, %v6976, 0
        %v7013 = vsel %vm7002, %v6977, 0
        %v7016 = vsel %vm7002, %v6978, 0
        %v7019 = vsel %vm7002, %v6979, 0
        %v7022 = vsel %vm7002, %v6980, 0
        %v7025 = vsel %vm7002, %v6981, 0
        %v7028 = vsel %vm7002, %v6982, 0
        %v7031 = vsel %vm7002, %v6983, 0
        %v7034 = vsel %vm7002, %v6984, 0
        %v7037 = vsel %vm7002, %v6985, 0
        %v7040 = vsel %vm7002, %v6986, 0
        %v7043 = vsel %vm7002, %v6987, 0
        %v7046 = vsel %vm7002, %v6988, 0
        %v7049 = vsel %vm7002, %v6989, 0
        %7051 = vmatprep.subr.bf16.mxu0 0
        %7052 = vmatpush1.bf16.msra.mxu0 %v6998
        %7053 = vmatprep.subr.bf16.mxu0 0
        %7054 = vmatpush1.bf16.msra.mxu0 %v6999
        %7055 = vmatprep.subr.bf16.mxu0 0
        %7056 = vmatpush1.bf16.msra.mxu0 0
        %7057 = vmatprep.subr.bf16.mxu0 0
        %7058 = vmatpush1.bf16.msra.mxu0 0
        %7059 = vmatprep.subr.bf16.mxu0 0
        %7060 = vmatpush1.bf16.msra.mxu0 0
        %7061 = vmatprep.subr.bf16.mxu0 0
        %7062 = vmatpush1.bf16.msra.mxu0 0
        %7063 = vmatprep.subr.bf16.mxu0 0
        %7064 = vmatpush1.bf16.msra.mxu0 0
        %7065 = vmatprep.subr.bf16.mxu0 0
        %7066 = vmatpush1.bf16.msra.mxu0 0
        %7067 = vmatprep.subr.bf16.mxu0 0
        %7068 = vmatpush1.bf16.msra.mxu0 0
        %7069 = vmatprep.subr.bf16.mxu0 0
        %7070 = vmatpush1.bf16.msra.mxu0 0
        %7071 = vmatprep.subr.bf16.mxu0 0
        %7072 = vmatpush1.bf16.msra.mxu0 0
        %7073 = vmatprep.subr.bf16.mxu0 0
        %7074 = vmatpush1.bf16.msra.mxu0 0
        %7075 = vmatprep.subr.bf16.mxu0 0
        %7076 = vmatpush1.bf16.msra.mxu0 0
        %7077 = vmatprep.subr.bf16.mxu0 0
        %7078 = vmatpush1.bf16.msra.mxu0 0
        %7079 = vmatprep.subr.bf16.mxu0 0
        %7080 = vmatpush1.bf16.msra.mxu0 0
        %7081 = vmatprep.subr.bf16.mxu0 0
        %7082 = vmatpush1.bf16.msra.mxu0 0
        %7083 = vmatprep.mubr.bf16.mxu0 0
        %7084 = vmatmul.mubr.bf16.gmra.mrb[0].mxu0 %v7004
        %v7085 = vpop.f32.mrb[0].mxu0
        %v7086 = vadd.f32 0.0, %v7085
        %v7087 = vpop.f32.mrb[0].mxu0
        %v7088 = vpop.f32.mrb[0].mxu0
        %v7089 = vadd.f32 0.0, %v7088
        %v7090 = vpop.f32.mrb[0].mxu0
        %7091 = vmatprep.mubr.bf16.mxu0 0
        %7092 = vmatmul.mubr.bf16.gmra.mrb[0].mxu0 %v7007
        %v7093 = vpop.f32.mrb[0].mxu0
        %v7094 = vadd.f32 0.0, %v7093
        %v7095 = vpop.f32.mrb[0].mxu0
        %v7096 = vpop.f32.mrb[0].mxu0
        %v7097 = vadd.f32 0.0, %v7096
        %v7098 = vpop.f32.mrb[0].mxu0
        %7099 = vmatprep.mubr.bf16.mxu0 0
        %7100 = vmatmul.mubr.bf16.gmra.mrb[0].mxu0 %v7010
        %v7101 = vpop.f32.mrb[0].mxu0
        %v7102 = vadd.f32 0.0, %v7101
        %v7103 = vpop.f32.mrb[0].mxu0
        %v7104 = vpop.f32.mrb[0].mxu0
        %v7105 = vadd.f32 0.0, %v7104
        %v7106 = vpop.f32.mrb[0].mxu0
        %7107 = vmatprep.mubr.bf16.mxu0 0
        %7108 = vmatmul.mubr.bf16.gmra.mrb[0].mxu0 %v7013
        %v7109 = vpop.f32.mrb[0].mxu0
        %v7110 = vadd.f32 0.0, %v7109
        %v7111 = vpop.f32.mrb[0].mxu0
        %v7112 = vpop.f32.mrb[0].mxu0
        %v7113 = vadd.f32 0.0, %v7112
        %v7114 = vpop.f32.mrb[0].mxu0
        %7115 = vmatprep.mubr.bf16.mxu0 0
        %7116 = vmatmul.mubr.bf16.gmra.mrb[0].mxu0 %v7016
        %v7117 = vpop.f32.mrb[0].mxu0
        %v7118 = vadd.f32 0.0, %v7117
        %v7119 = vpop.f32.mrb[0].mxu0
        %v7120 = vpop.f32.mrb[0].mxu0
        %v7121 = vadd.f32 0.0, %v7120
        %v7122 = vpop.f32.mrb[0].mxu0
        %7123 = vmatprep.mubr.bf16.mxu0 0
        %7124 = vmatmul.mubr.bf16.gmra.mrb[0].mxu0 %v7019
        %v7125 = vpop.f32.mrb[0].mxu0
        %v7126 = vadd.f32 0.0, %v7125
        %v7127 = vpop.f32.mrb[0].mxu0
        %v7128 = vpop.f32.mrb[0].mxu0
        %v7129 = vadd.f32 0.0, %v7128
        %v7130 = vpop.f32.mrb[0].mxu0
        %7131 = vmatprep.mubr.bf16.mxu0 0
        %7132 = vmatmul.mubr.bf16.gmra.mrb[0].mxu0 %v7022
        %v7133 = vpop.f32.mrb[0].mxu0
        %v7134 = vadd.f32 0.0, %v7133
        %v7135 = vpop.f32.mrb[0].mxu0
        %v7136 = vpop.f32.mrb[0].mxu0
        %v7137 = vadd.f32 0.0, %v7136
        %v7138 = vpop.f32.mrb[0].mxu0
        %7139 = vmatprep.mubr.bf16.mxu0 0
        %7140 = vmatmul.mubr.bf16.gmra.mrb[0].mxu0 %v7025
        %v7141 = vpop.f32.mrb[0].mxu0
        %v7142 = vadd.f32 0.0, %v7141
        %v7143 = vpop.f32.mrb[0].mxu0
        %v7144 = vpop.f32.mrb[0].mxu0
        %v7145 = vadd.f32 0.0, %v7144
        %v7146 = vpop.f32.mrb[0].mxu0
        %7147 = vmatprep.mubr.bf16.mxu0 0
        %7148 = vmatmul.mubr.bf16.gmra.mrb[0].mxu0 %v7028
        %v7149 = vpop.f32.mrb[0].mxu0
        %v7150 = vadd.f32 0.0, %v7149
        %v7151 = vpop.f32.mrb[0].mxu0
        %v7152 = vpop.f32.mrb[0].mxu0
        %v7153 = vadd.f32 0.0, %v7152
        %v7154 = vpop.f32.mrb[0].mxu0
        %7155 = vmatprep.mubr.bf16.mxu0 0
        %7156 = vmatmul.mubr.bf16.gmra.mrb[0].mxu0 %v7031
        %v7157 = vpop.f32.mrb[0].mxu0
        %v7158 = vadd.f32 0.0, %v7157
        %v7159 = vpop.f32.mrb[0].mxu0
        %v7160 = vpop.f32.mrb[0].mxu0
        %v7161 = vadd.f32 0.0, %v7160
        %v7162 = vpop.f32.mrb[0].mxu0
        %7163 = vmatprep.mubr.bf16.mxu0 0
        %7164 = vmatmul.mubr.bf16.gmra.mrb[0].mxu0 %v7034
        %v7165 = vpop.f32.mrb[0].mxu0
        %v7166 = vadd.f32 0.0, %v7165
        %v7167 = vpop.f32.mrb[0].mxu0
        %v7168 = vpop.f32.mrb[0].mxu0
        %v7169 = vadd.f32 0.0, %v7168
        %v7170 = vpop.f32.mrb[0].mxu0
        %7171 = vmatprep.mubr.bf16.mxu0 0
        %7172 = vmatmul.mubr.bf16.gmra.mrb[0].mxu0 %v7037
        %v7173 = vpop.f32.mrb[0].mxu0
        %v7174 = vadd.f32 0.0, %v7173
        %v7175 = vpop.f32.mrb[0].mxu0
        %v7176 = vpop.f32.mrb[0].mxu0
        %v7177 = vadd.f32 0.0, %v7176
        %v7178 = vpop.f32.mrb[0].mxu0
        %7179 = vmatprep.mubr.bf16.mxu0 0
        %7180 = vmatmul.mubr.bf16.gmra.mrb[0].mxu0 %v7040
        %v7181 = vpop.f32.mrb[0].mxu0
        %v7182 = vadd.f32 0.0, %v7181
        %v7183 = vpop.f32.mrb[0].mxu0
        %v7184 = vpop.f32.mrb[0].mxu0
        %v7185 = vadd.f32 0.0, %v7184
        %v7186 = vpop.f32.mrb[0].mxu0
        %7187 = vmatprep.mubr.bf16.mxu0 0
        %7188 = vmatmul.mubr.bf16.gmra.mrb[0].mxu0 %v7043
        %v7189 = vpop.f32.mrb[0].mxu0
        %v7190 = vadd.f32 0.0, %v7189
        %v7191 = vpop.f32.mrb[0].mxu0
        %v7192 = vpop.f32.mrb[0].mxu0
        %v7193 = vadd.f32 0.0, %v7192
        %v7194 = vpop.f32.mrb[0].mxu0
        %7195 = vmatprep.mubr.bf16.mxu0 0
        %7196 = vmatmul.mubr.bf16.gmra.mrb[0].mxu0 %v7046
        %v7197 = vpop.f32.mrb[0].mxu0
        %v7198 = vadd.f32 0.0, %v7197
        %v7199 = vpop.f32.mrb[0].mxu0
        %v7200 = vpop.f32.mrb[0].mxu0
        %v7201 = vadd.f32 0.0, %v7200
        %v7202 = vpop.f32.mrb[0].mxu0
        %7203 = vmatprep.mubr.bf16.mxu0 0
        %7204 = vmatmul.mubr.bf16.gmra.mrb[0].mxu0 %v7049
        %v7205 = vpop.f32.mrb[0].mxu0
        %v7206 = vadd.f32 0.0, %v7205
        %v7207 = vpop.f32.mrb[0].mxu0
        %v7208 = vpop.f32.mrb[0].mxu0
        %v7209 = vadd.f32 0.0, %v7208
        %v7210 = vpop.f32.mrb[0].mxu0
        %7211 = vdwg.mxu0
        %v7244 = vunpack.c.l.b16 %v6501
        %v7245 = vunpack.c.l.b16 %v6502
        %v7246 = vunpack.c.l.b16 %v6503
        %v7247 = vunpack.c.l.b16 %v6504
        %v7248 = vunpack.c.l.b16 %v6505
        %v7249 = vunpack.c.l.b16 %v6506
        %v7250 = vunpack.c.l.b16 %v6507
        %v7251 = vunpack.c.l.b16 %v6508
        %v7252 = vunpack.c.l.b16 %v6509
        %v7253 = vunpack.c.l.b16 %v6510
        %v7254 = vunpack.c.l.b16 %v6511
        %v7255 = vunpack.c.l.b16 %v6512
        %v7256 = vunpack.c.l.b16 %v6513
        %v7257 = vunpack.c.l.b16 %v6514
        %v7258 = vunpack.c.l.b16 %v6515
        %v7259 = vunpack.c.l.b16 %v6516
        %v7260 = vunpack.c.l.b16 %v6517
        %v7261 = vunpack.c.l.b16 %v6518
        %v7262 = vunpack.c.l.b16 %v6519
        %v7263 = vunpack.c.l.b16 %v6520
        %v7264 = vunpack.c.l.b16 %v6521
        %v7265 = vunpack.c.l.b16 %v6522
        %v7266 = vunpack.c.l.b16 %v6523
        %v7267 = vunpack.c.l.b16 %v6524
        %v7268 = vunpack.c.l.b16 %v6525
        %v7269 = vunpack.c.l.b16 %v6526
        %v7270 = vunpack.c.l.b16 %v6527
        %v7271 = vunpack.c.l.b16 %v6528
        %v7272 = vunpack.c.l.b16 %v6529
        %v7273 = vunpack.c.l.b16 %v6530
        %v7274 = vunpack.c.l.b16 %v6531
        %v7275 = vunpack.c.l.b16 %v6532
        %v7276 = vpack.c.b16 %v7245, %v7244
        %v7277 = vpack.c.b16 %v7247, %v7246
        %v7278 = vpack.c.b16 %v7249, %v7248
        %v7279 = vpack.c.b16 %v7251, %v7250
        %v7280 = vpack.c.b16 %v7253, %v7252
        %v7281 = vpack.c.b16 %v7255, %v7254
        %v7282 = vpack.c.b16 %v7257, %v7256
        %v7283 = vpack.c.b16 %v7259, %v7258
        %v7284 = vpack.c.b16 %v7261, %v7260
        %v7285 = vpack.c.b16 %v7263, %v7262
        %v7286 = vpack.c.b16 %v7265, %v7264
        %v7287 = vpack.c.b16 %v7267, %v7266
        %v7288 = vpack.c.b16 %v7269, %v7268
        %v7289 = vpack.c.b16 %v7271, %v7270
        %v7290 = vpack.c.b16 %v7273, %v7272
        %v7291 = vpack.c.b16 %v7275, %v7274
        %v7296 = vunpack.c.l.b16 %v6533
        %v7297 = vunpack.c.l.b16 %v6534
        %v7298 = vunpack.c.l.b16 %v6535
        %v7299 = vunpack.c.l.b16 %v6536
        %v7300 = vpack.c.b16 %v7297, %v7296
        %v7301 = vpack.c.b16 %v7299, %v7298
        %v7305 = vsel %vm7002, %v7276, 0
        %v7308 = vsel %vm7002, %v7277, 0
        %v7311 = vsel %vm7002, %v7278, 0
        %v7314 = vsel %vm7002, %v7279, 0
        %v7317 = vsel %vm7002, %v7280, 0
        %v7320 = vsel %vm7002, %v7281, 0
        %v7323 = vsel %vm7002, %v7282, 0
        %v7326 = vsel %vm7002, %v7283, 0
        %v7329 = vsel %vm7002, %v7284, 0
        %v7332 = vsel %vm7002, %v7285, 0
        %v7335 = vsel %vm7002, %v7286, 0
        %v7338 = vsel %vm7002, %v7287, 0
        %v7341 = vsel %vm7002, %v7288, 0
        %v7344 = vsel %vm7002, %v7289, 0
        %v7347 = vsel %vm7002, %v7290, 0
        %v7350 = vsel %vm7002, %v7291, 0
        %7352 = vmatprep.subr.bf16.mxu0 0
        %7353 = vmatpush1.bf16.msra.mxu0 %v7300
        %7354 = vmatprep.subr.bf16.mxu0 0
        %7355 = vmatpush1.bf16.msra.mxu0 %v7301
        %7356 = vmatprep.subr.bf16.mxu0 0
        %7357 = vmatpush1.bf16.msra.mxu0 0
        %7358 = vmatprep.subr.bf16.mxu0 0
        %7359 = vmatpush1.bf16.msra.mxu0 0
        %7360 = vmatprep.subr.bf16.mxu0 0
        %7361 = vmatpush1.bf16.msra.mxu0 0
        %7362 = vmatprep.subr.bf16.mxu0 0
        %7363 = vmatpush1.bf16.msra.mxu0 0
        %7364 = vmatprep.subr.bf16.mxu0 0
        %7365 = vmatpush1.bf16.msra.mxu0 0
        %7366 = vmatprep.subr.bf16.mxu0 0
        %7367 = vmatpush1.bf16.msra.mxu0 0
        %7368 = vmatprep.subr.bf16.mxu0 0
        %7369 = vmatpush1.bf16.msra.mxu0 0
        %7370 = vmatprep.subr.bf16.mxu0 0
        %7371 = vmatpush1.bf16.msra.mxu0 0
        %7372 = vmatprep.subr.bf16.mxu0 0
        %7373 = vmatpush1.bf16.msra.mxu0 0
        %7374 = vmatprep.subr.bf16.mxu0 0
        %7375 = vmatpush1.bf16.msra.mxu0 0
        %7376 = vmatprep.subr.bf16.mxu0 0
        %7377 = vmatpush1.bf16.msra.mxu0 0
        %7378 = vmatprep.subr.bf16.mxu0 0
        %7379 = vmatpush1.bf16.msra.mxu0 0
        %7380 = vmatprep.subr.bf16.mxu0 0
        %7381 = vmatpush1.bf16.msra.mxu0 0
        %7382 = vmatprep.subr.bf16.mxu0 0
        %7383 = vmatpush1.bf16.msra.mxu0 0
        %7384 = vmatprep.mubr.bf16.mxu0 0
        %7385 = vmatmul.mubr.bf16.gmra.mrb[0].mxu0 %v7305
        %v7386 = vpop.f32.mrb[0].mxu0
        %v7387 = vadd.f32 %v7086, %v7386
        %v7388 = vpop.f32.mrb[0].mxu0
        %v7389 = vpop.f32.mrb[0].mxu0
        %v7390 = vadd.f32 %v7089, %v7389
        %v7391 = vpop.f32.mrb[0].mxu0
        %7392 = vmatprep.mubr.bf16.mxu0 0
        %7393 = vmatmul.mubr.bf16.gmra.mrb[0].mxu0 %v7308
        %v7394 = vpop.f32.mrb[0].mxu0
        %v7395 = vadd.f32 %v7094, %v7394
        %v7396 = vpop.f32.mrb[0].mxu0
        %v7397 = vpop.f32.mrb[0].mxu0
        %v7398 = vadd.f32 %v7097, %v7397
        %v7399 = vpop.f32.mrb[0].mxu0
        %7400 = vmatprep.mubr.bf16.mxu0 0
        %7401 = vmatmul.mubr.bf16.gmra.mrb[0].mxu0 %v7311
        %v7402 = vpop.f32.mrb[0].mxu0
        %v7403 = vadd.f32 %v7102, %v7402
        %v7404 = vpop.f32.mrb[0].mxu0
        %v7405 = vpop.f32.mrb[0].mxu0
        %v7406 = vadd.f32 %v7105, %v7405
        %v7407 = vpop.f32.mrb[0].mxu0
        %7408 = vmatprep.mubr.bf16.mxu0 0
        %7409 = vmatmul.mubr.bf16.gmra.mrb[0].mxu0 %v7314
        %v7410 = vpop.f32.mrb[0].mxu0
        %v7411 = vadd.f32 %v7110, %v7410
        %v7412 = vpop.f32.mrb[0].mxu0
        %v7413 = vpop.f32.mrb[0].mxu0
        %v7414 = vadd.f32 %v7113, %v7413
        %v7415 = vpop.f32.mrb[0].mxu0
        %7416 = vmatprep.mubr.bf16.mxu0 0
        %7417 = vmatmul.mubr.bf16.gmra.mrb[0].mxu0 %v7317
        %v7418 = vpop.f32.mrb[0].mxu0
        %v7419 = vadd.f32 %v7118, %v7418
        %v7420 = vpop.f32.mrb[0].mxu0
        %v7421 = vpop.f32.mrb[0].mxu0
        %v7422 = vadd.f32 %v7121, %v7421
        %v7423 = vpop.f32.mrb[0].mxu0
        %7424 = vmatprep.mubr.bf16.mxu0 0
        %7425 = vmatmul.mubr.bf16.gmra.mrb[0].mxu0 %v7320
        %v7426 = vpop.f32.mrb[0].mxu0
        %v7427 = vadd.f32 %v7126, %v7426
        %v7428 = vpop.f32.mrb[0].mxu0
        %v7429 = vpop.f32.mrb[0].mxu0
        %v7430 = vadd.f32 %v7129, %v7429
        %v7431 = vpop.f32.mrb[0].mxu0
        %7432 = vmatprep.mubr.bf16.mxu0 0
        %7433 = vmatmul.mubr.bf16.gmra.mrb[0].mxu0 %v7323
        %v7434 = vpop.f32.mrb[0].mxu0
        %v7435 = vadd.f32 %v7134, %v7434
        %v7436 = vpop.f32.mrb[0].mxu0
        %v7437 = vpop.f32.mrb[0].mxu0
        %v7438 = vadd.f32 %v7137, %v7437
        %v7439 = vpop.f32.mrb[0].mxu0
        %7440 = vmatprep.mubr.bf16.mxu0 0
        %7441 = vmatmul.mubr.bf16.gmra.mrb[0].mxu0 %v7326
        %v7442 = vpop.f32.mrb[0].mxu0
        %v7443 = vadd.f32 %v7142, %v7442
        %v7444 = vpop.f32.mrb[0].mxu0
        %v7445 = vpop.f32.mrb[0].mxu0
        %v7446 = vadd.f32 %v7145, %v7445
        %v7447 = vpop.f32.mrb[0].mxu0
        %7448 = vmatprep.mubr.bf16.mxu0 0
        %7449 = vmatmul.mubr.bf16.gmra.mrb[0].mxu0 %v7329
        %v7450 = vpop.f32.mrb[0].mxu0
        %v7451 = vadd.f32 %v7150, %v7450
        %v7452 = vpop.f32.mrb[0].mxu0
        %v7453 = vpop.f32.mrb[0].mxu0
        %v7454 = vadd.f32 %v7153, %v7453
        %v7455 = vpop.f32.mrb[0].mxu0
        %7456 = vmatprep.mubr.bf16.mxu0 0
        %7457 = vmatmul.mubr.bf16.gmra.mrb[0].mxu0 %v7332
        %v7458 = vpop.f32.mrb[0].mxu0
        %v7459 = vadd.f32 %v7158, %v7458
        %v7460 = vpop.f32.mrb[0].mxu0
        %v7461 = vpop.f32.mrb[0].mxu0
        %v7462 = vadd.f32 %v7161, %v7461
        %v7463 = vpop.f32.mrb[0].mxu0
        %7464 = vmatprep.mubr.bf16.mxu0 0
        %7465 = vmatmul.mubr.bf16.gmra.mrb[0].mxu0 %v7335
        %v7466 = vpop.f32.mrb[0].mxu0
        %v7467 = vadd.f32 %v7166, %v7466
        %v7468 = vpop.f32.mrb[0].mxu0
        %v7469 = vpop.f32.mrb[0].mxu0
        %v7470 = vadd.f32 %v7169, %v7469
        %v7471 = vpop.f32.mrb[0].mxu0
        %7472 = vmatprep.mubr.bf16.mxu0 0
        %7473 = vmatmul.mubr.bf16.gmra.mrb[0].mxu0 %v7338
        %v7474 = vpop.f32.mrb[0].mxu0
        %v7475 = vadd.f32 %v7174, %v7474
        %v7476 = vpop.f32.mrb[0].mxu0
        %v7477 = vpop.f32.mrb[0].mxu0
        %v7478 = vadd.f32 %v7177, %v7477
        %v7479 = vpop.f32.mrb[0].mxu0
        %7480 = vmatprep.mubr.bf16.mxu0 0
        %7481 = vmatmul.mubr.bf16.gmra.mrb[0].mxu0 %v7341
        %v7482 = vpop.f32.mrb[0].mxu0
        %v7483 = vadd.f32 %v7182, %v7482
        %v7484 = vpop.f32.mrb[0].mxu0
        %v7485 = vpop.f32.mrb[0].mxu0
        %v7486 = vadd.f32 %v7185, %v7485
        %v7487 = vpop.f32.mrb[0].mxu0
        %7488 = vmatprep.mubr.bf16.mxu0 0
        %7489 = vmatmul.mubr.bf16.gmra.mrb[0].mxu0 %v7344
        %v7490 = vpop.f32.mrb[0].mxu0
        %v7491 = vadd.f32 %v7190, %v7490
        %v7492 = vpop.f32.mrb[0].mxu0
        %v7493 = vpop.f32.mrb[0].mxu0
        %v7494 = vadd.f32 %v7193, %v7493
        %v7495 = vpop.f32.mrb[0].mxu0
        %7496 = vmatprep.mubr.bf16.mxu0 0
        %7497 = vmatmul.mubr.bf16.gmra.mrb[0].mxu0 %v7347
        %v7498 = vpop.f32.mrb[0].mxu0
        %v7499 = vadd.f32 %v7198, %v7498
        %v7500 = vpop.f32.mrb[0].mxu0
        %v7501 = vpop.f32.mrb[0].mxu0
        %v7502 = vadd.f32 %v7201, %v7501
        %v7503 = vpop.f32.mrb[0].mxu0
        %7504 = vmatprep.mubr.bf16.mxu0 0
        %7505 = vmatmul.mubr.bf16.gmra.mrb[0].mxu0 %v7350
        %v7506 = vpop.f32.mrb[0].mxu0
        %v7507 = vadd.f32 %v7206, %v7506
        %v7508 = vpop.f32.mrb[0].mxu0
        %v7509 = vpop.f32.mrb[0].mxu0
        %v7510 = vadd.f32 %v7209, %v7509
        %v7511 = vpop.f32.mrb[0].mxu0
        %7512 = vdwg.mxu0
        %v7513 = vld [vmem:[#allocation3] sm:$0xe]
        %v7514 = vld [vmem:[#allocation3 + $0xc] sm:$0xe]
        %v7515 = vld [vmem:[#allocation3 + $0x18] sm:$0xe]
        %v7516 = vld [vmem:[#allocation3 + $0x24] sm:$0xe]
        %v7517 = vld [vmem:[#allocation3 + $0x30] sm:$0xe]
        %v7518 = vld [vmem:[#allocation3 + $0x3c] sm:$0xe]
        %v7519 = vld [vmem:[#allocation3 + $0x48] sm:$0xe]
        %v7520 = vld [vmem:[#allocation3 + $0x54] sm:$0xe]
        %v7521 = vld [vmem:[#allocation3 + $0x60] sm:$0xe]
        %v7522 = vld [vmem:[#allocation3 + $0x6c] sm:$0xe]
        %v7523 = vld [vmem:[#allocation3 + $0x78] sm:$0xe]
        %v7524 = vld [vmem:[#allocation3 + $0x84] sm:$0xe]
        %v7525 = vld [vmem:[#allocation3 + $0x90] sm:$0xe]
        %v7526 = vld [vmem:[#allocation3 + $0x9c] sm:$0xe]
        %v7527 = vld [vmem:[#allocation3 + $0xa8] sm:$0xe]
        %v7528 = vld [vmem:[#allocation3 + $0xb4] sm:$0xe]
        %v7561 = vrot.slane %v7513, 5
        %v7562 = vrot.slane %v7561, 4
        %v7563 = vrot.slane %v6502, 5
        %v7564 = vsel %vm2187, %v7562, %v7563
        %v7565 = vrot.slane %v7563, 4
        %v7566 = vrot.slane %v6537, 5
        %v7567 = vsel %vm2187, %v7565, %v7566
        %v7568 = vrot.slane %v7514, 5
        %v7569 = vrot.slane %v7568, 4
        %v7570 = vrot.slane %v6504, 5
        %v7571 = vsel %vm2187, %v7569, %v7570
        %v7572 = vrot.slane %v7570, 4
        %v7573 = vrot.slane %v6538, 5
        %v7574 = vsel %vm2187, %v7572, %v7573
        %v7575 = vrot.slane %v7515, 5
        %v7576 = vrot.slane %v7575, 4
        %v7577 = vrot.slane %v6506, 5
        %v7578 = vsel %vm2187, %v7576, %v7577
        %v7579 = vrot.slane %v7577, 4
        %v7580 = vrot.slane %v6539, 5
        %v7581 = vsel %vm2187, %v7579, %v7580
        %v7582 = vrot.slane %v7516, 5
        %v7583 = vrot.slane %v7582, 4
        %v7584 = vrot.slane %v6508, 5
        %v7585 = vsel %vm2187, %v7583, %v7584
        %v7586 = vrot.slane %v7584, 4
        %v7587 = vrot.slane %v6540, 5
        %v7588 = vsel %vm2187, %v7586, %v7587
        %v7589 = vrot.slane %v7517, 5
        %v7590 = vrot.slane %v7589, 4
        %v7591 = vrot.slane %v6510, 5
        %v7592 = vsel %vm2187, %v7590, %v7591
        %v7593 = vrot.slane %v7591, 4
        %v7594 = vrot.slane %v6541, 5
        %v7595 = vsel %vm2187, %v7593, %v7594
        %v7596 = vrot.slane %v7518, 5
        %v7597 = vrot.slane %v7596, 4
        %v7598 = vrot.slane %v6512, 5
        %v7599 = vsel %vm2187, %v7597, %v7598
        %v7600 = vrot.slane %v7598, 4
        %v7601 = vrot.slane %v6542, 5
        %v7602 = vsel %vm2187, %v7600, %v7601
        %v7603 = vrot.slane %v7519, 5
        %v7604 = vrot.slane %v7603, 4
        %v7605 = vrot.slane %v6514, 5
        %v7606 = vsel %vm2187, %v7604, %v7605
        %v7607 = vrot.slane %v7605, 4
        %v7608 = vrot.slane %v6543, 5
        %v7609 = vsel %vm2187, %v7607, %v7608
        %v7610 = vrot.slane %v7520, 5
        %v7611 = vrot.slane %v7610, 4
        %v7612 = vrot.slane %v6516, 5
        %v7613 = vsel %vm2187, %v7611, %v7612
        %v7614 = vrot.slane %v7612, 4
        %v7615 = vrot.slane %v6544, 5
        %v7616 = vsel %vm2187, %v7614, %v7615
        %v7617 = vrot.slane %v7521, 5
        %v7618 = vrot.slane %v7617, 4
        %v7619 = vrot.slane %v6518, 5
        %v7620 = vsel %vm2187, %v7618, %v7619
        %v7621 = vrot.slane %v7619, 4
        %v7622 = vrot.slane %v6545, 5
        %v7623 = vsel %vm2187, %v7621, %v7622
        %v7624 = vrot.slane %v7522, 5
        %v7625 = vrot.slane %v7624, 4
        %v7626 = vrot.slane %v6520, 5
        %v7627 = vsel %vm2187, %v7625, %v7626
        %v7628 = vrot.slane %v7626, 4
        %v7629 = vrot.slane %v6546, 5
        %v7630 = vsel %vm2187, %v7628, %v7629
        %v7631 = vrot.slane %v7523, 5
        %v7632 = vrot.slane %v7631, 4
        %v7633 = vrot.slane %v6522, 5
        %v7634 = vsel %vm2187, %v7632, %v7633
        %v7635 = vrot.slane %v7633, 4
        %v7636 = vrot.slane %v6547, 5
        %v7637 = vsel %vm2187, %v7635, %v7636
        %v7638 = vrot.slane %v7524, 5
        %v7639 = vrot.slane %v7638, 4
        %v7640 = vrot.slane %v6524, 5
        %v7641 = vsel %vm2187, %v7639, %v7640
        %v7642 = vrot.slane %v7640, 4
        %v7643 = vrot.slane %v6548, 5
        %v7644 = vsel %vm2187, %v7642, %v7643
        %v7645 = vrot.slane %v7525, 5
        %v7646 = vrot.slane %v7645, 4
        %v7647 = vrot.slane %v6526, 5
        %v7648 = vsel %vm2187, %v7646, %v7647
        %v7649 = vrot.slane %v7647, 4
        %v7650 = vrot.slane %v6549, 5
        %v7651 = vsel %vm2187, %v7649, %v7650
        %v7652 = vrot.slane %v7526, 5
        %v7653 = vrot.slane %v7652, 4
        %v7654 = vrot.slane %v6528, 5
        %v7655 = vsel %vm2187, %v7653, %v7654
        %v7656 = vrot.slane %v7654, 4
        %v7657 = vrot.slane %v6550, 5
        %v7658 = vsel %vm2187, %v7656, %v7657
        %v7659 = vrot.slane %v7527, 5
        %v7660 = vrot.slane %v7659, 4
        %v7661 = vrot.slane %v6530, 5
        %v7662 = vsel %vm2187, %v7660, %v7661
        %v7663 = vrot.slane %v7661, 4
        %v7664 = vrot.slane %v6551, 5
        %v7665 = vsel %vm2187, %v7663, %v7664
        %v7666 = vrot.slane %v7528, 5
        %v7667 = vrot.slane %v7666, 4
        %v7668 = vrot.slane %v6532, 5
        %v7669 = vsel %vm2187, %v7667, %v7668
        %v7670 = vrot.slane %v7668, 4
        %v7671 = vrot.slane %v6552, 5
        %v7672 = vsel %vm2187, %v7670, %v7671
        %s7673 = scalar_lea.vmem [#allocation10], 32
        %v7674 = vld [vmem:[%s7673] sm:$0xf]
        %v7675 = vld [vmem:[%s7673 + $0x4] sm:$0xf]
        %v7676 = vld [vmem:[%s7673 + $0x8] sm:$0xf]
        %v7677 = vld [vmem:[%s7673 + $0xc] sm:$0xf]
        %v7678 = vunpack.c.l.b16 %v7564
        %v7679 = vunpack.c.l.b16 %v7567
        %v7680 = vunpack.c.l.b16 %v7571
        %v7681 = vunpack.c.l.b16 %v7574
        %v7682 = vunpack.c.l.b16 %v7578
        %v7683 = vunpack.c.l.b16 %v7581
        %v7684 = vunpack.c.l.b16 %v7585
        %v7685 = vunpack.c.l.b16 %v7588
        %v7686 = vunpack.c.l.b16 %v7592
        %v7687 = vunpack.c.l.b16 %v7595
        %v7688 = vunpack.c.l.b16 %v7599
        %v7689 = vunpack.c.l.b16 %v7602
        %v7690 = vunpack.c.l.b16 %v7606
        %v7691 = vunpack.c.l.b16 %v7609
        %v7692 = vunpack.c.l.b16 %v7613
        %v7693 = vunpack.c.l.b16 %v7616
        %v7694 = vunpack.c.l.b16 %v7620
        %v7695 = vunpack.c.l.b16 %v7623
        %v7696 = vunpack.c.l.b16 %v7627
        %v7697 = vunpack.c.l.b16 %v7630
        %v7698 = vunpack.c.l.b16 %v7634
        %v7699 = vunpack.c.l.b16 %v7637
        %v7700 = vunpack.c.l.b16 %v7641
        %v7701 = vunpack.c.l.b16 %v7644
        %v7702 = vunpack.c.l.b16 %v7648
        %v7703 = vunpack.c.l.b16 %v7651
        %v7704 = vunpack.c.l.b16 %v7655
        %v7705 = vunpack.c.l.b16 %v7658
        %v7706 = vunpack.c.l.b16 %v7662
        %v7707 = vunpack.c.l.b16 %v7665
        %v7708 = vunpack.c.l.b16 %v7669
        %v7709 = vunpack.c.l.b16 %v7672
        %v7710 = vpack.c.b16 %v7679, %v7678
        %v7711 = vpack.c.b16 %v7681, %v7680
        %v7712 = vpack.c.b16 %v7683, %v7682
        %v7713 = vpack.c.b16 %v7685, %v7684
        %v7714 = vpack.c.b16 %v7687, %v7686
        %v7715 = vpack.c.b16 %v7689, %v7688
        %v7716 = vpack.c.b16 %v7691, %v7690
        %v7717 = vpack.c.b16 %v7693, %v7692
        %v7718 = vpack.c.b16 %v7695, %v7694
        %v7719 = vpack.c.b16 %v7697, %v7696
        %v7720 = vpack.c.b16 %v7699, %v7698
        %v7721 = vpack.c.b16 %v7701, %v7700
        %v7722 = vpack.c.b16 %v7703, %v7702
        %v7723 = vpack.c.b16 %v7705, %v7704
        %v7724 = vpack.c.b16 %v7707, %v7706
        %v7725 = vpack.c.b16 %v7709, %v7708
        %v7730 = vunpack.c.l.b16 %v7674
        %v7731 = vunpack.c.l.b16 %v7675
        %v7732 = vunpack.c.l.b16 %v7676
        %v7733 = vunpack.c.l.b16 %v7677
        %v7734 = vpack.c.b16 %v7731, %v7730
        %v7735 = vpack.c.b16 %v7733, %v7732
        %v7739 = vsel %vm7002, %v7710, 0
        %v7742 = vsel %vm7002, %v7711, 0
        %v7745 = vsel %vm7002, %v7712, 0
        %v7748 = vsel %vm7002, %v7713, 0
        %v7751 = vsel %vm7002, %v7714, 0
        %v7754 = vsel %vm7002, %v7715, 0
        %v7757 = vsel %vm7002, %v7716, 0
        %v7760 = vsel %vm7002, %v7717, 0
        %v7763 = vsel %vm7002, %v7718, 0
        %v7766 = vsel %vm7002, %v7719, 0
        %v7769 = vsel %vm7002, %v7720, 0
        %v7772 = vsel %vm7002, %v7721, 0
        %v7775 = vsel %vm7002, %v7722, 0
        %v7778 = vsel %vm7002, %v7723, 0
        %v7781 = vsel %vm7002, %v7724, 0
        %v7784 = vsel %vm7002, %v7725, 0
        %7786 = vmatprep.subr.bf16.mxu0 0
        %7787 = vmatpush1.bf16.msra.mxu0 %v7734
        %7788 = vmatprep.subr.bf16.mxu0 0
        %7789 = vmatpush1.bf16.msra.mxu0 %v7735
        %7790 = vmatprep.subr.bf16.mxu0 0
        %7791 = vmatpush1.bf16.msra.mxu0 0
        %7792 = vmatprep.subr.bf16.mxu0 0
        %7793 = vmatpush1.bf16.msra.mxu0 0
        %7794 = vmatprep.subr.bf16.mxu0 0
        %7795 = vmatpush1.bf16.msra.mxu0 0
        %7796 = vmatprep.subr.bf16.mxu0 0
        %7797 = vmatpush1.bf16.msra.mxu0 0
        %7798 = vmatprep.subr.bf16.mxu0 0
        %7799 = vmatpush1.bf16.msra.mxu0 0
        %7800 = vmatprep.subr.bf16.mxu0 0
        %7801 = vmatpush1.bf16.msra.mxu0 0
        %7802 = vmatprep.subr.bf16.mxu0 0
        %7803 = vmatpush1.bf16.msra.mxu0 0
        %7804 = vmatprep.subr.bf16.mxu0 0
        %7805 = vmatpush1.bf16.msra.mxu0 0
        %7806 = vmatprep.subr.bf16.mxu0 0
        %7807 = vmatpush1.bf16.msra.mxu0 0
        %7808 = vmatprep.subr.bf16.mxu0 0
        %7809 = vmatpush1.bf16.msra.mxu0 0
        %7810 = vmatprep.subr.bf16.mxu0 0
        %7811 = vmatpush1.bf16.msra.mxu0 0
        %7812 = vmatprep.subr.bf16.mxu0 0
        %7813 = vmatpush1.bf16.msra.mxu0 0
        %7814 = vmatprep.subr.bf16.mxu0 0
        %7815 = vmatpush1.bf16.msra.mxu0 0
        %7816 = vmatprep.subr.bf16.mxu0 0
        %7817 = vmatpush1.bf16.msra.mxu0 0
        %7818 = vmatprep.mubr.bf16.mxu0 0
        %7819 = vmatmul.mubr.bf16.gmra.mrb[0].mxu0 %v7739
        %v7820 = vpop.f32.mrb[0].mxu0
        %v7821 = vadd.f32 0.0, %v7820
        %v7822 = vpop.f32.mrb[0].mxu0
        %v7823 = vpop.f32.mrb[0].mxu0
        %v7824 = vadd.f32 0.0, %v7823
        %v7825 = vpop.f32.mrb[0].mxu0
        %7826 = vmatprep.mubr.bf16.mxu0 0
        %7827 = vmatmul.mubr.bf16.gmra.mrb[0].mxu0 %v7742
        %v7828 = vpop.f32.mrb[0].mxu0
        %v7829 = vadd.f32 0.0, %v7828
        %v7830 = vpop.f32.mrb[0].mxu0
        %v7831 = vpop.f32.mrb[0].mxu0
        %v7832 = vadd.f32 0.0, %v7831
        %v7833 = vpop.f32.mrb[0].mxu0
        %7834 = vmatprep.mubr.bf16.mxu0 0
        %7835 = vmatmul.mubr.bf16.gmra.mrb[0].mxu0 %v7745
        %v7836 = vpop.f32.mrb[0].mxu0
        %v7837 = vadd.f32 0.0, %v7836
        %v7838 = vpop.f32.mrb[0].mxu0
        %v7839 = vpop.f32.mrb[0].mxu0
        %v7840 = vadd.f32 0.0, %v7839
        %v7841 = vpop.f32.mrb[0].mxu0
        %7842 = vmatprep.mubr.bf16.mxu0 0
        %7843 = vmatmul.mubr.bf16.gmra.mrb[0].mxu0 %v7748
        %v7844 = vpop.f32.mrb[0].mxu0
        %v7845 = vadd.f32 0.0, %v7844
        %v7846 = vpop.f32.mrb[0].mxu0
        %v7847 = vpop.f32.mrb[0].mxu0
        %v7848 = vadd.f32 0.0, %v7847
        %v7849 = vpop.f32.mrb[0].mxu0
        %7850 = vmatprep.mubr.bf16.mxu0 0
        %7851 = vmatmul.mubr.bf16.gmra.mrb[0].mxu0 %v7751
        %v7852 = vpop.f32.mrb[0].mxu0
        %v7853 = vadd.f32 0.0, %v7852
        %v7854 = vpop.f32.mrb[0].mxu0
        %v7855 = vpop.f32.mrb[0].mxu0
        %v7856 = vadd.f32 0.0, %v7855
        %v7857 = vpop.f32.mrb[0].mxu0
        %7858 = vmatprep.mubr.bf16.mxu0 0
        %7859 = vmatmul.mubr.bf16.gmra.mrb[0].mxu0 %v7754
        %v7860 = vpop.f32.mrb[0].mxu0
        %v7861 = vadd.f32 0.0, %v7860
        %v7862 = vpop.f32.mrb[0].mxu0
        %v7863 = vpop.f32.mrb[0].mxu0
        %v7864 = vadd.f32 0.0, %v7863
        %v7865 = vpop.f32.mrb[0].mxu0
        %7866 = vmatprep.mubr.bf16.mxu0 0
        %7867 = vmatmul.mubr.bf16.gmra.mrb[0].mxu0 %v7757
        %v7868 = vpop.f32.mrb[0].mxu0
        %v7869 = vadd.f32 0.0, %v7868
        %v7870 = vpop.f32.mrb[0].mxu0
        %v7871 = vpop.f32.mrb[0].mxu0
        %v7872 = vadd.f32 0.0, %v7871
        %v7873 = vpop.f32.mrb[0].mxu0
        %7874 = vmatprep.mubr.bf16.mxu0 0
        %7875 = vmatmul.mubr.bf16.gmra.mrb[0].mxu0 %v7760
        %v7876 = vpop.f32.mrb[0].mxu0
        %v7877 = vadd.f32 0.0, %v7876
        %v7878 = vpop.f32.mrb[0].mxu0
        %v7879 = vpop.f32.mrb[0].mxu0
        %v7880 = vadd.f32 0.0, %v7879
        %v7881 = vpop.f32.mrb[0].mxu0
        %7882 = vmatprep.mubr.bf16.mxu0 0
        %7883 = vmatmul.mubr.bf16.gmra.mrb[0].mxu0 %v7763
        %v7884 = vpop.f32.mrb[0].mxu0
        %v7885 = vadd.f32 0.0, %v7884
        %v7886 = vpop.f32.mrb[0].mxu0
        %v7887 = vpop.f32.mrb[0].mxu0
        %v7888 = vadd.f32 0.0, %v7887
        %v7889 = vpop.f32.mrb[0].mxu0
        %7890 = vmatprep.mubr.bf16.mxu0 0
        %7891 = vmatmul.mubr.bf16.gmra.mrb[0].mxu0 %v7766
        %v7892 = vpop.f32.mrb[0].mxu0
        %v7893 = vadd.f32 0.0, %v7892
        %v7894 = vpop.f32.mrb[0].mxu0
        %v7895 = vpop.f32.mrb[0].mxu0
        %v7896 = vadd.f32 0.0, %v7895
        %v7897 = vpop.f32.mrb[0].mxu0
        %7898 = vmatprep.mubr.bf16.mxu0 0
        %7899 = vmatmul.mubr.bf16.gmra.mrb[0].mxu0 %v7769
        %v7900 = vpop.f32.mrb[0].mxu0
        %v7901 = vadd.f32 0.0, %v7900
        %v7902 = vpop.f32.mrb[0].mxu0
        %v7903 = vpop.f32.mrb[0].mxu0
        %v7904 = vadd.f32 0.0, %v7903
        %v7905 = vpop.f32.mrb[0].mxu0
        %7906 = vmatprep.mubr.bf16.mxu0 0
        %7907 = vmatmul.mubr.bf16.gmra.mrb[0].mxu0 %v7772
        %v7908 = vpop.f32.mrb[0].mxu0
        %v7909 = vadd.f32 0.0, %v7908
        %v7910 = vpop.f32.mrb[0].mxu0
        %v7911 = vpop.f32.mrb[0].mxu0
        %v7912 = vadd.f32 0.0, %v7911
        %v7913 = vpop.f32.mrb[0].mxu0
        %7914 = vmatprep.mubr.bf16.mxu0 0
        %7915 = vmatmul.mubr.bf16.gmra.mrb[0].mxu0 %v7775
        %v7916 = vpop.f32.mrb[0].mxu0
        %v7917 = vadd.f32 0.0, %v7916
        %v7918 = vpop.f32.mrb[0].mxu0
        %v7919 = vpop.f32.mrb[0].mxu0
        %v7920 = vadd.f32 0.0, %v7919
        %v7921 = vpop.f32.mrb[0].mxu0
        %7922 = vmatprep.mubr.bf16.mxu0 0
        %7923 = vmatmul.mubr.bf16.gmra.mrb[0].mxu0 %v7778
        %v7924 = vpop.f32.mrb[0].mxu0
        %v7925 = vadd.f32 0.0, %v7924
        %v7926 = vpop.f32.mrb[0].mxu0
        %v7927 = vpop.f32.mrb[0].mxu0
        %v7928 = vadd.f32 0.0, %v7927
        %v7929 = vpop.f32.mrb[0].mxu0
        %7930 = vmatprep.mubr.bf16.mxu0 0
        %7931 = vmatmul.mubr.bf16.gmra.mrb[0].mxu0 %v7781
        %v7932 = vpop.f32.mrb[0].mxu0
        %v7933 = vadd.f32 0.0, %v7932
        %v7934 = vpop.f32.mrb[0].mxu0
        %v7935 = vpop.f32.mrb[0].mxu0
        %v7936 = vadd.f32 0.0, %v7935
        %v7937 = vpop.f32.mrb[0].mxu0
        %7938 = vmatprep.mubr.bf16.mxu0 0
        %7939 = vmatmul.mubr.bf16.gmra.mrb[0].mxu0 %v7784
        %v7940 = vpop.f32.mrb[0].mxu0
        %v7941 = vadd.f32 0.0, %v7940
        %v7942 = vpop.f32.mrb[0].mxu0
        %v7943 = vpop.f32.mrb[0].mxu0
        %v7944 = vadd.f32 0.0, %v7943
        %v7945 = vpop.f32.mrb[0].mxu0
        %7946 = vdwg.mxu0
        %v7947 = vadd.f32 %v7387, %v7821
        %v7948 = vadd.f32 %v7390, %v7824
        %v7949 = vadd.f32 %v7395, %v7829
        %v7950 = vadd.f32 %v7398, %v7832
        %v7951 = vadd.f32 %v7403, %v7837
        %v7952 = vadd.f32 %v7406, %v7840
        %v7953 = vadd.f32 %v7411, %v7845
        %v7954 = vadd.f32 %v7414, %v7848
        %v7955 = vadd.f32 %v7419, %v7853
        %v7956 = vadd.f32 %v7422, %v7856
        %v7957 = vadd.f32 %v7427, %v7861
        %v7958 = vadd.f32 %v7430, %v7864
        %v7959 = vadd.f32 %v7435, %v7869
        %v7960 = vadd.f32 %v7438, %v7872
        %v7961 = vadd.f32 %v7443, %v7877
        %v7962 = vadd.f32 %v7446, %v7880
        %v7963 = vadd.f32 %v7451, %v7885
        %v7964 = vadd.f32 %v7454, %v7888
        %v7965 = vadd.f32 %v7459, %v7893
        %v7966 = vadd.f32 %v7462, %v7896
        %v7967 = vadd.f32 %v7467, %v7901
        %v7968 = vadd.f32 %v7470, %v7904
        %v7969 = vadd.f32 %v7475, %v7909
        %v7970 = vadd.f32 %v7478, %v7912
        %v7971 = vadd.f32 %v7483, %v7917
        %v7972 = vadd.f32 %v7486, %v7920
        %v7973 = vadd.f32 %v7491, %v7925
        %v7974 = vadd.f32 %v7494, %v7928
        %v7975 = vadd.f32 %v7499, %v7933
        %v7976 = vadd.f32 %v7502, %v7936
        %v7977 = vadd.f32 %v7507, %v7941
        %v7978 = vadd.f32 %v7510, %v7944
        %v7979 = vld [vmem:[%s6386] sm:$0xf]
        %v7980 = vld [vmem:[%s6386 + $0x4] sm:$0xf]
        %v7981 = vld [vmem:[%s6386 + $0xc] sm:$0xf]
        %v7982 = vld [vmem:[%s6386 + $0x10] sm:$0xf]
        %v7983 = vld [vmem:[%s6386 + $0x18] sm:$0xf]
        %v7984 = vld [vmem:[%s6386 + $0x1c] sm:$0xf]
        %v7985 = vld [vmem:[%s6386 + $0x24] sm:$0xf]
        %v7986 = vld [vmem:[%s6386 + $0x28] sm:$0xf]
        %v7987 = vld [vmem:[%s6386 + $0x30] sm:$0xf]
        %v7988 = vld [vmem:[%s6386 + $0x34] sm:$0xf]
        %v7989 = vld [vmem:[%s6386 + $0x3c] sm:$0xf]
        %v7990 = vld [vmem:[%s6386 + $0x40] sm:$0xf]
        %v7991 = vld [vmem:[%s6386 + $0x48] sm:$0xf]
        %v7992 = vld [vmem:[%s6386 + $0x4c] sm:$0xf]
        %v7993 = vld [vmem:[%s6386 + $0x54] sm:$0xf]
        %v7994 = vld [vmem:[%s6386 + $0x58] sm:$0xf]
        %v7995 = vld [vmem:[%s6386 + $0x60] sm:$0xf]
        %v7996 = vld [vmem:[%s6386 + $0x64] sm:$0xf]
        %v7997 = vld [vmem:[%s6386 + $0x6c] sm:$0xf]
        %v7998 = vld [vmem:[%s6386 + $0x70] sm:$0xf]
        %v7999 = vld [vmem:[%s6386 + $0x78] sm:$0xf]
        %v8000 = vld [vmem:[%s6386 + $0x7c] sm:$0xf]
        %v8001 = vld [vmem:[%s6386 + $0x84] sm:$0xf]
        %v8002 = vld [vmem:[%s6386 + $0x88] sm:$0xf]
        %v8003 = vld [vmem:[%s6386 + $0x90] sm:$0xf]
        %v8004 = vld [vmem:[%s6386 + $0x94] sm:$0xf]
        %v8005 = vld [vmem:[%s6386 + $0x9c] sm:$0xf]
        %v8006 = vld [vmem:[%s6386 + $0xa0] sm:$0xf]
        %v8007 = vld [vmem:[%s6386 + $0xa8] sm:$0xf]
        %v8008 = vld [vmem:[%s6386 + $0xac] sm:$0xf]
        %v8009 = vld [vmem:[%s6386 + $0xb4] sm:$0xf]
        %v8010 = vld [vmem:[%s6386 + $0xb8] sm:$0xf]
        %s8011 = scalar_lea.vmem [#allocation10], 48
        %v8012 = vld [vmem:[%s8011] sm:$0xf]
        %v8013 = vld [vmem:[%s8011 + $0x4] sm:$0xf]
        %v8014 = vld [vmem:[%s8011 + $0x8] sm:$0xf]
        %v8015 = vld [vmem:[%s8011 + $0xc] sm:$0xf]
        %v8048 = vunpack.c.l.b16 %v7979
        %v8049 = vunpack.c.l.b16 %v7980
        %v8050 = vunpack.c.l.b16 %v7981
        %v8051 = vunpack.c.l.b16 %v7982
        %v8052 = vunpack.c.l.b16 %v7983
        %v8053 = vunpack.c.l.b16 %v7984
        %v8054 = vunpack.c.l.b16 %v7985
        %v8055 = vunpack.c.l.b16 %v7986
        %v8056 = vunpack.c.l.b16 %v7987
        %v8057 = vunpack.c.l.b16 %v7988
        %v8058 = vunpack.c.l.b16 %v7989
        %v8059 = vunpack.c.l.b16 %v7990
        %v8060 = vunpack.c.l.b16 %v7991
        %v8061 = vunpack.c.l.b16 %v7992
        %v8062 = vunpack.c.l.b16 %v7993
        %v8063 = vunpack.c.l.b16 %v7994
        %v8064 = vunpack.c.l.b16 %v7995
        %v8065 = vunpack.c.l.b16 %v7996
        %v8066 = vunpack.c.l.b16 %v7997
        %v8067 = vunpack.c.l.b16 %v7998
        %v8068 = vunpack.c.l.b16 %v7999
        %v8069 = vunpack.c.l.b16 %v8000
        %v8070 = vunpack.c.l.b16 %v8001
        %v8071 = vunpack.c.l.b16 %v8002
        %v8072 = vunpack.c.l.b16 %v8003
        %v8073 = vunpack.c.l.b16 %v8004
        %v8074 = vunpack.c.l.b16 %v8005
        %v8075 = vunpack.c.l.b16 %v8006
        %v8076 = vunpack.c.l.b16 %v8007
        %v8077 = vunpack.c.l.b16 %v8008
        %v8078 = vunpack.c.l.b16 %v8009
        %v8079 = vunpack.c.l.b16 %v8010
        %v8080 = vpack.c.b16 %v8049, %v8048
        %v8081 = vpack.c.b16 %v8051, %v8050
        %v8082 = vpack.c.b16 %v8053, %v8052
        %v8083 = vpack.c.b16 %v8055, %v8054
        %v8084 = vpack.c.b16 %v8057, %v8056
        %v8085 = vpack.c.b16 %v8059, %v8058
        %v8086 = vpack.c.b16 %v8061, %v8060
        %v8087 = vpack.c.b16 %v8063, %v8062
        %v8088 = vpack.c.b16 %v8065, %v8064
        %v8089 = vpack.c.b16 %v8067, %v8066
        %v8090 = vpack.c.b16 %v8069, %v8068
        %v8091 = vpack.c.b16 %v8071, %v8070
        %v8092 = vpack.c.b16 %v8073, %v8072
        %v8093 = vpack.c.b16 %v8075, %v8074
        %v8094 = vpack.c.b16 %v8077, %v8076
        %v8095 = vpack.c.b16 %v8079, %v8078
        %v8100 = vunpack.c.l.b16 %v8012
        %v8101 = vunpack.c.l.b16 %v8013
        %v8102 = vunpack.c.l.b16 %v8014
        %v8103 = vunpack.c.l.b16 %v8015
        %v8104 = vpack.c.b16 %v8101, %v8100
        %v8105 = vpack.c.b16 %v8103, %v8102
        %v8109 = vsel %vm7002, %v8080, 0
        %v8112 = vsel %vm7002, %v8081, 0
        %v8115 = vsel %vm7002, %v8082, 0
        %v8118 = vsel %vm7002, %v8083, 0
        %v8121 = vsel %vm7002, %v8084, 0
        %v8124 = vsel %vm7002, %v8085, 0
        %v8127 = vsel %vm7002, %v8086, 0
        %v8130 = vsel %vm7002, %v8087, 0
        %v8133 = vsel %vm7002, %v8088, 0
        %v8136 = vsel %vm7002, %v8089, 0
        %v8139 = vsel %vm7002, %v8090, 0
        %v8142 = vsel %vm7002, %v8091, 0
        %v8145 = vsel %vm7002, %v8092, 0
        %v8148 = vsel %vm7002, %v8093, 0
        %v8151 = vsel %vm7002, %v8094, 0
        %v8154 = vsel %vm7002, %v8095, 0
        %8156 = vmatprep.subr.bf16.mxu0 0
        %8157 = vmatpush1.bf16.msra.mxu0 %v8104
        %8158 = vmatprep.subr.bf16.mxu0 0
        %8159 = vmatpush1.bf16.msra.mxu0 %v8105
        %8160 = vmatprep.subr.bf16.mxu0 0
        %8161 = vmatpush1.bf16.msra.mxu0 0
        %8162 = vmatprep.subr.bf16.mxu0 0
        %8163 = vmatpush1.bf16.msra.mxu0 0
        %8164 = vmatprep.subr.bf16.mxu0 0
        %8165 = vmatpush1.bf16.msra.mxu0 0
        %8166 = vmatprep.subr.bf16.mxu0 0
        %8167 = vmatpush1.bf16.msra.mxu0 0
        %8168 = vmatprep.subr.bf16.mxu0 0
        %8169 = vmatpush1.bf16.msra.mxu0 0
        %8170 = vmatprep.subr.bf16.mxu0 0
        %8171 = vmatpush1.bf16.msra.mxu0 0
        %8172 = vmatprep.subr.bf16.mxu0 0
        %8173 = vmatpush1.bf16.msra.mxu0 0
        %8174 = vmatprep.subr.bf16.mxu0 0
        %8175 = vmatpush1.bf16.msra.mxu0 0
        %8176 = vmatprep.subr.bf16.mxu0 0
        %8177 = vmatpush1.bf16.msra.mxu0 0
        %8178 = vmatprep.subr.bf16.mxu0 0
        %8179 = vmatpush1.bf16.msra.mxu0 0
        %8180 = vmatprep.subr.bf16.mxu0 0
        %8181 = vmatpush1.bf16.msra.mxu0 0
        %8182 = vmatprep.subr.bf16.mxu0 0
        %8183 = vmatpush1.bf16.msra.mxu0 0
        %8184 = vmatprep.subr.bf16.mxu0 0
        %8185 = vmatpush1.bf16.msra.mxu0 0
        %8186 = vmatprep.subr.bf16.mxu0 0
        %8187 = vmatpush1.bf16.msra.mxu0 0
        %8188 = vmatprep.mubr.bf16.mxu0 0
        %8189 = vmatmul.mubr.bf16.gmra.mrb[0].mxu0 %v8109
        %v8190 = vpop.f32.mrb[0].mxu0
        %v8191 = vadd.f32 0.0, %v8190
        %v8192 = vpop.f32.mrb[0].mxu0
        %v8193 = vpop.f32.mrb[0].mxu0
        %v8194 = vadd.f32 0.0, %v8193
        %v8195 = vpop.f32.mrb[0].mxu0
        %8196 = vmatprep.mubr.bf16.mxu0 0
        %8197 = vmatmul.mubr.bf16.gmra.mrb[0].mxu0 %v8112
        %v8198 = vpop.f32.mrb[0].mxu0
        %v8199 = vadd.f32 0.0, %v8198
        %v8200 = vpop.f32.mrb[0].mxu0
        %v8201 = vpop.f32.mrb[0].mxu0
        %v8202 = vadd.f32 0.0, %v8201
        %v8203 = vpop.f32.mrb[0].mxu0
        %8204 = vmatprep.mubr.bf16.mxu0 0
        %8205 = vmatmul.mubr.bf16.gmra.mrb[0].mxu0 %v8115
        %v8206 = vpop.f32.mrb[0].mxu0
        %v8207 = vadd.f32 0.0, %v8206
        %v8208 = vpop.f32.mrb[0].mxu0
        %v8209 = vpop.f32.mrb[0].mxu0
        %v8210 = vadd.f32 0.0, %v8209
        %v8211 = vpop.f32.mrb[0].mxu0
        %8212 = vmatprep.mubr.bf16.mxu0 0
        %8213 = vmatmul.mubr.bf16.gmra.mrb[0].mxu0 %v8118
        %v8214 = vpop.f32.mrb[0].mxu0
        %v8215 = vadd.f32 0.0, %v8214
        %v8216 = vpop.f32.mrb[0].mxu0
        %v8217 = vpop.f32.mrb[0].mxu0
        %v8218 = vadd.f32 0.0, %v8217
        %v8219 = vpop.f32.mrb[0].mxu0
        %8220 = vmatprep.mubr.bf16.mxu0 0
        %8221 = vmatmul.mubr.bf16.gmra.mrb[0].mxu0 %v8121
        %v8222 = vpop.f32.mrb[0].mxu0
        %v8223 = vadd.f32 0.0, %v8222
        %v8224 = vpop.f32.mrb[0].mxu0
        %v8225 = vpop.f32.mrb[0].mxu0
        %v8226 = vadd.f32 0.0, %v8225
        %v8227 = vpop.f32.mrb[0].mxu0
        %8228 = vmatprep.mubr.bf16.mxu0 0
        %8229 = vmatmul.mubr.bf16.gmra.mrb[0].mxu0 %v8124
        %v8230 = vpop.f32.mrb[0].mxu0
        %v8231 = vadd.f32 0.0, %v8230
        %v8232 = vpop.f32.mrb[0].mxu0
        %v8233 = vpop.f32.mrb[0].mxu0
        %v8234 = vadd.f32 0.0, %v8233
        %v8235 = vpop.f32.mrb[0].mxu0
        %8236 = vmatprep.mubr.bf16.mxu0 0
        %8237 = vmatmul.mubr.bf16.gmra.mrb[0].mxu0 %v8127
        %v8238 = vpop.f32.mrb[0].mxu0
        %v8239 = vadd.f32 0.0, %v8238
        %v8240 = vpop.f32.mrb[0].mxu0
        %v8241 = vpop.f32.mrb[0].mxu0
        %v8242 = vadd.f32 0.0, %v8241
        %v8243 = vpop.f32.mrb[0].mxu0
        %8244 = vmatprep.mubr.bf16.mxu0 0
        %8245 = vmatmul.mubr.bf16.gmra.mrb[0].mxu0 %v8130
        %v8246 = vpop.f32.mrb[0].mxu0
        %v8247 = vadd.f32 0.0, %v8246
        %v8248 = vpop.f32.mrb[0].mxu0
        %v8249 = vpop.f32.mrb[0].mxu0
        %v8250 = vadd.f32 0.0, %v8249
        %v8251 = vpop.f32.mrb[0].mxu0
        %8252 = vmatprep.mubr.bf16.mxu0 0
        %8253 = vmatmul.mubr.bf16.gmra.mrb[0].mxu0 %v8133
        %v8254 = vpop.f32.mrb[0].mxu0
        %v8255 = vadd.f32 0.0, %v8254
        %v8256 = vpop.f32.mrb[0].mxu0
        %v8257 = vpop.f32.mrb[0].mxu0
        %v8258 = vadd.f32 0.0, %v8257
        %v8259 = vpop.f32.mrb[0].mxu0
        %8260 = vmatprep.mubr.bf16.mxu0 0
        %8261 = vmatmul.mubr.bf16.gmra.mrb[0].mxu0 %v8136
        %v8262 = vpop.f32.mrb[0].mxu0
        %v8263 = vadd.f32 0.0, %v8262
        %v8264 = vpop.f32.mrb[0].mxu0
        %v8265 = vpop.f32.mrb[0].mxu0
        %v8266 = vadd.f32 0.0, %v8265
        %v8267 = vpop.f32.mrb[0].mxu0
        %8268 = vmatprep.mubr.bf16.mxu0 0
        %8269 = vmatmul.mubr.bf16.gmra.mrb[0].mxu0 %v8139
        %v8270 = vpop.f32.mrb[0].mxu0
        %v8271 = vadd.f32 0.0, %v8270
        %v8272 = vpop.f32.mrb[0].mxu0
        %v8273 = vpop.f32.mrb[0].mxu0
        %v8274 = vadd.f32 0.0, %v8273
        %v8275 = vpop.f32.mrb[0].mxu0
        %8276 = vmatprep.mubr.bf16.mxu0 0
        %8277 = vmatmul.mubr.bf16.gmra.mrb[0].mxu0 %v8142
        %v8278 = vpop.f32.mrb[0].mxu0
        %v8279 = vadd.f32 0.0, %v8278
        %v8280 = vpop.f32.mrb[0].mxu0
        %v8281 = vpop.f32.mrb[0].mxu0
        %v8282 = vadd.f32 0.0, %v8281
        %v8283 = vpop.f32.mrb[0].mxu0
        %8284 = vmatprep.mubr.bf16.mxu0 0
        %8285 = vmatmul.mubr.bf16.gmra.mrb[0].mxu0 %v8145
        %v8286 = vpop.f32.mrb[0].mxu0
        %v8287 = vadd.f32 0.0, %v8286
        %v8288 = vpop.f32.mrb[0].mxu0
        %v8289 = vpop.f32.mrb[0].mxu0
        %v8290 = vadd.f32 0.0, %v8289
        %v8291 = vpop.f32.mrb[0].mxu0
        %8292 = vmatprep.mubr.bf16.mxu0 0
        %8293 = vmatmul.mubr.bf16.gmra.mrb[0].mxu0 %v8148
        %v8294 = vpop.f32.mrb[0].mxu0
        %v8295 = vadd.f32 0.0, %v8294
        %v8296 = vpop.f32.mrb[0].mxu0
        %v8297 = vpop.f32.mrb[0].mxu0
        %v8298 = vadd.f32 0.0, %v8297
        %v8299 = vpop.f32.mrb[0].mxu0
        %8300 = vmatprep.mubr.bf16.mxu0 0
        %8301 = vmatmul.mubr.bf16.gmra.mrb[0].mxu0 %v8151
        %v8302 = vpop.f32.mrb[0].mxu0
        %v8303 = vadd.f32 0.0, %v8302
        %v8304 = vpop.f32.mrb[0].mxu0
        %v8305 = vpop.f32.mrb[0].mxu0
        %v8306 = vadd.f32 0.0, %v8305
        %v8307 = vpop.f32.mrb[0].mxu0
        %8308 = vmatprep.mubr.bf16.mxu0 0
        %8309 = vmatmul.mubr.bf16.gmra.mrb[0].mxu0 %v8154
        %v8310 = vpop.f32.mrb[0].mxu0
        %v8311 = vadd.f32 0.0, %v8310
        %v8312 = vpop.f32.mrb[0].mxu0
        %v8313 = vpop.f32.mrb[0].mxu0
        %v8314 = vadd.f32 0.0, %v8313
        %v8315 = vpop.f32.mrb[0].mxu0
        %8316 = vdwg.mxu0
        %v8317 = vadd.f32 %v7947, %v8191
        %v8318 = vadd.f32 %v7948, %v8194
        %v8319 = vadd.f32 %v7949, %v8199
        %v8320 = vadd.f32 %v7950, %v8202
        %v8321 = vadd.f32 %v7951, %v8207
        %v8322 = vadd.f32 %v7952, %v8210
        %v8323 = vadd.f32 %v7953, %v8215
        %v8324 = vadd.f32 %v7954, %v8218
        %v8325 = vadd.f32 %v7955, %v8223
        %v8326 = vadd.f32 %v7956, %v8226
        %v8327 = vadd.f32 %v7957, %v8231
        %v8328 = vadd.f32 %v7958, %v8234
        %v8329 = vadd.f32 %v7959, %v8239
        %v8330 = vadd.f32 %v7960, %v8242
        %v8331 = vadd.f32 %v7961, %v8247
        %v8332 = vadd.f32 %v7962, %v8250
        %v8333 = vadd.f32 %v7963, %v8255
        %v8334 = vadd.f32 %v7964, %v8258
        %v8335 = vadd.f32 %v7965, %v8263
        %v8336 = vadd.f32 %v7966, %v8266
        %v8337 = vadd.f32 %v7967, %v8271
        %v8338 = vadd.f32 %v7968, %v8274
        %v8339 = vadd.f32 %v7969, %v8279
        %v8340 = vadd.f32 %v7970, %v8282
        %v8341 = vadd.f32 %v7971, %v8287
        %v8342 = vadd.f32 %v7972, %v8290
        %v8343 = vadd.f32 %v7973, %v8295
        %v8344 = vadd.f32 %v7974, %v8298
        %v8345 = vadd.f32 %v7975, %v8303
        %v8346 = vadd.f32 %v7976, %v8306
        %v8347 = vadd.f32 %v7977, %v8311
        %v8348 = vadd.f32 %v7978, %v8314
        %v8349 = vld [vmem:[%s6386] sm:$0xf]
        %v8350 = vld [vmem:[%s6386 + $0x4] sm:$0xf]
        %v8351 = vld [vmem:[%s6386 + $0x8] sm:$0x1]
        %v8352 = vld [vmem:[%s6386 + $0xc] sm:$0xf]
        %v8353 = vld [vmem:[%s6386 + $0x10] sm:$0xf]
        %v8354 = vld [vmem:[%s6386 + $0x14] sm:$0x1]
        %v8355 = vld [vmem:[%s6386 + $0x18] sm:$0xf]
        %v8356 = vld [vmem:[%s6386 + $0x1c] sm:$0xf]
        %v8357 = vld [vmem:[%s6386 + $0x20] sm:$0x1]
        %v8358 = vld [vmem:[%s6386 + $0x24] sm:$0xf]
        %v8359 = vld [vmem:[%s6386 + $0x28] sm:$0xf]
        %v8360 = vld [vmem:[%s6386 + $0x2c] sm:$0x1]
        %v8361 = vld [vmem:[%s6386 + $0x30] sm:$0xf]
        %v8362 = vld [vmem:[%s6386 + $0x34] sm:$0xf]
        %v8363 = vld [vmem:[%s6386 + $0x38] sm:$0x1]
        %v8364 = vld [vmem:[%s6386 + $0x3c] sm:$0xf]
        %v8365 = vld [vmem:[%s6386 + $0x40] sm:$0xf]
        %v8366 = vld [vmem:[%s6386 + $0x44] sm:$0x1]
        %v8367 = vld [vmem:[%s6386 + $0x48] sm:$0xf]
        %v8368 = vld [vmem:[%s6386 + $0x4c] sm:$0xf]
        %v8369 = vld [vmem:[%s6386 + $0x50] sm:$0x1]
        %v8370 = vld [vmem:[%s6386 + $0x54] sm:$0xf]
        %v8371 = vld [vmem:[%s6386 + $0x58] sm:$0xf]
        %v8372 = vld [vmem:[%s6386 + $0x5c] sm:$0x1]
        %v8373 = vld [vmem:[%s6386 + $0x60] sm:$0xf]
        %v8374 = vld [vmem:[%s6386 + $0x64] sm:$0xf]
        %v8375 = vld [vmem:[%s6386 + $0x68] sm:$0x1]
        %v8376 = vld [vmem:[%s6386 + $0x6c] sm:$0xf]
        %v8377 = vld [vmem:[%s6386 + $0x70] sm:$0xf]
        %v8378 = vld [vmem:[%s6386 + $0x74] sm:$0x1]
        %v8379 = vld [vmem:[%s6386 + $0x78] sm:$0xf]
        %v8380 = vld [vmem:[%s6386 + $0x7c] sm:$0xf]
        %v8381 = vld [vmem:[%s6386 + $0x80] sm:$0x1]
        %v8382 = vld [vmem:[%s6386 + $0x84] sm:$0xf]
        %v8383 = vld [vmem:[%s6386 + $0x88] sm:$0xf]
        %v8384 = vld [vmem:[%s6386 + $0x8c] sm:$0x1]
        %v8385 = vld [vmem:[%s6386 + $0x90] sm:$0xf]
        %v8386 = vld [vmem:[%s6386 + $0x94] sm:$0xf]
        %v8387 = vld [vmem:[%s6386 + $0x98] sm:$0x1]
        %v8388 = vld [vmem:[%s6386 + $0x9c] sm:$0xf]
        %v8389 = vld [vmem:[%s6386 + $0xa0] sm:$0xf]
        %v8390 = vld [vmem:[%s6386 + $0xa4] sm:$0x1]
        %v8391 = vld [vmem:[%s6386 + $0xa8] sm:$0xf]
        %v8392 = vld [vmem:[%s6386 + $0xac] sm:$0xf]
        %v8393 = vld [vmem:[%s6386 + $0xb0] sm:$0x1]
        %v8394 = vld [vmem:[%s6386 + $0xb4] sm:$0xf]
        %v8395 = vld [vmem:[%s6386 + $0xb8] sm:$0xf]
        %v8396 = vld [vmem:[%s6386 + $0xbc] sm:$0x1]
        %v8398 = vshrl.u32 %v8349, 16
        %v8400 = vrot.slane %v8398, 4
        %v8401 = vshll.u32 %v8349, 16
        %v8403 = vrot.slane %v8401, 5
        %v8404 = vor.u32 %v8400, %v8403
        %v8405 = vrot.slane %v8404, 4
        %v8407 = vshll.u32 %v8350, 16
        %v8409 = vrot.slane %v8407, 5
        %v8410 = vsel %vm1148, %v8405, %v8409
        %v8411 = vshrl.u32 %v8350, 16
        %v8413 = vrot.slane %v8411, 4
        %v8414 = vor.u32 %v8413, %v8409
        %v8415 = vrot.slane %v8414, 4
        %v8417 = vshll.u32 %v8351, 16
        %v8419 = vrot.slane %v8417, 5
        %v8420 = vsel %vm1148, %v8415, %v8419
        %v8422 = vshrl.u32 %v8352, 16
        %v8424 = vrot.slane %v8422, 4
        %v8425 = vshll.u32 %v8352, 16
        %v8427 = vrot.slane %v8425, 5
        %v8428 = vor.u32 %v8424, %v8427
        %v8429 = vrot.slane %v8428, 4
        %v8431 = vshll.u32 %v8353, 16
        %v8433 = vrot.slane %v8431, 5
        %v8434 = vsel %vm1148, %v8429, %v8433
        %v8435 = vshrl.u32 %v8353, 16
        %v8437 = vrot.slane %v8435, 4
        %v8438 = vor.u32 %v8437, %v8433
        %v8439 = vrot.slane %v8438, 4
        %v8441 = vshll.u32 %v8354, 16
        %v8443 = vrot.slane %v8441, 5
        %v8444 = vsel %vm1148, %v8439, %v8443
        %v8446 = vshrl.u32 %v8355, 16
        %v8448 = vrot.slane %v8446, 4
        %v8449 = vshll.u32 %v8355, 16
        %v8451 = vrot.slane %v8449, 5
        %v8452 = vor.u32 %v8448, %v8451
        %v8453 = vrot.slane %v8452, 4
        %v8455 = vshll.u32 %v8356, 16
        %v8457 = vrot.slane %v8455, 5
        %v8458 = vsel %vm1148, %v8453, %v8457
        %v8459 = vshrl.u32 %v8356, 16
        %v8461 = vrot.slane %v8459, 4
        %v8462 = vor.u32 %v8461, %v8457
        %v8463 = vrot.slane %v8462, 4
        %v8465 = vshll.u32 %v8357, 16
        %v8467 = vrot.slane %v8465, 5
        %v8468 = vsel %vm1148, %v8463, %v8467
        %v8470 = vshrl.u32 %v8358, 16
        %v8472 = vrot.slane %v8470, 4
        %v8473 = vshll.u32 %v8358, 16
        %v8475 = vrot.slane %v8473, 5
        %v8476 = vor.u32 %v8472, %v8475
        %v8477 = vrot.slane %v8476, 4
        %v8479 = vshll.u32 %v8359, 16
        %v8481 = vrot.slane %v8479, 5
        %v8482 = vsel %vm1148, %v8477, %v8481
        %v8483 = vshrl.u32 %v8359, 16
        %v8485 = vrot.slane %v8483, 4
        %v8486 = vor.u32 %v8485, %v8481
        %v8487 = vrot.slane %v8486, 4
        %v8489 = vshll.u32 %v8360, 16
        %v8491 = vrot.slane %v8489, 5
        %v8492 = vsel %vm1148, %v8487, %v8491
        %v8494 = vshrl.u32 %v8361, 16
        %v8496 = vrot.slane %v8494, 4
        %v8497 = vshll.u32 %v8361, 16
        %v8499 = vrot.slane %v8497, 5
        %v8500 = vor.u32 %v8496, %v8499
        %v8501 = vrot.slane %v8500, 4
        %v8503 = vshll.u32 %v8362, 16
        %v8505 = vrot.slane %v8503, 5
        %v8506 = vsel %vm1148, %v8501, %v8505
        %v8507 = vshrl.u32 %v8362, 16
        %v8509 = vrot.slane %v8507, 4
        %v8510 = vor.u32 %v8509, %v8505
        %v8511 = vrot.slane %v8510, 4
        %v8513 = vshll.u32 %v8363, 16
        %v8515 = vrot.slane %v8513, 5
        %v8516 = vsel %vm1148, %v8511, %v8515
        %v8518 = vshrl.u32 %v8364, 16
        %v8520 = vrot.slane %v8518, 4
        %v8521 = vshll.u32 %v8364, 16
        %v8523 = vrot.slane %v8521, 5
        %v8524 = vor.u32 %v8520, %v8523
        %v8525 = vrot.slane %v8524, 4
        %v8527 = vshll.u32 %v8365, 16
        %v8529 = vrot.slane %v8527, 5
        %v8530 = vsel %vm1148, %v8525, %v8529
        %v8531 = vshrl.u32 %v8365, 16
        %v8533 = vrot.slane %v8531, 4
        %v8534 = vor.u32 %v8533, %v8529
        %v8535 = vrot.slane %v8534, 4
        %v8537 = vshll.u32 %v8366, 16
        %v8539 = vrot.slane %v8537, 5
        %v8540 = vsel %vm1148, %v8535, %v8539
        %v8542 = vshrl.u32 %v8367, 16
        %v8544 = vrot.slane %v8542, 4
        %v8545 = vshll.u32 %v8367, 16
        %v8547 = vrot.slane %v8545, 5
        %v8548 = vor.u32 %v8544, %v8547
        %v8549 = vrot.slane %v8548, 4
        %v8551 = vshll.u32 %v8368, 16
        %v8553 = vrot.slane %v8551, 5
        %v8554 = vsel %vm1148, %v8549, %v8553
        %v8555 = vshrl.u32 %v8368, 16
        %v8557 = vrot.slane %v8555, 4
        %v8558 = vor.u32 %v8557, %v8553
        %v8559 = vrot.slane %v8558, 4
        %v8561 = vshll.u32 %v8369, 16
        %v8563 = vrot.slane %v8561, 5
        %v8564 = vsel %vm1148, %v8559, %v8563
        %v8566 = vshrl.u32 %v8370, 16
        %v8568 = vrot.slane %v8566, 4
        %v8569 = vshll.u32 %v8370, 16
        %v8571 = vrot.slane %v8569, 5
        %v8572 = vor.u32 %v8568, %v8571
        %v8573 = vrot.slane %v8572, 4
        %v8575 = vshll.u32 %v8371, 16
        %v8577 = vrot.slane %v8575, 5
        %v8578 = vsel %vm1148, %v8573, %v8577
        %v8579 = vshrl.u32 %v8371, 16
        %v8581 = vrot.slane %v8579, 4
        %v8582 = vor.u32 %v8581, %v8577
        %v8583 = vrot.slane %v8582, 4
        %v8585 = vshll.u32 %v8372, 16
        %v8587 = vrot.slane %v8585, 5
        %v8588 = vsel %vm1148, %v8583, %v8587
        %v8590 = vshrl.u32 %v8373, 16
        %v8592 = vrot.slane %v8590, 4
        %v8593 = vshll.u32 %v8373, 16
        %v8595 = vrot.slane %v8593, 5
        %v8596 = vor.u32 %v8592, %v8595
        %v8597 = vrot.slane %v8596, 4
        %v8599 = vshll.u32 %v8374, 16
        %v8601 = vrot.slane %v8599, 5
        %v8602 = vsel %vm1148, %v8597, %v8601
        %v8603 = vshrl.u32 %v8374, 16
        %v8605 = vrot.slane %v8603, 4
        %v8606 = vor.u32 %v8605, %v8601
        %v8607 = vrot.slane %v8606, 4
        %v8609 = vshll.u32 %v8375, 16
        %v8611 = vrot.slane %v8609, 5
        %v8612 = vsel %vm1148, %v8607, %v8611
        %v8614 = vshrl.u32 %v8376, 16
        %v8616 = vrot.slane %v8614, 4
        %v8617 = vshll.u32 %v8376, 16
        %v8619 = vrot.slane %v8617, 5
        %v8620 = vor.u32 %v8616, %v8619
        %v8621 = vrot.slane %v8620, 4
        %v8623 = vshll.u32 %v8377, 16
        %v8625 = vrot.slane %v8623, 5
        %v8626 = vsel %vm1148, %v8621, %v8625
        %v8627 = vshrl.u32 %v8377, 16
        %v8629 = vrot.slane %v8627, 4
        %v8630 = vor.u32 %v8629, %v8625
        %v8631 = vrot.slane %v8630, 4
        %v8633 = vshll.u32 %v8378, 16
        %v8635 = vrot.slane %v8633, 5
        %v8636 = vsel %vm1148, %v8631, %v8635
        %v8638 = vshrl.u32 %v8379, 16
        %v8640 = vrot.slane %v8638, 4
        %v8641 = vshll.u32 %v8379, 16
        %v8643 = vrot.slane %v8641, 5
        %v8644 = vor.u32 %v8640, %v8643
        %v8645 = vrot.slane %v8644, 4
        %v8647 = vshll.u32 %v8380, 16
        %v8649 = vrot.slane %v8647, 5
        %v8650 = vsel %vm1148, %v8645, %v8649
        %v8651 = vshrl.u32 %v8380, 16
        %v8653 = vrot.slane %v8651, 4
        %v8654 = vor.u32 %v8653, %v8649
        %v8655 = vrot.slane %v8654, 4
        %v8657 = vshll.u32 %v8381, 16
        %v8659 = vrot.slane %v8657, 5
        %v8660 = vsel %vm1148, %v8655, %v8659
        %v8662 = vshrl.u32 %v8382, 16
        %v8664 = vrot.slane %v8662, 4
        %v8665 = vshll.u32 %v8382, 16
        %v8667 = vrot.slane %v8665, 5
        %v8668 = vor.u32 %v8664, %v8667
        %v8669 = vrot.slane %v8668, 4
        %v8671 = vshll.u32 %v8383, 16
        %v8673 = vrot.slane %v8671, 5
        %v8674 = vsel %vm1148, %v8669, %v8673
        %v8675 = vshrl.u32 %v8383, 16
        %v8677 = vrot.slane %v8675, 4
        %v8678 = vor.u32 %v8677, %v8673
        %v8679 = vrot.slane %v8678, 4
        %v8681 = vshll.u32 %v8384, 16
        %v8683 = vrot.slane %v8681, 5
        %v8684 = vsel %vm1148, %v8679, %v8683
        %v8686 = vshrl.u32 %v8385, 16
        %v8688 = vrot.slane %v8686, 4
        %v8689 = vshll.u32 %v8385, 16
        %v8691 = vrot.slane %v8689, 5
        %v8692 = vor.u32 %v8688, %v8691
        %v8693 = vrot.slane %v8692, 4
        %v8695 = vshll.u32 %v8386, 16
        %v8697 = vrot.slane %v8695, 5
        %v8698 = vsel %vm1148, %v8693, %v8697
        %v8699 = vshrl.u32 %v8386, 16
        %v8701 = vrot.slane %v8699, 4
        %v8702 = vor.u32 %v8701, %v8697
        %v8703 = vrot.slane %v8702, 4
        %v8705 = vshll.u32 %v8387, 16
        %v8707 = vrot.slane %v8705, 5
        %v8708 = vsel %vm1148, %v8703, %v8707
        %v8710 = vshrl.u32 %v8388, 16
        %v8712 = vrot.slane %v8710, 4
        %v8713 = vshll.u32 %v8388, 16
        %v8715 = vrot.slane %v8713, 5
        %v8716 = vor.u32 %v8712, %v8715
        %v8717 = vrot.slane %v8716, 4
        %v8719 = vshll.u32 %v8389, 16
        %v8721 = vrot.slane %v8719, 5
        %v8722 = vsel %vm1148, %v8717, %v8721
        %v8723 = vshrl.u32 %v8389, 16
        %v8725 = vrot.slane %v8723, 4
        %v8726 = vor.u32 %v8725, %v8721
        %v8727 = vrot.slane %v8726, 4
        %v8729 = vshll.u32 %v8390, 16
        %v8731 = vrot.slane %v8729, 5
        %v8732 = vsel %vm1148, %v8727, %v8731
        %v8734 = vshrl.u32 %v8391, 16
        %v8736 = vrot.slane %v8734, 4
        %v8737 = vshll.u32 %v8391, 16
        %v8739 = vrot.slane %v8737, 5
        %v8740 = vor.u32 %v8736, %v8739
        %v8741 = vrot.slane %v8740, 4
        %v8743 = vshll.u32 %v8392, 16
        %v8745 = vrot.slane %v8743, 5
        %v8746 = vsel %vm1148, %v8741, %v8745
        %v8747 = vshrl.u32 %v8392, 16
        %v8749 = vrot.slane %v8747, 4
        %v8750 = vor.u32 %v8749, %v8745
        %v8751 = vrot.slane %v8750, 4
        %v8753 = vshll.u32 %v8393, 16
        %v8755 = vrot.slane %v8753, 5
        %v8756 = vsel %vm1148, %v8751, %v8755
        %v8758 = vshrl.u32 %v8394, 16
        %v8760 = vrot.slane %v8758, 4
        %v8761 = vshll.u32 %v8394, 16
        %v8763 = vrot.slane %v8761, 5
        %v8764 = vor.u32 %v8760, %v8763
        %v8765 = vrot.slane %v8764, 4
        %v8767 = vshll.u32 %v8395, 16
        %v8769 = vrot.slane %v8767, 5
        %v8770 = vsel %vm1148, %v8765, %v8769
        %v8771 = vshrl.u32 %v8395, 16
        %v8773 = vrot.slane %v8771, 4
        %v8774 = vor.u32 %v8773, %v8769
        %v8775 = vrot.slane %v8774, 4
        %v8777 = vshll.u32 %v8396, 16
        %v8779 = vrot.slane %v8777, 5
        %v8780 = vsel %vm1148, %v8775, %v8779
        %s8781 = scalar_lea.vmem [#allocation10], 64
        %v8782 = vld [vmem:[%s8781] sm:$0xf]
        %v8783 = vld [vmem:[%s8781 + $0x4] sm:$0xf]
        %v8784 = vld [vmem:[%s8781 + $0x8] sm:$0xf]
        %v8785 = vld [vmem:[%s8781 + $0xc] sm:$0xf]
        %v8786 = vunpack.c.l.b16 %v8410
        %v8787 = vunpack.c.l.b16 %v8420
        %v8788 = vunpack.c.l.b16 %v8434
        %v8789 = vunpack.c.l.b16 %v8444
        %v8790 = vunpack.c.l.b16 %v8458
        %v8791 = vunpack.c.l.b16 %v8468
        %v8792 = vunpack.c.l.b16 %v8482
        %v8793 = vunpack.c.l.b16 %v8492
        %v8794 = vunpack.c.l.b16 %v8506
        %v8795 = vunpack.c.l.b16 %v8516
        %v8796 = vunpack.c.l.b16 %v8530
        %v8797 = vunpack.c.l.b16 %v8540
        %v8798 = vunpack.c.l.b16 %v8554
        %v8799 = vunpack.c.l.b16 %v8564
        %v8800 = vunpack.c.l.b16 %v8578
        %v8801 = vunpack.c.l.b16 %v8588
        %v8802 = vunpack.c.l.b16 %v8602
        %v8803 = vunpack.c.l.b16 %v8612
        %v8804 = vunpack.c.l.b16 %v8626
        %v8805 = vunpack.c.l.b16 %v8636
        %v8806 = vunpack.c.l.b16 %v8650
        %v8807 = vunpack.c.l.b16 %v8660
        %v8808 = vunpack.c.l.b16 %v8674
        %v8809 = vunpack.c.l.b16 %v8684
        %v8810 = vunpack.c.l.b16 %v8698
        %v8811 = vunpack.c.l.b16 %v8708
        %v8812 = vunpack.c.l.b16 %v8722
        %v8813 = vunpack.c.l.b16 %v8732
        %v8814 = vunpack.c.l.b16 %v8746
        %v8815 = vunpack.c.l.b16 %v8756
        %v8816 = vunpack.c.l.b16 %v8770
        %v8817 = vunpack.c.l.b16 %v8780
        %v8818 = vpack.c.b16 %v8787, %v8786
        %v8819 = vpack.c.b16 %v8789, %v8788
        %v8820 = vpack.c.b16 %v8791, %v8790
        %v8821 = vpack.c.b16 %v8793, %v8792
        %v8822 = vpack.c.b16 %v8795, %v8794
        %v8823 = vpack.c.b16 %v8797, %v8796
        %v8824 = vpack.c.b16 %v8799, %v8798
        %v8825 = vpack.c.b16 %v8801, %v8800
        %v8826 = vpack.c.b16 %v8803, %v8802
        %v8827 = vpack.c.b16 %v8805, %v8804
        %v8828 = vpack.c.b16 %v8807, %v8806
        %v8829 = vpack.c.b16 %v8809, %v8808
        %v8830 = vpack.c.b16 %v8811, %v8810
        %v8831 = vpack.c.b16 %v8813, %v8812
        %v8832 = vpack.c.b16 %v8815, %v8814
        %v8833 = vpack.c.b16 %v8817, %v8816
        %v8838 = vunpack.c.l.b16 %v8782
        %v8839 = vunpack.c.l.b16 %v8783
        %v8840 = vunpack.c.l.b16 %v8784
        %v8841 = vunpack.c.l.b16 %v8785
        %v8842 = vpack.c.b16 %v8839, %v8838
        %v8843 = vpack.c.b16 %v8841, %v8840
        %v8847 = vsel %vm7002, %v8818, 0
        %v8850 = vsel %vm7002, %v8819, 0
        %v8853 = vsel %vm7002, %v8820, 0
        %v8856 = vsel %vm7002, %v8821, 0
        %v8859 = vsel %vm7002, %v8822, 0
        %v8862 = vsel %vm7002, %v8823, 0
        %v8865 = vsel %vm7002, %v8824, 0
        %v8868 = vsel %vm7002, %v8825, 0
        %v8871 = vsel %vm7002, %v8826, 0
        %v8874 = vsel %vm7002, %v8827, 0
        %v8877 = vsel %vm7002, %v8828, 0
        %v8880 = vsel %vm7002, %v8829, 0
        %v8883 = vsel %vm7002, %v8830, 0
        %v8886 = vsel %vm7002, %v8831, 0
        %v8889 = vsel %vm7002, %v8832, 0
        %v8892 = vsel %vm7002, %v8833, 0
        %8894 = vmatprep.subr.bf16.mxu0 0
        %8895 = vmatpush1.bf16.msra.mxu0 %v8842
        %8896 = vmatprep.subr.bf16.mxu0 0
        %8897 = vmatpush1.bf16.msra.mxu0 %v8843
        %8898 = vmatprep.subr.bf16.mxu0 0
        %8899 = vmatpush1.bf16.msra.mxu0 0
        %8900 = vmatprep.subr.bf16.mxu0 0
        %8901 = vmatpush1.bf16.msra.mxu0 0
        %8902 = vmatprep.subr.bf16.mxu0 0
        %8903 = vmatpush1.bf16.msra.mxu0 0
        %8904 = vmatprep.subr.bf16.mxu0 0
        %8905 = vmatpush1.bf16.msra.mxu0 0
        %8906 = vmatprep.subr.bf16.mxu0 0
        %8907 = vmatpush1.bf16.msra.mxu0 0
        %8908 = vmatprep.subr.bf16.mxu0 0
        %8909 = vmatpush1.bf16.msra.mxu0 0
        %8910 = vmatprep.subr.bf16.mxu0 0
        %8911 = vmatpush1.bf16.msra.mxu0 0
        %8912 = vmatprep.subr.bf16.mxu0 0
        %8913 = vmatpush1.bf16.msra.mxu0 0
        %8914 = vmatprep.subr.bf16.mxu0 0
        %8915 = vmatpush1.bf16.msra.mxu0 0
        %8916 = vmatprep.subr.bf16.mxu0 0
        %8917 = vmatpush1.bf16.msra.mxu0 0
        %8918 = vmatprep.subr.bf16.mxu0 0
        %8919 = vmatpush1.bf16.msra.mxu0 0
        %8920 = vmatprep.subr.bf16.mxu0 0
        %8921 = vmatpush1.bf16.msra.mxu0 0
        %8922 = vmatprep.subr.bf16.mxu0 0
        %8923 = vmatpush1.bf16.msra.mxu0 0
        %8924 = vmatprep.subr.bf16.mxu0 0
        %8925 = vmatpush1.bf16.msra.mxu0 0
        %8926 = vmatprep.mubr.bf16.mxu0 0
        %8927 = vmatmul.mubr.bf16.gmra.mrb[0].mxu0 %v8847
        %v8928 = vpop.f32.mrb[0].mxu0
        %v8929 = vadd.f32 0.0, %v8928
        %v8930 = vpop.f32.mrb[0].mxu0
        %v8931 = vpop.f32.mrb[0].mxu0
        %v8932 = vadd.f32 0.0, %v8931
        %v8933 = vpop.f32.mrb[0].mxu0
        %8934 = vmatprep.mubr.bf16.mxu0 0
        %8935 = vmatmul.mubr.bf16.gmra.mrb[0].mxu0 %v8850
        %v8936 = vpop.f32.mrb[0].mxu0
        %v8937 = vadd.f32 0.0, %v8936
        %v8938 = vpop.f32.mrb[0].mxu0
        %v8939 = vpop.f32.mrb[0].mxu0
        %v8940 = vadd.f32 0.0, %v8939
        %v8941 = vpop.f32.mrb[0].mxu0
        %8942 = vmatprep.mubr.bf16.mxu0 0
        %8943 = vmatmul.mubr.bf16.gmra.mrb[0].mxu0 %v8853
        %v8944 = vpop.f32.mrb[0].mxu0
        %v8945 = vadd.f32 0.0, %v8944
        %v8946 = vpop.f32.mrb[0].mxu0
        %v8947 = vpop.f32.mrb[0].mxu0
        %v8948 = vadd.f32 0.0, %v8947
        %v8949 = vpop.f32.mrb[0].mxu0
        %8950 = vmatprep.mubr.bf16.mxu0 0
        %8951 = vmatmul.mubr.bf16.gmra.mrb[0].mxu0 %v8856
        %v8952 = vpop.f32.mrb[0].mxu0
        %v8953 = vadd.f32 0.0, %v8952
        %v8954 = vpop.f32.mrb[0].mxu0
        %v8955 = vpop.f32.mrb[0].mxu0
        %v8956 = vadd.f32 0.0, %v8955
        %v8957 = vpop.f32.mrb[0].mxu0
        %8958 = vmatprep.mubr.bf16.mxu0 0
        %8959 = vmatmul.mubr.bf16.gmra.mrb[0].mxu0 %v8859
        %v8960 = vpop.f32.mrb[0].mxu0
        %v8961 = vadd.f32 0.0, %v8960
        %v8962 = vpop.f32.mrb[0].mxu0
        %v8963 = vpop.f32.mrb[0].mxu0
        %v8964 = vadd.f32 0.0, %v8963
        %v8965 = vpop.f32.mrb[0].mxu0
        %8966 = vmatprep.mubr.bf16.mxu0 0
        %8967 = vmatmul.mubr.bf16.gmra.mrb[0].mxu0 %v8862
        %v8968 = vpop.f32.mrb[0].mxu0
        %v8969 = vadd.f32 0.0, %v8968
        %v8970 = vpop.f32.mrb[0].mxu0
        %v8971 = vpop.f32.mrb[0].mxu0
        %v8972 = vadd.f32 0.0, %v8971
        %v8973 = vpop.f32.mrb[0].mxu0
        %8974 = vmatprep.mubr.bf16.mxu0 0
        %8975 = vmatmul.mubr.bf16.gmra.mrb[0].mxu0 %v8865
        %v8976 = vpop.f32.mrb[0].mxu0
        %v8977 = vadd.f32 0.0, %v8976
        %v8978 = vpop.f32.mrb[0].mxu0
        %v8979 = vpop.f32.mrb[0].mxu0
        %v8980 = vadd.f32 0.0, %v8979
        %v8981 = vpop.f32.mrb[0].mxu0
        %8982 = vmatprep.mubr.bf16.mxu0 0
        %8983 = vmatmul.mubr.bf16.gmra.mrb[0].mxu0 %v8868
        %v8984 = vpop.f32.mrb[0].mxu0
        %v8985 = vadd.f32 0.0, %v8984
        %v8986 = vpop.f32.mrb[0].mxu0
        %v8987 = vpop.f32.mrb[0].mxu0
        %v8988 = vadd.f32 0.0, %v8987
        %v8989 = vpop.f32.mrb[0].mxu0
        %8990 = vmatprep.mubr.bf16.mxu0 0
        %8991 = vmatmul.mubr.bf16.gmra.mrb[0].mxu0 %v8871
        %v8992 = vpop.f32.mrb[0].mxu0
        %v8993 = vadd.f32 0.0, %v8992
        %v8994 = vpop.f32.mrb[0].mxu0
        %v8995 = vpop.f32.mrb[0].mxu0
        %v8996 = vadd.f32 0.0, %v8995
        %v8997 = vpop.f32.mrb[0].mxu0
        %8998 = vmatprep.mubr.bf16.mxu0 0
        %8999 = vmatmul.mubr.bf16.gmra.mrb[0].mxu0 %v8874
        %v9000 = vpop.f32.mrb[0].mxu0
        %v9001 = vadd.f32 0.0, %v9000
        %v9002 = vpop.f32.mrb[0].mxu0
        %v9003 = vpop.f32.mrb[0].mxu0
        %v9004 = vadd.f32 0.0, %v9003
        %v9005 = vpop.f32.mrb[0].mxu0
        %9006 = vmatprep.mubr.bf16.mxu0 0
        %9007 = vmatmul.mubr.bf16.gmra.mrb[0].mxu0 %v8877
        %v9008 = vpop.f32.mrb[0].mxu0
        %v9009 = vadd.f32 0.0, %v9008
        %v9010 = vpop.f32.mrb[0].mxu0
        %v9011 = vpop.f32.mrb[0].mxu0
        %v9012 = vadd.f32 0.0, %v9011
        %v9013 = vpop.f32.mrb[0].mxu0
        %9014 = vmatprep.mubr.bf16.mxu0 0
        %9015 = vmatmul.mubr.bf16.gmra.mrb[0].mxu0 %v8880
        %v9016 = vpop.f32.mrb[0].mxu0
        %v9017 = vadd.f32 0.0, %v9016
        %v9018 = vpop.f32.mrb[0].mxu0
        %v9019 = vpop.f32.mrb[0].mxu0
        %v9020 = vadd.f32 0.0, %v9019
        %v9021 = vpop.f32.mrb[0].mxu0
        %9022 = vmatprep.mubr.bf16.mxu0 0
        %9023 = vmatmul.mubr.bf16.gmra.mrb[0].mxu0 %v8883
        %v9024 = vpop.f32.mrb[0].mxu0
        %v9025 = vadd.f32 0.0, %v9024
        %v9026 = vpop.f32.mrb[0].mxu0
        %v9027 = vpop.f32.mrb[0].mxu0
        %v9028 = vadd.f32 0.0, %v9027
        %v9029 = vpop.f32.mrb[0].mxu0
        %9030 = vmatprep.mubr.bf16.mxu0 0
        %9031 = vmatmul.mubr.bf16.gmra.mrb[0].mxu0 %v8886
        %v9032 = vpop.f32.mrb[0].mxu0
        %v9033 = vadd.f32 0.0, %v9032
        %v9034 = vpop.f32.mrb[0].mxu0
        %v9035 = vpop.f32.mrb[0].mxu0
        %v9036 = vadd.f32 0.0, %v9035
        %v9037 = vpop.f32.mrb[0].mxu0
        %9038 = vmatprep.mubr.bf16.mxu0 0
        %9039 = vmatmul.mubr.bf16.gmra.mrb[0].mxu0 %v8889
        %v9040 = vpop.f32.mrb[0].mxu0
        %v9041 = vadd.f32 0.0, %v9040
        %v9042 = vpop.f32.mrb[0].mxu0
        %v9043 = vpop.f32.mrb[0].mxu0
        %v9044 = vadd.f32 0.0, %v9043
        %v9045 = vpop.f32.mrb[0].mxu0
        %9046 = vmatprep.mubr.bf16.mxu0 0
        %9047 = vmatmul.mubr.bf16.gmra.mrb[0].mxu0 %v8892
        %v9048 = vpop.f32.mrb[0].mxu0
        %v9049 = vadd.f32 0.0, %v9048
        %v9050 = vpop.f32.mrb[0].mxu0
        %v9051 = vpop.f32.mrb[0].mxu0
        %v9052 = vadd.f32 0.0, %v9051
        %v9053 = vpop.f32.mrb[0].mxu0
        %9054 = vdwg.mxu0
        %v9055 = vadd.f32 %v8317, %v8929
        %v9056 = vadd.f32 %v8318, %v8932
        %v9057 = vadd.f32 %v8319, %v8937
        %v9058 = vadd.f32 %v8320, %v8940
        %v9059 = vadd.f32 %v8321, %v8945
        %v9060 = vadd.f32 %v8322, %v8948
        %v9061 = vadd.f32 %v8323, %v8953
        %v9062 = vadd.f32 %v8324, %v8956
        %v9063 = vadd.f32 %v8325, %v8961
        %v9064 = vadd.f32 %v8326, %v8964
        %v9065 = vadd.f32 %v8327, %v8969
        %v9066 = vadd.f32 %v8328, %v8972
        %v9067 = vadd.f32 %v8329, %v8977
        %v9068 = vadd.f32 %v8330, %v8980
        %v9069 = vadd.f32 %v8331, %v8985
        %v9070 = vadd.f32 %v8332, %v8988
        %v9071 = vadd.f32 %v8333, %v8993
        %v9072 = vadd.f32 %v8334, %v8996
        %v9073 = vadd.f32 %v8335, %v9001
        %v9074 = vadd.f32 %v8336, %v9004
        %v9075 = vadd.f32 %v8337, %v9009
        %v9076 = vadd.f32 %v8338, %v9012
        %v9077 = vadd.f32 %v8339, %v9017
        %v9078 = vadd.f32 %v8340, %v9020
        %v9079 = vadd.f32 %v8341, %v9025
        %v9080 = vadd.f32 %v8342, %v9028
        %v9081 = vadd.f32 %v8343, %v9033
        %v9082 = vadd.f32 %v8344, %v9036
        %v9083 = vadd.f32 %v8345, %v9041
        %v9084 = vadd.f32 %v8346, %v9044
        %v9085 = vadd.f32 %v8347, %v9049
        %v9086 = vadd.f32 %v8348, %v9052
        %v9087 = vld [vmem:[%s6386] sm:$0xe]
        %v9088 = vld [vmem:[%s6386 + $0xc] sm:$0xe]
        %v9089 = vld [vmem:[%s6386 + $0x18] sm:$0xe]
        %v9090 = vld [vmem:[%s6386 + $0x24] sm:$0xe]
        %v9091 = vld [vmem:[%s6386 + $0x30] sm:$0xe]
        %v9092 = vld [vmem:[%s6386 + $0x3c] sm:$0xe]
        %v9093 = vld [vmem:[%s6386 + $0x48] sm:$0xe]
        %v9094 = vld [vmem:[%s6386 + $0x54] sm:$0xe]
        %v9095 = vld [vmem:[%s6386 + $0x60] sm:$0xe]
        %v9096 = vld [vmem:[%s6386 + $0x6c] sm:$0xe]
        %v9097 = vld [vmem:[%s6386 + $0x78] sm:$0xe]
        %v9098 = vld [vmem:[%s6386 + $0x84] sm:$0xe]
        %v9099 = vld [vmem:[%s6386 + $0x90] sm:$0xe]
        %v9100 = vld [vmem:[%s6386 + $0x9c] sm:$0xe]
        %v9101 = vld [vmem:[%s6386 + $0xa8] sm:$0xe]
        %v9102 = vld [vmem:[%s6386 + $0xb4] sm:$0xe]
        %v9151 = vrot.slane %v9087, 5
        %v9152 = vrot.slane %v9151, 4
        %v9153 = vrot.slane %v8350, 5
        %v9154 = vsel %vm2187, %v9152, %v9153
        %v9155 = vrot.slane %v9153, 4
        %v9156 = vrot.slane %v8351, 5
        %v9157 = vsel %vm2187, %v9155, %v9156
        %v9158 = vrot.slane %v9088, 5
        %v9159 = vrot.slane %v9158, 4
        %v9160 = vrot.slane %v8353, 5
        %v9161 = vsel %vm2187, %v9159, %v9160
        %v9162 = vrot.slane %v9160, 4
        %v9163 = vrot.slane %v8354, 5
        %v9164 = vsel %vm2187, %v9162, %v9163
        %v9165 = vrot.slane %v9089, 5
        %v9166 = vrot.slane %v9165, 4
        %v9167 = vrot.slane %v8356, 5
        %v9168 = vsel %vm2187, %v9166, %v9167
        %v9169 = vrot.slane %v9167, 4
        %v9170 = vrot.slane %v8357, 5
        %v9171 = vsel %vm2187, %v9169, %v9170
        %v9172 = vrot.slane %v9090, 5
        %v9173 = vrot.slane %v9172, 4
        %v9174 = vrot.slane %v8359, 5
        %v9175 = vsel %vm2187, %v9173, %v9174
        %v9176 = vrot.slane %v9174, 4
        %v9177 = vrot.slane %v8360, 5
        %v9178 = vsel %vm2187, %v9176, %v9177
        %v9179 = vrot.slane %v9091, 5
        %v9180 = vrot.slane %v9179, 4
        %v9181 = vrot.slane %v8362, 5
        %v9182 = vsel %vm2187, %v9180, %v9181
        %v9183 = vrot.slane %v9181, 4
        %v9184 = vrot.slane %v8363, 5
        %v9185 = vsel %vm2187, %v9183, %v9184
        %v9186 = vrot.slane %v9092, 5
        %v9187 = vrot.slane %v9186, 4
        %v9188 = vrot.slane %v8365, 5
        %v9189 = vsel %vm2187, %v9187, %v9188
        %v9190 = vrot.slane %v9188, 4
        %v9191 = vrot.slane %v8366, 5
        %v9192 = vsel %vm2187, %v9190, %v9191
        %v9193 = vrot.slane %v9093, 5
        %v9194 = vrot.slane %v9193, 4
        %v9195 = vrot.slane %v8368, 5
        %v9196 = vsel %vm2187, %v9194, %v9195
        %v9197 = vrot.slane %v9195, 4
        %v9198 = vrot.slane %v8369, 5
        %v9199 = vsel %vm2187, %v9197, %v9198
        %v9200 = vrot.slane %v9094, 5
        %v9201 = vrot.slane %v9200, 4
        %v9202 = vrot.slane %v8371, 5
        %v9203 = vsel %vm2187, %v9201, %v9202
        %v9204 = vrot.slane %v9202, 4
        %v9205 = vrot.slane %v8372, 5
        %v9206 = vsel %vm2187, %v9204, %v9205
        %v9207 = vrot.slane %v9095, 5
        %v9208 = vrot.slane %v9207, 4
        %v9209 = vrot.slane %v8374, 5
        %v9210 = vsel %vm2187, %v9208, %v9209
        %v9211 = vrot.slane %v9209, 4
        %v9212 = vrot.slane %v8375, 5
        %v9213 = vsel %vm2187, %v9211, %v9212
        %v9214 = vrot.slane %v9096, 5
        %v9215 = vrot.slane %v9214, 4
        %v9216 = vrot.slane %v8377, 5
        %v9217 = vsel %vm2187, %v9215, %v9216
        %v9218 = vrot.slane %v9216, 4
        %v9219 = vrot.slane %v8378, 5
        %v9220 = vsel %vm2187, %v9218, %v9219
        %v9221 = vrot.slane %v9097, 5
        %v9222 = vrot.slane %v9221, 4
        %v9223 = vrot.slane %v8380, 5
        %v9224 = vsel %vm2187, %v9222, %v9223
        %v9225 = vrot.slane %v9223, 4
        %v9226 = vrot.slane %v8381, 5
        %v9227 = vsel %vm2187, %v9225, %v9226
        %v9228 = vrot.slane %v9098, 5
        %v9229 = vrot.slane %v9228, 4
        %v9230 = vrot.slane %v8383, 5
        %v9231 = vsel %vm2187, %v9229, %v9230
        %v9232 = vrot.slane %v9230, 4
        %v9233 = vrot.slane %v8384, 5
        %v9234 = vsel %vm2187, %v9232, %v9233
        %v9235 = vrot.slane %v9099, 5
        %v9236 = vrot.slane %v9235, 4
        %v9237 = vrot.slane %v8386, 5
        %v9238 = vsel %vm2187, %v9236, %v9237
        %v9239 = vrot.slane %v9237, 4
        %v9240 = vrot.slane %v8387, 5
        %v9241 = vsel %vm2187, %v9239, %v9240
        %v9242 = vrot.slane %v9100, 5
        %v9243 = vrot.slane %v9242, 4
        %v9244 = vrot.slane %v8389, 5
        %v9245 = vsel %vm2187, %v9243, %v9244
        %v9246 = vrot.slane %v9244, 4
        %v9247 = vrot.slane %v8390, 5
        %v9248 = vsel %vm2187, %v9246, %v9247
        %v9249 = vrot.slane %v9101, 5
        %v9250 = vrot.slane %v9249, 4
        %v9251 = vrot.slane %v8392, 5
        %v9252 = vsel %vm2187, %v9250, %v9251
        %v9253 = vrot.slane %v9251, 4
        %v9254 = vrot.slane %v8393, 5
        %v9255 = vsel %vm2187, %v9253, %v9254
        %v9256 = vrot.slane %v9102, 5
        %v9257 = vrot.slane %v9256, 4
        %v9258 = vrot.slane %v8395, 5
        %v9259 = vsel %vm2187, %v9257, %v9258
        %v9260 = vrot.slane %v9258, 4
        %v9261 = vrot.slane %v8396, 5
        %v9262 = vsel %vm2187, %v9260, %v9261
        %s9263 = scalar_lea.vmem [#allocation10], 80
        %v9264 = vld [vmem:[%s9263] sm:$0xf]
        %v9265 = vld [vmem:[%s9263 + $0x4] sm:$0xf]
        %v9266 = vld [vmem:[%s9263 + $0x8] sm:$0xf]
        %v9267 = vld [vmem:[%s9263 + $0xc] sm:$0xf]
        %v9268 = vunpack.c.l.b16 %v9154
        %v9269 = vunpack.c.l.b16 %v9157
        %v9270 = vunpack.c.l.b16 %v9161
        %v9271 = vunpack.c.l.b16 %v9164
        %v9272 = vunpack.c.l.b16 %v9168
        %v9273 = vunpack.c.l.b16 %v9171
        %v9274 = vunpack.c.l.b16 %v9175
        %v9275 = vunpack.c.l.b16 %v9178
        %v9276 = vunpack.c.l.b16 %v9182
        %v9277 = vunpack.c.l.b16 %v9185
        %v9278 = vunpack.c.l.b16 %v9189
        %v9279 = vunpack.c.l.b16 %v9192
        %v9280 = vunpack.c.l.b16 %v9196
        %v9281 = vunpack.c.l.b16 %v9199
        %v9282 = vunpack.c.l.b16 %v9203
        %v9283 = vunpack.c.l.b16 %v9206
        %v9284 = vunpack.c.l.b16 %v9210
        %v9285 = vunpack.c.l.b16 %v9213
        %v9286 = vunpack.c.l.b16 %v9217
        %v9287 = vunpack.c.l.b16 %v9220
        %v9288 = vunpack.c.l.b16 %v9224
        %v9289 = vunpack.c.l.b16 %v9227
        %v9290 = vunpack.c.l.b16 %v9231
        %v9291 = vunpack.c.l.b16 %v9234
        %v9292 = vunpack.c.l.b16 %v9238
        %v9293 = vunpack.c.l.b16 %v9241
        %v9294 = vunpack.c.l.b16 %v9245
        %v9295 = vunpack.c.l.b16 %v9248
        %v9296 = vunpack.c.l.b16 %v9252
        %v9297 = vunpack.c.l.b16 %v9255
        %v9298 = vunpack.c.l.b16 %v9259
        %v9299 = vunpack.c.l.b16 %v9262
        %v9300 = vpack.c.b16 %v9269, %v9268
        %v9301 = vpack.c.b16 %v9271, %v9270
        %v9302 = vpack.c.b16 %v9273, %v9272
        %v9303 = vpack.c.b16 %v9275, %v9274
        %v9304 = vpack.c.b16 %v9277, %v9276
        %v9305 = vpack.c.b16 %v9279, %v9278
        %v9306 = vpack.c.b16 %v9281, %v9280
        %v9307 = vpack.c.b16 %v9283, %v9282
        %v9308 = vpack.c.b16 %v9285, %v9284
        %v9309 = vpack.c.b16 %v9287, %v9286
        %v9310 = vpack.c.b16 %v9289, %v9288
        %v9311 = vpack.c.b16 %v9291, %v9290
        %v9312 = vpack.c.b16 %v9293, %v9292
        %v9313 = vpack.c.b16 %v9295, %v9294
        %v9314 = vpack.c.b16 %v9297, %v9296
        %v9315 = vpack.c.b16 %v9299, %v9298
        %v9320 = vunpack.c.l.b16 %v9264
        %v9321 = vunpack.c.l.b16 %v9265
        %v9322 = vunpack.c.l.b16 %v9266
        %v9323 = vunpack.c.l.b16 %v9267
        %v9324 = vpack.c.b16 %v9321, %v9320
        %v9325 = vpack.c.b16 %v9323, %v9322
        %v9329 = vsel %vm7002, %v9300, 0
        %v9332 = vsel %vm7002, %v9301, 0
        %v9335 = vsel %vm7002, %v9302, 0
        %v9338 = vsel %vm7002, %v9303, 0
        %v9341 = vsel %vm7002, %v9304, 0
        %v9344 = vsel %vm7002, %v9305, 0
        %v9347 = vsel %vm7002, %v9306, 0
        %v9350 = vsel %vm7002, %v9307, 0
        %v9353 = vsel %vm7002, %v9308, 0
        %v9356 = vsel %vm7002, %v9309, 0
        %v9359 = vsel %vm7002, %v9310, 0
        %v9362 = vsel %vm7002, %v9311, 0
        %v9365 = vsel %vm7002, %v9312, 0
        %v9368 = vsel %vm7002, %v9313, 0
        %v9371 = vsel %vm7002, %v9314, 0
        %v9374 = vsel %vm7002, %v9315, 0
        %9376 = vmatprep.subr.bf16.mxu0 0
        %9377 = vmatpush1.bf16.msra.mxu0 %v9324
        %9378 = vmatprep.subr.bf16.mxu0 0
        %9379 = vmatpush1.bf16.msra.mxu0 %v9325
        %9380 = vmatprep.subr.bf16.mxu0 0
        %9381 = vmatpush1.bf16.msra.mxu0 0
        %9382 = vmatprep.subr.bf16.mxu0 0
        %9383 = vmatpush1.bf16.msra.mxu0 0
        %9384 = vmatprep.subr.bf16.mxu0 0
        %9385 = vmatpush1.bf16.msra.mxu0 0
        %9386 = vmatprep.subr.bf16.mxu0 0
        %9387 = vmatpush1.bf16.msra.mxu0 0
        %9388 = vmatprep.subr.bf16.mxu0 0
        %9389 = vmatpush1.bf16.msra.mxu0 0
        %9390 = vmatprep.subr.bf16.mxu0 0
        %9391 = vmatpush1.bf16.msra.mxu0 0
        %9392 = vmatprep.subr.bf16.mxu0 0
        %9393 = vmatpush1.bf16.msra.mxu0 0
        %9394 = vmatprep.subr.bf16.mxu0 0
        %9395 = vmatpush1.bf16.msra.mxu0 0
        %9396 = vmatprep.subr.bf16.mxu0 0
        %9397 = vmatpush1.bf16.msra.mxu0 0
        %9398 = vmatprep.subr.bf16.mxu0 0
        %9399 = vmatpush1.bf16.msra.mxu0 0
        %9400 = vmatprep.subr.bf16.mxu0 0
        %9401 = vmatpush1.bf16.msra.mxu0 0
        %9402 = vmatprep.subr.bf16.mxu0 0
        %9403 = vmatpush1.bf16.msra.mxu0 0
        %9404 = vmatprep.subr.bf16.mxu0 0
        %9405 = vmatpush1.bf16.msra.mxu0 0
        %9406 = vmatprep.subr.bf16.mxu0 0
        %9407 = vmatpush1.bf16.msra.mxu0 0
        %9408 = vmatprep.mubr.bf16.mxu0 0
        %9409 = vmatmul.mubr.bf16.gmra.mrb[0].mxu0 %v9329
        %v9410 = vpop.f32.mrb[0].mxu0
        %v9411 = vadd.f32 0.0, %v9410
        %v9412 = vpop.f32.mrb[0].mxu0
        %v9413 = vpop.f32.mrb[0].mxu0
        %v9414 = vadd.f32 0.0, %v9413
        %v9415 = vpop.f32.mrb[0].mxu0
        %9416 = vmatprep.mubr.bf16.mxu0 0
        %9417 = vmatmul.mubr.bf16.gmra.mrb[0].mxu0 %v9332
        %v9418 = vpop.f32.mrb[0].mxu0
        %v9419 = vadd.f32 0.0, %v9418
        %v9420 = vpop.f32.mrb[0].mxu0
        %v9421 = vpop.f32.mrb[0].mxu0
        %v9422 = vadd.f32 0.0, %v9421
        %v9423 = vpop.f32.mrb[0].mxu0
        %9424 = vmatprep.mubr.bf16.mxu0 0
        %9425 = vmatmul.mubr.bf16.gmra.mrb[0].mxu0 %v9335
        %v9426 = vpop.f32.mrb[0].mxu0
        %v9427 = vadd.f32 0.0, %v9426
        %v9428 = vpop.f32.mrb[0].mxu0
        %v9429 = vpop.f32.mrb[0].mxu0
        %v9430 = vadd.f32 0.0, %v9429
        %v9431 = vpop.f32.mrb[0].mxu0
        %9432 = vmatprep.mubr.bf16.mxu0 0
        %9433 = vmatmul.mubr.bf16.gmra.mrb[0].mxu0 %v9338
        %v9434 = vpop.f32.mrb[0].mxu0
        %v9435 = vadd.f32 0.0, %v9434
        %v9436 = vpop.f32.mrb[0].mxu0
        %v9437 = vpop.f32.mrb[0].mxu0
        %v9438 = vadd.f32 0.0, %v9437
        %v9439 = vpop.f32.mrb[0].mxu0
        %9440 = vmatprep.mubr.bf16.mxu0 0
        %9441 = vmatmul.mubr.bf16.gmra.mrb[0].mxu0 %v9341
        %v9442 = vpop.f32.mrb[0].mxu0
        %v9443 = vadd.f32 0.0, %v9442
        %v9444 = vpop.f32.mrb[0].mxu0
        %v9445 = vpop.f32.mrb[0].mxu0
        %v9446 = vadd.f32 0.0, %v9445
        %v9447 = vpop.f32.mrb[0].mxu0
        %9448 = vmatprep.mubr.bf16.mxu0 0
        %9449 = vmatmul.mubr.bf16.gmra.mrb[0].mxu0 %v9344
        %v9450 = vpop.f32.mrb[0].mxu0
        %v9451 = vadd.f32 0.0, %v9450
        %v9452 = vpop.f32.mrb[0].mxu0
        %v9453 = vpop.f32.mrb[0].mxu0
        %v9454 = vadd.f32 0.0, %v9453
        %v9455 = vpop.f32.mrb[0].mxu0
        %9456 = vmatprep.mubr.bf16.mxu0 0
        %9457 = vmatmul.mubr.bf16.gmra.mrb[0].mxu0 %v9347
        %v9458 = vpop.f32.mrb[0].mxu0
        %v9459 = vadd.f32 0.0, %v9458
        %v9460 = vpop.f32.mrb[0].mxu0
        %v9461 = vpop.f32.mrb[0].mxu0
        %v9462 = vadd.f32 0.0, %v9461
        %v9463 = vpop.f32.mrb[0].mxu0
        %9464 = vmatprep.mubr.bf16.mxu0 0
        %9465 = vmatmul.mubr.bf16.gmra.mrb[0].mxu0 %v9350
        %v9466 = vpop.f32.mrb[0].mxu0
        %v9467 = vadd.f32 0.0, %v9466
        %v9468 = vpop.f32.mrb[0].mxu0
        %v9469 = vpop.f32.mrb[0].mxu0
        %v9470 = vadd.f32 0.0, %v9469
        %v9471 = vpop.f32.mrb[0].mxu0
        %9472 = vmatprep.mubr.bf16.mxu0 0
        %9473 = vmatmul.mubr.bf16.gmra.mrb[0].mxu0 %v9353
        %v9474 = vpop.f32.mrb[0].mxu0
        %v9475 = vadd.f32 0.0, %v9474
        %v9476 = vpop.f32.mrb[0].mxu0
        %v9477 = vpop.f32.mrb[0].mxu0
        %v9478 = vadd.f32 0.0, %v9477
        %v9479 = vpop.f32.mrb[0].mxu0
        %9480 = vmatprep.mubr.bf16.mxu0 0
        %9481 = vmatmul.mubr.bf16.gmra.mrb[0].mxu0 %v9356
        %v9482 = vpop.f32.mrb[0].mxu0
        %v9483 = vadd.f32 0.0, %v9482
        %v9484 = vpop.f32.mrb[0].mxu0
        %v9485 = vpop.f32.mrb[0].mxu0
        %v9486 = vadd.f32 0.0, %v9485
        %v9487 = vpop.f32.mrb[0].mxu0
        %9488 = vmatprep.mubr.bf16.mxu0 0
        %9489 = vmatmul.mubr.bf16.gmra.mrb[0].mxu0 %v9359
        %v9490 = vpop.f32.mrb[0].mxu0
        %v9491 = vadd.f32 0.0, %v9490
        %v9492 = vpop.f32.mrb[0].mxu0
        %v9493 = vpop.f32.mrb[0].mxu0
        %v9494 = vadd.f32 0.0, %v9493
        %v9495 = vpop.f32.mrb[0].mxu0
        %9496 = vmatprep.mubr.bf16.mxu0 0
        %9497 = vmatmul.mubr.bf16.gmra.mrb[0].mxu0 %v9362
        %v9498 = vpop.f32.mrb[0].mxu0
        %v9499 = vadd.f32 0.0, %v9498
        %v9500 = vpop.f32.mrb[0].mxu0
        %v9501 = vpop.f32.mrb[0].mxu0
        %v9502 = vadd.f32 0.0, %v9501
        %v9503 = vpop.f32.mrb[0].mxu0
        %9504 = vmatprep.mubr.bf16.mxu0 0
        %9505 = vmatmul.mubr.bf16.gmra.mrb[0].mxu0 %v9365
        %v9506 = vpop.f32.mrb[0].mxu0
        %v9507 = vadd.f32 0.0, %v9506
        %v9508 = vpop.f32.mrb[0].mxu0
        %v9509 = vpop.f32.mrb[0].mxu0
        %v9510 = vadd.f32 0.0, %v9509
        %v9511 = vpop.f32.mrb[0].mxu0
        %9512 = vmatprep.mubr.bf16.mxu0 0
        %9513 = vmatmul.mubr.bf16.gmra.mrb[0].mxu0 %v9368
        %v9514 = vpop.f32.mrb[0].mxu0
        %v9515 = vadd.f32 0.0, %v9514
        %v9516 = vpop.f32.mrb[0].mxu0
        %v9517 = vpop.f32.mrb[0].mxu0
        %v9518 = vadd.f32 0.0, %v9517
        %v9519 = vpop.f32.mrb[0].mxu0
        %9520 = vmatprep.mubr.bf16.mxu0 0
        %9521 = vmatmul.mubr.bf16.gmra.mrb[0].mxu0 %v9371
        %v9522 = vpop.f32.mrb[0].mxu0
        %v9523 = vadd.f32 0.0, %v9522
        %v9524 = vpop.f32.mrb[0].mxu0
        %v9525 = vpop.f32.mrb[0].mxu0
        %v9526 = vadd.f32 0.0, %v9525
        %v9527 = vpop.f32.mrb[0].mxu0
        %9528 = vmatprep.mubr.bf16.mxu0 0
        %9529 = vmatmul.mubr.bf16.gmra.mrb[0].mxu0 %v9374
        %v9530 = vpop.f32.mrb[0].mxu0
        %v9531 = vadd.f32 0.0, %v9530
        %v9532 = vpop.f32.mrb[0].mxu0
        %v9533 = vpop.f32.mrb[0].mxu0
        %v9534 = vadd.f32 0.0, %v9533
        %v9535 = vpop.f32.mrb[0].mxu0
        %9536 = vdwg.mxu0
        %v9537 = vadd.f32 %v9055, %v9411
        %v9538 = vadd.f32 %v9056, %v9414
        %v9539 = vadd.f32 %v9057, %v9419
        %v9540 = vadd.f32 %v9058, %v9422
        %v9541 = vadd.f32 %v9059, %v9427
        %v9542 = vadd.f32 %v9060, %v9430
        %v9543 = vadd.f32 %v9061, %v9435
        %v9544 = vadd.f32 %v9062, %v9438
        %v9545 = vadd.f32 %v9063, %v9443
        %v9546 = vadd.f32 %v9064, %v9446
        %v9547 = vadd.f32 %v9065, %v9451
        %v9548 = vadd.f32 %v9066, %v9454
        %v9549 = vadd.f32 %v9067, %v9459
        %v9550 = vadd.f32 %v9068, %v9462
        %v9551 = vadd.f32 %v9069, %v9467
        %v9552 = vadd.f32 %v9070, %v9470
        %v9553 = vadd.f32 %v9071, %v9475
        %v9554 = vadd.f32 %v9072, %v9478
        %v9555 = vadd.f32 %v9073, %v9483
        %v9556 = vadd.f32 %v9074, %v9486
        %v9557 = vadd.f32 %v9075, %v9491
        %v9558 = vadd.f32 %v9076, %v9494
        %v9559 = vadd.f32 %v9077, %v9499
        %v9560 = vadd.f32 %v9078, %v9502
        %v9561 = vadd.f32 %v9079, %v9507
        %v9562 = vadd.f32 %v9080, %v9510
        %v9563 = vadd.f32 %v9081, %v9515
        %v9564 = vadd.f32 %v9082, %v9518
        %v9565 = vadd.f32 %v9083, %v9523
        %v9566 = vadd.f32 %v9084, %v9526
        %v9567 = vadd.f32 %v9085, %v9531
        %v9568 = vadd.f32 %v9086, %v9534
        %s9569 = scalar_lea.vmem [#allocation3], 24
        %v9570 = vld [vmem:[%s9569] sm:$0xf]
        %v9571 = vld [vmem:[%s9569 + $0x4] sm:$0xf]
        %v9572 = vld [vmem:[%s9569 + $0xc] sm:$0xf]
        %v9573 = vld [vmem:[%s9569 + $0x10] sm:$0xf]
        %v9574 = vld [vmem:[%s9569 + $0x18] sm:$0xf]
        %v9575 = vld [vmem:[%s9569 + $0x1c] sm:$0xf]
        %v9576 = vld [vmem:[%s9569 + $0x24] sm:$0xf]
        %v9577 = vld [vmem:[%s9569 + $0x28] sm:$0xf]
        %v9578 = vld [vmem:[%s9569 + $0x30] sm:$0xf]
        %v9579 = vld [vmem:[%s9569 + $0x34] sm:$0xf]
        %v9580 = vld [vmem:[%s9569 + $0x3c] sm:$0xf]
        %v9581 = vld [vmem:[%s9569 + $0x40] sm:$0xf]
        %v9582 = vld [vmem:[%s9569 + $0x48] sm:$0xf]
        %v9583 = vld [vmem:[%s9569 + $0x4c] sm:$0xf]
        %v9584 = vld [vmem:[%s9569 + $0x54] sm:$0xf]
        %v9585 = vld [vmem:[%s9569 + $0x58] sm:$0xf]
        %v9586 = vld [vmem:[%s9569 + $0x60] sm:$0xf]
        %v9587 = vld [vmem:[%s9569 + $0x64] sm:$0xf]
        %v9588 = vld [vmem:[%s9569 + $0x6c] sm:$0xf]
        %v9589 = vld [vmem:[%s9569 + $0x70] sm:$0xf]
        %v9590 = vld [vmem:[%s9569 + $0x78] sm:$0xf]
        %v9591 = vld [vmem:[%s9569 + $0x7c] sm:$0xf]
        %v9592 = vld [vmem:[%s9569 + $0x84] sm:$0xf]
        %v9593 = vld [vmem:[%s9569 + $0x88] sm:$0xf]
        %v9594 = vld [vmem:[%s9569 + $0x90] sm:$0xf]
        %v9595 = vld [vmem:[%s9569 + $0x94] sm:$0xf]
        %v9596 = vld [vmem:[%s9569 + $0x9c] sm:$0xf]
        %v9597 = vld [vmem:[%s9569 + $0xa0] sm:$0xf]
        %v9598 = vld [vmem:[%s9569 + $0xa8] sm:$0xf]
        %v9599 = vld [vmem:[%s9569 + $0xac] sm:$0xf]
        %v9600 = vld [vmem:[%s9569 + $0xb4] sm:$0xf]
        %v9601 = vld [vmem:[%s9569 + $0xb8] sm:$0xf]
        %s9602 = scalar_lea.vmem [#allocation10], 96
        %v9603 = vld [vmem:[%s9602] sm:$0xf]
        %v9604 = vld [vmem:[%s9602 + $0x4] sm:$0xf]
        %v9605 = vld [vmem:[%s9602 + $0x8] sm:$0xf]
        %v9606 = vld [vmem:[%s9602 + $0xc] sm:$0xf]
        %v9639 = vunpack.c.l.b16 %v9570
        %v9640 = vunpack.c.l.b16 %v9571
        %v9641 = vunpack.c.l.b16 %v9572
        %v9642 = vunpack.c.l.b16 %v9573
        %v9643 = vunpack.c.l.b16 %v9574
        %v9644 = vunpack.c.l.b16 %v9575
        %v9645 = vunpack.c.l.b16 %v9576
        %v9646 = vunpack.c.l.b16 %v9577
        %v9647 = vunpack.c.l.b16 %v9578
        %v9648 = vunpack.c.l.b16 %v9579
        %v9649 = vunpack.c.l.b16 %v9580
        %v9650 = vunpack.c.l.b16 %v9581
        %v9651 = vunpack.c.l.b16 %v9582
        %v9652 = vunpack.c.l.b16 %v9583
        %v9653 = vunpack.c.l.b16 %v9584
        %v9654 = vunpack.c.l.b16 %v9585
        %v9655 = vunpack.c.l.b16 %v9586
        %v9656 = vunpack.c.l.b16 %v9587
        %v9657 = vunpack.c.l.b16 %v9588
        %v9658 = vunpack.c.l.b16 %v9589
        %v9659 = vunpack.c.l.b16 %v9590
        %v9660 = vunpack.c.l.b16 %v9591
        %v9661 = vunpack.c.l.b16 %v9592
        %v9662 = vunpack.c.l.b16 %v9593
        %v9663 = vunpack.c.l.b16 %v9594
        %v9664 = vunpack.c.l.b16 %v9595
        %v9665 = vunpack.c.l.b16 %v9596
        %v9666 = vunpack.c.l.b16 %v9597
        %v9667 = vunpack.c.l.b16 %v9598
        %v9668 = vunpack.c.l.b16 %v9599
        %v9669 = vunpack.c.l.b16 %v9600
        %v9670 = vunpack.c.l.b16 %v9601
        %v9671 = vpack.c.b16 %v9640, %v9639
        %v9672 = vpack.c.b16 %v9642, %v9641
        %v9673 = vpack.c.b16 %v9644, %v9643
        %v9674 = vpack.c.b16 %v9646, %v9645
        %v9675 = vpack.c.b16 %v9648, %v9647
        %v9676 = vpack.c.b16 %v9650, %v9649
        %v9677 = vpack.c.b16 %v9652, %v9651
        %v9678 = vpack.c.b16 %v9654, %v9653
        %v9679 = vpack.c.b16 %v9656, %v9655
        %v9680 = vpack.c.b16 %v9658, %v9657
        %v9681 = vpack.c.b16 %v9660, %v9659
        %v9682 = vpack.c.b16 %v9662, %v9661
        %v9683 = vpack.c.b16 %v9664, %v9663
        %v9684 = vpack.c.b16 %v9666, %v9665
        %v9685 = vpack.c.b16 %v9668, %v9667
        %v9686 = vpack.c.b16 %v9670, %v9669
        %v9691 = vunpack.c.l.b16 %v9603
        %v9692 = vunpack.c.l.b16 %v9604
        %v9693 = vunpack.c.l.b16 %v9605
        %v9694 = vunpack.c.l.b16 %v9606
        %v9695 = vpack.c.b16 %v9692, %v9691
        %v9696 = vpack.c.b16 %v9694, %v9693
        %v9700 = vsel %vm7002, %v9671, 0
        %v9703 = vsel %vm7002, %v9672, 0
        %v9706 = vsel %vm7002, %v9673, 0
        %v9709 = vsel %vm7002, %v9674, 0
        %v9712 = vsel %vm7002, %v9675, 0
        %v9715 = vsel %vm7002, %v9676, 0
        %v9718 = vsel %vm7002, %v9677, 0
        %v9721 = vsel %vm7002, %v9678, 0
        %v9724 = vsel %vm7002, %v9679, 0
        %v9727 = vsel %vm7002, %v9680, 0
        %v9730 = vsel %vm7002, %v9681, 0
        %v9733 = vsel %vm7002, %v9682, 0
        %v9736 = vsel %vm7002, %v9683, 0
        %v9739 = vsel %vm7002, %v9684, 0
        %v9742 = vsel %vm7002, %v9685, 0
        %v9745 = vsel %vm7002, %v9686, 0
        %9747 = vmatprep.subr.bf16.mxu0 0
        %9748 = vmatpush1.bf16.msra.mxu0 %v9695
        %9749 = vmatprep.subr.bf16.mxu0 0
        %9750 = vmatpush1.bf16.msra.mxu0 %v9696
        %9751 = vmatprep.subr.bf16.mxu0 0
        %9752 = vmatpush1.bf16.msra.mxu0 0
        %9753 = vmatprep.subr.bf16.mxu0 0
        %9754 = vmatpush1.bf16.msra.mxu0 0
        %9755 = vmatprep.subr.bf16.mxu0 0
        %9756 = vmatpush1.bf16.msra.mxu0 0
        %9757 = vmatprep.subr.bf16.mxu0 0
        %9758 = vmatpush1.bf16.msra.mxu0 0
        %9759 = vmatprep.subr.bf16.mxu0 0
        %9760 = vmatpush1.bf16.msra.mxu0 0
        %9761 = vmatprep.subr.bf16.mxu0 0
        %9762 = vmatpush1.bf16.msra.mxu0 0
        %9763 = vmatprep.subr.bf16.mxu0 0
        %9764 = vmatpush1.bf16.msra.mxu0 0
        %9765 = vmatprep.subr.bf16.mxu0 0
        %9766 = vmatpush1.bf16.msra.mxu0 0
        %9767 = vmatprep.subr.bf16.mxu0 0
        %9768 = vmatpush1.bf16.msra.mxu0 0
        %9769 = vmatprep.subr.bf16.mxu0 0
        %9770 = vmatpush1.bf16.msra.mxu0 0
        %9771 = vmatprep.subr.bf16.mxu0 0
        %9772 = vmatpush1.bf16.msra.mxu0 0
        %9773 = vmatprep.subr.bf16.mxu0 0
        %9774 = vmatpush1.bf16.msra.mxu0 0
        %9775 = vmatprep.subr.bf16.mxu0 0
        %9776 = vmatpush1.bf16.msra.mxu0 0
        %9777 = vmatprep.subr.bf16.mxu0 0
        %9778 = vmatpush1.bf16.msra.mxu0 0
        %9779 = vmatprep.mubr.bf16.mxu0 0
        %9780 = vmatmul.mubr.bf16.gmra.mrb[0].mxu0 %v9700
        %v9781 = vpop.f32.mrb[0].mxu0
        %v9782 = vadd.f32 0.0, %v9781
        %v9783 = vpop.f32.mrb[0].mxu0
        %v9784 = vpop.f32.mrb[0].mxu0
        %v9785 = vadd.f32 0.0, %v9784
        %v9786 = vpop.f32.mrb[0].mxu0
        %9787 = vmatprep.mubr.bf16.mxu0 0
        %9788 = vmatmul.mubr.bf16.gmra.mrb[0].mxu0 %v9703
        %v9789 = vpop.f32.mrb[0].mxu0
        %v9790 = vadd.f32 0.0, %v9789
        %v9791 = vpop.f32.mrb[0].mxu0
        %v9792 = vpop.f32.mrb[0].mxu0
        %v9793 = vadd.f32 0.0, %v9792
        %v9794 = vpop.f32.mrb[0].mxu0
        %9795 = vmatprep.mubr.bf16.mxu0 0
        %9796 = vmatmul.mubr.bf16.gmra.mrb[0].mxu0 %v9706
        %v9797 = vpop.f32.mrb[0].mxu0
        %v9798 = vadd.f32 0.0, %v9797
        %v9799 = vpop.f32.mrb[0].mxu0
        %v9800 = vpop.f32.mrb[0].mxu0
        %v9801 = vadd.f32 0.0, %v9800
        %v9802 = vpop.f32.mrb[0].mxu0
        %9803 = vmatprep.mubr.bf16.mxu0 0
        %9804 = vmatmul.mubr.bf16.gmra.mrb[0].mxu0 %v9709
        %v9805 = vpop.f32.mrb[0].mxu0
        %v9806 = vadd.f32 0.0, %v9805
        %v9807 = vpop.f32.mrb[0].mxu0
        %v9808 = vpop.f32.mrb[0].mxu0
        %v9809 = vadd.f32 0.0, %v9808
        %v9810 = vpop.f32.mrb[0].mxu0
        %9811 = vmatprep.mubr.bf16.mxu0 0
        %9812 = vmatmul.mubr.bf16.gmra.mrb[0].mxu0 %v9712
        %v9813 = vpop.f32.mrb[0].mxu0
        %v9814 = vadd.f32 0.0, %v9813
        %v9815 = vpop.f32.mrb[0].mxu0
        %v9816 = vpop.f32.mrb[0].mxu0
        %v9817 = vadd.f32 0.0, %v9816
        %v9818 = vpop.f32.mrb[0].mxu0
        %9819 = vmatprep.mubr.bf16.mxu0 0
        %9820 = vmatmul.mubr.bf16.gmra.mrb[0].mxu0 %v9715
        %v9821 = vpop.f32.mrb[0].mxu0
        %v9822 = vadd.f32 0.0, %v9821
        %v9823 = vpop.f32.mrb[0].mxu0
        %v9824 = vpop.f32.mrb[0].mxu0
        %v9825 = vadd.f32 0.0, %v9824
        %v9826 = vpop.f32.mrb[0].mxu0
        %9827 = vmatprep.mubr.bf16.mxu0 0
        %9828 = vmatmul.mubr.bf16.gmra.mrb[0].mxu0 %v9718
        %v9829 = vpop.f32.mrb[0].mxu0
        %v9830 = vadd.f32 0.0, %v9829
        %v9831 = vpop.f32.mrb[0].mxu0
        %v9832 = vpop.f32.mrb[0].mxu0
        %v9833 = vadd.f32 0.0, %v9832
        %v9834 = vpop.f32.mrb[0].mxu0
        %9835 = vmatprep.mubr.bf16.mxu0 0
        %9836 = vmatmul.mubr.bf16.gmra.mrb[0].mxu0 %v9721
        %v9837 = vpop.f32.mrb[0].mxu0
        %v9838 = vadd.f32 0.0, %v9837
        %v9839 = vpop.f32.mrb[0].mxu0
        %v9840 = vpop.f32.mrb[0].mxu0
        %v9841 = vadd.f32 0.0, %v9840
        %v9842 = vpop.f32.mrb[0].mxu0
        %9843 = vmatprep.mubr.bf16.mxu0 0
        %9844 = vmatmul.mubr.bf16.gmra.mrb[0].mxu0 %v9724
        %v9845 = vpop.f32.mrb[0].mxu0
        %v9846 = vadd.f32 0.0, %v9845
        %v9847 = vpop.f32.mrb[0].mxu0
        %v9848 = vpop.f32.mrb[0].mxu0
        %v9849 = vadd.f32 0.0, %v9848
        %v9850 = vpop.f32.mrb[0].mxu0
        %9851 = vmatprep.mubr.bf16.mxu0 0
        %9852 = vmatmul.mubr.bf16.gmra.mrb[0].mxu0 %v9727
        %v9853 = vpop.f32.mrb[0].mxu0
        %v9854 = vadd.f32 0.0, %v9853
        %v9855 = vpop.f32.mrb[0].mxu0
        %v9856 = vpop.f32.mrb[0].mxu0
        %v9857 = vadd.f32 0.0, %v9856
        %v9858 = vpop.f32.mrb[0].mxu0
        %9859 = vmatprep.mubr.bf16.mxu0 0
        %9860 = vmatmul.mubr.bf16.gmra.mrb[0].mxu0 %v9730
        %v9861 = vpop.f32.mrb[0].mxu0
        %v9862 = vadd.f32 0.0, %v9861
        %v9863 = vpop.f32.mrb[0].mxu0
        %v9864 = vpop.f32.mrb[0].mxu0
        %v9865 = vadd.f32 0.0, %v9864
        %v9866 = vpop.f32.mrb[0].mxu0
        %9867 = vmatprep.mubr.bf16.mxu0 0
        %9868 = vmatmul.mubr.bf16.gmra.mrb[0].mxu0 %v9733
        %v9869 = vpop.f32.mrb[0].mxu0
        %v9870 = vadd.f32 0.0, %v9869
        %v9871 = vpop.f32.mrb[0].mxu0
        %v9872 = vpop.f32.mrb[0].mxu0
        %v9873 = vadd.f32 0.0, %v9872
        %v9874 = vpop.f32.mrb[0].mxu0
        %9875 = vmatprep.mubr.bf16.mxu0 0
        %9876 = vmatmul.mubr.bf16.gmra.mrb[0].mxu0 %v9736
        %v9877 = vpop.f32.mrb[0].mxu0
        %v9878 = vadd.f32 0.0, %v9877
        %v9879 = vpop.f32.mrb[0].mxu0
        %v9880 = vpop.f32.mrb[0].mxu0
        %v9881 = vadd.f32 0.0, %v9880
        %v9882 = vpop.f32.mrb[0].mxu0
        %9883 = vmatprep.mubr.bf16.mxu0 0
        %9884 = vmatmul.mubr.bf16.gmra.mrb[0].mxu0 %v9739
        %v9885 = vpop.f32.mrb[0].mxu0
        %v9886 = vadd.f32 0.0, %v9885
        %v9887 = vpop.f32.mrb[0].mxu0
        %v9888 = vpop.f32.mrb[0].mxu0
        %v9889 = vadd.f32 0.0, %v9888
        %v9890 = vpop.f32.mrb[0].mxu0
        %9891 = vmatprep.mubr.bf16.mxu0 0
        %9892 = vmatmul.mubr.bf16.gmra.mrb[0].mxu0 %v9742
        %v9893 = vpop.f32.mrb[0].mxu0
        %v9894 = vadd.f32 0.0, %v9893
        %v9895 = vpop.f32.mrb[0].mxu0
        %v9896 = vpop.f32.mrb[0].mxu0
        %v9897 = vadd.f32 0.0, %v9896
        %v9898 = vpop.f32.mrb[0].mxu0
        %9899 = vmatprep.mubr.bf16.mxu0 0
        %9900 = vmatmul.mubr.bf16.gmra.mrb[0].mxu0 %v9745
        %v9901 = vpop.f32.mrb[0].mxu0
        %v9902 = vadd.f32 0.0, %v9901
        %v9903 = vpop.f32.mrb[0].mxu0
        %v9904 = vpop.f32.mrb[0].mxu0
        %v9905 = vadd.f32 0.0, %v9904
        %v9906 = vpop.f32.mrb[0].mxu0
        %9907 = vdwg.mxu0
        %v9908 = vadd.f32 %v9537, %v9782
        %v9909 = vadd.f32 %v9538, %v9785
        %v9910 = vadd.f32 %v9539, %v9790
        %v9911 = vadd.f32 %v9540, %v9793
        %v9912 = vadd.f32 %v9541, %v9798
        %v9913 = vadd.f32 %v9542, %v9801
        %v9914 = vadd.f32 %v9543, %v9806
        %v9915 = vadd.f32 %v9544, %v9809
        %v9916 = vadd.f32 %v9545, %v9814
        %v9917 = vadd.f32 %v9546, %v9817
        %v9918 = vadd.f32 %v9547, %v9822
        %v9919 = vadd.f32 %v9548, %v9825
        %v9920 = vadd.f32 %v9549, %v9830
        %v9921 = vadd.f32 %v9550, %v9833
        %v9922 = vadd.f32 %v9551, %v9838
        %v9923 = vadd.f32 %v9552, %v9841
        %v9924 = vadd.f32 %v9553, %v9846
        %v9925 = vadd.f32 %v9554, %v9849
        %v9926 = vadd.f32 %v9555, %v9854
        %v9927 = vadd.f32 %v9556, %v9857
        %v9928 = vadd.f32 %v9557, %v9862
        %v9929 = vadd.f32 %v9558, %v9865
        %v9930 = vadd.f32 %v9559, %v9870
        %v9931 = vadd.f32 %v9560, %v9873
        %v9932 = vadd.f32 %v9561, %v9878
        %v9933 = vadd.f32 %v9562, %v9881
        %v9934 = vadd.f32 %v9563, %v9886
        %v9935 = vadd.f32 %v9564, %v9889
        %v9936 = vadd.f32 %v9565, %v9894
        %v9937 = vadd.f32 %v9566, %v9897
        %v9938 = vadd.f32 %v9567, %v9902
        %v9939 = vadd.f32 %v9568, %v9905
        %v9940 = vld [vmem:[%s9569] sm:$0xf]
        %v9941 = vld [vmem:[%s9569 + $0x4] sm:$0xf]
        %v9942 = vld [vmem:[%s9569 + $0x8] sm:$0x1]
        %v9943 = vld [vmem:[%s9569 + $0xc] sm:$0xf]
        %v9944 = vld [vmem:[%s9569 + $0x10] sm:$0xf]
        %v9945 = vld [vmem:[%s9569 + $0x14] sm:$0x1]
        %v9946 = vld [vmem:[%s9569 + $0x18] sm:$0xf]
        %v9947 = vld [vmem:[%s9569 + $0x1c] sm:$0xf]
        %v9948 = vld [vmem:[%s9569 + $0x20] sm:$0x1]
        %v9949 = vld [vmem:[%s9569 + $0x24] sm:$0xf]
        %v9950 = vld [vmem:[%s9569 + $0x28] sm:$0xf]
        %v9951 = vld [vmem:[%s9569 + $0x2c] sm:$0x1]
        %v9952 = vld [vmem:[%s9569 + $0x30] sm:$0xf]
        %v9953 = vld [vmem:[%s9569 + $0x34] sm:$0xf]
        %v9954 = vld [vmem:[%s9569 + $0x38] sm:$0x1]
        %v9955 = vld [vmem:[%s9569 + $0x3c] sm:$0xf]
        %v9956 = vld [vmem:[%s9569 + $0x40] sm:$0xf]
        %v9957 = vld [vmem:[%s9569 + $0x44] sm:$0x1]
        %v9958 = vld [vmem:[%s9569 + $0x48] sm:$0xf]
        %v9959 = vld [vmem:[%s9569 + $0x4c] sm:$0xf]
        %v9960 = vld [vmem:[%s9569 + $0x50] sm:$0x1]
        %v9961 = vld [vmem:[%s9569 + $0x54] sm:$0xf]
        %v9962 = vld [vmem:[%s9569 + $0x58] sm:$0xf]
        %v9963 = vld [vmem:[%s9569 + $0x5c] sm:$0x1]
        %v9964 = vld [vmem:[%s9569 + $0x60] sm:$0xf]
        %v9965 = vld [vmem:[%s9569 + $0x64] sm:$0xf]
        %v9966 = vld [vmem:[%s9569 + $0x68] sm:$0x1]
        %v9967 = vld [vmem:[%s9569 + $0x6c] sm:$0xf]
        %v9968 = vld [vmem:[%s9569 + $0x70] sm:$0xf]
        %v9969 = vld [vmem:[%s9569 + $0x74] sm:$0x1]
        %v9970 = vld [vmem:[%s9569 + $0x78] sm:$0xf]
        %v9971 = vld [vmem:[%s9569 + $0x7c] sm:$0xf]
        %v9972 = vld [vmem:[%s9569 + $0x80] sm:$0x1]
        %v9973 = vld [vmem:[%s9569 + $0x84] sm:$0xf]
        %v9974 = vld [vmem:[%s9569 + $0x88] sm:$0xf]
        %v9975 = vld [vmem:[%s9569 + $0x8c] sm:$0x1]
        %v9976 = vld [vmem:[%s9569 + $0x90] sm:$0xf]
        %v9977 = vld [vmem:[%s9569 + $0x94] sm:$0xf]
        %v9978 = vld [vmem:[%s9569 + $0x98] sm:$0x1]
        %v9979 = vld [vmem:[%s9569 + $0x9c] sm:$0xf]
        %v9980 = vld [vmem:[%s9569 + $0xa0] sm:$0xf]
        %v9981 = vld [vmem:[%s9569 + $0xa4] sm:$0x1]
        %v9982 = vld [vmem:[%s9569 + $0xa8] sm:$0xf]
        %v9983 = vld [vmem:[%s9569 + $0xac] sm:$0xf]
        %v9984 = vld [vmem:[%s9569 + $0xb0] sm:$0x1]
        %v9985 = vld [vmem:[%s9569 + $0xb4] sm:$0xf]
        %v9986 = vld [vmem:[%s9569 + $0xb8] sm:$0xf]
        %v9987 = vld [vmem:[%s9569 + $0xbc] sm:$0x1]
        %v9989 = vshrl.u32 %v9940, 16
        %v9991 = vrot.slane %v9989, 4
        %v9992 = vshll.u32 %v9940, 16
        %v9994 = vrot.slane %v9992, 5
        %v9995 = vor.u32 %v9991, %v9994
        %v9996 = vrot.slane %v9995, 4
        %v9998 = vshll.u32 %v9941, 16
        %v10000 = vrot.slane %v9998, 5
        %v10001 = vsel %vm1148, %v9996, %v10000
        %v10002 = vshrl.u32 %v9941, 16
        %v10004 = vrot.slane %v10002, 4
        %v10005 = vor.u32 %v10004, %v10000
        %v10006 = vrot.slane %v10005, 4
        %v10008 = vshll.u32 %v9942, 16
        %v10010 = vrot.slane %v10008, 5
        %v10011 = vsel %vm1148, %v10006, %v10010
        %v10013 = vshrl.u32 %v9943, 16
        %v10015 = vrot.slane %v10013, 4
        %v10016 = vshll.u32 %v9943, 16
        %v10018 = vrot.slane %v10016, 5
        %v10019 = vor.u32 %v10015, %v10018
        %v10020 = vrot.slane %v10019, 4
        %v10022 = vshll.u32 %v9944, 16
        %v10024 = vrot.slane %v10022, 5
        %v10025 = vsel %vm1148, %v10020, %v10024
        %v10026 = vshrl.u32 %v9944, 16
        %v10028 = vrot.slane %v10026, 4
        %v10029 = vor.u32 %v10028, %v10024
        %v10030 = vrot.slane %v10029, 4
        %v10032 = vshll.u32 %v9945, 16
        %v10034 = vrot.slane %v10032, 5
        %v10035 = vsel %vm1148, %v10030, %v10034
        %v10037 = vshrl.u32 %v9946, 16
        %v10039 = vrot.slane %v10037, 4
        %v10040 = vshll.u32 %v9946, 16
        %v10042 = vrot.slane %v10040, 5
        %v10043 = vor.u32 %v10039, %v10042
        %v10044 = vrot.slane %v10043, 4
        %v10046 = vshll.u32 %v9947, 16
        %v10048 = vrot.slane %v10046, 5
        %v10049 = vsel %vm1148, %v10044, %v10048
        %v10050 = vshrl.u32 %v9947, 16
        %v10052 = vrot.slane %v10050, 4
        %v10053 = vor.u32 %v10052, %v10048
        %v10054 = vrot.slane %v10053, 4
        %v10056 = vshll.u32 %v9948, 16
        %v10058 = vrot.slane %v10056, 5
        %v10059 = vsel %vm1148, %v10054, %v10058
        %v10061 = vshrl.u32 %v9949, 16
        %v10063 = vrot.slane %v10061, 4
        %v10064 = vshll.u32 %v9949, 16
        %v10066 = vrot.slane %v10064, 5
        %v10067 = vor.u32 %v10063, %v10066
        %v10068 = vrot.slane %v10067, 4
        %v10070 = vshll.u32 %v9950, 16
        %v10072 = vrot.slane %v10070, 5
        %v10073 = vsel %vm1148, %v10068, %v10072
        %v10074 = vshrl.u32 %v9950, 16
        %v10076 = vrot.slane %v10074, 4
        %v10077 = vor.u32 %v10076, %v10072
        %v10078 = vrot.slane %v10077, 4
        %v10080 = vshll.u32 %v9951, 16
        %v10082 = vrot.slane %v10080, 5
        %v10083 = vsel %vm1148, %v10078, %v10082
        %v10085 = vshrl.u32 %v9952, 16
        %v10087 = vrot.slane %v10085, 4
        %v10088 = vshll.u32 %v9952, 16
        %v10090 = vrot.slane %v10088, 5
        %v10091 = vor.u32 %v10087, %v10090
        %v10092 = vrot.slane %v10091, 4
        %v10094 = vshll.u32 %v9953, 16
        %v10096 = vrot.slane %v10094, 5
        %v10097 = vsel %vm1148, %v10092, %v10096
        %v10098 = vshrl.u32 %v9953, 16
        %v10100 = vrot.slane %v10098, 4
        %v10101 = vor.u32 %v10100, %v10096
        %v10102 = vrot.slane %v10101, 4
        %v10104 = vshll.u32 %v9954, 16
        %v10106 = vrot.slane %v10104, 5
        %v10107 = vsel %vm1148, %v10102, %v10106
        %v10109 = vshrl.u32 %v9955, 16
        %v10111 = vrot.slane %v10109, 4
        %v10112 = vshll.u32 %v9955, 16
        %v10114 = vrot.slane %v10112, 5
        %v10115 = vor.u32 %v10111, %v10114
        %v10116 = vrot.slane %v10115, 4
        %v10118 = vshll.u32 %v9956, 16
        %v10120 = vrot.slane %v10118, 5
        %v10121 = vsel %vm1148, %v10116, %v10120
        %v10122 = vshrl.u32 %v9956, 16
        %v10124 = vrot.slane %v10122, 4
        %v10125 = vor.u32 %v10124, %v10120
        %v10126 = vrot.slane %v10125, 4
        %v10128 = vshll.u32 %v9957, 16
        %v10130 = vrot.slane %v10128, 5
        %v10131 = vsel %vm1148, %v10126, %v10130
        %v10133 = vshrl.u32 %v9958, 16
        %v10135 = vrot.slane %v10133, 4
        %v10136 = vshll.u32 %v9958, 16
        %v10138 = vrot.slane %v10136, 5
        %v10139 = vor.u32 %v10135, %v10138
        %v10140 = vrot.slane %v10139, 4
        %v10142 = vshll.u32 %v9959, 16
        %v10144 = vrot.slane %v10142, 5
        %v10145 = vsel %vm1148, %v10140, %v10144
        %v10146 = vshrl.u32 %v9959, 16
        %v10148 = vrot.slane %v10146, 4
        %v10149 = vor.u32 %v10148, %v10144
        %v10150 = vrot.slane %v10149, 4
        %v10152 = vshll.u32 %v9960, 16
        %v10154 = vrot.slane %v10152, 5
        %v10155 = vsel %vm1148, %v10150, %v10154
        %v10157 = vshrl.u32 %v9961, 16
        %v10159 = vrot.slane %v10157, 4
        %v10160 = vshll.u32 %v9961, 16
        %v10162 = vrot.slane %v10160, 5
        %v10163 = vor.u32 %v10159, %v10162
        %v10164 = vrot.slane %v10163, 4
        %v10166 = vshll.u32 %v9962, 16
        %v10168 = vrot.slane %v10166, 5
        %v10169 = vsel %vm1148, %v10164, %v10168
        %v10170 = vshrl.u32 %v9962, 16
        %v10172 = vrot.slane %v10170, 4
        %v10173 = vor.u32 %v10172, %v10168
        %v10174 = vrot.slane %v10173, 4
        %v10176 = vshll.u32 %v9963, 16
        %v10178 = vrot.slane %v10176, 5
        %v10179 = vsel %vm1148, %v10174, %v10178
        %v10181 = vshrl.u32 %v9964, 16
        %v10183 = vrot.slane %v10181, 4
        %v10184 = vshll.u32 %v9964, 16
        %v10186 = vrot.slane %v10184, 5
        %v10187 = vor.u32 %v10183, %v10186
        %v10188 = vrot.slane %v10187, 4
        %v10190 = vshll.u32 %v9965, 16
        %v10192 = vrot.slane %v10190, 5
        %v10193 = vsel %vm1148, %v10188, %v10192
        %v10194 = vshrl.u32 %v9965, 16
        %v10196 = vrot.slane %v10194, 4
        %v10197 = vor.u32 %v10196, %v10192
        %v10198 = vrot.slane %v10197, 4
        %v10200 = vshll.u32 %v9966, 16
        %v10202 = vrot.slane %v10200, 5
        %v10203 = vsel %vm1148, %v10198, %v10202
        %v10205 = vshrl.u32 %v9967, 16
        %v10207 = vrot.slane %v10205, 4
        %v10208 = vshll.u32 %v9967, 16
        %v10210 = vrot.slane %v10208, 5
        %v10211 = vor.u32 %v10207, %v10210
        %v10212 = vrot.slane %v10211, 4
        %v10214 = vshll.u32 %v9968, 16
        %v10216 = vrot.slane %v10214, 5
        %v10217 = vsel %vm1148, %v10212, %v10216
        %v10218 = vshrl.u32 %v9968, 16
        %v10220 = vrot.slane %v10218, 4
        %v10221 = vor.u32 %v10220, %v10216
        %v10222 = vrot.slane %v10221, 4
        %v10224 = vshll.u32 %v9969, 16
        %v10226 = vrot.slane %v10224, 5
        %v10227 = vsel %vm1148, %v10222, %v10226
        %v10229 = vshrl.u32 %v9970, 16
        %v10231 = vrot.slane %v10229, 4
        %v10232 = vshll.u32 %v9970, 16
        %v10234 = vrot.slane %v10232, 5
        %v10235 = vor.u32 %v10231, %v10234
        %v10236 = vrot.slane %v10235, 4
        %v10238 = vshll.u32 %v9971, 16
        %v10240 = vrot.slane %v10238, 5
        %v10241 = vsel %vm1148, %v10236, %v10240
        %v10242 = vshrl.u32 %v9971, 16
        %v10244 = vrot.slane %v10242, 4
        %v10245 = vor.u32 %v10244, %v10240
        %v10246 = vrot.slane %v10245, 4
        %v10248 = vshll.u32 %v9972, 16
        %v10250 = vrot.slane %v10248, 5
        %v10251 = vsel %vm1148, %v10246, %v10250
        %v10253 = vshrl.u32 %v9973, 16
        %v10255 = vrot.slane %v10253, 4
        %v10256 = vshll.u32 %v9973, 16
        %v10258 = vrot.slane %v10256, 5
        %v10259 = vor.u32 %v10255, %v10258
        %v10260 = vrot.slane %v10259, 4
        %v10262 = vshll.u32 %v9974, 16
        %v10264 = vrot.slane %v10262, 5
        %v10265 = vsel %vm1148, %v10260, %v10264
        %v10266 = vshrl.u32 %v9974, 16
        %v10268 = vrot.slane %v10266, 4
        %v10269 = vor.u32 %v10268, %v10264
        %v10270 = vrot.slane %v10269, 4
        %v10272 = vshll.u32 %v9975, 16
        %v10274 = vrot.slane %v10272, 5
        %v10275 = vsel %vm1148, %v10270, %v10274
        %v10277 = vshrl.u32 %v9976, 16
        %v10279 = vrot.slane %v10277, 4
        %v10280 = vshll.u32 %v9976, 16
        %v10282 = vrot.slane %v10280, 5
        %v10283 = vor.u32 %v10279, %v10282
        %v10284 = vrot.slane %v10283, 4
        %v10286 = vshll.u32 %v9977, 16
        %v10288 = vrot.slane %v10286, 5
        %v10289 = vsel %vm1148, %v10284, %v10288
        %v10290 = vshrl.u32 %v9977, 16
        %v10292 = vrot.slane %v10290, 4
        %v10293 = vor.u32 %v10292, %v10288
        %v10294 = vrot.slane %v10293, 4
        %v10296 = vshll.u32 %v9978, 16
        %v10298 = vrot.slane %v10296, 5
        %v10299 = vsel %vm1148, %v10294, %v10298
        %v10301 = vshrl.u32 %v9979, 16
        %v10303 = vrot.slane %v10301, 4
        %v10304 = vshll.u32 %v9979, 16
        %v10306 = vrot.slane %v10304, 5
        %v10307 = vor.u32 %v10303, %v10306
        %v10308 = vrot.slane %v10307, 4
        %v10310 = vshll.u32 %v9980, 16
        %v10312 = vrot.slane %v10310, 5
        %v10313 = vsel %vm1148, %v10308, %v10312
        %v10314 = vshrl.u32 %v9980, 16
        %v10316 = vrot.slane %v10314, 4
        %v10317 = vor.u32 %v10316, %v10312
        %v10318 = vrot.slane %v10317, 4
        %v10320 = vshll.u32 %v9981, 16
        %v10322 = vrot.slane %v10320, 5
        %v10323 = vsel %vm1148, %v10318, %v10322
        %v10325 = vshrl.u32 %v9982, 16
        %v10327 = vrot.slane %v10325, 4
        %v10328 = vshll.u32 %v9982, 16
        %v10330 = vrot.slane %v10328, 5
        %v10331 = vor.u32 %v10327, %v10330
        %v10332 = vrot.slane %v10331, 4
        %v10334 = vshll.u32 %v9983, 16
        %v10336 = vrot.slane %v10334, 5
        %v10337 = vsel %vm1148, %v10332, %v10336
        %v10338 = vshrl.u32 %v9983, 16
        %v10340 = vrot.slane %v10338, 4
        %v10341 = vor.u32 %v10340, %v10336
        %v10342 = vrot.slane %v10341, 4
        %v10344 = vshll.u32 %v9984, 16
        %v10346 = vrot.slane %v10344, 5
        %v10347 = vsel %vm1148, %v10342, %v10346
        %v10349 = vshrl.u32 %v9985, 16
        %v10351 = vrot.slane %v10349, 4
        %v10352 = vshll.u32 %v9985, 16
        %v10354 = vrot.slane %v10352, 5
        %v10355 = vor.u32 %v10351, %v10354
        %v10356 = vrot.slane %v10355, 4
        %v10358 = vshll.u32 %v9986, 16
        %v10360 = vrot.slane %v10358, 5
        %v10361 = vsel %vm1148, %v10356, %v10360
        %v10362 = vshrl.u32 %v9986, 16
        %v10364 = vrot.slane %v10362, 4
        %v10365 = vor.u32 %v10364, %v10360
        %v10366 = vrot.slane %v10365, 4
        %v10368 = vshll.u32 %v9987, 16
        %v10370 = vrot.slane %v10368, 5
        %v10371 = vsel %vm1148, %v10366, %v10370
        %s10372 = scalar_lea.vmem [#allocation10], 112
        %v10373 = vld [vmem:[%s10372] sm:$0xf]
        %v10374 = vld [vmem:[%s10372 + $0x4] sm:$0xf]
        %v10375 = vld [vmem:[%s10372 + $0x8] sm:$0xf]
        %v10376 = vld [vmem:[%s10372 + $0xc] sm:$0xf]
        %v10377 = vunpack.c.l.b16 %v10001
        %v10378 = vunpack.c.l.b16 %v10011
        %v10379 = vunpack.c.l.b16 %v10025
        %v10380 = vunpack.c.l.b16 %v10035
        %v10381 = vunpack.c.l.b16 %v10049
        %v10382 = vunpack.c.l.b16 %v10059
        %v10383 = vunpack.c.l.b16 %v10073
        %v10384 = vunpack.c.l.b16 %v10083
        %v10385 = vunpack.c.l.b16 %v10097
        %v10386 = vunpack.c.l.b16 %v10107
        %v10387 = vunpack.c.l.b16 %v10121
        %v10388 = vunpack.c.l.b16 %v10131
        %v10389 = vunpack.c.l.b16 %v10145
        %v10390 = vunpack.c.l.b16 %v10155
        %v10391 = vunpack.c.l.b16 %v10169
        %v10392 = vunpack.c.l.b16 %v10179
        %v10393 = vunpack.c.l.b16 %v10193
        %v10394 = vunpack.c.l.b16 %v10203
        %v10395 = vunpack.c.l.b16 %v10217
        %v10396 = vunpack.c.l.b16 %v10227
        %v10397 = vunpack.c.l.b16 %v10241
        %v10398 = vunpack.c.l.b16 %v10251
        %v10399 = vunpack.c.l.b16 %v10265
        %v10400 = vunpack.c.l.b16 %v10275
        %v10401 = vunpack.c.l.b16 %v10289
        %v10402 = vunpack.c.l.b16 %v10299
        %v10403 = vunpack.c.l.b16 %v10313
        %v10404 = vunpack.c.l.b16 %v10323
        %v10405 = vunpack.c.l.b16 %v10337
        %v10406 = vunpack.c.l.b16 %v10347
        %v10407 = vunpack.c.l.b16 %v10361
        %v10408 = vunpack.c.l.b16 %v10371
        %v10409 = vpack.c.b16 %v10378, %v10377
        %v10410 = vpack.c.b16 %v10380, %v10379
        %v10411 = vpack.c.b16 %v10382, %v10381
        %v10412 = vpack.c.b16 %v10384, %v10383
        %v10413 = vpack.c.b16 %v10386, %v10385
        %v10414 = vpack.c.b16 %v10388, %v10387
        %v10415 = vpack.c.b16 %v10390, %v10389
        %v10416 = vpack.c.b16 %v10392, %v10391
        %v10417 = vpack.c.b16 %v10394, %v10393
        %v10418 = vpack.c.b16 %v10396, %v10395
        %v10419 = vpack.c.b16 %v10398, %v10397
        %v10420 = vpack.c.b16 %v10400, %v10399
        %v10421 = vpack.c.b16 %v10402, %v10401
        %v10422 = vpack.c.b16 %v10404, %v10403
        %v10423 = vpack.c.b16 %v10406, %v10405
        %v10424 = vpack.c.b16 %v10408, %v10407
        %v10429 = vunpack.c.l.b16 %v10373
        %v10430 = vunpack.c.l.b16 %v10374
        %v10431 = vunpack.c.l.b16 %v10375
        %v10432 = vunpack.c.l.b16 %v10376
        %v10433 = vpack.c.b16 %v10430, %v10429
        %v10434 = vpack.c.b16 %v10432, %v10431
        %v10438 = vsel %vm7002, %v10409, 0
        %v10441 = vsel %vm7002, %v10410, 0
        %v10444 = vsel %vm7002, %v10411, 0
        %v10447 = vsel %vm7002, %v10412, 0
        %v10450 = vsel %vm7002, %v10413, 0
        %v10453 = vsel %vm7002, %v10414, 0
        %v10456 = vsel %vm7002, %v10415, 0
        %v10459 = vsel %vm7002, %v10416, 0
        %v10462 = vsel %vm7002, %v10417, 0
        %v10465 = vsel %vm7002, %v10418, 0
        %v10468 = vsel %vm7002, %v10419, 0
        %v10471 = vsel %vm7002, %v10420, 0
        %v10474 = vsel %vm7002, %v10421, 0
        %v10477 = vsel %vm7002, %v10422, 0
        %v10480 = vsel %vm7002, %v10423, 0
        %v10483 = vsel %vm7002, %v10424, 0
        %10485 = vmatprep.subr.bf16.mxu0 0
        %10486 = vmatpush1.bf16.msra.mxu0 %v10433
        %10487 = vmatprep.subr.bf16.mxu0 0
        %10488 = vmatpush1.bf16.msra.mxu0 %v10434
        %10489 = vmatprep.subr.bf16.mxu0 0
        %10490 = vmatpush1.bf16.msra.mxu0 0
        %10491 = vmatprep.subr.bf16.mxu0 0
        %10492 = vmatpush1.bf16.msra.mxu0 0
        %10493 = vmatprep.subr.bf16.mxu0 0
        %10494 = vmatpush1.bf16.msra.mxu0 0
        %10495 = vmatprep.subr.bf16.mxu0 0
        %10496 = vmatpush1.bf16.msra.mxu0 0
        %10497 = vmatprep.subr.bf16.mxu0 0
        %10498 = vmatpush1.bf16.msra.mxu0 0
        %10499 = vmatprep.subr.bf16.mxu0 0
        %10500 = vmatpush1.bf16.msra.mxu0 0
        %10501 = vmatprep.subr.bf16.mxu0 0
        %10502 = vmatpush1.bf16.msra.mxu0 0
        %10503 = vmatprep.subr.bf16.mxu0 0
        %10504 = vmatpush1.bf16.msra.mxu0 0
        %10505 = vmatprep.subr.bf16.mxu0 0
        %10506 = vmatpush1.bf16.msra.mxu0 0
        %10507 = vmatprep.subr.bf16.mxu0 0
        %10508 = vmatpush1.bf16.msra.mxu0 0
        %10509 = vmatprep.subr.bf16.mxu0 0
        %10510 = vmatpush1.bf16.msra.mxu0 0
        %10511 = vmatprep.subr.bf16.mxu0 0
        %10512 = vmatpush1.bf16.msra.mxu0 0
        %10513 = vmatprep.subr.bf16.mxu0 0
        %10514 = vmatpush1.bf16.msra.mxu0 0
        %10515 = vmatprep.subr.bf16.mxu0 0
        %10516 = vmatpush1.bf16.msra.mxu0 0
        %10517 = vmatprep.mubr.bf16.mxu0 0
        %10518 = vmatmul.mubr.bf16.gmra.mrb[0].mxu0 %v10438
        %v10519 = vpop.f32.mrb[0].mxu0
        %v10520 = vadd.f32 0.0, %v10519
        %v10521 = vpop.f32.mrb[0].mxu0
        %v10522 = vpop.f32.mrb[0].mxu0
        %v10523 = vadd.f32 0.0, %v10522
        %v10524 = vpop.f32.mrb[0].mxu0
        %10525 = vmatprep.mubr.bf16.mxu0 0
        %10526 = vmatmul.mubr.bf16.gmra.mrb[0].mxu0 %v10441
        %v10527 = vpop.f32.mrb[0].mxu0
        %v10528 = vadd.f32 0.0, %v10527
        %v10529 = vpop.f32.mrb[0].mxu0
        %v10530 = vpop.f32.mrb[0].mxu0
        %v10531 = vadd.f32 0.0, %v10530
        %v10532 = vpop.f32.mrb[0].mxu0
        %10533 = vmatprep.mubr.bf16.mxu0 0
        %10534 = vmatmul.mubr.bf16.gmra.mrb[0].mxu0 %v10444
        %v10535 = vpop.f32.mrb[0].mxu0
        %v10536 = vadd.f32 0.0, %v10535
        %v10537 = vpop.f32.mrb[0].mxu0
        %v10538 = vpop.f32.mrb[0].mxu0
        %v10539 = vadd.f32 0.0, %v10538
        %v10540 = vpop.f32.mrb[0].mxu0
        %10541 = vmatprep.mubr.bf16.mxu0 0
        %10542 = vmatmul.mubr.bf16.gmra.mrb[0].mxu0 %v10447
        %v10543 = vpop.f32.mrb[0].mxu0
        %v10544 = vadd.f32 0.0, %v10543
        %v10545 = vpop.f32.mrb[0].mxu0
        %v10546 = vpop.f32.mrb[0].mxu0
        %v10547 = vadd.f32 0.0, %v10546
        %v10548 = vpop.f32.mrb[0].mxu0
        %10549 = vmatprep.mubr.bf16.mxu0 0
        %10550 = vmatmul.mubr.bf16.gmra.mrb[0].mxu0 %v10450
        %v10551 = vpop.f32.mrb[0].mxu0
        %v10552 = vadd.f32 0.0, %v10551
        %v10553 = vpop.f32.mrb[0].mxu0
        %v10554 = vpop.f32.mrb[0].mxu0
        %v10555 = vadd.f32 0.0, %v10554
        %v10556 = vpop.f32.mrb[0].mxu0
        %10557 = vmatprep.mubr.bf16.mxu0 0
        %10558 = vmatmul.mubr.bf16.gmra.mrb[0].mxu0 %v10453
        %v10559 = vpop.f32.mrb[0].mxu0
        %v10560 = vadd.f32 0.0, %v10559
        %v10561 = vpop.f32.mrb[0].mxu0
        %v10562 = vpop.f32.mrb[0].mxu0
        %v10563 = vadd.f32 0.0, %v10562
        %v10564 = vpop.f32.mrb[0].mxu0
        %10565 = vmatprep.mubr.bf16.mxu0 0
        %10566 = vmatmul.mubr.bf16.gmra.mrb[0].mxu0 %v10456
        %v10567 = vpop.f32.mrb[0].mxu0
        %v10568 = vadd.f32 0.0, %v10567
        %v10569 = vpop.f32.mrb[0].mxu0
        %v10570 = vpop.f32.mrb[0].mxu0
        %v10571 = vadd.f32 0.0, %v10570
        %v10572 = vpop.f32.mrb[0].mxu0
        %10573 = vmatprep.mubr.bf16.mxu0 0
        %10574 = vmatmul.mubr.bf16.gmra.mrb[0].mxu0 %v10459
        %v10575 = vpop.f32.mrb[0].mxu0
        %v10576 = vadd.f32 0.0, %v10575
        %v10577 = vpop.f32.mrb[0].mxu0
        %v10578 = vpop.f32.mrb[0].mxu0
        %v10579 = vadd.f32 0.0, %v10578
        %v10580 = vpop.f32.mrb[0].mxu0
        %10581 = vmatprep.mubr.bf16.mxu0 0
        %10582 = vmatmul.mubr.bf16.gmra.mrb[0].mxu0 %v10462
        %v10583 = vpop.f32.mrb[0].mxu0
        %v10584 = vadd.f32 0.0, %v10583
        %v10585 = vpop.f32.mrb[0].mxu0
        %v10586 = vpop.f32.mrb[0].mxu0
        %v10587 = vadd.f32 0.0, %v10586
        %v10588 = vpop.f32.mrb[0].mxu0
        %10589 = vmatprep.mubr.bf16.mxu0 0
        %10590 = vmatmul.mubr.bf16.gmra.mrb[0].mxu0 %v10465
        %v10591 = vpop.f32.mrb[0].mxu0
        %v10592 = vadd.f32 0.0, %v10591
        %v10593 = vpop.f32.mrb[0].mxu0
        %v10594 = vpop.f32.mrb[0].mxu0
        %v10595 = vadd.f32 0.0, %v10594
        %v10596 = vpop.f32.mrb[0].mxu0
        %10597 = vmatprep.mubr.bf16.mxu0 0
        %10598 = vmatmul.mubr.bf16.gmra.mrb[0].mxu0 %v10468
        %v10599 = vpop.f32.mrb[0].mxu0
        %v10600 = vadd.f32 0.0, %v10599
        %v10601 = vpop.f32.mrb[0].mxu0
        %v10602 = vpop.f32.mrb[0].mxu0
        %v10603 = vadd.f32 0.0, %v10602
        %v10604 = vpop.f32.mrb[0].mxu0
        %10605 = vmatprep.mubr.bf16.mxu0 0
        %10606 = vmatmul.mubr.bf16.gmra.mrb[0].mxu0 %v10471
        %v10607 = vpop.f32.mrb[0].mxu0
        %v10608 = vadd.f32 0.0, %v10607
        %v10609 = vpop.f32.mrb[0].mxu0
        %v10610 = vpop.f32.mrb[0].mxu0
        %v10611 = vadd.f32 0.0, %v10610
        %v10612 = vpop.f32.mrb[0].mxu0
        %10613 = vmatprep.mubr.bf16.mxu0 0
        %10614 = vmatmul.mubr.bf16.gmra.mrb[0].mxu0 %v10474
        %v10615 = vpop.f32.mrb[0].mxu0
        %v10616 = vadd.f32 0.0, %v10615
        %v10617 = vpop.f32.mrb[0].mxu0
        %v10618 = vpop.f32.mrb[0].mxu0
        %v10619 = vadd.f32 0.0, %v10618
        %v10620 = vpop.f32.mrb[0].mxu0
        %10621 = vmatprep.mubr.bf16.mxu0 0
        %10622 = vmatmul.mubr.bf16.gmra.mrb[0].mxu0 %v10477
        %v10623 = vpop.f32.mrb[0].mxu0
        %v10624 = vadd.f32 0.0, %v10623
        %v10625 = vpop.f32.mrb[0].mxu0
        %v10626 = vpop.f32.mrb[0].mxu0
        %v10627 = vadd.f32 0.0, %v10626
        %v10628 = vpop.f32.mrb[0].mxu0
        %10629 = vmatprep.mubr.bf16.mxu0 0
        %10630 = vmatmul.mubr.bf16.gmra.mrb[0].mxu0 %v10480
        %v10631 = vpop.f32.mrb[0].mxu0
        %v10632 = vadd.f32 0.0, %v10631
        %v10633 = vpop.f32.mrb[0].mxu0
        %v10634 = vpop.f32.mrb[0].mxu0
        %v10635 = vadd.f32 0.0, %v10634
        %v10636 = vpop.f32.mrb[0].mxu0
        %10637 = vmatprep.mubr.bf16.mxu0 0
        %10638 = vmatmul.mubr.bf16.gmra.mrb[0].mxu0 %v10483
        %v10639 = vpop.f32.mrb[0].mxu0
        %v10640 = vadd.f32 0.0, %v10639
        %v10641 = vpop.f32.mrb[0].mxu0
        %v10642 = vpop.f32.mrb[0].mxu0
        %v10643 = vadd.f32 0.0, %v10642
        %v10644 = vpop.f32.mrb[0].mxu0
        %10645 = vdwg.mxu0
        %v10646 = vadd.f32 %v9908, %v10520
        %v10647 = vadd.f32 %v9909, %v10523
        %v10648 = vadd.f32 %v9910, %v10528
        %v10649 = vadd.f32 %v9911, %v10531
        %v10650 = vadd.f32 %v9912, %v10536
        %v10651 = vadd.f32 %v9913, %v10539
        %v10652 = vadd.f32 %v9914, %v10544
        %v10653 = vadd.f32 %v9915, %v10547
        %v10654 = vadd.f32 %v9916, %v10552
        %v10655 = vadd.f32 %v9917, %v10555
        %v10656 = vadd.f32 %v9918, %v10560
        %v10657 = vadd.f32 %v9919, %v10563
        %v10658 = vadd.f32 %v9920, %v10568
        %v10659 = vadd.f32 %v9921, %v10571
        %v10660 = vadd.f32 %v9922, %v10576
        %v10661 = vadd.f32 %v9923, %v10579
        %v10662 = vadd.f32 %v9924, %v10584
        %v10663 = vadd.f32 %v9925, %v10587
        %v10664 = vadd.f32 %v9926, %v10592
        %v10665 = vadd.f32 %v9927, %v10595
        %v10666 = vadd.f32 %v9928, %v10600
        %v10667 = vadd.f32 %v9929, %v10603
        %v10668 = vadd.f32 %v9930, %v10608
        %v10669 = vadd.f32 %v9931, %v10611
        %v10670 = vadd.f32 %v9932, %v10616
        %v10671 = vadd.f32 %v9933, %v10619
        %v10672 = vadd.f32 %v9934, %v10624
        %v10673 = vadd.f32 %v9935, %v10627
        %v10674 = vadd.f32 %v9936, %v10632
        %v10675 = vadd.f32 %v9937, %v10635
        %v10676 = vadd.f32 %v9938, %v10640
        %v10677 = vadd.f32 %v9939, %v10643
        %v10678 = vld [vmem:[%s9569] sm:$0xe]
        %v10679 = vld [vmem:[%s9569 + $0xc] sm:$0xe]
        %v10680 = vld [vmem:[%s9569 + $0x18] sm:$0xe]
        %v10681 = vld [vmem:[%s9569 + $0x24] sm:$0xe]
        %v10682 = vld [vmem:[%s9569 + $0x30] sm:$0xe]
        %v10683 = vld [vmem:[%s9569 + $0x3c] sm:$0xe]
        %v10684 = vld [vmem:[%s9569 + $0x48] sm:$0xe]
        %v10685 = vld [vmem:[%s9569 + $0x54] sm:$0xe]
        %v10686 = vld [vmem:[%s9569 + $0x60] sm:$0xe]
        %v10687 = vld [vmem:[%s9569 + $0x6c] sm:$0xe]
        %v10688 = vld [vmem:[%s9569 + $0x78] sm:$0xe]
        %v10689 = vld [vmem:[%s9569 + $0x84] sm:$0xe]
        %v10690 = vld [vmem:[%s9569 + $0x90] sm:$0xe]
        %v10691 = vld [vmem:[%s9569 + $0x9c] sm:$0xe]
        %v10692 = vld [vmem:[%s9569 + $0xa8] sm:$0xe]
        %v10693 = vld [vmem:[%s9569 + $0xb4] sm:$0xe]
        %v10742 = vrot.slane %v10678, 5
        %v10743 = vrot.slane %v10742, 4
        %v10744 = vrot.slane %v9941, 5
        %v10745 = vsel %vm2187, %v10743, %v10744
        %v10746 = vrot.slane %v10744, 4
        %v10747 = vrot.slane %v9942, 5
        %v10748 = vsel %vm2187, %v10746, %v10747
        %v10749 = vrot.slane %v10679, 5
        %v10750 = vrot.slane %v10749, 4
        %v10751 = vrot.slane %v9944, 5
        %v10752 = vsel %vm2187, %v10750, %v10751
        %v10753 = vrot.slane %v10751, 4
        %v10754 = vrot.slane %v9945, 5
        %v10755 = vsel %vm2187, %v10753, %v10754
        %v10756 = vrot.slane %v10680, 5
        %v10757 = vrot.slane %v10756, 4
        %v10758 = vrot.slane %v9947, 5
        %v10759 = vsel %vm2187, %v10757, %v10758
        %v10760 = vrot.slane %v10758, 4
        %v10761 = vrot.slane %v9948, 5
        %v10762 = vsel %vm2187, %v10760, %v10761
        %v10763 = vrot.slane %v10681, 5
        %v10764 = vrot.slane %v10763, 4
        %v10765 = vrot.slane %v9950, 5
        %v10766 = vsel %vm2187, %v10764, %v10765
        %v10767 = vrot.slane %v10765, 4
        %v10768 = vrot.slane %v9951, 5
        %v10769 = vsel %vm2187, %v10767, %v10768
        %v10770 = vrot.slane %v10682, 5
        %v10771 = vrot.slane %v10770, 4
        %v10772 = vrot.slane %v9953, 5
        %v10773 = vsel %vm2187, %v10771, %v10772
        %v10774 = vrot.slane %v10772, 4
        %v10775 = vrot.slane %v9954, 5
        %v10776 = vsel %vm2187, %v10774, %v10775
        %v10777 = vrot.slane %v10683, 5
        %v10778 = vrot.slane %v10777, 4
        %v10779 = vrot.slane %v9956, 5
        %v10780 = vsel %vm2187, %v10778, %v10779
        %v10781 = vrot.slane %v10779, 4
        %v10782 = vrot.slane %v9957, 5
        %v10783 = vsel %vm2187, %v10781, %v10782
        %v10784 = vrot.slane %v10684, 5
        %v10785 = vrot.slane %v10784, 4
        %v10786 = vrot.slane %v9959, 5
        %v10787 = vsel %vm2187, %v10785, %v10786
        %v10788 = vrot.slane %v10786, 4
        %v10789 = vrot.slane %v9960, 5
        %v10790 = vsel %vm2187, %v10788, %v10789
        %v10791 = vrot.slane %v10685, 5
        %v10792 = vrot.slane %v10791, 4
        %v10793 = vrot.slane %v9962, 5
        %v10794 = vsel %vm2187, %v10792, %v10793
        %v10795 = vrot.slane %v10793, 4
        %v10796 = vrot.slane %v9963, 5
        %v10797 = vsel %vm2187, %v10795, %v10796
        %v10798 = vrot.slane %v10686, 5
        %v10799 = vrot.slane %v10798, 4
        %v10800 = vrot.slane %v9965, 5
        %v10801 = vsel %vm2187, %v10799, %v10800
        %v10802 = vrot.slane %v10800, 4
        %v10803 = vrot.slane %v9966, 5
        %v10804 = vsel %vm2187, %v10802, %v10803
        %v10805 = vrot.slane %v10687, 5
        %v10806 = vrot.slane %v10805, 4
        %v10807 = vrot.slane %v9968, 5
        %v10808 = vsel %vm2187, %v10806, %v10807
        %v10809 = vrot.slane %v10807, 4
        %v10810 = vrot.slane %v9969, 5
        %v10811 = vsel %vm2187, %v10809, %v10810
        %v10812 = vrot.slane %v10688, 5
        %v10813 = vrot.slane %v10812, 4
        %v10814 = vrot.slane %v9971, 5
        %v10815 = vsel %vm2187, %v10813, %v10814
        %v10816 = vrot.slane %v10814, 4
        %v10817 = vrot.slane %v9972, 5
        %v10818 = vsel %vm2187, %v10816, %v10817
        %v10819 = vrot.slane %v10689, 5
        %v10820 = vrot.slane %v10819, 4
        %v10821 = vrot.slane %v9974, 5
        %v10822 = vsel %vm2187, %v10820, %v10821
        %v10823 = vrot.slane %v10821, 4
        %v10824 = vrot.slane %v9975, 5
        %v10825 = vsel %vm2187, %v10823, %v10824
        %v10826 = vrot.slane %v10690, 5
        %v10827 = vrot.slane %v10826, 4
        %v10828 = vrot.slane %v9977, 5
        %v10829 = vsel %vm2187, %v10827, %v10828
        %v10830 = vrot.slane %v10828, 4
        %v10831 = vrot.slane %v9978, 5
        %v10832 = vsel %vm2187, %v10830, %v10831
        %v10833 = vrot.slane %v10691, 5
        %v10834 = vrot.slane %v10833, 4
        %v10835 = vrot.slane %v9980, 5
        %v10836 = vsel %vm2187, %v10834, %v10835
        %v10837 = vrot.slane %v10835, 4
        %v10838 = vrot.slane %v9981, 5
        %v10839 = vsel %vm2187, %v10837, %v10838
        %v10840 = vrot.slane %v10692, 5
        %v10841 = vrot.slane %v10840, 4
        %v10842 = vrot.slane %v9983, 5
        %v10843 = vsel %vm2187, %v10841, %v10842
        %v10844 = vrot.slane %v10842, 4
        %v10845 = vrot.slane %v9984, 5
        %v10846 = vsel %vm2187, %v10844, %v10845
        %v10847 = vrot.slane %v10693, 5
        %v10848 = vrot.slane %v10847, 4
        %v10849 = vrot.slane %v9986, 5
        %v10850 = vsel %vm2187, %v10848, %v10849
        %v10851 = vrot.slane %v10849, 4
        %v10852 = vrot.slane %v9987, 5
        %v10853 = vsel %vm2187, %v10851, %v10852
        %s10854 = scalar_lea.vmem [#allocation10], 128
        %v10855 = vld [vmem:[%s10854] sm:$0xf]
        %v10856 = vld [vmem:[%s10854 + $0x4] sm:$0xf]
        %v10857 = vld [vmem:[%s10854 + $0x8] sm:$0xf]
        %v10858 = vld [vmem:[%s10854 + $0xc] sm:$0xf]
        %v10859 = vunpack.c.l.b16 %v10745
        %v10860 = vunpack.c.l.b16 %v10748
        %v10861 = vunpack.c.l.b16 %v10752
        %v10862 = vunpack.c.l.b16 %v10755
        %v10863 = vunpack.c.l.b16 %v10759
        %v10864 = vunpack.c.l.b16 %v10762
        %v10865 = vunpack.c.l.b16 %v10766
        %v10866 = vunpack.c.l.b16 %v10769
        %v10867 = vunpack.c.l.b16 %v10773
        %v10868 = vunpack.c.l.b16 %v10776
        %v10869 = vunpack.c.l.b16 %v10780
        %v10870 = vunpack.c.l.b16 %v10783
        %v10871 = vunpack.c.l.b16 %v10787
        %v10872 = vunpack.c.l.b16 %v10790
        %v10873 = vunpack.c.l.b16 %v10794
        %v10874 = vunpack.c.l.b16 %v10797
        %v10875 = vunpack.c.l.b16 %v10801
        %v10876 = vunpack.c.l.b16 %v10804
        %v10877 = vunpack.c.l.b16 %v10808
        %v10878 = vunpack.c.l.b16 %v10811
        %v10879 = vunpack.c.l.b16 %v10815
        %v10880 = vunpack.c.l.b16 %v10818
        %v10881 = vunpack.c.l.b16 %v10822
        %v10882 = vunpack.c.l.b16 %v10825
        %v10883 = vunpack.c.l.b16 %v10829
        %v10884 = vunpack.c.l.b16 %v10832
        %v10885 = vunpack.c.l.b16 %v10836
        %v10886 = vunpack.c.l.b16 %v10839
        %v10887 = vunpack.c.l.b16 %v10843
        %v10888 = vunpack.c.l.b16 %v10846
        %v10889 = vunpack.c.l.b16 %v10850
        %v10890 = vunpack.c.l.b16 %v10853
        %v10891 = vpack.c.b16 %v10860, %v10859
        %v10892 = vpack.c.b16 %v10862, %v10861
        %v10893 = vpack.c.b16 %v10864, %v10863
        %v10894 = vpack.c.b16 %v10866, %v10865
        %v10895 = vpack.c.b16 %v10868, %v10867
        %v10896 = vpack.c.b16 %v10870, %v10869
        %v10897 = vpack.c.b16 %v10872, %v10871
        %v10898 = vpack.c.b16 %v10874, %v10873
        %v10899 = vpack.c.b16 %v10876, %v10875
        %v10900 = vpack.c.b16 %v10878, %v10877
        %v10901 = vpack.c.b16 %v10880, %v10879
        %v10902 = vpack.c.b16 %v10882, %v10881
        %v10903 = vpack.c.b16 %v10884, %v10883
        %v10904 = vpack.c.b16 %v10886, %v10885
        %v10905 = vpack.c.b16 %v10888, %v10887
        %v10906 = vpack.c.b16 %v10890, %v10889
        %v10911 = vunpack.c.l.b16 %v10855
        %v10912 = vunpack.c.l.b16 %v10856
        %v10913 = vunpack.c.l.b16 %v10857
        %v10914 = vunpack.c.l.b16 %v10858
        %v10915 = vpack.c.b16 %v10912, %v10911
        %v10916 = vpack.c.b16 %v10914, %v10913
        %v10920 = vsel %vm7002, %v10891, 0
        %v10923 = vsel %vm7002, %v10892, 0
        %v10926 = vsel %vm7002, %v10893, 0
        %v10929 = vsel %vm7002, %v10894, 0
        %v10932 = vsel %vm7002, %v10895, 0
        %v10935 = vsel %vm7002, %v10896, 0
        %v10938 = vsel %vm7002, %v10897, 0
        %v10941 = vsel %vm7002, %v10898, 0
        %v10944 = vsel %vm7002, %v10899, 0
        %v10947 = vsel %vm7002, %v10900, 0
        %v10950 = vsel %vm7002, %v10901, 0
        %v10953 = vsel %vm7002, %v10902, 0
        %v10956 = vsel %vm7002, %v10903, 0
        %v10959 = vsel %vm7002, %v10904, 0
        %v10962 = vsel %vm7002, %v10905, 0
        %v10965 = vsel %vm7002, %v10906, 0
        %10967 = vmatprep.subr.bf16.mxu0 0
        %10968 = vmatpush1.bf16.msra.mxu0 %v10915
        %10969 = vmatprep.subr.bf16.mxu0 0
        %10970 = vmatpush1.bf16.msra.mxu0 %v10916
        %10971 = vmatprep.subr.bf16.mxu0 0
        %10972 = vmatpush1.bf16.msra.mxu0 0
        %10973 = vmatprep.subr.bf16.mxu0 0
        %10974 = vmatpush1.bf16.msra.mxu0 0
        %10975 = vmatprep.subr.bf16.mxu0 0
        %10976 = vmatpush1.bf16.msra.mxu0 0
        %10977 = vmatprep.subr.bf16.mxu0 0
        %10978 = vmatpush1.bf16.msra.mxu0 0
        %10979 = vmatprep.subr.bf16.mxu0 0
        %10980 = vmatpush1.bf16.msra.mxu0 0
        %10981 = vmatprep.subr.bf16.mxu0 0
        %10982 = vmatpush1.bf16.msra.mxu0 0
        %10983 = vmatprep.subr.bf16.mxu0 0
        %10984 = vmatpush1.bf16.msra.mxu0 0
        %10985 = vmatprep.subr.bf16.mxu0 0
        %10986 = vmatpush1.bf16.msra.mxu0 0
        %10987 = vmatprep.subr.bf16.mxu0 0
        %10988 = vmatpush1.bf16.msra.mxu0 0
        %10989 = vmatprep.subr.bf16.mxu0 0
        %10990 = vmatpush1.bf16.msra.mxu0 0
        %10991 = vmatprep.subr.bf16.mxu0 0
        %10992 = vmatpush1.bf16.msra.mxu0 0
        %10993 = vmatprep.subr.bf16.mxu0 0
        %10994 = vmatpush1.bf16.msra.mxu0 0
        %10995 = vmatprep.subr.bf16.mxu0 0
        %10996 = vmatpush1.bf16.msra.mxu0 0
        %10997 = vmatprep.subr.bf16.mxu0 0
        %10998 = vmatpush1.bf16.msra.mxu0 0
        %10999 = vmatprep.mubr.bf16.mxu0 0
        %11000 = vmatmul.mubr.bf16.gmra.mrb[0].mxu0 %v10920
        %v11001 = vpop.f32.mrb[0].mxu0
        %v11002 = vadd.f32 0.0, %v11001
        %v11003 = vpop.f32.mrb[0].mxu0
        %v11004 = vpop.f32.mrb[0].mxu0
        %v11005 = vadd.f32 0.0, %v11004
        %v11006 = vpop.f32.mrb[0].mxu0
        %11007 = vmatprep.mubr.bf16.mxu0 0
        %11008 = vmatmul.mubr.bf16.gmra.mrb[0].mxu0 %v10923
        %v11009 = vpop.f32.mrb[0].mxu0
        %v11010 = vadd.f32 0.0, %v11009
        %v11011 = vpop.f32.mrb[0].mxu0
        %v11012 = vpop.f32.mrb[0].mxu0
        %v11013 = vadd.f32 0.0, %v11012
        %v11014 = vpop.f32.mrb[0].mxu0
        %11015 = vmatprep.mubr.bf16.mxu0 0
        %11016 = vmatmul.mubr.bf16.gmra.mrb[0].mxu0 %v10926
        %v11017 = vpop.f32.mrb[0].mxu0
        %v11018 = vadd.f32 0.0, %v11017
        %v11019 = vpop.f32.mrb[0].mxu0
        %v11020 = vpop.f32.mrb[0].mxu0
        %v11021 = vadd.f32 0.0, %v11020
        %v11022 = vpop.f32.mrb[0].mxu0
        %11023 = vmatprep.mubr.bf16.mxu0 0
        %11024 = vmatmul.mubr.bf16.gmra.mrb[0].mxu0 %v10929
        %v11025 = vpop.f32.mrb[0].mxu0
        %v11026 = vadd.f32 0.0, %v11025
        %v11027 = vpop.f32.mrb[0].mxu0
        %v11028 = vpop.f32.mrb[0].mxu0
        %v11029 = vadd.f32 0.0, %v11028
        %v11030 = vpop.f32.mrb[0].mxu0
        %11031 = vmatprep.mubr.bf16.mxu0 0
        %11032 = vmatmul.mubr.bf16.gmra.mrb[0].mxu0 %v10932
        %v11033 = vpop.f32.mrb[0].mxu0
        %v11034 = vadd.f32 0.0, %v11033
        %v11035 = vpop.f32.mrb[0].mxu0
        %v11036 = vpop.f32.mrb[0].mxu0
        %v11037 = vadd.f32 0.0, %v11036
        %v11038 = vpop.f32.mrb[0].mxu0
        %11039 = vmatprep.mubr.bf16.mxu0 0
        %11040 = vmatmul.mubr.bf16.gmra.mrb[0].mxu0 %v10935
        %v11041 = vpop.f32.mrb[0].mxu0
        %v11042 = vadd.f32 0.0, %v11041
        %v11043 = vpop.f32.mrb[0].mxu0
        %v11044 = vpop.f32.mrb[0].mxu0
        %v11045 = vadd.f32 0.0, %v11044
        %v11046 = vpop.f32.mrb[0].mxu0
        %11047 = vmatprep.mubr.bf16.mxu0 0
        %11048 = vmatmul.mubr.bf16.gmra.mrb[0].mxu0 %v10938
        %v11049 = vpop.f32.mrb[0].mxu0
        %v11050 = vadd.f32 0.0, %v11049
        %v11051 = vpop.f32.mrb[0].mxu0
        %v11052 = vpop.f32.mrb[0].mxu0
        %v11053 = vadd.f32 0.0, %v11052
        %v11054 = vpop.f32.mrb[0].mxu0
        %11055 = vmatprep.mubr.bf16.mxu0 0
        %11056 = vmatmul.mubr.bf16.gmra.mrb[0].mxu0 %v10941
        %v11057 = vpop.f32.mrb[0].mxu0
        %v11058 = vadd.f32 0.0, %v11057
        %v11059 = vpop.f32.mrb[0].mxu0
        %v11060 = vpop.f32.mrb[0].mxu0
        %v11061 = vadd.f32 0.0, %v11060
        %v11062 = vpop.f32.mrb[0].mxu0
        %11063 = vmatprep.mubr.bf16.mxu0 0
        %11064 = vmatmul.mubr.bf16.gmra.mrb[0].mxu0 %v10944
        %v11065 = vpop.f32.mrb[0].mxu0
        %v11066 = vadd.f32 0.0, %v11065
        %v11067 = vpop.f32.mrb[0].mxu0
        %v11068 = vpop.f32.mrb[0].mxu0
        %v11069 = vadd.f32 0.0, %v11068
        %v11070 = vpop.f32.mrb[0].mxu0
        %11071 = vmatprep.mubr.bf16.mxu0 0
        %11072 = vmatmul.mubr.bf16.gmra.mrb[0].mxu0 %v10947
        %v11073 = vpop.f32.mrb[0].mxu0
        %v11074 = vadd.f32 0.0, %v11073
        %v11075 = vpop.f32.mrb[0].mxu0
        %v11076 = vpop.f32.mrb[0].mxu0
        %v11077 = vadd.f32 0.0, %v11076
        %v11078 = vpop.f32.mrb[0].mxu0
        %11079 = vmatprep.mubr.bf16.mxu0 0
        %11080 = vmatmul.mubr.bf16.gmra.mrb[0].mxu0 %v10950
        %v11081 = vpop.f32.mrb[0].mxu0
        %v11082 = vadd.f32 0.0, %v11081
        %v11083 = vpop.f32.mrb[0].mxu0
        %v11084 = vpop.f32.mrb[0].mxu0
        %v11085 = vadd.f32 0.0, %v11084
        %v11086 = vpop.f32.mrb[0].mxu0
        %11087 = vmatprep.mubr.bf16.mxu0 0
        %11088 = vmatmul.mubr.bf16.gmra.mrb[0].mxu0 %v10953
        %v11089 = vpop.f32.mrb[0].mxu0
        %v11090 = vadd.f32 0.0, %v11089
        %v11091 = vpop.f32.mrb[0].mxu0
        %v11092 = vpop.f32.mrb[0].mxu0
        %v11093 = vadd.f32 0.0, %v11092
        %v11094 = vpop.f32.mrb[0].mxu0
        %11095 = vmatprep.mubr.bf16.mxu0 0
        %11096 = vmatmul.mubr.bf16.gmra.mrb[0].mxu0 %v10956
        %v11097 = vpop.f32.mrb[0].mxu0
        %v11098 = vadd.f32 0.0, %v11097
        %v11099 = vpop.f32.mrb[0].mxu0
        %v11100 = vpop.f32.mrb[0].mxu0
        %v11101 = vadd.f32 0.0, %v11100
        %v11102 = vpop.f32.mrb[0].mxu0
        %11103 = vmatprep.mubr.bf16.mxu0 0
        %11104 = vmatmul.mubr.bf16.gmra.mrb[0].mxu0 %v10959
        %v11105 = vpop.f32.mrb[0].mxu0
        %v11106 = vadd.f32 0.0, %v11105
        %v11107 = vpop.f32.mrb[0].mxu0
        %v11108 = vpop.f32.mrb[0].mxu0
        %v11109 = vadd.f32 0.0, %v11108
        %v11110 = vpop.f32.mrb[0].mxu0
        %11111 = vmatprep.mubr.bf16.mxu0 0
        %11112 = vmatmul.mubr.bf16.gmra.mrb[0].mxu0 %v10962
        %v11113 = vpop.f32.mrb[0].mxu0
        %v11114 = vadd.f32 0.0, %v11113
        %v11115 = vpop.f32.mrb[0].mxu0
        %v11116 = vpop.f32.mrb[0].mxu0
        %v11117 = vadd.f32 0.0, %v11116
        %v11118 = vpop.f32.mrb[0].mxu0
        %11119 = vmatprep.mubr.bf16.mxu0 0
        %11120 = vmatmul.mubr.bf16.gmra.mrb[0].mxu0 %v10965
        %v11121 = vpop.f32.mrb[0].mxu0
        %v11122 = vadd.f32 0.0, %v11121
        %v11123 = vpop.f32.mrb[0].mxu0
        %v11124 = vpop.f32.mrb[0].mxu0
        %v11125 = vadd.f32 0.0, %v11124
        %v11126 = vpop.f32.mrb[0].mxu0
        %11127 = vdwg.mxu0
        %v11128 = vadd.f32 %v10646, %v11002
        %v11129 = vadd.f32 %v10647, %v11005
        %v11130 = vadd.f32 %v10648, %v11010
        %v11131 = vadd.f32 %v10649, %v11013
        %v11132 = vadd.f32 %v10650, %v11018
        %v11133 = vadd.f32 %v10651, %v11021
        %v11134 = vadd.f32 %v10652, %v11026
        %v11135 = vadd.f32 %v10653, %v11029
        %v11136 = vadd.f32 %v10654, %v11034
        %v11137 = vadd.f32 %v10655, %v11037
        %v11138 = vadd.f32 %v10656, %v11042
        %v11139 = vadd.f32 %v10657, %v11045
        %v11140 = vadd.f32 %v10658, %v11050
        %v11141 = vadd.f32 %v10659, %v11053
        %v11142 = vadd.f32 %v10660, %v11058
        %v11143 = vadd.f32 %v10661, %v11061
        %v11144 = vadd.f32 %v10662, %v11066
        %v11145 = vadd.f32 %v10663, %v11069
        %v11146 = vadd.f32 %v10664, %v11074
        %v11147 = vadd.f32 %v10665, %v11077
        %v11148 = vadd.f32 %v10666, %v11082
        %v11149 = vadd.f32 %v10667, %v11085
        %v11150 = vadd.f32 %v10668, %v11090
        %v11151 = vadd.f32 %v10669, %v11093
        %v11152 = vadd.f32 %v10670, %v11098
        %v11153 = vadd.f32 %v10671, %v11101
        %v11154 = vadd.f32 %v10672, %v11106
        %v11155 = vadd.f32 %v10673, %v11109
        %v11156 = vadd.f32 %v10674, %v11114
        %v11157 = vadd.f32 %v10675, %v11117
        %v11158 = vadd.f32 %v10676, %v11122
        %v11159 = vadd.f32 %v10677, %v11125
        %v11160 = vld [vmem:[#allocation12] sm:$0x1]
        %v11162 = vlaneseq
        %v11163 = vshrl.u32 %v11162, 7
        %v11164 = vsub.s32 0, %v11163
        %v11165 = vrot.slane %v11160, %v11164
        %v11167 = vadd.f32 %v11128, %v11165
        %v11168 = vadd.f32 %v11129, %v11165
        %v11169 = vadd.f32 %v11130, %v11165
        %v11170 = vadd.f32 %v11131, %v11165
        %v11171 = vadd.f32 %v11132, %v11165
        %v11172 = vadd.f32 %v11133, %v11165
        %v11173 = vadd.f32 %v11134, %v11165
        %v11174 = vadd.f32 %v11135, %v11165
        %v11175 = vadd.f32 %v11136, %v11165
        %v11176 = vadd.f32 %v11137, %v11165
        %v11177 = vadd.f32 %v11138, %v11165
        %v11178 = vadd.f32 %v11139, %v11165
        %v11179 = vadd.f32 %v11140, %v11165
        %v11180 = vadd.f32 %v11141, %v11165
        %v11181 = vadd.f32 %v11142, %v11165
        %v11182 = vadd.f32 %v11143, %v11165
        %v11183 = vadd.f32 %v11144, %v11165
        %v11184 = vadd.f32 %v11145, %v11165
        %v11185 = vadd.f32 %v11146, %v11165
        %v11186 = vadd.f32 %v11147, %v11165
        %v11187 = vadd.f32 %v11148, %v11165
        %v11188 = vadd.f32 %v11149, %v11165
        %v11189 = vadd.f32 %v11150, %v11165
        %v11190 = vadd.f32 %v11151, %v11165
        %v11191 = vadd.f32 %v11152, %v11165
        %v11192 = vadd.f32 %v11153, %v11165
        %v11193 = vadd.f32 %v11154, %v11165
        %v11194 = vadd.f32 %v11155, %v11165
        %v11195 = vadd.f32 %v11156, %v11165
        %v11196 = vadd.f32 %v11157, %v11165
        %v11197 = vadd.f32 %v11158, %v11165
        %v11198 = vadd.f32 %v11159, %v11165
        %v11199 = vmax.f32 %v11167, 0.0
        %v11200 = vmax.f32 %v11168, 0.0
        %v11201 = vmax.f32 %v11169, 0.0
        %v11202 = vmax.f32 %v11170, 0.0
        %v11203 = vmax.f32 %v11171, 0.0
        %v11204 = vmax.f32 %v11172, 0.0
        %v11205 = vmax.f32 %v11173, 0.0
        %v11206 = vmax.f32 %v11174, 0.0
        %v11207 = vmax.f32 %v11175, 0.0
        %v11208 = vmax.f32 %v11176, 0.0
        %v11209 = vmax.f32 %v11177, 0.0
        %v11210 = vmax.f32 %v11178, 0.0
        %v11211 = vmax.f32 %v11179, 0.0
        %v11212 = vmax.f32 %v11180, 0.0
        %v11213 = vmax.f32 %v11181, 0.0
        %v11214 = vmax.f32 %v11182, 0.0
        %v11215 = vmax.f32 %v11183, 0.0
        %v11216 = vmax.f32 %v11184, 0.0
        %v11217 = vmax.f32 %v11185, 0.0
        %v11218 = vmax.f32 %v11186, 0.0
        %v11219 = vmax.f32 %v11187, 0.0
        %v11220 = vmax.f32 %v11188, 0.0
        %v11221 = vmax.f32 %v11189, 0.0
        %v11222 = vmax.f32 %v11190, 0.0
        %v11223 = vmax.f32 %v11191, 0.0
        %v11224 = vmax.f32 %v11192, 0.0
        %v11225 = vmax.f32 %v11193, 0.0
        %v11226 = vmax.f32 %v11194, 0.0
        %v11227 = vmax.f32 %v11195, 0.0
        %v11228 = vmax.f32 %v11196, 0.0
        %v11229 = vmax.f32 %v11197, 0.0
        %v11230 = vmax.f32 %v11198, 0.0
        %v11231 = vpack.c.bf16 %v11200, %v11199
        %v11232 = vpack.c.bf16 %v11202, %v11201
        %v11233 = vpack.c.bf16 %v11204, %v11203
        %v11234 = vpack.c.bf16 %v11206, %v11205
        %v11235 = vpack.c.bf16 %v11208, %v11207
        %v11236 = vpack.c.bf16 %v11210, %v11209
        %v11237 = vpack.c.bf16 %v11212, %v11211
        %v11238 = vpack.c.bf16 %v11214, %v11213
        %v11239 = vpack.c.bf16 %v11216, %v11215
        %v11240 = vpack.c.bf16 %v11218, %v11217
        %v11241 = vpack.c.bf16 %v11220, %v11219
        %v11242 = vpack.c.bf16 %v11222, %v11221
        %v11243 = vpack.c.bf16 %v11224, %v11223
        %v11244 = vpack.c.bf16 %v11226, %v11225
        %v11245 = vpack.c.bf16 %v11228, %v11227
        %v11246 = vpack.c.bf16 %v11230, %v11229
        %v11247 = vld [vmem:[#allocation13] sm:$0xf]
        %v11248 = vld [vmem:[#allocation13 + $0x4] sm:$0xf]
        %v11249 = vld [vmem:[#allocation13 + $0x8] sm:$0xf]
        %v11250 = vld [vmem:[#allocation13 + $0xc] sm:$0xf]
        %v11251 = vld [vmem:[#allocation15] sm:$0x1]
        %v11253 = vlaneseq
        %v11254 = vshrl.u32 %v11253, 7
        %v11255 = vsub.s32 0, %v11254
        %v11256 = vrot.slane %v11251, %v11255
        %v11262 = vunpack.c.l.b16 %v11247
        %v11263 = vunpack.c.l.b16 %v11248
        %v11264 = vunpack.c.l.b16 %v11249
        %v11265 = vunpack.c.l.b16 %v11250
        %v11266 = vpack.c.b16 %v11263, %v11262
        %v11267 = vpack.c.b16 %v11265, %v11264
        %v11271 = vsel %vm7002, %v11231, 0
        %v11274 = vsel %vm7002, %v11232, 0
        %v11277 = vsel %vm7002, %v11233, 0
        %v11280 = vsel %vm7002, %v11234, 0
        %v11283 = vsel %vm7002, %v11235, 0
        %v11286 = vsel %vm7002, %v11236, 0
        %v11289 = vsel %vm7002, %v11237, 0
        %v11292 = vsel %vm7002, %v11238, 0
        %v11295 = vsel %vm7002, %v11239, 0
        %v11298 = vsel %vm7002, %v11240, 0
        %v11301 = vsel %vm7002, %v11241, 0
        %v11304 = vsel %vm7002, %v11242, 0
        %v11307 = vsel %vm7002, %v11243, 0
        %v11310 = vsel %vm7002, %v11244, 0
        %v11313 = vsel %vm7002, %v11245, 0
        %v11316 = vsel %vm7002, %v11246, 0
        %11318 = vmatprep.subr.bf16.mxu0 0
        %11319 = vmatpush1.bf16.msra.mxu0 %v11266
        %11320 = vmatprep.subr.bf16.mxu0 0
        %11321 = vmatpush1.bf16.msra.mxu0 %v11267
        %11322 = vmatprep.subr.bf16.mxu0 0
        %11323 = vmatpush1.bf16.msra.mxu0 0
        %11324 = vmatprep.subr.bf16.mxu0 0
        %11325 = vmatpush1.bf16.msra.mxu0 0
        %11326 = vmatprep.subr.bf16.mxu0 0
        %11327 = vmatpush1.bf16.msra.mxu0 0
        %11328 = vmatprep.subr.bf16.mxu0 0
        %11329 = vmatpush1.bf16.msra.mxu0 0
        %11330 = vmatprep.subr.bf16.mxu0 0
        %11331 = vmatpush1.bf16.msra.mxu0 0
        %11332 = vmatprep.subr.bf16.mxu0 0
        %11333 = vmatpush1.bf16.msra.mxu0 0
        %11334 = vmatprep.subr.bf16.mxu0 0
        %11335 = vmatpush1.bf16.msra.mxu0 0
        %11336 = vmatprep.subr.bf16.mxu0 0
        %11337 = vmatpush1.bf16.msra.mxu0 0
        %11338 = vmatprep.subr.bf16.mxu0 0
        %11339 = vmatpush1.bf16.msra.mxu0 0
        %11340 = vmatprep.subr.bf16.mxu0 0
        %11341 = vmatpush1.bf16.msra.mxu0 0
        %11342 = vmatprep.subr.bf16.mxu0 0
        %11343 = vmatpush1.bf16.msra.mxu0 0
        %11344 = vmatprep.subr.bf16.mxu0 0
        %11345 = vmatpush1.bf16.msra.mxu0 0
        %11346 = vmatprep.subr.bf16.mxu0 0
        %11347 = vmatpush1.bf16.msra.mxu0 0
        %11348 = vmatprep.subr.bf16.mxu0 0
        %11349 = vmatpush1.bf16.msra.mxu0 0
        %11350 = vmatprep.mubr.bf16.mxu0 0
        %11351 = vmatmul.mubr.bf16.gmra.mrb[0].mxu0 %v11271
        %v11352 = vpop.f32.mrb[0].mxu0
        %v11353 = vadd.f32 %v11256, %v11352
        %v11354 = vpop.f32.mrb[0].mxu0
        %v11355 = vpop.f32.mrb[0].mxu0
        %v11356 = vadd.f32 %v11256, %v11355
        %v11357 = vpop.f32.mrb[0].mxu0
        %11358 = vmatprep.mubr.bf16.mxu0 0
        %11359 = vmatmul.mubr.bf16.gmra.mrb[0].mxu0 %v11274
        %v11360 = vpop.f32.mrb[0].mxu0
        %v11361 = vadd.f32 %v11256, %v11360
        %v11362 = vpop.f32.mrb[0].mxu0
        %v11363 = vpop.f32.mrb[0].mxu0
        %v11364 = vadd.f32 %v11256, %v11363
        %v11365 = vpop.f32.mrb[0].mxu0
        %11366 = vmatprep.mubr.bf16.mxu0 0
        %11367 = vmatmul.mubr.bf16.gmra.mrb[0].mxu0 %v11277
        %v11368 = vpop.f32.mrb[0].mxu0
        %v11369 = vadd.f32 %v11256, %v11368
        %v11370 = vpop.f32.mrb[0].mxu0
        %v11371 = vpop.f32.mrb[0].mxu0
        %v11372 = vadd.f32 %v11256, %v11371
        %v11373 = vpop.f32.mrb[0].mxu0
        %11374 = vmatprep.mubr.bf16.mxu0 0
        %11375 = vmatmul.mubr.bf16.gmra.mrb[0].mxu0 %v11280
        %v11376 = vpop.f32.mrb[0].mxu0
        %v11377 = vadd.f32 %v11256, %v11376
        %v11378 = vpop.f32.mrb[0].mxu0
        %v11379 = vpop.f32.mrb[0].mxu0
        %v11380 = vadd.f32 %v11256, %v11379
        %v11381 = vpop.f32.mrb[0].mxu0
        %11382 = vmatprep.mubr.bf16.mxu0 0
        %11383 = vmatmul.mubr.bf16.gmra.mrb[0].mxu0 %v11283
        %v11384 = vpop.f32.mrb[0].mxu0
        %v11385 = vadd.f32 %v11256, %v11384
        %v11386 = vpop.f32.mrb[0].mxu0
        %v11387 = vpop.f32.mrb[0].mxu0
        %v11388 = vadd.f32 %v11256, %v11387
        %v11389 = vpop.f32.mrb[0].mxu0
        %11390 = vmatprep.mubr.bf16.mxu0 0
        %11391 = vmatmul.mubr.bf16.gmra.mrb[0].mxu0 %v11286
        %v11392 = vpop.f32.mrb[0].mxu0
        %v11393 = vadd.f32 %v11256, %v11392
        %v11394 = vpop.f32.mrb[0].mxu0
        %v11395 = vpop.f32.mrb[0].mxu0
        %v11396 = vadd.f32 %v11256, %v11395
        %v11397 = vpop.f32.mrb[0].mxu0
        %11398 = vmatprep.mubr.bf16.mxu0 0
        %11399 = vmatmul.mubr.bf16.gmra.mrb[0].mxu0 %v11289
        %v11400 = vpop.f32.mrb[0].mxu0
        %v11401 = vadd.f32 %v11256, %v11400
        %v11402 = vpop.f32.mrb[0].mxu0
        %v11403 = vpop.f32.mrb[0].mxu0
        %v11404 = vadd.f32 %v11256, %v11403
        %v11405 = vpop.f32.mrb[0].mxu0
        %11406 = vmatprep.mubr.bf16.mxu0 0
        %11407 = vmatmul.mubr.bf16.gmra.mrb[0].mxu0 %v11292
        %v11408 = vpop.f32.mrb[0].mxu0
        %v11409 = vadd.f32 %v11256, %v11408
        %v11410 = vpop.f32.mrb[0].mxu0
        %v11411 = vpop.f32.mrb[0].mxu0
        %v11412 = vadd.f32 %v11256, %v11411
        %v11413 = vpop.f32.mrb[0].mxu0
        %11414 = vmatprep.mubr.bf16.mxu0 0
        %11415 = vmatmul.mubr.bf16.gmra.mrb[0].mxu0 %v11295
        %v11416 = vpop.f32.mrb[0].mxu0
        %v11417 = vadd.f32 %v11256, %v11416
        %v11418 = vpop.f32.mrb[0].mxu0
        %v11419 = vpop.f32.mrb[0].mxu0
        %v11420 = vadd.f32 %v11256, %v11419
        %v11421 = vpop.f32.mrb[0].mxu0
        %11422 = vmatprep.mubr.bf16.mxu0 0
        %11423 = vmatmul.mubr.bf16.gmra.mrb[0].mxu0 %v11298
        %v11424 = vpop.f32.mrb[0].mxu0
        %v11425 = vadd.f32 %v11256, %v11424
        %v11426 = vpop.f32.mrb[0].mxu0
        %v11427 = vpop.f32.mrb[0].mxu0
        %v11428 = vadd.f32 %v11256, %v11427
        %v11429 = vpop.f32.mrb[0].mxu0
        %11430 = vmatprep.mubr.bf16.mxu0 0
        %11431 = vmatmul.mubr.bf16.gmra.mrb[0].mxu0 %v11301
        %v11432 = vpop.f32.mrb[0].mxu0
        %v11433 = vadd.f32 %v11256, %v11432
        %v11434 = vpop.f32.mrb[0].mxu0
        %v11435 = vpop.f32.mrb[0].mxu0
        %v11436 = vadd.f32 %v11256, %v11435
        %v11437 = vpop.f32.mrb[0].mxu0
        %11438 = vmatprep.mubr.bf16.mxu0 0
        %11439 = vmatmul.mubr.bf16.gmra.mrb[0].mxu0 %v11304
        %v11440 = vpop.f32.mrb[0].mxu0
        %v11441 = vadd.f32 %v11256, %v11440
        %v11442 = vpop.f32.mrb[0].mxu0
        %v11443 = vpop.f32.mrb[0].mxu0
        %v11444 = vadd.f32 %v11256, %v11443
        %v11445 = vpop.f32.mrb[0].mxu0
        %11446 = vmatprep.mubr.bf16.mxu0 0
        %11447 = vmatmul.mubr.bf16.gmra.mrb[0].mxu0 %v11307
        %v11448 = vpop.f32.mrb[0].mxu0
        %v11449 = vadd.f32 %v11256, %v11448
        %v11450 = vpop.f32.mrb[0].mxu0
        %v11451 = vpop.f32.mrb[0].mxu0
        %v11452 = vadd.f32 %v11256, %v11451
        %v11453 = vpop.f32.mrb[0].mxu0
        %11454 = vmatprep.mubr.bf16.mxu0 0
        %11455 = vmatmul.mubr.bf16.gmra.mrb[0].mxu0 %v11310
        %v11456 = vpop.f32.mrb[0].mxu0
        %v11457 = vadd.f32 %v11256, %v11456
        %v11458 = vpop.f32.mrb[0].mxu0
        %v11459 = vpop.f32.mrb[0].mxu0
        %v11460 = vadd.f32 %v11256, %v11459
        %v11461 = vpop.f32.mrb[0].mxu0
        %11462 = vmatprep.mubr.bf16.mxu0 0
        %11463 = vmatmul.mubr.bf16.gmra.mrb[0].mxu0 %v11313
        %v11464 = vpop.f32.mrb[0].mxu0
        %v11465 = vadd.f32 %v11256, %v11464
        %v11466 = vpop.f32.mrb[0].mxu0
        %v11467 = vpop.f32.mrb[0].mxu0
        %v11468 = vadd.f32 %v11256, %v11467
        %v11469 = vpop.f32.mrb[0].mxu0
        %11470 = vmatprep.mubr.bf16.mxu0 0
        %11471 = vmatmul.mubr.bf16.gmra.mrb[0].mxu0 %v11316
        %v11472 = vpop.f32.mrb[0].mxu0
        %v11473 = vadd.f32 %v11256, %v11472
        %v11474 = vpop.f32.mrb[0].mxu0
        %v11475 = vpop.f32.mrb[0].mxu0
        %v11476 = vadd.f32 %v11256, %v11475
        %v11477 = vpop.f32.mrb[0].mxu0
        %11478 = vdwg.mxu0
        %v11479 = vmax.f32 %v11353, 0.0
        %v11480 = vmax.f32 %v11356, 0.0
        %v11481 = vmax.f32 %v11361, 0.0
        %v11482 = vmax.f32 %v11364, 0.0
        %v11483 = vmax.f32 %v11369, 0.0
        %v11484 = vmax.f32 %v11372, 0.0
        %v11485 = vmax.f32 %v11377, 0.0
        %v11486 = vmax.f32 %v11380, 0.0
        %v11487 = vmax.f32 %v11385, 0.0
        %v11488 = vmax.f32 %v11388, 0.0
        %v11489 = vmax.f32 %v11393, 0.0
        %v11490 = vmax.f32 %v11396, 0.0
        %v11491 = vmax.f32 %v11401, 0.0
        %v11492 = vmax.f32 %v11404, 0.0
        %v11493 = vmax.f32 %v11409, 0.0
        %v11494 = vmax.f32 %v11412, 0.0
        %v11495 = vmax.f32 %v11417, 0.0
        %v11496 = vmax.f32 %v11420, 0.0
        %v11497 = vmax.f32 %v11425, 0.0
        %v11498 = vmax.f32 %v11428, 0.0
        %v11499 = vmax.f32 %v11433, 0.0
        %v11500 = vmax.f32 %v11436, 0.0
        %v11501 = vmax.f32 %v11441, 0.0
        %v11502 = vmax.f32 %v11444, 0.0
        %v11503 = vmax.f32 %v11449, 0.0
        %v11504 = vmax.f32 %v11452, 0.0
        %v11505 = vmax.f32 %v11457, 0.0
        %v11506 = vmax.f32 %v11460, 0.0
        %v11507 = vmax.f32 %v11465, 0.0
        %v11508 = vmax.f32 %v11468, 0.0
        %v11509 = vmax.f32 %v11473, 0.0
        %v11510 = vmax.f32 %v11476, 0.0
        %v11511 = vpack.c.bf16 %v11480, %v11479
        %v11512 = vpack.c.bf16 %v11482, %v11481
        %v11513 = vpack.c.bf16 %v11484, %v11483
        %v11514 = vpack.c.bf16 %v11486, %v11485
        %v11515 = vpack.c.bf16 %v11488, %v11487
        %v11516 = vpack.c.bf16 %v11490, %v11489
        %v11517 = vpack.c.bf16 %v11492, %v11491
        %v11518 = vpack.c.bf16 %v11494, %v11493
        %v11519 = vpack.c.bf16 %v11496, %v11495
        %v11520 = vpack.c.bf16 %v11498, %v11497
        %v11521 = vpack.c.bf16 %v11500, %v11499
        %v11522 = vpack.c.bf16 %v11502, %v11501
        %v11523 = vpack.c.bf16 %v11504, %v11503
        %v11524 = vpack.c.bf16 %v11506, %v11505
        %v11525 = vpack.c.bf16 %v11508, %v11507
        %v11526 = vpack.c.bf16 %v11510, %v11509
        %v11543 = vunpack.c.l.b16 %v11511
        %v11544 = vunpack.c.h.b16 %v11511
        %v11545 = vunpack.c.l.b16 %v11512
        %v11546 = vunpack.c.h.b16 %v11512
        %v11547 = vunpack.c.l.b16 %v11513
        %v11548 = vunpack.c.h.b16 %v11513
        %v11549 = vunpack.c.l.b16 %v11514
        %v11550 = vunpack.c.h.b16 %v11514
        %v11551 = vunpack.c.l.b16 %v11515
        %v11552 = vunpack.c.h.b16 %v11515
        %v11553 = vunpack.c.l.b16 %v11516
        %v11554 = vunpack.c.h.b16 %v11516
        %v11555 = vunpack.c.l.b16 %v11517
        %v11556 = vunpack.c.h.b16 %v11517
        %v11557 = vunpack.c.l.b16 %v11518
        %v11558 = vunpack.c.h.b16 %v11518
        %v11559 = vunpack.c.l.b16 %v11519
        %v11560 = vunpack.c.h.b16 %v11519
        %v11561 = vunpack.c.l.b16 %v11520
        %v11562 = vunpack.c.h.b16 %v11520
        %v11563 = vunpack.c.l.b16 %v11521
        %v11564 = vunpack.c.h.b16 %v11521
        %v11565 = vunpack.c.l.b16 %v11522
        %v11566 = vunpack.c.h.b16 %v11522
        %v11567 = vunpack.c.l.b16 %v11523
        %v11568 = vunpack.c.h.b16 %v11523
        %v11569 = vunpack.c.l.b16 %v11524
        %v11570 = vunpack.c.h.b16 %v11524
        %v11571 = vunpack.c.l.b16 %v11525
        %v11572 = vunpack.c.h.b16 %v11525
        %v11573 = vunpack.c.l.b16 %v11526
        %v11574 = vunpack.c.h.b16 %v11526
        %v11575 = vpack.c.b16 %v11543, %v11543
        %v11576 = vpack.c.b16 %v11544, %v11544
        %v11577 = vpack.c.b16 %v11545, %v11545
        %v11578 = vpack.c.b16 %v11546, %v11546
        %v11579 = vpack.c.b16 %v11547, %v11547
        %v11580 = vpack.c.b16 %v11548, %v11548
        %v11581 = vpack.c.b16 %v11549, %v11549
        %v11582 = vpack.c.b16 %v11550, %v11550
        %v11583 = vpack.c.b16 %v11551, %v11551
        %v11584 = vpack.c.b16 %v11552, %v11552
        %v11585 = vpack.c.b16 %v11553, %v11553
        %v11586 = vpack.c.b16 %v11554, %v11554
        %v11587 = vpack.c.b16 %v11555, %v11555
        %v11588 = vpack.c.b16 %v11556, %v11556
        %v11589 = vpack.c.b16 %v11557, %v11557
        %v11590 = vpack.c.b16 %v11558, %v11558
        %v11591 = vpack.c.b16 %v11559, %v11559
        %v11592 = vpack.c.b16 %v11560, %v11560
        %v11593 = vpack.c.b16 %v11561, %v11561
        %v11594 = vpack.c.b16 %v11562, %v11562
        %v11595 = vpack.c.b16 %v11563, %v11563
        %v11596 = vpack.c.b16 %v11564, %v11564
        %v11597 = vpack.c.b16 %v11565, %v11565
        %v11598 = vpack.c.b16 %v11566, %v11566
        %v11599 = vpack.c.b16 %v11567, %v11567
        %v11600 = vpack.c.b16 %v11568, %v11568
        %v11601 = vpack.c.b16 %v11569, %v11569
        %v11602 = vpack.c.b16 %v11570, %v11570
        %v11603 = vpack.c.b16 %v11571, %v11571
        %v11604 = vpack.c.b16 %v11572, %v11572
        %v11605 = vpack.c.b16 %v11573, %v11573
        %v11606 = vpack.c.b16 %v11574, %v11574
        %11639 = vst [vmem:[%s377] sm:$0xf] %v11575
        %11640 = vst [vmem:[%s377 + $0x4] sm:$0xf] %v11576
        %11641 = vst [vmem:[%s377 + $0x8] sm:$0xf] %v11577
        %11642 = vst [vmem:[%s377 + $0xc] sm:$0xf] %v11578
        %11643 = vst [vmem:[%s377 + $0x10] sm:$0xf] %v11579
        %11644 = vst [vmem:[%s377 + $0x14] sm:$0xf] %v11580
        %11645 = vst [vmem:[%s377 + $0x18] sm:$0xf] %v11581
        %11646 = vst [vmem:[%s377 + $0x1c] sm:$0xf] %v11582
        %11647 = vst [vmem:[%s377 + $0x20] sm:$0xf] %v11583
        %11648 = vst [vmem:[%s377 + $0x24] sm:$0xf] %v11584
        %11649 = vst [vmem:[%s377 + $0x28] sm:$0xf] %v11585
        %11650 = vst [vmem:[%s377 + $0x2c] sm:$0xf] %v11586
        %11651 = vst [vmem:[%s377 + $0x30] sm:$0xf] %v11587
        %11652 = vst [vmem:[%s377 + $0x34] sm:$0xf] %v11588
        %11653 = vst [vmem:[%s377 + $0x38] sm:$0xf] %v11589
        %11654 = vst [vmem:[%s377 + $0x3c] sm:$0xf] %v11590
        %11655 = vst [vmem:[%s377 + $0x40] sm:$0xf] %v11591
        %11656 = vst [vmem:[%s377 + $0x44] sm:$0xf] %v11592
        %11657 = vst [vmem:[%s377 + $0x48] sm:$0xf] %v11593
        %11658 = vst [vmem:[%s377 + $0x4c] sm:$0xf] %v11594
        %11659 = vst [vmem:[%s377 + $0x50] sm:$0xf] %v11595
        %11660 = vst [vmem:[%s377 + $0x54] sm:$0xf] %v11596
        %11661 = vst [vmem:[%s377 + $0x58] sm:$0xf] %v11597
        %11662 = vst [vmem:[%s377 + $0x5c] sm:$0xf] %v11598
        %11663 = vst [vmem:[%s377 + $0x60] sm:$0xf] %v11599
        %11664 = vst [vmem:[%s377 + $0x64] sm:$0xf] %v11600
        %11665 = vst [vmem:[%s377 + $0x68] sm:$0xf] %v11601
        %11666 = vst [vmem:[%s377 + $0x6c] sm:$0xf] %v11602
        %11667 = vst [vmem:[%s377 + $0x70] sm:$0xf] %v11603
        %11668 = vst [vmem:[%s377 + $0x74] sm:$0xf] %v11604
        %11669 = vst [vmem:[%s377 + $0x78] sm:$0xf] %v11605
        %11670 = vst [vmem:[%s377 + $0x7c] sm:$0xf] %v11606
        %s11671 = sand.u32 %s187, 1
        %s11672 = scalar_lea.sflag [#allocation6], %s11671
        %s11673 = sand.u32 %s187, 1
        %s11674 = smul.addr %s11673, 128
        %s11675 = scalar_lea.vmem [#allocation16], %s11674
        // Predicated region
        $region77: #{tpu_custom_call.1} parent=47 // pred_check
          %p11676 = pneg %p197
        $region78: #{tpu_custom_call.1} parent=47 // pred_check_branch
          %11678 = sbr.rel (%p11676) target = $region80
        $region79: #{tpu_custom_call.1} parent=47 // pred_region
          %s11680 = ssub.s32 2048, 2048
          %11681 = vsyncadd %s11672, %s11680
          %s11682 = smul.addr %s27, 32
          %s11683 = smul.addr %s11682, 64
          %s11684 = scalar_lea.hbm %s7, %s11683
          %s11685 = sshll.u32 %s11675, 4
          %s11686 = int_to_ptr.vmem [resolvable:$true] %s11685
          %11691 = dma.vmem_to_hbm [thread:$0]  %s11686, 2048, %s11684, %s11672, 64, 64, 4
        $region80: #{tpu_custom_call.1} parent=47 // pred_fallthru
          _
      $region48: #{tpu_custom_call.1} parent=5 // pred_fallthru
        _
      %p11692 = scmp.le.s32.totalorder 2, %s22
      // Predicated region
      $region81: #{tpu_custom_call.1} parent=5 // pred_check
        %p11693 = pneg %p11692
      $region82: #{tpu_custom_call.1} parent=5 // pred_check_branch
        %11695 = sbr.rel (%p11693) target = $region84
      $region83: #{tpu_custom_call.1} parent=5 // pred_region
        %s11696 = ssub.s32 %s22, 2
        // Predicated region
        $region85: #{tpu_custom_call.1} parent=83 // pred_check
          %p11697 = pneg %p203
        $region86: #{tpu_custom_call.1} parent=83 // pred_check_branch
          %11699 = sbr.rel (%p11697) target = $region88
        $region87: #{tpu_custom_call.1} parent=83 // pred_region
          %s11700 = sand.u32 %s188, 1
          %s11701 = scalar_lea.sflag [#allocation6], %s11700
          %s11702 = sand.u32 %s188, 1
          %s11703 = smul.addr %s11702, 128
          %s11704 = scalar_lea.vmem [#allocation16], %s11703
          %11705 = dma.done %s11701, 2048
        $region88: #{tpu_custom_call.1} parent=83 // pred_fallthru
          _
      $region84: #{tpu_custom_call.1} parent=5 // pred_fallthru
        _
    $region6: #{tpu_custom_call.1} parent=1 // loop_footer
      %s26 = sadd.s32 1, %s22
    $region7: #{tpu_custom_call.1} parent=1 // loop_footer_branch
      %21 = sbr.rel target = $region3
    $region8: #{tpu_custom_call.1} parent=1 // loop_exit
      _
    %11706 = vsyncpa [#allocation5], 1
    %s11707 = scalar_lea.sflag [#allocation5], 1
    %11708 = vsyncpa %s11707, 1
    %11709 = vsyncpa [#allocation8], 1
    %11710 = vsyncpa [#allocation11], 1
    %11711 = vsyncpa [#allocation14], 1
    %11712 = vsyncpa [#allocation6], 1
    %s11713 = scalar_lea.sflag [#allocation6], 1
    %11714 = vsyncpa %s11713, 1

</llo_original>
